<compile_context>
chip_gen: v5e
topology: v5e:2x2
jax: 0.10.0
libtpu: 0.0.40
codegen_flags: <defaults>
</compile_context>

<pallas_src>
import jax
import jax.numpy as jnp
from jax.experimental import pallas as pl
from jax.experimental.pallas import tpu as pltpu

EPS = 1e-5
C_IN = 224    # conv2 input channels (fixed by the module)
C_MID = 448   # conv2 / conv6 output channels (fixed by the module)

_PARALLEL2 = pltpu.CompilerParams(
    dimension_semantics=("parallel", "parallel"))


# ------------------------------ kernels -------------------------------------

def _conv2_stats_kernel(x_ref, w2_ref, st_ref):
    """y2 = W2 @ x (bf16 MXU, f32 acc); emit only per-tile sum / sumsq."""
    x = x_ref[...].astype(jnp.bfloat16)                               # (224, tm)
    y = jnp.dot(w2_ref[...], x, preferred_element_type=jnp.float32)   # (448, tm)
    st_ref[...] = jnp.concatenate(
        [jnp.sum(y, axis=1, keepdims=True),
         jnp.sum(y * y, axis=1, keepdims=True)], axis=1)              # (448, 2)


def _conv2_bn2_conv6_stats_kernel(x_ref, w2s_ref, sh2_ref, w6_ref,
                                  y6_ref, st_ref):
    """Recompute conv2 (scale folded into W2s), BN2+ReLU2, conv6; emit y6
    (bf16, 448 ch) and per-tile sum / sumsq partials for BN6 (f32 acc)."""
    x = x_ref[...].astype(jnp.bfloat16)                               # (224, tm)
    y2 = jnp.dot(w2s_ref[...], x, preferred_element_type=jnp.float32)  # sc2*conv2
    x2 = jnp.maximum(y2 + sh2_ref[...], 0.0)                          # BN2+ReLU2
    y6 = jnp.dot(w6_ref[...], x2.astype(jnp.bfloat16),
                 preferred_element_type=jnp.float32)                  # (448, tm)
    y6_ref[...] = y6.astype(jnp.bfloat16)
    st_ref[...] = jnp.concatenate(
        [jnp.sum(y6, axis=1, keepdims=True),
         jnp.sum(y6 * y6, axis=1, keepdims=True)], axis=1)            # (448, 2)


def _bn6_relu_kernel(y6_ref, ss6_ref, o_ref):
    """out = relu(y6 * sc6 + sh6) — single FMA pass, lane-dense stores."""
    y6 = y6_ref[...].astype(jnp.float32)                              # (448, tm)
    o_ref[...] = jnp.maximum(y6 * ss6_ref[:, 0:1] + ss6_ref[:, 1:2], 0.0)


# ------------------------------ wrapper --------------------------------------

def _fold_bn(stats, gamma, beta, count):
    """Fold training-mode BN into per-channel scale / shift from sum & sumsq.

    TODO(synk): E[x^2]-E[x]^2 in f32 can lose precision at very large N*H*W;
    per-tile mean-centered partials / Welford would be more robust at scale.
    """
    sums = jnp.sum(stats, axis=(0, 1))                     # (C_MID, 2) f32
    mean = sums[:, 0] / count
    var = jnp.maximum(sums[:, 1] / count - mean * mean, 0.0)   # biased var
    scale = gamma * jax.lax.rsqrt(var + EPS)
    shift = beta - mean * scale
    return scale, shift


def _pick_tile(n, hw):
    """Largest lane-dense spatial tile that still leaves >= 2 parallel grid
    steps (so both v7x TensorCores get work); falls back to the largest tile
    dividing hw."""
    tm = None
    for cand in (2048, 1024, 512, 256, 128):
        if hw % cand != 0:
            continue
        if tm is None:
            tm = cand
        if n * (hw // cand) >= 2:
            tm = cand
            break
    if tm is None:
        raise ValueError("H*W must be a multiple of 128 for this kernel")
    return tm


def res_bottleneck_block3(x_nchw, w2, g2, b2, w6, g6, b6):
    n, c, h, w = x_nchw.shape
    assert c == C_IN, c
    hw = h * w
    tm = _pick_tile(n, hw)
    nt = hw // tm

    x = x_nchw.reshape(n, c, hw)          # free reshape, no transpose
    count = jnp.float32(n * hw)

    w2_bf = w2.astype(jnp.bfloat16)       # (448, 224)
    w6_bf = w6.astype(jnp.bfloat16)       # (448, 448)

    # ---- pass A: conv2 -> BN2 partial stats only (no y2 HBM write) ---------
    st2 = pl.pallas_call(
        _conv2_stats_kernel,
        grid=(n, nt),
        in_specs=[
            pl.BlockSpec((None, C_IN, tm), lambda i, j: (i, 0, j)),
            pl.BlockSpec((C_MID, C_IN), lambda i, j: (0, 0)),
        ],
        out_specs=pl.BlockSpec((None, None, C_MID, 2),
                               lambda i, j: (i, j, 0, 0)),
        out_shape=jax.ShapeDtypeStruct((n, nt, C_MID, 2), jnp.float32),
        compiler_params=_PARALLEL2,
    )(x, w2_bf)

    sc2, sh2 = _fold_bn(st2, g2, b2, count)
    # Fold the BN2 scale into the conv2 weight rows; only the shift remains
    # as a per-channel vector input to pass B.
    w2s = (w2 * sc2[:, None]).astype(jnp.bfloat16)          # (448, 224)
    sh2 = sh2.reshape(-1, 1).astype(jnp.float32)            # (448, 1)

    # ---- pass B: conv2 (recomputed) + BN2+ReLU2 + conv6 + BN6 stats --------
    y6, st6 = pl.pallas_call(
        _conv2_bn2_conv6_stats_kernel,
        grid=(n, nt),
        in_specs=[
            pl.BlockSpec((None, C_IN, tm), lambda i, j: (i, 0, j)),
            pl.BlockSpec((C_MID, C_IN), lambda i, j: (0, 0)),
            pl.BlockSpec((C_MID, 1), lambda i, j: (0, 0)),
            pl.BlockSpec((C_MID, C_MID), lambda i, j: (0, 0)),
        ],
        out_specs=[
            pl.BlockSpec((None, C_MID, tm), lambda i, j: (i, 0, j)),
            pl.BlockSpec((None, None, C_MID, 2), lambda i, j: (i, j, 0, 0)),
        ],
        out_shape=[
            jax.ShapeDtypeStruct((n, C_MID, hw), jnp.bfloat16),
            jax.ShapeDtypeStruct((n, nt, C_MID, 2), jnp.float32),
        ],
        compiler_params=_PARALLEL2,
    )(x, w2s, sh2, w6_bf)

    sc6, sh6 = _fold_bn(st6, g6, b6, count)
    ss6 = jnp.stack([sc6, sh6], axis=1).astype(jnp.float32)  # (448, 2) packed

    # ---- pass C: BN6 + ReLU6 (folded) ---------------------------------------
    out = pl.pallas_call(
        _bn6_relu_kernel,
        grid=(n, nt),
        in_specs=[
            pl.BlockSpec((None, C_MID, tm), lambda i, j: (i, 0, j)),
            pl.BlockSpec((C_MID, 2), lambda i, j: (0, 0)),
        ],
        out_specs=pl.BlockSpec((None, C_MID, tm), lambda i, j: (i, 0, j)),
        out_shape=jax.ShapeDtypeStruct((n, C_MID, hw), jnp.float32),
        compiler_params=_PARALLEL2,
    )(y6, ss6)

    return out.reshape(n, C_MID, h, w)


# ------------------------------ reference ------------------------------------

def _reference(x_nchw, w2, g2, b2, w6, g6, b6):
    """Plain-JAX f32 reference of the live path."""
    n, c, h, w = x_nchw.shape
    x = x_nchw.reshape(n, c, h * w)

    def bn_relu(y, g, b):
        mean = jnp.mean(y, axis=(0, 2), keepdims=True)
        var = jnp.mean(jnp.square(y - mean), axis=(0, 2), keepdims=True)
        return jnp.maximum(
            (y - mean) * jax.lax.rsqrt(var + EPS) * g[None, :, None]
            + b[None, :, None], 0.0)

    hi = jax.lax.Precision.HIGHEST
    y2 = jnp.einsum("oc,ncm->nom", w2, x, precision=hi)
    x2 = bn_relu(y2, g2, b2)
    y6 = jnp.einsum("oc,ncm->nom", w6, x2, precision=hi)
    out = bn_relu(y6, g6, b6)
    return out.reshape(n, C_MID, h, w)


def make_params(key):
    ks = jax.random.split(key, 6)
    w2 = jax.random.normal(ks[0], (C_MID, C_IN), jnp.float32) * 0.05   # conv2
    w6 = jax.random.normal(ks[1], (C_MID, C_MID), jnp.float32) * 0.05  # conv6
    g2 = 1.0 + 0.1 * jax.random.normal(ks[2], (C_MID,), jnp.float32)
    b2 = 0.1 * jax.random.normal(ks[3], (C_MID,), jnp.float32)
    g6 = 1.0 + 0.1 * jax.random.normal(ks[4], (C_MID,), jnp.float32)
    b6 = 0.1 * jax.random.normal(ks[5], (C_MID,), jnp.float32)
    return w2, g2, b2, w6, g6, b6


if __name__ == "__main__":
    key = jax.random.PRNGKey(0)
    k_x, k_p = jax.random.split(key)

    # Small shapes consistent with the module: Conv2d(224, ...) => C=224.
    N, H, W = 2, 16, 16
    x1 = jax.random.normal(k_x, (N, C_IN, H, W), jnp.float32)
    params = make_params(k_p)

    out = jax.block_until_ready(jax.jit(res_bottleneck_block3)(x1, *params))
    ref = jax.block_until_ready(_reference(x1, *params))

    assert out.shape == (N, C_MID, H, W), out.shape
    max_err = float(jnp.max(jnp.abs(out - ref)))
    assert bool(jnp.allclose(out, ref, rtol=2e-2, atol=2e-2)), (
        f"mismatch vs reference, max abs err = {max_err}")

    print("KERNEL_OK")
</pallas_src>

<mosaic_0001>
module attributes {stable_mosaic.version = 11 : i64} {
  func.func @_conv2_stats_kernel(%arg0: i32, %arg1: i32, %arg2: memref<1x224x256xf32, #tpu.memory_space<vmem>>, %arg3: memref<448x224xbf16, #tpu.memory_space<vmem>>, %arg4: memref<1x1x448x2xf32, #tpu.memory_space<vmem>>) attributes {dimension_semantics = [#tpu.dimension_semantics<parallel>, #tpu.dimension_semantics<parallel>], iteration_bounds = array<i64: 2, 1>, scalar_prefetch = 0 : i64, scratch_operands = 0 : i64, tpu.core_type = #tpu.core_type<tc>, window_params = [{transform_indices = @transform_0, window_bounds = array<i64: 1, 224, 256>}, {pipeline_mode = #tpu.pipeline_mode<synchronous>, transform_indices = @transform_1, window_bounds = array<i64: 448, 224>}, {transform_indices = @transform_2, window_bounds = array<i64: 1, 1, 448, 2>}]} {
    %c0 = arith.constant 0 : index
    %c0_0 = arith.constant 0 : index
    %c0_1 = arith.constant 0 : index
    %0 = vector.load %arg2[%c0, %c0_0, %c0_1] : memref<1x224x256xf32, #tpu.memory_space<vmem>>, vector<1x224x256xf32>
    %1 = vector.shape_cast %0 : vector<1x224x256xf32> to vector<224x256xf32>
    %2 = arith.truncf %1 : vector<224x256xf32> to vector<224x256xbf16>
    %c0_2 = arith.constant 0 : index
    %c0_3 = arith.constant 0 : index
    %3 = vector.load %arg3[%c0_2, %c0_3] : memref<448x224xbf16, #tpu.memory_space<vmem>>, vector<448x224xbf16>
    %cst = arith.constant dense<0.000000e+00> : vector<448x256xf32>
    %4 = tpu.matmul %3, %2, %cst {dimension_numbers = #tpu.dot_dimension_numbers<[1], [0], [0], [1], [0, 0, 1, 1], [], []>} : vector<448x224xbf16>, vector<224x256xbf16>, vector<448x256xf32> -> vector<448x256xf32>
    %cst_4 = arith.constant dense<0.000000e+00> : vector<448xf32>
    %5 = vector.multi_reduction <add>, %4, %cst_4 [1] : vector<448x256xf32> to vector<448xf32>
    %6 = vector.shape_cast %5 : vector<448xf32> to vector<448x1xf32>
    %7 = arith.mulf %4, %4 : vector<448x256xf32>
    %cst_5 = arith.constant dense<0.000000e+00> : vector<448xf32>
    %8 = vector.multi_reduction <add>, %7, %cst_5 [1] : vector<448x256xf32> to vector<448xf32>
    %9 = vector.shape_cast %8 : vector<448xf32> to vector<448x1xf32>
    %10 = tpu.concatenate %6, %9 in 1 : vector<448x1xf32>, vector<448x1xf32> -> vector<448x2xf32>
    %c0_6 = arith.constant 0 : index
    %c0_7 = arith.constant 0 : index
    %c0_8 = arith.constant 0 : index
    %c0_9 = arith.constant 0 : index
    %11 = vector.load %arg4[%c0_6, %c0_7, %c0_8, %c0_9] : memref<1x1x448x2xf32, #tpu.memory_space<vmem>>, vector<1x1x448x2xf32>
    %12 = vector.shape_cast %11 : vector<1x1x448x2xf32> to vector<448x2xf32>
    %13 = vector.shape_cast %10 : vector<448x2xf32> to vector<1x1x448x2xf32>
    tpu.vector_store %arg4[%c0_6, %c0_7, %c0_8, %c0_9], %13 {strides = array<i32>} : memref<1x1x448x2xf32, #tpu.memory_space<vmem>>, vector<1x1x448x2xf32>,
    return
  }
  func.func @transform_0(%arg0: i32, %arg1: i32) -> (i32, i32, i32) {
    %c0_i32 = arith.constant 0 : i32
    %c0_i32_0 = arith.constant 0 : i32
    return %arg0, %c0_i32, %arg1 : i32, i32, i32
  }
  func.func @transform_1(%arg0: i32, %arg1: i32) -> (i32, i32) {
    %c0_i32 = arith.constant 0 : i32
    %c0_i32_0 = arith.constant 0 : i32
    %c0_i32_1 = arith.constant 0 : i32
    return %c0_i32, %c0_i32_0 : i32, i32
  }
  func.func @transform_2(%arg0: i32, %arg1: i32) -> (i32, i32, i32, i32) {
    %c0_i32 = arith.constant 0 : i32
    %c0_i32_0 = arith.constant 0 : i32
    %c0_i32_1 = arith.constant 0 : i32
    return %arg0, %arg1, %c0_i32, %c0_i32_0 : i32, i32, i32, i32
  }
}

module attributes {stable_mosaic.version = 11 : i64} {
  func.func @_conv2_bn2_conv6_stats_kernel(%arg0: i32, %arg1: i32, %arg2: memref<1x224x256xf32, #tpu.memory_space<vmem>>, %arg3: memref<448x224xbf16, #tpu.memory_space<vmem>>, %arg4: memref<448x1xf32, #tpu.memory_space<vmem>>, %arg5: memref<448x448xbf16, #tpu.memory_space<vmem>>, %arg6: memref<1x448x256xbf16, #tpu.memory_space<vmem>>, %arg7: memref<1x1x448x2xf32, #tpu.memory_space<vmem>>) attributes {dimension_semantics = [#tpu.dimension_semantics<parallel>, #tpu.dimension_semantics<parallel>], iteration_bounds = array<i64: 2, 1>, scalar_prefetch = 0 : i64, scratch_operands = 0 : i64, tpu.core_type = #tpu.core_type<tc>, window_params = [{transform_indices = @transform_0, window_bounds = array<i64: 1, 224, 256>}, {pipeline_mode = #tpu.pipeline_mode<synchronous>, transform_indices = @transform_1, window_bounds = array<i64: 448, 224>}, {pipeline_mode = #tpu.pipeline_mode<synchronous>, transform_indices = @transform_2, window_bounds = array<i64: 448, 1>}, {pipeline_mode = #tpu.pipeline_mode<synchronous>, transform_indices = @transform_3, window_bounds = array<i64: 448, 448>}, {transform_indices = @transform_4, window_bounds = array<i64: 1, 448, 256>}, {transform_indices = @transform_5, window_bounds = array<i64: 1, 1, 448, 2>}]} {
    %c0 = arith.constant 0 : index
    %c0_0 = arith.constant 0 : index
    %c0_1 = arith.constant 0 : index
    %0 = vector.load %arg2[%c0, %c0_0, %c0_1] : memref<1x224x256xf32, #tpu.memory_space<vmem>>, vector<1x224x256xf32>
    %1 = vector.shape_cast %0 : vector<1x224x256xf32> to vector<224x256xf32>
    %2 = arith.truncf %1 : vector<224x256xf32> to vector<224x256xbf16>
    %c0_2 = arith.constant 0 : index
    %c0_3 = arith.constant 0 : index
    %3 = vector.load %arg3[%c0_2, %c0_3] : memref<448x224xbf16, #tpu.memory_space<vmem>>, vector<448x224xbf16>
    %cst = arith.constant dense<0.000000e+00> : vector<448x256xf32>
    %4 = tpu.matmul %3, %2, %cst {dimension_numbers = #tpu.dot_dimension_numbers<[1], [0], [0], [1], [0, 0, 1, 1], [], []>} : vector<448x224xbf16>, vector<224x256xbf16>, vector<448x256xf32> -> vector<448x256xf32>
    %c0_4 = arith.constant 0 : index
    %c0_5 = arith.constant 0 : index
    %5 = vector.load %arg4[%c0_4, %c0_5] : memref<448x1xf32, #tpu.memory_space<vmem>>, vector<448x1xf32>
    %6 = vector.broadcast %5 : vector<448x1xf32> to vector<448x256xf32>
    %7 = arith.addf %4, %6 : vector<448x256xf32>
    %cst_6 = arith.constant 0.000000e+00 : f32
    %8 = vector.broadcast %cst_6 : f32 to vector<448x256xf32>
    %9 = arith.maximumf %7, %8 : vector<448x256xf32>
    %c0_7 = arith.constant 0 : index
    %c0_8 = arith.constant 0 : index
    %10 = vector.load %arg5[%c0_7, %c0_8] : memref<448x448xbf16, #tpu.memory_space<vmem>>, vector<448x448xbf16>
    %11 = arith.truncf %9 : vector<448x256xf32> to vector<448x256xbf16>
    %cst_9 = arith.constant dense<0.000000e+00> : vector<448x256xf32>
    %12 = tpu.matmul %10, %11, %cst_9 {dimension_numbers = #tpu.dot_dimension_numbers<[1], [0], [0], [1], [0, 0, 1, 1], [], []>} : vector<448x448xbf16>, vector<448x256xbf16>, vector<448x256xf32> -> vector<448x256xf32>
    %13 = arith.truncf %12 : vector<448x256xf32> to vector<448x256xbf16>
    %c0_10 = arith.constant 0 : index
    %c0_11 = arith.constant 0 : index
    %c0_12 = arith.constant 0 : index
    %14 = vector.load %arg6[%c0_10, %c0_11, %c0_12] : memref<1x448x256xbf16, #tpu.memory_space<vmem>>, vector<1x448x256xbf16>
    %15 = vector.shape_cast %14 : vector<1x448x256xbf16> to vector<448x256xbf16>
    %16 = vector.shape_cast %13 : vector<448x256xbf16> to vector<1x448x256xbf16>
    tpu.vector_store %arg6[%c0_10, %c0_11, %c0_12], %16 {strides = array<i32>} : memref<1x448x256xbf16, #tpu.memory_space<vmem>>, vector<1x448x256xbf16>,
    %cst_13 = arith.constant dense<0.000000e+00> : vector<448xf32>
    %17 = vector.multi_reduction <add>, %12, %cst_13 [1] : vector<448x256xf32> to vector<448xf32>
    %18 = vector.shape_cast %17 : vector<448xf32> to vector<448x1xf32>
    %19 = arith.mulf %12, %12 : vector<448x256xf32>
    %cst_14 = arith.constant dense<0.000000e+00> : vector<448xf32>
    %20 = vector.multi_reduction <add>, %19, %cst_14 [1] : vector<448x256xf32> to vector<448xf32>
    %21 = vector.shape_cast %20 : vector<448xf32> to vector<448x1xf32>
    %22 = tpu.concatenate %18, %21 in 1 : vector<448x1xf32>, vector<448x1xf32> -> vector<448x2xf32>
    %c0_15 = arith.constant 0 : index
    %c0_16 = arith.constant 0 : index
    %c0_17 = arith.constant 0 : index
    %c0_18 = arith.constant 0 : index
    %23 = vector.load %arg7[%c0_15, %c0_16, %c0_17, %c0_18] : memref<1x1x448x2xf32, #tpu.memory_space<vmem>>, vector<1x1x448x2xf32>
    %24 = vector.shape_cast %23 : vector<1x1x448x2xf32> to vector<448x2xf32>
    %25 = vector.shape_cast %22 : vector<448x2xf32> to vector<1x1x448x2xf32>
    tpu.vector_store %arg7[%c0_15, %c0_16, %c0_17, %c0_18], %25 {strides = array<i32>} : memref<1x1x448x2xf32, #tpu.memory_space<vmem>>, vector<1x1x448x2xf32>,
    return
  }
  func.func @transform_0(%arg0: i32, %arg1: i32) -> (i32, i32, i32) {
    %c0_i32 = arith.constant 0 : i32
    %c0_i32_0 = arith.constant 0 : i32
    return %arg0, %c0_i32, %arg1 : i32, i32, i32
  }
  func.func @transform_1(%arg0: i32, %arg1: i32) -> (i32, i32) {
    %c0_i32 = arith.constant 0 : i32
    %c0_i32_0 = arith.constant 0 : i32
    %c0_i32_1 = arith.constant 0 : i32
    return %c0_i32, %c0_i32_0 : i32, i32
  }
  func.func @transform_2(%arg0: i32, %arg1: i32) -> (i32, i32) {
    %c0_i32 = arith.constant 0 : i32
    %c0_i32_0 = arith.constant 0 : i32
    %c0_i32_1 = arith.constant 0 : i32
    return %c0_i32, %c0_i32_0 : i32, i32
  }
  func.func @transform_3(%arg0: i32, %arg1: i32) -> (i32, i32) {
    %c0_i32 = arith.constant 0 : i32
    %c0_i32_0 = arith.constant 0 : i32
    %c0_i32_1 = arith.constant 0 : i32
    return %c0_i32, %c0_i32_0 : i32, i32
  }
  func.func @transform_4(%arg0: i32, %arg1: i32) -> (i32, i32, i32) {
    %c0_i32 = arith.constant 0 : i32
    %c0_i32_0 = arith.constant 0 : i32
    return %arg0, %c0_i32, %arg1 : i32, i32, i32
  }
  func.func @transform_5(%arg0: i32, %arg1: i32) -> (i32, i32, i32, i32) {
    %c0_i32 = arith.constant 0 : i32
    %c0_i32_0 = arith.constant 0 : i32
    %c0_i32_1 = arith.constant 0 : i32
    return %arg0, %arg1, %c0_i32, %c0_i32_0 : i32, i32, i32, i32
  }
}

module attributes {stable_mosaic.version = 11 : i64} {
  func.func @_bn6_relu_kernel(%arg0: i32, %arg1: i32, %arg2: memref<1x448x256xbf16, #tpu.memory_space<vmem>>, %arg3: memref<448x2xf32, #tpu.memory_space<vmem>>, %arg4: memref<1x448x256xf32, #tpu.memory_space<vmem>>) attributes {dimension_semantics = [#tpu.dimension_semantics<parallel>, #tpu.dimension_semantics<parallel>], iteration_bounds = array<i64: 2, 1>, scalar_prefetch = 0 : i64, scratch_operands = 0 : i64, tpu.core_type = #tpu.core_type<tc>, window_params = [{transform_indices = @transform_0, window_bounds = array<i64: 1, 448, 256>}, {pipeline_mode = #tpu.pipeline_mode<synchronous>, transform_indices = @transform_1, window_bounds = array<i64: 448, 2>}, {transform_indices = @transform_2, window_bounds = array<i64: 1, 448, 256>}]} {
    %c0 = arith.constant 0 : index
    %c0_0 = arith.constant 0 : index
    %c0_1 = arith.constant 0 : index
    %0 = vector.load %arg2[%c0, %c0_0, %c0_1] : memref<1x448x256xbf16, #tpu.memory_space<vmem>>, vector<1x448x256xbf16>
    %1 = vector.shape_cast %0 : vector<1x448x256xbf16> to vector<448x256xbf16>
    %2 = arith.extf %1 : vector<448x256xbf16> to vector<448x256xf32>
    %c0_2 = arith.constant 0 : index
    %c0_3 = arith.constant 0 : index
    %3 = vector.load %arg3[%c0_2, %c0_3] : memref<448x2xf32, #tpu.memory_space<vmem>>, vector<448x1xf32>
    %4 = vector.broadcast %3 : vector<448x1xf32> to vector<448x256xf32>
    %5 = arith.mulf %2, %4 : vector<448x256xf32>
    %c0_4 = arith.constant 0 : index
    %c1 = arith.constant 1 : index
    %6 = vector.load %arg3[%c0_4, %c1] : memref<448x2xf32, #tpu.memory_space<vmem>>, vector<448x1xf32>
    %7 = vector.broadcast %6 : vector<448x1xf32> to vector<448x256xf32>
    %8 = arith.addf %5, %7 : vector<448x256xf32>
    %cst = arith.constant 0.000000e+00 : f32
    %9 = vector.broadcast %cst : f32 to vector<448x256xf32>
    %10 = arith.maximumf %8, %9 : vector<448x256xf32>
    %c0_5 = arith.constant 0 : index
    %c0_6 = arith.constant 0 : index
    %c0_7 = arith.constant 0 : index
    %11 = vector.load %arg4[%c0_5, %c0_6, %c0_7] : memref<1x448x256xf32, #tpu.memory_space<vmem>>, vector<1x448x256xf32>
    %12 = vector.shape_cast %11 : vector<1x448x256xf32> to vector<448x256xf32>
    %13 = vector.shape_cast %10 : vector<448x256xf32> to vector<1x448x256xf32>
    tpu.vector_store %arg4[%c0_5, %c0_6, %c0_7], %13 {strides = array<i32>} : memref<1x448x256xf32, #tpu.memory_space<vmem>>, vector<1x448x256xf32>,
    return
  }
  func.func @transform_0(%arg0: i32, %arg1: i32) -> (i32, i32, i32) {
    %c0_i32 = arith.constant 0 : i32
    %c0_i32_0 = arith.constant 0 : i32
    return %arg0, %c0_i32, %arg1 : i32, i32, i32
  }
  func.func @transform_1(%arg0: i32, %arg1: i32) -> (i32, i32) {
    %c0_i32 = arith.constant 0 : i32
    %c0_i32_0 = arith.constant 0 : i32
    %c0_i32_1 = arith.constant 0 : i32
    return %c0_i32, %c0_i32_0 : i32, i32
  }
  func.func @transform_2(%arg0: i32, %arg1: i32) -> (i32, i32, i32) {
    %c0_i32 = arith.constant 0 : i32
    %c0_i32_0 = arith.constant 0 : i32
    return %arg0, %c0_i32, %arg1 : i32, i32, i32
  }
}

</mosaic_0001>

<llo_original>
// kernel: res_bottleneck_block3.3
$region0: #{res_bottleneck_block3.3}
  #allocation0 [shape = 'u32[]', space=smem, size = 0x4, offset = 0x4, fixed_abs, tag = 'smem constant byte address 0x4 - core index']
  #allocation1 [shape = 'u32[72,128]{1,0:T(1,128)}', space=vmem, size = 0x9000, scoped, tag = 'internal scratch']
  %s0 = inlined_call_operand.vmem [shape: f32[2,224,256], index: 0, kind: input, shape index: {}]
  %s1 = inlined_call_operand.vmem [shape: bf16[448,224], index: 1, kind: input, shape index: {}]
  %s2 = inlined_call_operand.vmem [shape: f32[2,1,448,2], index: 2, kind: output, shape index: {}]
  %s3 = sld [smem:[#allocation0]]
  $region41: #{res_bottleneck_block3.3} parent=0
    _
  %s5 = ssub.s32 1, %s3
  %s6 = scalar_select 0, %s5, %s3
  loop: start=0, step=1, limit=4
  $region2: #{res_bottleneck_block3.3} parent=0 // loop_pre_header
    _
  $region3: #{res_bottleneck_block3.3} parent=0 // loop_header
    %s8 = sphi 0, %s12
    %p9 = scmp.ge.s32.totalorder %s8, 4
    %s15 = sphi 0, %s27
    %s16 = sphi 0, %s23
    %s17 = sphi 0, %s15
    %s18 = sphi 0, %s16
    %s19 = sphi 0, %s17
    %s20 = sphi 0, %s18
    %s32 = sphi 0, %s34
    %s35 = sphi 0, %s32
    %s36 = sphi 0, %s35
    %s52 = sphi 0, %s36
    %s56 = sphi 0, %s56
    %s58 = sphi 0, %s56
    %s59 = sphi 0, %s58
    %s73 = sphi 0, %s59
    %s81 = sphi 0, %s83
    %s84 = sphi 0, %s81
    %s85 = sphi 0, %s84
    %s101 = sphi 0, %s85
  $region4: #{res_bottleneck_block3.3} parent=0 // loop_header_branch
    %11 = sbr.rel (%p9) target = $region8
  $region5: #{res_bottleneck_block3.3} parent=0 // loop_body
    %s13 = ssub.s32 %s8, 1
    %s14 = ssub.s32 %s8, 2
    %s21 = sadd.s32 1, %s16
    %p22 = scmp.ge.s32.totalorder %s21, 1
    %s23 = scalar_select %p22, 0, %s21
    %s24 = sadd.s32 1, %s15
    %s25 = scalar_select %p22, %s24, %s15
    %p26 = scmp.ge.s32.totalorder %s25, 2
    %s27 = scalar_select %p26, 0, %s25
    %s28 = ssub.s32 %s15, %s27
    %s29 = ssub.s32 %s16, %s23
    %s30 = sor.u32 %s28, %s29
    %p31 = scmp.eq.s32.totalorder %s30, 0
    %s33 = sadd.s32 %s32, 1
    %s34 = scalar_select %p31, %s32, %s33
    %p37 = pneg %p31
    %p38 = scmp.eq.s32.totalorder %s8, 1
    %p39 = por %p37, %p38
    %p40 = scmp.ne.s32.totalorder %s32, %s35
    %p41 = scmp.eq.s32.totalorder %s8, 0
    %p42 = por %p40, %p41
    %p43 = scmp.ne.s32.totalorder %s32, %s35
    %p44 = scmp.eq.s32.totalorder %s13, 1
    %p45 = por %p43, %p44
    %p46 = scmp.ne.s32.totalorder %s35, %s36
    %p47 = scmp.eq.s32.totalorder %s13, 0
    %p48 = por %p46, %p47
    %p49 = scmp.ne.s32.totalorder %s35, %s36
    %p50 = scmp.eq.s32.totalorder %s14, 1
    %p51 = por %p49, %p50
    %p53 = scmp.ne.s32.totalorder %s36, %s52
    %p54 = scmp.eq.s32.totalorder %s14, 0
    %p55 = por %p53, %p54
    %s57 = sadd.s32 %s56, 1
    %p60 = scmp.eq.s32.totalorder %s8, 1
    %p61 = scmp.ne.s32.totalorder %s56, %s58
    %p62 = scmp.eq.s32.totalorder %s8, 0
    %p63 = por %p61, %p62
    %p64 = scmp.ne.s32.totalorder %s56, %s58
    %p65 = scmp.eq.s32.totalorder %s13, 1
    %p66 = por %p64, %p65
    %p67 = scmp.ne.s32.totalorder %s58, %s59
    %p68 = scmp.eq.s32.totalorder %s13, 0
    %p69 = por %p67, %p68
    %p70 = scmp.ne.s32.totalorder %s58, %s59
    %p71 = scmp.eq.s32.totalorder %s14, 1
    %p72 = por %p70, %p71
    %p74 = scmp.ne.s32.totalorder %s59, %s73
    %p75 = scmp.eq.s32.totalorder %s14, 0
    %p76 = por %p74, %p75
    %s77 = ssub.s32 %s15, %s27
    %s78 = ssub.s32 %s16, %s23
    %s79 = sor.u32 %s77, %s78
    %p80 = scmp.eq.s32.totalorder %s79, 0
    %s82 = sadd.s32 %s81, 1
    %s83 = scalar_select %p80, %s81, %s82
    %p86 = pneg %p80
    %p87 = scmp.eq.s32.totalorder %s8, 1
    %p88 = por %p86, %p87
    %p89 = scmp.ne.s32.totalorder %s81, %s84
    %p90 = scmp.eq.s32.totalorder %s8, 0
    %p91 = por %p89, %p90
    %p92 = scmp.ne.s32.totalorder %s81, %s84
    %p93 = scmp.eq.s32.totalorder %s13, 1
    %p94 = por %p92, %p93
    %p95 = scmp.ne.s32.totalorder %s84, %s85
    %p96 = scmp.eq.s32.totalorder %s13, 0
    %p97 = por %p95, %p96
    %p98 = scmp.ne.s32.totalorder %s84, %s85
    %p99 = scmp.eq.s32.totalorder %s14, 1
    %p100 = por %p98, %p99
    %p102 = scmp.ne.s32.totalorder %s85, %s101
    %p103 = scmp.eq.s32.totalorder %s14, 0
    %p104 = por %p102, %p103
    %p105 = scmp.le.s32.totalorder 1, %s8
    %p106 = scmp.lt.s32.totalorder %s8, 3
    %p107 = pnand %p105, %p106
    %p108 = pneg %p107
    // Predicated region
    $region9: #{res_bottleneck_block3.3} parent=5 // pred_check
      _
    $region10: #{res_bottleneck_block3.3} parent=5 // pred_check_branch
      %110 = sbr.rel (%p107) target = $region12
    $region11: #{res_bottleneck_block3.3} parent=5 // pred_region
      %s111 = ssub.s32 %s8, 1
      // Predicated region
      $region13: #{res_bottleneck_block3.3} parent=11 // pred_check
        %p112 = pneg %p69
      $region14: #{res_bottleneck_block3.3} parent=11 // pred_check_branch
        %114 = sbr.rel (%p112) target = $region16
      $region15: #{res_bottleneck_block3.3} parent=11 // pred_region
        _
      $region16: #{res_bottleneck_block3.3} parent=11 // pred_fallthru
        _
    $region12: #{res_bottleneck_block3.3} parent=5 // pred_fallthru
      _
    %p115 = scmp.lt.s32.totalorder %s8, 2
    // Predicated region
    $region17: #{res_bottleneck_block3.3} parent=5 // pred_check
      %p116 = pneg %p115
    $region18: #{res_bottleneck_block3.3} parent=5 // pred_check_branch
      %118 = sbr.rel (%p116) target = $region20
    $region19: #{res_bottleneck_block3.3} parent=5 // pred_region
      // Predicated region
      $region21: #{res_bottleneck_block3.3} parent=19 // pred_check
        %p119 = pneg %p42
      $region22: #{res_bottleneck_block3.3} parent=19 // pred_check_branch
        %121 = sbr.rel (%p119) target = $region24
      $region23: #{res_bottleneck_block3.3} parent=19 // pred_region
        %s122 = smul.u32 2, %s16
        %p123 = scmp.lt.s32.totalorder %s15, 1
        %s124 = scalar_select %p123, %s15, 1
        %p125 = scmp.lt.s32.totalorder %s122, 1
        %s126 = scalar_select %p125, %s122, 1
        %s127 = smul.addr %s124, 56
        %s128 = sadd.s32 %s126, %s127
        %s129 = smul.addr %s128, 8
        %s130 = scalar_lea.vmem %s0, %s129
        %s131 = smul.u32 2, %s16
      $region24: #{res_bottleneck_block3.3} parent=19 // pred_fallthru
        _
    $region20: #{res_bottleneck_block3.3} parent=5 // pred_fallthru
      _
    %p132 = scmp.le.s32.totalorder 1, %s8
    %p133 = scmp.lt.s32.totalorder %s8, 3
    %p134 = pnand %p132, %p133
    %p135 = pneg %p134
    // Predicated region
    $region25: #{res_bottleneck_block3.3} parent=5 // pred_check
      _
    $region26: #{res_bottleneck_block3.3} parent=5 // pred_check_branch
      %137 = sbr.rel (%p134) target = $region28
    $region27: #{res_bottleneck_block3.3} parent=5 // pred_region
      %s138 = ssub.s32 %s8, 1
      %s139 = smul.u32 2, %s18
      %p140 = scmp.lt.s32.totalorder %s17, 1
      %s141 = scalar_select %p140, %s17, 1
      %p142 = scmp.lt.s32.totalorder %s139, 1
      %s143 = scalar_select %p142, %s139, 1
      %s144 = smul.addr %s141, 56
      %s145 = sadd.s32 %s143, %s144
      %s146 = smul.addr %s145, 8
      %s147 = scalar_lea.vmem %s0, %s146
      %p148 = pneg %p48
      %p149 = pneg %p45
      %p150 = pneg %p69
      %p151 = pneg %p66
      %p152 = pneg %p97
      %p153 = pneg %p94
      %p154 = scmp.lt.s32.totalorder %s17, 1
      %s155 = scalar_select %p154, %s17, 1
      %p156 = scmp.lt.s32.totalorder %s18, 0
      %s157 = scalar_select %p156, %s18, 0
      %s158 = smul.addr %s157, 56
      %s159 = smul.addr %s155, 56
      %s160 = sadd.s32 %s158, %s159
      %s161 = smul.addr %s160, 8
      %s162 = scalar_lea.vmem %s2, %s161
      %s163 = smul.u32 2, %s18
      %p164 = scmp.lt.s32.totalorder %s17, 1
      %s165 = scalar_select %p164, %s17, 1
      %p166 = scmp.lt.s32.totalorder %s163, 1
      %s167 = scalar_select %p166, %s163, 1
      %s168 = smul.addr %s165, 56
      %s169 = sadd.s32 %s167, %s168
      %s170 = smul.addr %s169, 8
      %s171 = scalar_lea.vmem %s0, %s170
      %s172 = smul.u32 2, %s18
      %p173 = scmp.lt.s32.totalorder %s17, 1
      %s174 = scalar_select %p173, %s17, 1
      %p175 = scmp.lt.s32.totalorder %s18, 0
      %s176 = scalar_select %p175, %s18, 0
      %s177 = smul.addr %s176, 56
      %s178 = smul.addr %s174, 56
      %s179 = sadd.s32 %s177, %s178
      %s180 = smul.addr %s179, 8
      %s181 = scalar_lea.vmem %s2, %s180
      %v183 = vld [vmem:[%s171] sm:$0xff]
      %v184 = vld [vmem:[%s171 + $0x8] sm:$0xff]
      %v185 = vld [vmem:[%s171 + $0x10] sm:$0xff]
      %v186 = vld [vmem:[%s171 + $0x18] sm:$0xff]
      %v187 = vld [vmem:[%s171 + $0x20] sm:$0xff]
      %v188 = vld [vmem:[%s171 + $0x28] sm:$0xff]
      %v189 = vld [vmem:[%s171 + $0x30] sm:$0xff]
      %v190 = vld [vmem:[%s171 + $0x38] sm:$0xff]
      %v191 = vld [vmem:[%s171 + $0x40] sm:$0xff]
      %v192 = vld [vmem:[%s171 + $0x48] sm:$0xff]
      %v193 = vld [vmem:[%s171 + $0x50] sm:$0xff]
      %v194 = vld [vmem:[%s171 + $0x58] sm:$0xff]
      %v195 = vld [vmem:[%s171 + $0x60] sm:$0xff]
      %v196 = vld [vmem:[%s171 + $0x68] sm:$0xff]
      %v197 = vld [vmem:[%s171 + $0x70] sm:$0xff]
      %v198 = vld [vmem:[%s171 + $0x78] sm:$0xff]
      %v199 = vld [vmem:[%s171 + $0x80] sm:$0xff]
      %v200 = vld [vmem:[%s171 + $0x88] sm:$0xff]
      %v201 = vld [vmem:[%s171 + $0x90] sm:$0xff]
      %v202 = vld [vmem:[%s171 + $0x98] sm:$0xff]
      %v203 = vld [vmem:[%s171 + $0xa0] sm:$0xff]
      %v204 = vld [vmem:[%s171 + $0xa8] sm:$0xff]
      %v205 = vld [vmem:[%s171 + $0xb0] sm:$0xff]
      %v206 = vld [vmem:[%s171 + $0xb8] sm:$0xff]
      %v207 = vld [vmem:[%s171 + $0xc0] sm:$0xff]
      %v208 = vld [vmem:[%s171 + $0xc8] sm:$0xff]
      %v209 = vld [vmem:[%s171 + $0xd0] sm:$0xff]
      %v210 = vld [vmem:[%s171 + $0xd8] sm:$0xff]
      %v211 = vld [vmem:[%s171 + $0xe0] sm:$0xff]
      %v212 = vld [vmem:[%s171 + $0xe8] sm:$0xff]
      %v213 = vld [vmem:[%s171 + $0xf0] sm:$0xff]
      %v214 = vld [vmem:[%s171 + $0xf8] sm:$0xff]
      %v215 = vld [vmem:[%s171 + $0x100] sm:$0xff]
      %v216 = vld [vmem:[%s171 + $0x108] sm:$0xff]
      %v217 = vld [vmem:[%s171 + $0x110] sm:$0xff]
      %v218 = vld [vmem:[%s171 + $0x118] sm:$0xff]
      %v219 = vld [vmem:[%s171 + $0x120] sm:$0xff]
      %v220 = vld [vmem:[%s171 + $0x128] sm:$0xff]
      %v221 = vld [vmem:[%s171 + $0x130] sm:$0xff]
      %v222 = vld [vmem:[%s171 + $0x138] sm:$0xff]
      %v223 = vld [vmem:[%s171 + $0x140] sm:$0xff]
      %v224 = vld [vmem:[%s171 + $0x148] sm:$0xff]
      %v225 = vld [vmem:[%s171 + $0x150] sm:$0xff]
      %v226 = vld [vmem:[%s171 + $0x158] sm:$0xff]
      %v227 = vld [vmem:[%s171 + $0x160] sm:$0xff]
      %v228 = vld [vmem:[%s171 + $0x168] sm:$0xff]
      %v229 = vld [vmem:[%s171 + $0x170] sm:$0xff]
      %v230 = vld [vmem:[%s171 + $0x178] sm:$0xff]
      %v231 = vld [vmem:[%s171 + $0x180] sm:$0xff]
      %v232 = vld [vmem:[%s171 + $0x188] sm:$0xff]
      %v233 = vld [vmem:[%s171 + $0x190] sm:$0xff]
      %v234 = vld [vmem:[%s171 + $0x198] sm:$0xff]
      %v235 = vld [vmem:[%s171 + $0x1a0] sm:$0xff]
      %v236 = vld [vmem:[%s171 + $0x1a8] sm:$0xff]
      %v237 = vld [vmem:[%s171 + $0x1b0] sm:$0xff]
      %v238 = vld [vmem:[%s171 + $0x1b8] sm:$0xff]
      %v239 = vpack.c.bf16 %v185, %v183
      %v240 = vpack.c.bf16 %v186, %v184
      %v241 = vpack.c.bf16 %v189, %v187
      %v242 = vpack.c.bf16 %v190, %v188
      %v243 = vpack.c.bf16 %v193, %v191
      %v244 = vpack.c.bf16 %v194, %v192
      %v245 = vpack.c.bf16 %v197, %v195
      %v246 = vpack.c.bf16 %v198, %v196
      %v247 = vpack.c.bf16 %v201, %v199
      %v248 = vpack.c.bf16 %v202, %v200
      %v249 = vpack.c.bf16 %v205, %v203
      %v250 = vpack.c.bf16 %v206, %v204
      %v251 = vpack.c.bf16 %v209, %v207
      %v252 = vpack.c.bf16 %v210, %v208
      %v253 = vpack.c.bf16 %v213, %v211
      %v254 = vpack.c.bf16 %v214, %v212
      %v255 = vpack.c.bf16 %v217, %v215
      %v256 = vpack.c.bf16 %v218, %v216
      %v257 = vpack.c.bf16 %v221, %v219
      %v258 = vpack.c.bf16 %v222, %v220
      %v259 = vpack.c.bf16 %v225, %v223
      %v260 = vpack.c.bf16 %v226, %v224
      %v261 = vpack.c.bf16 %v229, %v227
      %v262 = vpack.c.bf16 %v230, %v228
      %v263 = vpack.c.bf16 %v233, %v231
      %v264 = vpack.c.bf16 %v234, %v232
      %v265 = vpack.c.bf16 %v237, %v235
      %v266 = vpack.c.bf16 %v238, %v236
      %v267 = vld [vmem:[%s1] sm:$0xff]
      %v268 = vld [vmem:[%s1 + $0x8] sm:$0xff]
      %v269 = vld [vmem:[%s1 + $0x10] sm:$0xff]
      %v270 = vld [vmem:[%s1 + $0x18] sm:$0xff]
      %v271 = vld [vmem:[%s1 + $0x20] sm:$0xff]
      %v272 = vld [vmem:[%s1 + $0x28] sm:$0xff]
      %v273 = vld [vmem:[%s1 + $0x30] sm:$0xff]
      %v274 = vld [vmem:[%s1 + $0x38] sm:$0xff]
      %v275 = vld [vmem:[%s1 + $0x40] sm:$0xff]
      %v276 = vld [vmem:[%s1 + $0x48] sm:$0xff]
      %v277 = vld [vmem:[%s1 + $0x50] sm:$0xff]
      %v278 = vld [vmem:[%s1 + $0x58] sm:$0xff]
      %v279 = vld [vmem:[%s1 + $0x60] sm:$0xff]
      %v280 = vld [vmem:[%s1 + $0x68] sm:$0xff]
      %v281 = vld [vmem:[%s1 + $0x70] sm:$0xff]
      %v282 = vld [vmem:[%s1 + $0x78] sm:$0xff]
      %v283 = vld [vmem:[%s1 + $0x80] sm:$0xff]
      %v284 = vld [vmem:[%s1 + $0x88] sm:$0xff]
      %v285 = vld [vmem:[%s1 + $0x90] sm:$0xff]
      %v286 = vld [vmem:[%s1 + $0x98] sm:$0xff]
      %v287 = vld [vmem:[%s1 + $0xa0] sm:$0xff]
      %v288 = vld [vmem:[%s1 + $0xa8] sm:$0xff]
      %v289 = vld [vmem:[%s1 + $0xb0] sm:$0xff]
      %v290 = vld [vmem:[%s1 + $0xb8] sm:$0xff]
      %v291 = vld [vmem:[%s1 + $0xc0] sm:$0xff]
      %v292 = vld [vmem:[%s1 + $0xc8] sm:$0xff]
      %v293 = vld [vmem:[%s1 + $0xd0] sm:$0xff]
      %v294 = vld [vmem:[%s1 + $0xd8] sm:$0xff]
      %v295 = vld [vmem:[%s1 + $0xe0] sm:$0xff]
      %v296 = vld [vmem:[%s1 + $0xe8] sm:$0xff]
      %v297 = vld [vmem:[%s1 + $0xf0] sm:$0xff]
      %v298 = vld [vmem:[%s1 + $0xf8] sm:$0xff]
      %v299 = vld [vmem:[%s1 + $0x100] sm:$0xff]
      %v300 = vld [vmem:[%s1 + $0x108] sm:$0xff]
      %v301 = vld [vmem:[%s1 + $0x110] sm:$0xff]
      %v302 = vld [vmem:[%s1 + $0x118] sm:$0xff]
      %v303 = vld [vmem:[%s1 + $0x120] sm:$0xff]
      %v304 = vld [vmem:[%s1 + $0x128] sm:$0xff]
      %v305 = vld [vmem:[%s1 + $0x130] sm:$0xff]
      %v306 = vld [vmem:[%s1 + $0x138] sm:$0xff]
      %v307 = vld [vmem:[%s1 + $0x140] sm:$0xff]
      %v308 = vld [vmem:[%s1 + $0x148] sm:$0xff]
      %v309 = vld [vmem:[%s1 + $0x150] sm:$0xff]
      %v310 = vld [vmem:[%s1 + $0x158] sm:$0xff]
      %v311 = vld [vmem:[%s1 + $0x160] sm:$0xff]
      %v312 = vld [vmem:[%s1 + $0x168] sm:$0xff]
      %v313 = vld [vmem:[%s1 + $0x170] sm:$0xff]
      %v314 = vld [vmem:[%s1 + $0x178] sm:$0xff]
      %v315 = vld [vmem:[%s1 + $0x180] sm:$0xff]
      %v316 = vld [vmem:[%s1 + $0x188] sm:$0xff]
      %v317 = vld [vmem:[%s1 + $0x190] sm:$0xff]
      %v318 = vld [vmem:[%s1 + $0x198] sm:$0xff]
      %v319 = vld [vmem:[%s1 + $0x1a0] sm:$0xff]
      %v320 = vld [vmem:[%s1 + $0x1a8] sm:$0xff]
      %v321 = vld [vmem:[%s1 + $0x1b0] sm:$0xff]
      %v322 = vld [vmem:[%s1 + $0x1b8] sm:$0xff]
      %v379 = vunpack.c.l.b16 %v267
      %v380 = vunpack.c.h.b16 %v267
      %v381 = vunpack.c.l.b16 %v268
      %v382 = vunpack.c.h.b16 %v268
      %v383 = vunpack.c.l.b16 %v269
      %v384 = vunpack.c.h.b16 %v269
      %v385 = vunpack.c.l.b16 %v270
      %v386 = vunpack.c.h.b16 %v270
      %v387 = vunpack.c.l.b16 %v271
      %v388 = vunpack.c.h.b16 %v271
      %v389 = vunpack.c.l.b16 %v272
      %v390 = vunpack.c.h.b16 %v272
      %v391 = vunpack.c.l.b16 %v273
      %v392 = vunpack.c.h.b16 %v273
      %v393 = vunpack.c.l.b16 %v274
      %v394 = vunpack.c.h.b16 %v274
      %v395 = vunpack.c.l.b16 %v275
      %v396 = vunpack.c.h.b16 %v275
      %v397 = vunpack.c.l.b16 %v276
      %v398 = vunpack.c.h.b16 %v276
      %v399 = vunpack.c.l.b16 %v277
      %v400 = vunpack.c.h.b16 %v277
      %v401 = vunpack.c.l.b16 %v278
      %v402 = vunpack.c.h.b16 %v278
      %v403 = vunpack.c.l.b16 %v279
      %v404 = vunpack.c.h.b16 %v279
      %v405 = vunpack.c.l.b16 %v280
      %v406 = vunpack.c.h.b16 %v280
      %v407 = vunpack.c.l.b16 %v281
      %v408 = vunpack.c.h.b16 %v281
      %v409 = vunpack.c.l.b16 %v282
      %v410 = vunpack.c.h.b16 %v282
      %v411 = vunpack.c.l.b16 %v283
      %v412 = vunpack.c.h.b16 %v283
      %v413 = vunpack.c.l.b16 %v284
      %v414 = vunpack.c.h.b16 %v284
      %v415 = vunpack.c.l.b16 %v285
      %v416 = vunpack.c.h.b16 %v285
      %v417 = vunpack.c.l.b16 %v286
      %v418 = vunpack.c.h.b16 %v286
      %v419 = vunpack.c.l.b16 %v287
      %v420 = vunpack.c.h.b16 %v287
      %v421 = vunpack.c.l.b16 %v288
      %v422 = vunpack.c.h.b16 %v288
      %v423 = vunpack.c.l.b16 %v289
      %v424 = vunpack.c.h.b16 %v289
      %v425 = vunpack.c.l.b16 %v290
      %v426 = vunpack.c.h.b16 %v290
      %v427 = vunpack.c.l.b16 %v291
      %v428 = vunpack.c.h.b16 %v291
      %v429 = vunpack.c.l.b16 %v292
      %v430 = vunpack.c.h.b16 %v292
      %v431 = vunpack.c.l.b16 %v293
      %v432 = vunpack.c.h.b16 %v293
      %v433 = vunpack.c.l.b16 %v294
      %v434 = vunpack.c.h.b16 %v294
      %v435 = vunpack.c.l.b16 %v295
      %v436 = vunpack.c.h.b16 %v295
      %v437 = vunpack.c.l.b16 %v296
      %v438 = vunpack.c.h.b16 %v296
      %v439 = vunpack.c.l.b16 %v297
      %v440 = vunpack.c.h.b16 %v297
      %v441 = vunpack.c.l.b16 %v298
      %v442 = vunpack.c.h.b16 %v298
      %v443 = vunpack.c.l.b16 %v299
      %v444 = vunpack.c.h.b16 %v299
      %v445 = vunpack.c.l.b16 %v300
      %v446 = vunpack.c.h.b16 %v300
      %v447 = vunpack.c.l.b16 %v301
      %v448 = vunpack.c.h.b16 %v301
      %v449 = vunpack.c.l.b16 %v302
      %v450 = vunpack.c.h.b16 %v302
      %v451 = vunpack.c.l.b16 %v303
      %v452 = vunpack.c.h.b16 %v303
      %v453 = vunpack.c.l.b16 %v304
      %v454 = vunpack.c.h.b16 %v304
      %v455 = vunpack.c.l.b16 %v305
      %v456 = vunpack.c.h.b16 %v305
      %v457 = vunpack.c.l.b16 %v306
      %v458 = vunpack.c.h.b16 %v306
      %v459 = vunpack.c.l.b16 %v307
      %v460 = vunpack.c.h.b16 %v307
      %v461 = vunpack.c.l.b16 %v308
      %v462 = vunpack.c.h.b16 %v308
      %v463 = vunpack.c.l.b16 %v309
      %v464 = vunpack.c.h.b16 %v309
      %v465 = vunpack.c.l.b16 %v310
      %v466 = vunpack.c.h.b16 %v310
      %v467 = vunpack.c.l.b16 %v311
      %v468 = vunpack.c.h.b16 %v311
      %v469 = vunpack.c.l.b16 %v312
      %v470 = vunpack.c.h.b16 %v312
      %v471 = vunpack.c.l.b16 %v313
      %v472 = vunpack.c.h.b16 %v313
      %v473 = vunpack.c.l.b16 %v314
      %v474 = vunpack.c.h.b16 %v314
      %v475 = vunpack.c.l.b16 %v315
      %v476 = vunpack.c.h.b16 %v315
      %v477 = vunpack.c.l.b16 %v316
      %v478 = vunpack.c.h.b16 %v316
      %v479 = vunpack.c.l.b16 %v317
      %v480 = vunpack.c.h.b16 %v317
      %v481 = vunpack.c.l.b16 %v318
      %v482 = vunpack.c.h.b16 %v318
      %v483 = vunpack.c.l.b16 %v319
      %v484 = vunpack.c.h.b16 %v319
      %v485 = vunpack.c.l.b16 %v320
      %v486 = vunpack.c.h.b16 %v320
      %v487 = vunpack.c.l.b16 %v321
      %v488 = vunpack.c.h.b16 %v321
      %v489 = vunpack.c.l.b16 %v322
      %v490 = vunpack.c.h.b16 %v322
      %v491 = vpack.c.b16 %v381, %v379
      %v492 = vpack.c.b16 %v382, %v380
      %v493 = vpack.c.b16 %v385, %v383
      %v494 = vpack.c.b16 %v386, %v384
      %v495 = vpack.c.b16 %v389, %v387
      %v496 = vpack.c.b16 %v390, %v388
      %v497 = vpack.c.b16 %v393, %v391
      %v498 = vpack.c.b16 %v394, %v392
      %v499 = vpack.c.b16 %v397, %v395
      %v500 = vpack.c.b16 %v398, %v396
      %v501 = vpack.c.b16 %v401, %v399
      %v502 = vpack.c.b16 %v402, %v400
      %v503 = vpack.c.b16 %v405, %v403
      %v504 = vpack.c.b16 %v406, %v404
      %v505 = vpack.c.b16 %v409, %v407
      %v506 = vpack.c.b16 %v410, %v408
      %v507 = vpack.c.b16 %v413, %v411
      %v508 = vpack.c.b16 %v414, %v412
      %v509 = vpack.c.b16 %v417, %v415
      %v510 = vpack.c.b16 %v418, %v416
      %v511 = vpack.c.b16 %v421, %v419
      %v512 = vpack.c.b16 %v422, %v420
      %v513 = vpack.c.b16 %v425, %v423
      %v514 = vpack.c.b16 %v426, %v424
      %v515 = vpack.c.b16 %v429, %v427
      %v516 = vpack.c.b16 %v430, %v428
      %v517 = vpack.c.b16 %v433, %v431
      %v518 = vpack.c.b16 %v434, %v432
      %v519 = vpack.c.b16 %v437, %v435
      %v520 = vpack.c.b16 %v438, %v436
      %v521 = vpack.c.b16 %v441, %v439
      %v522 = vpack.c.b16 %v442, %v440
      %v523 = vpack.c.b16 %v445, %v443
      %v524 = vpack.c.b16 %v446, %v444
      %v525 = vpack.c.b16 %v449, %v447
      %v526 = vpack.c.b16 %v450, %v448
      %v527 = vpack.c.b16 %v453, %v451
      %v528 = vpack.c.b16 %v454, %v452
      %v529 = vpack.c.b16 %v457, %v455
      %v530 = vpack.c.b16 %v458, %v456
      %v531 = vpack.c.b16 %v461, %v459
      %v532 = vpack.c.b16 %v462, %v460
      %v533 = vpack.c.b16 %v465, %v463
      %v534 = vpack.c.b16 %v466, %v464
      %v535 = vpack.c.b16 %v469, %v467
      %v536 = vpack.c.b16 %v470, %v468
      %v537 = vpack.c.b16 %v473, %v471
      %v538 = vpack.c.b16 %v474, %v472
      %v539 = vpack.c.b16 %v477, %v475
      %v540 = vpack.c.b16 %v478, %v476
      %v541 = vpack.c.b16 %v481, %v479
      %v542 = vpack.c.b16 %v482, %v480
      %v543 = vpack.c.b16 %v485, %v483
      %v544 = vpack.c.b16 %v486, %v484
      %v545 = vpack.c.b16 %v489, %v487
      %v546 = vpack.c.b16 %v490, %v488
      %vm575 = vcmask 785408
      %v577 = vsel %vm575, %v492, 0
      %v580 = vsel %vm575, %v494, 0
      %v583 = vsel %vm575, %v496, 0
      %v586 = vsel %vm575, %v498, 0
      %v589 = vsel %vm575, %v500, 0
      %v592 = vsel %vm575, %v502, 0
      %v595 = vsel %vm575, %v504, 0
      %v598 = vsel %vm575, %v506, 0
      %v601 = vsel %vm575, %v508, 0
      %v604 = vsel %vm575, %v510, 0
      %v607 = vsel %vm575, %v512, 0
      %v610 = vsel %vm575, %v514, 0
      %v613 = vsel %vm575, %v516, 0
      %v616 = vsel %vm575, %v518, 0
      %v619 = vsel %vm575, %v520, 0
      %v622 = vsel %vm575, %v522, 0
      %v625 = vsel %vm575, %v524, 0
      %v628 = vsel %vm575, %v526, 0
      %v631 = vsel %vm575, %v528, 0
      %v634 = vsel %vm575, %v530, 0
      %v637 = vsel %vm575, %v532, 0
      %v640 = vsel %vm575, %v534, 0
      %v643 = vsel %vm575, %v536, 0
      %v646 = vsel %vm575, %v538, 0
      %v649 = vsel %vm575, %v540, 0
      %v652 = vsel %vm575, %v542, 0
      %v655 = vsel %vm575, %v544, 0
      %v658 = vsel %vm575, %v546, 0
      %660 = vmatpush.bf16.msra.mxu0 %v253
      %661 = vmatpush.bf16.msra.mxu0 %v251
      %662 = vmatpush.bf16.msra.mxu0 %v249
      %663 = vmatpush.bf16.msra.mxu0 %v247
      %664 = vmatpush.bf16.msra.mxu0 %v245
      %665 = vmatpush.bf16.msra.mxu0 %v243
      %666 = vmatpush.bf16.msra.mxu0 %v241
      %667 = vmatpush.bf16.msra.mxu0 %v239
      %668 = vmatmul.bf16.gmra.mxu0 %v491
      %v669 = vpop.f32.mrf.mxu0
      %v670 = vadd.f32 0.0, %v669
      %v671 = vpop.f32.mrf.mxu0
      %v672 = vadd.f32 0.0, %v671
      %673 = vmatmul.bf16.gmra.mxu0 %v493
      %v674 = vpop.f32.mrf.mxu0
      %v675 = vadd.f32 0.0, %v674
      %v676 = vpop.f32.mrf.mxu0
      %v677 = vadd.f32 0.0, %v676
      %678 = vmatmul.bf16.gmra.mxu0 %v495
      %v679 = vpop.f32.mrf.mxu0
      %v680 = vadd.f32 0.0, %v679
      %v681 = vpop.f32.mrf.mxu0
      %v682 = vadd.f32 0.0, %v681
      %683 = vmatmul.bf16.gmra.mxu0 %v497
      %v684 = vpop.f32.mrf.mxu0
      %v685 = vadd.f32 0.0, %v684
      %v686 = vpop.f32.mrf.mxu0
      %v687 = vadd.f32 0.0, %v686
      %688 = vmatmul.bf16.gmra.mxu0 %v499
      %v689 = vpop.f32.mrf.mxu0
      %v690 = vadd.f32 0.0, %v689
      %v691 = vpop.f32.mrf.mxu0
      %v692 = vadd.f32 0.0, %v691
      %693 = vmatmul.bf16.gmra.mxu0 %v501
      %v694 = vpop.f32.mrf.mxu0
      %v695 = vadd.f32 0.0, %v694
      %v696 = vpop.f32.mrf.mxu0
      %v697 = vadd.f32 0.0, %v696
      %698 = vmatmul.bf16.gmra.mxu0 %v503
      %v699 = vpop.f32.mrf.mxu0
      %v700 = vadd.f32 0.0, %v699
      %v701 = vpop.f32.mrf.mxu0
      %v702 = vadd.f32 0.0, %v701
      %703 = vmatmul.bf16.gmra.mxu0 %v505
      %v704 = vpop.f32.mrf.mxu0
      %v705 = vadd.f32 0.0, %v704
      %v706 = vpop.f32.mrf.mxu0
      %v707 = vadd.f32 0.0, %v706
      %708 = vmatmul.bf16.gmra.mxu0 %v507
      %v709 = vpop.f32.mrf.mxu0
      %v710 = vadd.f32 0.0, %v709
      %v711 = vpop.f32.mrf.mxu0
      %v712 = vadd.f32 0.0, %v711
      %713 = vmatmul.bf16.gmra.mxu0 %v509
      %v714 = vpop.f32.mrf.mxu0
      %v715 = vadd.f32 0.0, %v714
      %v716 = vpop.f32.mrf.mxu0
      %v717 = vadd.f32 0.0, %v716
      %718 = vmatmul.bf16.gmra.mxu0 %v511
      %v719 = vpop.f32.mrf.mxu0
      %v720 = vadd.f32 0.0, %v719
      %v721 = vpop.f32.mrf.mxu0
      %v722 = vadd.f32 0.0, %v721
      %723 = vmatmul.bf16.gmra.mxu0 %v513
      %v724 = vpop.f32.mrf.mxu0
      %v725 = vadd.f32 0.0, %v724
      %v726 = vpop.f32.mrf.mxu0
      %v727 = vadd.f32 0.0, %v726
      %728 = vmatmul.bf16.gmra.mxu0 %v515
      %v729 = vpop.f32.mrf.mxu0
      %v730 = vadd.f32 0.0, %v729
      %v731 = vpop.f32.mrf.mxu0
      %v732 = vadd.f32 0.0, %v731
      %733 = vmatmul.bf16.gmra.mxu0 %v517
      %v734 = vpop.f32.mrf.mxu0
      %v735 = vadd.f32 0.0, %v734
      %v736 = vpop.f32.mrf.mxu0
      %v737 = vadd.f32 0.0, %v736
      %738 = vmatmul.bf16.gmra.mxu0 %v519
      %v739 = vpop.f32.mrf.mxu0
      %v740 = vadd.f32 0.0, %v739
      %v741 = vpop.f32.mrf.mxu0
      %v742 = vadd.f32 0.0, %v741
      %743 = vmatmul.bf16.gmra.mxu0 %v521
      %v744 = vpop.f32.mrf.mxu0
      %v745 = vadd.f32 0.0, %v744
      %v746 = vpop.f32.mrf.mxu0
      %v747 = vadd.f32 0.0, %v746
      %748 = vmatmul.bf16.gmra.mxu0 %v523
      %v749 = vpop.f32.mrf.mxu0
      %v750 = vadd.f32 0.0, %v749
      %v751 = vpop.f32.mrf.mxu0
      %v752 = vadd.f32 0.0, %v751
      %753 = vmatmul.bf16.gmra.mxu0 %v525
      %v754 = vpop.f32.mrf.mxu0
      %v755 = vadd.f32 0.0, %v754
      %v756 = vpop.f32.mrf.mxu0
      %v757 = vadd.f32 0.0, %v756
      %758 = vmatmul.bf16.gmra.mxu0 %v527
      %v759 = vpop.f32.mrf.mxu0
      %v760 = vadd.f32 0.0, %v759
      %v761 = vpop.f32.mrf.mxu0
      %v762 = vadd.f32 0.0, %v761
      %763 = vmatmul.bf16.gmra.mxu0 %v529
      %v764 = vpop.f32.mrf.mxu0
      %v765 = vadd.f32 0.0, %v764
      %v766 = vpop.f32.mrf.mxu0
      %v767 = vadd.f32 0.0, %v766
      %768 = vmatmul.bf16.gmra.mxu0 %v531
      %v769 = vpop.f32.mrf.mxu0
      %v770 = vadd.f32 0.0, %v769
      %v771 = vpop.f32.mrf.mxu0
      %v772 = vadd.f32 0.0, %v771
      %773 = vmatmul.bf16.gmra.mxu0 %v533
      %v774 = vpop.f32.mrf.mxu0
      %v775 = vadd.f32 0.0, %v774
      %v776 = vpop.f32.mrf.mxu0
      %v777 = vadd.f32 0.0, %v776
      %778 = vmatmul.bf16.gmra.mxu0 %v535
      %v779 = vpop.f32.mrf.mxu0
      %v780 = vadd.f32 0.0, %v779
      %v781 = vpop.f32.mrf.mxu0
      %v782 = vadd.f32 0.0, %v781
      %783 = vmatmul.bf16.gmra.mxu0 %v537
      %v784 = vpop.f32.mrf.mxu0
      %v785 = vadd.f32 0.0, %v784
      %v786 = vpop.f32.mrf.mxu0
      %v787 = vadd.f32 0.0, %v786
      %788 = vmatmul.bf16.gmra.mxu0 %v539
      %v789 = vpop.f32.mrf.mxu0
      %v790 = vadd.f32 0.0, %v789
      %v791 = vpop.f32.mrf.mxu0
      %v792 = vadd.f32 0.0, %v791
      %793 = vmatmul.bf16.gmra.mxu0 %v541
      %v794 = vpop.f32.mrf.mxu0
      %v795 = vadd.f32 0.0, %v794
      %v796 = vpop.f32.mrf.mxu0
      %v797 = vadd.f32 0.0, %v796
      %798 = vmatmul.bf16.gmra.mxu0 %v543
      %v799 = vpop.f32.mrf.mxu0
      %v800 = vadd.f32 0.0, %v799
      %v801 = vpop.f32.mrf.mxu0
      %v802 = vadd.f32 0.0, %v801
      %803 = vmatmul.bf16.gmra.mxu0 %v545
      %v804 = vpop.f32.mrf.mxu0
      %v805 = vadd.f32 0.0, %v804
      %v806 = vpop.f32.mrf.mxu0
      %v807 = vadd.f32 0.0, %v806
      %808 = vdwg.mxu0
      %809 = vmatpush.bf16.msra.mxu0 0
      %810 = vmatpush.bf16.msra.mxu0 0
      %811 = vmatpush.bf16.msra.mxu0 %v265
      %812 = vmatpush.bf16.msra.mxu0 %v263
      %813 = vmatpush.bf16.msra.mxu0 %v261
      %814 = vmatpush.bf16.msra.mxu0 %v259
      %815 = vmatpush.bf16.msra.mxu0 %v257
      %816 = vmatpush.bf16.msra.mxu0 %v255
      %817 = vmatmul.bf16.gmra.mxu0 %v577
      %v818 = vpop.f32.mrf.mxu0
      %v819 = vadd.f32 %v670, %v818
      %v820 = vpop.f32.mrf.mxu0
      %v821 = vadd.f32 %v672, %v820
      %822 = vmatmul.bf16.gmra.mxu0 %v580
      %v823 = vpop.f32.mrf.mxu0
      %v824 = vadd.f32 %v675, %v823
      %v825 = vpop.f32.mrf.mxu0
      %v826 = vadd.f32 %v677, %v825
      %827 = vmatmul.bf16.gmra.mxu0 %v583
      %v828 = vpop.f32.mrf.mxu0
      %v829 = vadd.f32 %v680, %v828
      %v830 = vpop.f32.mrf.mxu0
      %v831 = vadd.f32 %v682, %v830
      %832 = vmatmul.bf16.gmra.mxu0 %v586
      %v833 = vpop.f32.mrf.mxu0
      %v834 = vadd.f32 %v685, %v833
      %v835 = vpop.f32.mrf.mxu0
      %v836 = vadd.f32 %v687, %v835
      %837 = vmatmul.bf16.gmra.mxu0 %v589
      %v838 = vpop.f32.mrf.mxu0
      %v839 = vadd.f32 %v690, %v838
      %v840 = vpop.f32.mrf.mxu0
      %v841 = vadd.f32 %v692, %v840
      %842 = vmatmul.bf16.gmra.mxu0 %v592
      %v843 = vpop.f32.mrf.mxu0
      %v844 = vadd.f32 %v695, %v843
      %v845 = vpop.f32.mrf.mxu0
      %v846 = vadd.f32 %v697, %v845
      %847 = vmatmul.bf16.gmra.mxu0 %v595
      %v848 = vpop.f32.mrf.mxu0
      %v849 = vadd.f32 %v700, %v848
      %v850 = vpop.f32.mrf.mxu0
      %v851 = vadd.f32 %v702, %v850
      %852 = vmatmul.bf16.gmra.mxu0 %v598
      %v853 = vpop.f32.mrf.mxu0
      %v854 = vadd.f32 %v705, %v853
      %v855 = vpop.f32.mrf.mxu0
      %v856 = vadd.f32 %v707, %v855
      %857 = vmatmul.bf16.gmra.mxu0 %v601
      %v858 = vpop.f32.mrf.mxu0
      %v859 = vadd.f32 %v710, %v858
      %v860 = vpop.f32.mrf.mxu0
      %v861 = vadd.f32 %v712, %v860
      %862 = vmatmul.bf16.gmra.mxu0 %v604
      %v863 = vpop.f32.mrf.mxu0
      %v864 = vadd.f32 %v715, %v863
      %v865 = vpop.f32.mrf.mxu0
      %v866 = vadd.f32 %v717, %v865
      %867 = vmatmul.bf16.gmra.mxu0 %v607
      %v868 = vpop.f32.mrf.mxu0
      %v869 = vadd.f32 %v720, %v868
      %v870 = vpop.f32.mrf.mxu0
      %v871 = vadd.f32 %v722, %v870
      %872 = vmatmul.bf16.gmra.mxu0 %v610
      %v873 = vpop.f32.mrf.mxu0
      %v874 = vadd.f32 %v725, %v873
      %v875 = vpop.f32.mrf.mxu0
      %v876 = vadd.f32 %v727, %v875
      %877 = vmatmul.bf16.gmra.mxu0 %v613
      %v878 = vpop.f32.mrf.mxu0
      %v879 = vadd.f32 %v730, %v878
      %v880 = vpop.f32.mrf.mxu0
      %v881 = vadd.f32 %v732, %v880
      %882 = vmatmul.bf16.gmra.mxu0 %v616
      %v883 = vpop.f32.mrf.mxu0
      %v884 = vadd.f32 %v735, %v883
      %v885 = vpop.f32.mrf.mxu0
      %v886 = vadd.f32 %v737, %v885
      %887 = vmatmul.bf16.gmra.mxu0 %v619
      %v888 = vpop.f32.mrf.mxu0
      %v889 = vadd.f32 %v740, %v888
      %v890 = vpop.f32.mrf.mxu0
      %v891 = vadd.f32 %v742, %v890
      %892 = vmatmul.bf16.gmra.mxu0 %v622
      %v893 = vpop.f32.mrf.mxu0
      %v894 = vadd.f32 %v745, %v893
      %v895 = vpop.f32.mrf.mxu0
      %v896 = vadd.f32 %v747, %v895
      %897 = vmatmul.bf16.gmra.mxu0 %v625
      %v898 = vpop.f32.mrf.mxu0
      %v899 = vadd.f32 %v750, %v898
      %v900 = vpop.f32.mrf.mxu0
      %v901 = vadd.f32 %v752, %v900
      %902 = vmatmul.bf16.gmra.mxu0 %v628
      %v903 = vpop.f32.mrf.mxu0
      %v904 = vadd.f32 %v755, %v903
      %v905 = vpop.f32.mrf.mxu0
      %v906 = vadd.f32 %v757, %v905
      %907 = vmatmul.bf16.gmra.mxu0 %v631
      %v908 = vpop.f32.mrf.mxu0
      %v909 = vadd.f32 %v760, %v908
      %v910 = vpop.f32.mrf.mxu0
      %v911 = vadd.f32 %v762, %v910
      %912 = vmatmul.bf16.gmra.mxu0 %v634
      %v913 = vpop.f32.mrf.mxu0
      %v914 = vadd.f32 %v765, %v913
      %v915 = vpop.f32.mrf.mxu0
      %v916 = vadd.f32 %v767, %v915
      %917 = vmatmul.bf16.gmra.mxu0 %v637
      %v918 = vpop.f32.mrf.mxu0
      %v919 = vadd.f32 %v770, %v918
      %v920 = vpop.f32.mrf.mxu0
      %v921 = vadd.f32 %v772, %v920
      %922 = vmatmul.bf16.gmra.mxu0 %v640
      %v923 = vpop.f32.mrf.mxu0
      %v924 = vadd.f32 %v775, %v923
      %v925 = vpop.f32.mrf.mxu0
      %v926 = vadd.f32 %v777, %v925
      %927 = vmatmul.bf16.gmra.mxu0 %v643
      %v928 = vpop.f32.mrf.mxu0
      %v929 = vadd.f32 %v780, %v928
      %v930 = vpop.f32.mrf.mxu0
      %v931 = vadd.f32 %v782, %v930
      %932 = vmatmul.bf16.gmra.mxu0 %v646
      %v933 = vpop.f32.mrf.mxu0
      %v934 = vadd.f32 %v785, %v933
      %v935 = vpop.f32.mrf.mxu0
      %v936 = vadd.f32 %v787, %v935
      %937 = vmatmul.bf16.gmra.mxu0 %v649
      %v938 = vpop.f32.mrf.mxu0
      %v939 = vadd.f32 %v790, %v938
      %v940 = vpop.f32.mrf.mxu0
      %v941 = vadd.f32 %v792, %v940
      %942 = vmatmul.bf16.gmra.mxu0 %v652
      %v943 = vpop.f32.mrf.mxu0
      %v944 = vadd.f32 %v795, %v943
      %v945 = vpop.f32.mrf.mxu0
      %v946 = vadd.f32 %v797, %v945
      %947 = vmatmul.bf16.gmra.mxu0 %v655
      %v948 = vpop.f32.mrf.mxu0
      %v949 = vadd.f32 %v800, %v948
      %v950 = vpop.f32.mrf.mxu0
      %v951 = vadd.f32 %v802, %v950
      %952 = vmatmul.bf16.gmra.mxu0 %v658
      %v953 = vpop.f32.mrf.mxu0
      %v954 = vadd.f32 %v805, %v953
      %v955 = vpop.f32.mrf.mxu0
      %v956 = vadd.f32 %v807, %v955
      %957 = vdwg.mxu0
      %958 = vmatpush.bf16.msra.mxu0 %v254
      %959 = vmatpush.bf16.msra.mxu0 %v252
      %960 = vmatpush.bf16.msra.mxu0 %v250
      %961 = vmatpush.bf16.msra.mxu0 %v248
      %962 = vmatpush.bf16.msra.mxu0 %v246
      %963 = vmatpush.bf16.msra.mxu0 %v244
      %964 = vmatpush.bf16.msra.mxu0 %v242
      %965 = vmatpush.bf16.msra.mxu0 %v240
      %966 = vmatmul.bf16.gmra.mxu0 %v491
      %v967 = vpop.f32.mrf.mxu0
      %v968 = vadd.f32 0.0, %v967
      %v969 = vpop.f32.mrf.mxu0
      %v970 = vadd.f32 0.0, %v969
      %971 = vmatmul.bf16.gmra.mxu0 %v493
      %v972 = vpop.f32.mrf.mxu0
      %v973 = vadd.f32 0.0, %v972
      %v974 = vpop.f32.mrf.mxu0
      %v975 = vadd.f32 0.0, %v974
      %976 = vmatmul.bf16.gmra.mxu0 %v495
      %v977 = vpop.f32.mrf.mxu0
      %v978 = vadd.f32 0.0, %v977
      %v979 = vpop.f32.mrf.mxu0
      %v980 = vadd.f32 0.0, %v979
      %981 = vmatmul.bf16.gmra.mxu0 %v497
      %v982 = vpop.f32.mrf.mxu0
      %v983 = vadd.f32 0.0, %v982
      %v984 = vpop.f32.mrf.mxu0
      %v985 = vadd.f32 0.0, %v984
      %986 = vmatmul.bf16.gmra.mxu0 %v499
      %v987 = vpop.f32.mrf.mxu0
      %v988 = vadd.f32 0.0, %v987
      %v989 = vpop.f32.mrf.mxu0
      %v990 = vadd.f32 0.0, %v989
      %991 = vmatmul.bf16.gmra.mxu0 %v501
      %v992 = vpop.f32.mrf.mxu0
      %v993 = vadd.f32 0.0, %v992
      %v994 = vpop.f32.mrf.mxu0
      %v995 = vadd.f32 0.0, %v994
      %996 = vmatmul.bf16.gmra.mxu0 %v503
      %v997 = vpop.f32.mrf.mxu0
      %v998 = vadd.f32 0.0, %v997
      %v999 = vpop.f32.mrf.mxu0
      %v1000 = vadd.f32 0.0, %v999
      %1001 = vmatmul.bf16.gmra.mxu0 %v505
      %v1002 = vpop.f32.mrf.mxu0
      %v1003 = vadd.f32 0.0, %v1002
      %v1004 = vpop.f32.mrf.mxu0
      %v1005 = vadd.f32 0.0, %v1004
      %1006 = vmatmul.bf16.gmra.mxu0 %v507
      %v1007 = vpop.f32.mrf.mxu0
      %v1008 = vadd.f32 0.0, %v1007
      %v1009 = vpop.f32.mrf.mxu0
      %v1010 = vadd.f32 0.0, %v1009
      %1011 = vmatmul.bf16.gmra.mxu0 %v509
      %v1012 = vpop.f32.mrf.mxu0
      %v1013 = vadd.f32 0.0, %v1012
      %v1014 = vpop.f32.mrf.mxu0
      %v1015 = vadd.f32 0.0, %v1014
      %1016 = vmatmul.bf16.gmra.mxu0 %v511
      %v1017 = vpop.f32.mrf.mxu0
      %v1018 = vadd.f32 0.0, %v1017
      %v1019 = vpop.f32.mrf.mxu0
      %v1020 = vadd.f32 0.0, %v1019
      %1021 = vmatmul.bf16.gmra.mxu0 %v513
      %v1022 = vpop.f32.mrf.mxu0
      %v1023 = vadd.f32 0.0, %v1022
      %v1024 = vpop.f32.mrf.mxu0
      %v1025 = vadd.f32 0.0, %v1024
      %1026 = vmatmul.bf16.gmra.mxu0 %v515
      %v1027 = vpop.f32.mrf.mxu0
      %v1028 = vadd.f32 0.0, %v1027
      %v1029 = vpop.f32.mrf.mxu0
      %v1030 = vadd.f32 0.0, %v1029
      %1031 = vmatmul.bf16.gmra.mxu0 %v517
      %v1032 = vpop.f32.mrf.mxu0
      %v1033 = vadd.f32 0.0, %v1032
      %v1034 = vpop.f32.mrf.mxu0
      %v1035 = vadd.f32 0.0, %v1034
      %1036 = vmatmul.bf16.gmra.mxu0 %v519
      %v1037 = vpop.f32.mrf.mxu0
      %v1038 = vadd.f32 0.0, %v1037
      %v1039 = vpop.f32.mrf.mxu0
      %v1040 = vadd.f32 0.0, %v1039
      %1041 = vmatmul.bf16.gmra.mxu0 %v521
      %v1042 = vpop.f32.mrf.mxu0
      %v1043 = vadd.f32 0.0, %v1042
      %v1044 = vpop.f32.mrf.mxu0
      %v1045 = vadd.f32 0.0, %v1044
      %1046 = vmatmul.bf16.gmra.mxu0 %v523
      %v1047 = vpop.f32.mrf.mxu0
      %v1048 = vadd.f32 0.0, %v1047
      %v1049 = vpop.f32.mrf.mxu0
      %v1050 = vadd.f32 0.0, %v1049
      %1051 = vmatmul.bf16.gmra.mxu0 %v525
      %v1052 = vpop.f32.mrf.mxu0
      %v1053 = vadd.f32 0.0, %v1052
      %v1054 = vpop.f32.mrf.mxu0
      %v1055 = vadd.f32 0.0, %v1054
      %1056 = vmatmul.bf16.gmra.mxu0 %v527
      %v1057 = vpop.f32.mrf.mxu0
      %v1058 = vadd.f32 0.0, %v1057
      %v1059 = vpop.f32.mrf.mxu0
      %v1060 = vadd.f32 0.0, %v1059
      %1061 = vmatmul.bf16.gmra.mxu0 %v529
      %v1062 = vpop.f32.mrf.mxu0
      %v1063 = vadd.f32 0.0, %v1062
      %v1064 = vpop.f32.mrf.mxu0
      %v1065 = vadd.f32 0.0, %v1064
      %1066 = vmatmul.bf16.gmra.mxu0 %v531
      %v1067 = vpop.f32.mrf.mxu0
      %v1068 = vadd.f32 0.0, %v1067
      %v1069 = vpop.f32.mrf.mxu0
      %v1070 = vadd.f32 0.0, %v1069
      %1071 = vmatmul.bf16.gmra.mxu0 %v533
      %v1072 = vpop.f32.mrf.mxu0
      %v1073 = vadd.f32 0.0, %v1072
      %v1074 = vpop.f32.mrf.mxu0
      %v1075 = vadd.f32 0.0, %v1074
      %1076 = vmatmul.bf16.gmra.mxu0 %v535
      %v1077 = vpop.f32.mrf.mxu0
      %v1078 = vadd.f32 0.0, %v1077
      %v1079 = vpop.f32.mrf.mxu0
      %v1080 = vadd.f32 0.0, %v1079
      %1081 = vmatmul.bf16.gmra.mxu0 %v537
      %v1082 = vpop.f32.mrf.mxu0
      %v1083 = vadd.f32 0.0, %v1082
      %v1084 = vpop.f32.mrf.mxu0
      %v1085 = vadd.f32 0.0, %v1084
      %1086 = vmatmul.bf16.gmra.mxu0 %v539
      %v1087 = vpop.f32.mrf.mxu0
      %v1088 = vadd.f32 0.0, %v1087
      %v1089 = vpop.f32.mrf.mxu0
      %v1090 = vadd.f32 0.0, %v1089
      %1091 = vmatmul.bf16.gmra.mxu0 %v541
      %v1092 = vpop.f32.mrf.mxu0
      %v1093 = vadd.f32 0.0, %v1092
      %v1094 = vpop.f32.mrf.mxu0
      %v1095 = vadd.f32 0.0, %v1094
      %1096 = vmatmul.bf16.gmra.mxu0 %v543
      %v1097 = vpop.f32.mrf.mxu0
      %v1098 = vadd.f32 0.0, %v1097
      %v1099 = vpop.f32.mrf.mxu0
      %v1100 = vadd.f32 0.0, %v1099
      %1101 = vmatmul.bf16.gmra.mxu0 %v545
      %v1102 = vpop.f32.mrf.mxu0
      %v1103 = vadd.f32 0.0, %v1102
      %v1104 = vpop.f32.mrf.mxu0
      %v1105 = vadd.f32 0.0, %v1104
      %1106 = vdwg.mxu0
      %1107 = vmatpush.bf16.msra.mxu0 0
      %1108 = vmatpush.bf16.msra.mxu0 0
      %1109 = vmatpush.bf16.msra.mxu0 %v266
      %1110 = vmatpush.bf16.msra.mxu0 %v264
      %1111 = vmatpush.bf16.msra.mxu0 %v262
      %1112 = vmatpush.bf16.msra.mxu0 %v260
      %1113 = vmatpush.bf16.msra.mxu0 %v258
      %1114 = vmatpush.bf16.msra.mxu0 %v256
      %1115 = vmatmul.bf16.gmra.mxu0 %v577
      %v1116 = vpop.f32.mrf.mxu0
      %v1117 = vadd.f32 %v968, %v1116
      %v1118 = vpop.f32.mrf.mxu0
      %v1119 = vadd.f32 %v970, %v1118
      %1120 = vmatmul.bf16.gmra.mxu0 %v580
      %v1121 = vpop.f32.mrf.mxu0
      %v1122 = vadd.f32 %v973, %v1121
      %v1123 = vpop.f32.mrf.mxu0
      %v1124 = vadd.f32 %v975, %v1123
      %1125 = vmatmul.bf16.gmra.mxu0 %v583
      %v1126 = vpop.f32.mrf.mxu0
      %v1127 = vadd.f32 %v978, %v1126
      %v1128 = vpop.f32.mrf.mxu0
      %v1129 = vadd.f32 %v980, %v1128
      %1130 = vmatmul.bf16.gmra.mxu0 %v586
      %v1131 = vpop.f32.mrf.mxu0
      %v1132 = vadd.f32 %v983, %v1131
      %v1133 = vpop.f32.mrf.mxu0
      %v1134 = vadd.f32 %v985, %v1133
      %1135 = vmatmul.bf16.gmra.mxu0 %v589
      %v1136 = vpop.f32.mrf.mxu0
      %v1137 = vadd.f32 %v988, %v1136
      %v1138 = vpop.f32.mrf.mxu0
      %v1139 = vadd.f32 %v990, %v1138
      %1140 = vmatmul.bf16.gmra.mxu0 %v592
      %v1141 = vpop.f32.mrf.mxu0
      %v1142 = vadd.f32 %v993, %v1141
      %v1143 = vpop.f32.mrf.mxu0
      %v1144 = vadd.f32 %v995, %v1143
      %1145 = vmatmul.bf16.gmra.mxu0 %v595
      %v1146 = vpop.f32.mrf.mxu0
      %v1147 = vadd.f32 %v998, %v1146
      %v1148 = vpop.f32.mrf.mxu0
      %v1149 = vadd.f32 %v1000, %v1148
      %1150 = vmatmul.bf16.gmra.mxu0 %v598
      %v1151 = vpop.f32.mrf.mxu0
      %v1152 = vadd.f32 %v1003, %v1151
      %v1153 = vpop.f32.mrf.mxu0
      %v1154 = vadd.f32 %v1005, %v1153
      %1155 = vmatmul.bf16.gmra.mxu0 %v601
      %v1156 = vpop.f32.mrf.mxu0
      %v1157 = vadd.f32 %v1008, %v1156
      %v1158 = vpop.f32.mrf.mxu0
      %v1159 = vadd.f32 %v1010, %v1158
      %1160 = vmatmul.bf16.gmra.mxu0 %v604
      %v1161 = vpop.f32.mrf.mxu0
      %v1162 = vadd.f32 %v1013, %v1161
      %v1163 = vpop.f32.mrf.mxu0
      %v1164 = vadd.f32 %v1015, %v1163
      %1165 = vmatmul.bf16.gmra.mxu0 %v607
      %v1166 = vpop.f32.mrf.mxu0
      %v1167 = vadd.f32 %v1018, %v1166
      %v1168 = vpop.f32.mrf.mxu0
      %v1169 = vadd.f32 %v1020, %v1168
      %1170 = vmatmul.bf16.gmra.mxu0 %v610
      %v1171 = vpop.f32.mrf.mxu0
      %v1172 = vadd.f32 %v1023, %v1171
      %v1173 = vpop.f32.mrf.mxu0
      %v1174 = vadd.f32 %v1025, %v1173
      %1175 = vmatmul.bf16.gmra.mxu0 %v613
      %v1176 = vpop.f32.mrf.mxu0
      %v1177 = vadd.f32 %v1028, %v1176
      %v1178 = vpop.f32.mrf.mxu0
      %v1179 = vadd.f32 %v1030, %v1178
      %1180 = vmatmul.bf16.gmra.mxu0 %v616
      %v1181 = vpop.f32.mrf.mxu0
      %v1182 = vadd.f32 %v1033, %v1181
      %v1183 = vpop.f32.mrf.mxu0
      %v1184 = vadd.f32 %v1035, %v1183
      %1185 = vmatmul.bf16.gmra.mxu0 %v619
      %v1186 = vpop.f32.mrf.mxu0
      %v1187 = vadd.f32 %v1038, %v1186
      %v1188 = vpop.f32.mrf.mxu0
      %v1189 = vadd.f32 %v1040, %v1188
      %1190 = vmatmul.bf16.gmra.mxu0 %v622
      %v1191 = vpop.f32.mrf.mxu0
      %v1192 = vadd.f32 %v1043, %v1191
      %v1193 = vpop.f32.mrf.mxu0
      %v1194 = vadd.f32 %v1045, %v1193
      %1195 = vmatmul.bf16.gmra.mxu0 %v625
      %v1196 = vpop.f32.mrf.mxu0
      %v1197 = vadd.f32 %v1048, %v1196
      %v1198 = vpop.f32.mrf.mxu0
      %v1199 = vadd.f32 %v1050, %v1198
      %1200 = vmatmul.bf16.gmra.mxu0 %v628
      %v1201 = vpop.f32.mrf.mxu0
      %v1202 = vadd.f32 %v1053, %v1201
      %v1203 = vpop.f32.mrf.mxu0
      %v1204 = vadd.f32 %v1055, %v1203
      %1205 = vmatmul.bf16.gmra.mxu0 %v631
      %v1206 = vpop.f32.mrf.mxu0
      %v1207 = vadd.f32 %v1058, %v1206
      %v1208 = vpop.f32.mrf.mxu0
      %v1209 = vadd.f32 %v1060, %v1208
      %1210 = vmatmul.bf16.gmra.mxu0 %v634
      %v1211 = vpop.f32.mrf.mxu0
      %v1212 = vadd.f32 %v1063, %v1211
      %v1213 = vpop.f32.mrf.mxu0
      %v1214 = vadd.f32 %v1065, %v1213
      %1215 = vmatmul.bf16.gmra.mxu0 %v637
      %v1216 = vpop.f32.mrf.mxu0
      %v1217 = vadd.f32 %v1068, %v1216
      %v1218 = vpop.f32.mrf.mxu0
      %v1219 = vadd.f32 %v1070, %v1218
      %1220 = vmatmul.bf16.gmra.mxu0 %v640
      %v1221 = vpop.f32.mrf.mxu0
      %v1222 = vadd.f32 %v1073, %v1221
      %v1223 = vpop.f32.mrf.mxu0
      %v1224 = vadd.f32 %v1075, %v1223
      %1225 = vmatmul.bf16.gmra.mxu0 %v643
      %v1226 = vpop.f32.mrf.mxu0
      %v1227 = vadd.f32 %v1078, %v1226
      %v1228 = vpop.f32.mrf.mxu0
      %v1229 = vadd.f32 %v1080, %v1228
      %1230 = vmatmul.bf16.gmra.mxu0 %v646
      %v1231 = vpop.f32.mrf.mxu0
      %v1232 = vadd.f32 %v1083, %v1231
      %v1233 = vpop.f32.mrf.mxu0
      %v1234 = vadd.f32 %v1085, %v1233
      %1235 = vmatmul.bf16.gmra.mxu0 %v649
      %v1236 = vpop.f32.mrf.mxu0
      %v1237 = vadd.f32 %v1088, %v1236
      %v1238 = vpop.f32.mrf.mxu0
      %v1239 = vadd.f32 %v1090, %v1238
      %1240 = vmatmul.bf16.gmra.mxu0 %v652
      %v1241 = vpop.f32.mrf.mxu0
      %v1242 = vadd.f32 %v1093, %v1241
      %v1243 = vpop.f32.mrf.mxu0
      %v1244 = vadd.f32 %v1095, %v1243
      %1245 = vmatmul.bf16.gmra.mxu0 %v655
      %v1246 = vpop.f32.mrf.mxu0
      %v1247 = vadd.f32 %v1098, %v1246
      %v1248 = vpop.f32.mrf.mxu0
      %v1249 = vadd.f32 %v1100, %v1248
      %1250 = vmatmul.bf16.gmra.mxu0 %v658
      %v1251 = vpop.f32.mrf.mxu0
      %v1252 = vadd.f32 %v1103, %v1251
      %v1253 = vpop.f32.mrf.mxu0
      %v1254 = vadd.f32 %v1105, %v1253
      %1255 = vdwg.mxu0
      %v1256 = vadd.f32 %v819, %v1117
      %1257 = vadd.xlane.f32.xlu0 %v1256
      %v1258 = vpop.xlane.xlu0 %1257
      %v1259 = vadd.f32 %v821, %v1119
      %1260 = vadd.xlane.f32.xlu0 %v1259
      %v1261 = vpop.xlane.xlu0 %1260
      %v1262 = vadd.f32 %v824, %v1122
      %1263 = vadd.xlane.f32.xlu0 %v1262
      %v1264 = vpop.xlane.xlu0 %1263
      %v1265 = vadd.f32 %v826, %v1124
      %1266 = vadd.xlane.f32.xlu0 %v1265
      %v1267 = vpop.xlane.xlu0 %1266
      %v1268 = vadd.f32 %v829, %v1127
      %1269 = vadd.xlane.f32.xlu0 %v1268
      %v1270 = vpop.xlane.xlu0 %1269
      %v1271 = vadd.f32 %v831, %v1129
      %1272 = vadd.xlane.f32.xlu0 %v1271
      %v1273 = vpop.xlane.xlu0 %1272
      %v1274 = vadd.f32 %v834, %v1132
      %1275 = vadd.xlane.f32.xlu0 %v1274
      %v1276 = vpop.xlane.xlu0 %1275
      %v1277 = vadd.f32 %v836, %v1134
      %1278 = vadd.xlane.f32.xlu0 %v1277
      %v1279 = vpop.xlane.xlu0 %1278
      %v1280 = vadd.f32 %v839, %v1137
      %1281 = vadd.xlane.f32.xlu0 %v1280
      %v1282 = vpop.xlane.xlu0 %1281
      %v1283 = vadd.f32 %v841, %v1139
      %1284 = vadd.xlane.f32.xlu0 %v1283
      %v1285 = vpop.xlane.xlu0 %1284
      %v1286 = vadd.f32 %v844, %v1142
      %1287 = vadd.xlane.f32.xlu0 %v1286
      %v1288 = vpop.xlane.xlu0 %1287
      %v1289 = vadd.f32 %v846, %v1144
      %1290 = vadd.xlane.f32.xlu0 %v1289
      %v1291 = vpop.xlane.xlu0 %1290
      %v1292 = vadd.f32 %v849, %v1147
      %1293 = vadd.xlane.f32.xlu0 %v1292
      %v1294 = vpop.xlane.xlu0 %1293
      %v1295 = vadd.f32 %v851, %v1149
      %1296 = vadd.xlane.f32.xlu0 %v1295
      %v1297 = vpop.xlane.xlu0 %1296
      %v1298 = vadd.f32 %v854, %v1152
      %1299 = vadd.xlane.f32.xlu0 %v1298
      %v1300 = vpop.xlane.xlu0 %1299
      %v1301 = vadd.f32 %v856, %v1154
      %1302 = vadd.xlane.f32.xlu0 %v1301
      %v1303 = vpop.xlane.xlu0 %1302
      %v1304 = vadd.f32 %v859, %v1157
      %1305 = vadd.xlane.f32.xlu0 %v1304
      %v1306 = vpop.xlane.xlu0 %1305
      %v1307 = vadd.f32 %v861, %v1159
      %1308 = vadd.xlane.f32.xlu0 %v1307
      %v1309 = vpop.xlane.xlu0 %1308
      %v1310 = vadd.f32 %v864, %v1162
      %1311 = vadd.xlane.f32.xlu0 %v1310
      %v1312 = vpop.xlane.xlu0 %1311
      %v1313 = vadd.f32 %v866, %v1164
      %1314 = vadd.xlane.f32.xlu0 %v1313
      %v1315 = vpop.xlane.xlu0 %1314
      %v1316 = vadd.f32 %v869, %v1167
      %1317 = vadd.xlane.f32.xlu0 %v1316
      %v1318 = vpop.xlane.xlu0 %1317
      %v1319 = vadd.f32 %v871, %v1169
      %1320 = vadd.xlane.f32.xlu0 %v1319
      %v1321 = vpop.xlane.xlu0 %1320
      %v1322 = vadd.f32 %v874, %v1172
      %1323 = vadd.xlane.f32.xlu0 %v1322
      %v1324 = vpop.xlane.xlu0 %1323
      %v1325 = vadd.f32 %v876, %v1174
      %1326 = vadd.xlane.f32.xlu0 %v1325
      %v1327 = vpop.xlane.xlu0 %1326
      %v1328 = vadd.f32 %v879, %v1177
      %1329 = vadd.xlane.f32.xlu0 %v1328
      %v1330 = vpop.xlane.xlu0 %1329
      %v1331 = vadd.f32 %v881, %v1179
      %1332 = vadd.xlane.f32.xlu0 %v1331
      %v1333 = vpop.xlane.xlu0 %1332
      %v1334 = vadd.f32 %v884, %v1182
      %1335 = vadd.xlane.f32.xlu0 %v1334
      %v1336 = vpop.xlane.xlu0 %1335
      %v1337 = vadd.f32 %v886, %v1184
      %1338 = vadd.xlane.f32.xlu0 %v1337
      %v1339 = vpop.xlane.xlu0 %1338
      %v1340 = vadd.f32 %v889, %v1187
      %1341 = vadd.xlane.f32.xlu0 %v1340
      %v1342 = vpop.xlane.xlu0 %1341
      %v1343 = vadd.f32 %v891, %v1189
      %1344 = vadd.xlane.f32.xlu0 %v1343
      %v1345 = vpop.xlane.xlu0 %1344
      %v1346 = vadd.f32 %v894, %v1192
      %1347 = vadd.xlane.f32.xlu0 %v1346
      %v1348 = vpop.xlane.xlu0 %1347
      %v1349 = vadd.f32 %v896, %v1194
      %1350 = vadd.xlane.f32.xlu0 %v1349
      %v1351 = vpop.xlane.xlu0 %1350
      %v1352 = vadd.f32 %v899, %v1197
      %1353 = vadd.xlane.f32.xlu0 %v1352
      %v1354 = vpop.xlane.xlu0 %1353
      %v1355 = vadd.f32 %v901, %v1199
      %1356 = vadd.xlane.f32.xlu0 %v1355
      %v1357 = vpop.xlane.xlu0 %1356
      %v1358 = vadd.f32 %v904, %v1202
      %1359 = vadd.xlane.f32.xlu0 %v1358
      %v1360 = vpop.xlane.xlu0 %1359
      %v1361 = vadd.f32 %v906, %v1204
      %1362 = vadd.xlane.f32.xlu0 %v1361
      %v1363 = vpop.xlane.xlu0 %1362
      %v1364 = vadd.f32 %v909, %v1207
      %1365 = vadd.xlane.f32.xlu0 %v1364
      %v1366 = vpop.xlane.xlu0 %1365
      %v1367 = vadd.f32 %v911, %v1209
      %1368 = vadd.xlane.f32.xlu0 %v1367
      %v1369 = vpop.xlane.xlu0 %1368
      %v1370 = vadd.f32 %v914, %v1212
      %1371 = vadd.xlane.f32.xlu0 %v1370
      %v1372 = vpop.xlane.xlu0 %1371
      %v1373 = vadd.f32 %v916, %v1214
      %1374 = vadd.xlane.f32.xlu0 %v1373
      %v1375 = vpop.xlane.xlu0 %1374
      %v1376 = vadd.f32 %v919, %v1217
      %1377 = vadd.xlane.f32.xlu0 %v1376
      %v1378 = vpop.xlane.xlu0 %1377
      %v1379 = vadd.f32 %v921, %v1219
      %1380 = vadd.xlane.f32.xlu0 %v1379
      %v1381 = vpop.xlane.xlu0 %1380
      %v1382 = vadd.f32 %v924, %v1222
      %1383 = vadd.xlane.f32.xlu0 %v1382
      %v1384 = vpop.xlane.xlu0 %1383
      %v1385 = vadd.f32 %v926, %v1224
      %1386 = vadd.xlane.f32.xlu0 %v1385
      %v1387 = vpop.xlane.xlu0 %1386
      %v1388 = vadd.f32 %v929, %v1227
      %1389 = vadd.xlane.f32.xlu0 %v1388
      %v1390 = vpop.xlane.xlu0 %1389
      %v1391 = vadd.f32 %v931, %v1229
      %1392 = vadd.xlane.f32.xlu0 %v1391
      %v1393 = vpop.xlane.xlu0 %1392
      %v1394 = vadd.f32 %v934, %v1232
      %1395 = vadd.xlane.f32.xlu0 %v1394
      %v1396 = vpop.xlane.xlu0 %1395
      %v1397 = vadd.f32 %v936, %v1234
      %1398 = vadd.xlane.f32.xlu0 %v1397
      %v1399 = vpop.xlane.xlu0 %1398
      %v1400 = vadd.f32 %v939, %v1237
      %1401 = vadd.xlane.f32.xlu0 %v1400
      %v1402 = vpop.xlane.xlu0 %1401
      %v1403 = vadd.f32 %v941, %v1239
      %1404 = vadd.xlane.f32.xlu0 %v1403
      %v1405 = vpop.xlane.xlu0 %1404
      %v1406 = vadd.f32 %v944, %v1242
      %1407 = vadd.xlane.f32.xlu0 %v1406
      %v1408 = vpop.xlane.xlu0 %1407
      %v1409 = vadd.f32 %v946, %v1244
      %1410 = vadd.xlane.f32.xlu0 %v1409
      %v1411 = vpop.xlane.xlu0 %1410
      %v1412 = vadd.f32 %v949, %v1247
      %1413 = vadd.xlane.f32.xlu0 %v1412
      %v1414 = vpop.xlane.xlu0 %1413
      %v1415 = vadd.f32 %v951, %v1249
      %1416 = vadd.xlane.f32.xlu0 %v1415
      %v1417 = vpop.xlane.xlu0 %1416
      %v1418 = vadd.f32 %v954, %v1252
      %1419 = vadd.xlane.f32.xlu0 %v1418
      %v1420 = vpop.xlane.xlu0 %1419
      %v1421 = vadd.f32 %v956, %v1254
      %1422 = vadd.xlane.f32.xlu0 %v1421
      %v1423 = vpop.xlane.xlu0 %1422
      %v1424 = vmul.f32 %v819, %v819
      %v1425 = vmul.f32 %v1117, %v1117
      %v1426 = vmul.f32 %v821, %v821
      %v1427 = vmul.f32 %v1119, %v1119
      %v1428 = vmul.f32 %v824, %v824
      %v1429 = vmul.f32 %v1122, %v1122
      %v1430 = vmul.f32 %v826, %v826
      %v1431 = vmul.f32 %v1124, %v1124
      %v1432 = vmul.f32 %v829, %v829
      %v1433 = vmul.f32 %v1127, %v1127
      %v1434 = vmul.f32 %v831, %v831
      %v1435 = vmul.f32 %v1129, %v1129
      %v1436 = vmul.f32 %v834, %v834
      %v1437 = vmul.f32 %v1132, %v1132
      %v1438 = vmul.f32 %v836, %v836
      %v1439 = vmul.f32 %v1134, %v1134
      %v1440 = vmul.f32 %v839, %v839
      %v1441 = vmul.f32 %v1137, %v1137
      %v1442 = vmul.f32 %v841, %v841
      %v1443 = vmul.f32 %v1139, %v1139
      %v1444 = vmul.f32 %v844, %v844
      %v1445 = vmul.f32 %v1142, %v1142
      %v1446 = vmul.f32 %v846, %v846
      %v1447 = vmul.f32 %v1144, %v1144
      %v1448 = vmul.f32 %v849, %v849
      %v1449 = vmul.f32 %v1147, %v1147
      %v1450 = vmul.f32 %v851, %v851
      %v1451 = vmul.f32 %v1149, %v1149
      %v1452 = vmul.f32 %v854, %v854
      %v1453 = vmul.f32 %v1152, %v1152
      %v1454 = vmul.f32 %v856, %v856
      %v1455 = vmul.f32 %v1154, %v1154
      %v1456 = vmul.f32 %v859, %v859
      %v1457 = vmul.f32 %v1157, %v1157
      %v1458 = vmul.f32 %v861, %v861
      %v1459 = vmul.f32 %v1159, %v1159
      %v1460 = vmul.f32 %v864, %v864
      %v1461 = vmul.f32 %v1162, %v1162
      %v1462 = vmul.f32 %v866, %v866
      %v1463 = vmul.f32 %v1164, %v1164
      %v1464 = vmul.f32 %v869, %v869
      %v1465 = vmul.f32 %v1167, %v1167
      %v1466 = vmul.f32 %v871, %v871
      %v1467 = vmul.f32 %v1169, %v1169
      %v1468 = vmul.f32 %v874, %v874
      %v1469 = vmul.f32 %v1172, %v1172
      %v1470 = vmul.f32 %v876, %v876
      %v1471 = vmul.f32 %v1174, %v1174
      %v1472 = vmul.f32 %v879, %v879
      %v1473 = vmul.f32 %v1177, %v1177
      %v1474 = vmul.f32 %v881, %v881
      %v1475 = vmul.f32 %v1179, %v1179
      %v1476 = vmul.f32 %v884, %v884
      %v1477 = vmul.f32 %v1182, %v1182
      %v1478 = vmul.f32 %v886, %v886
      %v1479 = vmul.f32 %v1184, %v1184
      %v1480 = vmul.f32 %v889, %v889
      %v1481 = vmul.f32 %v1187, %v1187
      %v1482 = vmul.f32 %v891, %v891
      %v1483 = vmul.f32 %v1189, %v1189
      %v1484 = vmul.f32 %v894, %v894
      %v1485 = vmul.f32 %v1192, %v1192
      %v1486 = vmul.f32 %v896, %v896
      %v1487 = vmul.f32 %v1194, %v1194
      %v1488 = vmul.f32 %v899, %v899
      %v1489 = vmul.f32 %v1197, %v1197
      %v1490 = vmul.f32 %v901, %v901
      %v1491 = vmul.f32 %v1199, %v1199
      %v1492 = vmul.f32 %v904, %v904
      %v1493 = vmul.f32 %v1202, %v1202
      %v1494 = vmul.f32 %v906, %v906
      %v1495 = vmul.f32 %v1204, %v1204
      %v1496 = vmul.f32 %v909, %v909
      %v1497 = vmul.f32 %v1207, %v1207
      %v1498 = vmul.f32 %v911, %v911
      %v1499 = vmul.f32 %v1209, %v1209
      %v1500 = vmul.f32 %v914, %v914
      %v1501 = vmul.f32 %v1212, %v1212
      %v1502 = vmul.f32 %v916, %v916
      %v1503 = vmul.f32 %v1214, %v1214
      %v1504 = vmul.f32 %v919, %v919
      %v1505 = vmul.f32 %v1217, %v1217
      %v1506 = vmul.f32 %v921, %v921
      %v1507 = vmul.f32 %v1219, %v1219
      %v1508 = vmul.f32 %v924, %v924
      %v1509 = vmul.f32 %v1222, %v1222
      %v1510 = vmul.f32 %v926, %v926
      %v1511 = vmul.f32 %v1224, %v1224
      %v1512 = vmul.f32 %v929, %v929
      %v1513 = vmul.f32 %v1227, %v1227
      %v1514 = vmul.f32 %v931, %v931
      %v1515 = vmul.f32 %v1229, %v1229
      %v1516 = vmul.f32 %v934, %v934
      %v1517 = vmul.f32 %v1232, %v1232
      %v1518 = vmul.f32 %v936, %v936
      %v1519 = vmul.f32 %v1234, %v1234
      %v1520 = vmul.f32 %v939, %v939
      %v1521 = vmul.f32 %v1237, %v1237
      %v1522 = vmul.f32 %v941, %v941
      %v1523 = vmul.f32 %v1239, %v1239
      %v1524 = vmul.f32 %v944, %v944
      %v1525 = vmul.f32 %v1242, %v1242
      %v1526 = vmul.f32 %v946, %v946
      %v1527 = vmul.f32 %v1244, %v1244
      %v1528 = vmul.f32 %v949, %v949
      %v1529 = vmul.f32 %v1247, %v1247
      %v1530 = vmul.f32 %v951, %v951
      %v1531 = vmul.f32 %v1249, %v1249
      %v1532 = vmul.f32 %v954, %v954
      %v1533 = vmul.f32 %v1252, %v1252
      %v1534 = vmul.f32 %v956, %v956
      %v1535 = vmul.f32 %v1254, %v1254
      %v1536 = vadd.f32 %v1424, %v1425
      %1537 = vadd.xlane.f32.xlu0 %v1536
      %v1538 = vpop.xlane.xlu0 %1537
      %v1539 = vadd.f32 %v1426, %v1427
      %1540 = vadd.xlane.f32.xlu0 %v1539
      %v1541 = vpop.xlane.xlu0 %1540
      %v1542 = vadd.f32 %v1428, %v1429
      %1543 = vadd.xlane.f32.xlu0 %v1542
      %v1544 = vpop.xlane.xlu0 %1543
      %v1545 = vadd.f32 %v1430, %v1431
      %1546 = vadd.xlane.f32.xlu0 %v1545
      %v1547 = vpop.xlane.xlu0 %1546
      %v1548 = vadd.f32 %v1432, %v1433
      %1549 = vadd.xlane.f32.xlu0 %v1548
      %v1550 = vpop.xlane.xlu0 %1549
      %v1551 = vadd.f32 %v1434, %v1435
      %1552 = vadd.xlane.f32.xlu0 %v1551
      %v1553 = vpop.xlane.xlu0 %1552
      %v1554 = vadd.f32 %v1436, %v1437
      %1555 = vadd.xlane.f32.xlu0 %v1554
      %v1556 = vpop.xlane.xlu0 %1555
      %v1557 = vadd.f32 %v1438, %v1439
      %1558 = vadd.xlane.f32.xlu0 %v1557
      %v1559 = vpop.xlane.xlu0 %1558
      %v1560 = vadd.f32 %v1440, %v1441
      %1561 = vadd.xlane.f32.xlu0 %v1560
      %v1562 = vpop.xlane.xlu0 %1561
      %v1563 = vadd.f32 %v1442, %v1443
      %1564 = vadd.xlane.f32.xlu0 %v1563
      %v1565 = vpop.xlane.xlu0 %1564
      %v1566 = vadd.f32 %v1444, %v1445
      %1567 = vadd.xlane.f32.xlu0 %v1566
      %v1568 = vpop.xlane.xlu0 %1567
      %v1569 = vadd.f32 %v1446, %v1447
      %1570 = vadd.xlane.f32.xlu0 %v1569
      %v1571 = vpop.xlane.xlu0 %1570
      %v1572 = vadd.f32 %v1448, %v1449
      %1573 = vadd.xlane.f32.xlu0 %v1572
      %v1574 = vpop.xlane.xlu0 %1573
      %v1575 = vadd.f32 %v1450, %v1451
      %1576 = vadd.xlane.f32.xlu0 %v1575
      %v1577 = vpop.xlane.xlu0 %1576
      %v1578 = vadd.f32 %v1452, %v1453
      %1579 = vadd.xlane.f32.xlu0 %v1578
      %v1580 = vpop.xlane.xlu0 %1579
      %v1581 = vadd.f32 %v1454, %v1455
      %1582 = vadd.xlane.f32.xlu0 %v1581
      %v1583 = vpop.xlane.xlu0 %1582
      %v1584 = vadd.f32 %v1456, %v1457
      %1585 = vadd.xlane.f32.xlu0 %v1584
      %v1586 = vpop.xlane.xlu0 %1585
      %v1587 = vadd.f32 %v1458, %v1459
      %1588 = vadd.xlane.f32.xlu0 %v1587
      %v1589 = vpop.xlane.xlu0 %1588
      %v1590 = vadd.f32 %v1460, %v1461
      %1591 = vadd.xlane.f32.xlu0 %v1590
      %v1592 = vpop.xlane.xlu0 %1591
      %v1593 = vadd.f32 %v1462, %v1463
      %1594 = vadd.xlane.f32.xlu0 %v1593
      %v1595 = vpop.xlane.xlu0 %1594
      %v1596 = vadd.f32 %v1464, %v1465
      %1597 = vadd.xlane.f32.xlu0 %v1596
      %v1598 = vpop.xlane.xlu0 %1597
      %v1599 = vadd.f32 %v1466, %v1467
      %1600 = vadd.xlane.f32.xlu0 %v1599
      %v1601 = vpop.xlane.xlu0 %1600
      %v1602 = vadd.f32 %v1468, %v1469
      %1603 = vadd.xlane.f32.xlu0 %v1602
      %v1604 = vpop.xlane.xlu0 %1603
      %v1605 = vadd.f32 %v1470, %v1471
      %1606 = vadd.xlane.f32.xlu0 %v1605
      %v1607 = vpop.xlane.xlu0 %1606
      %v1608 = vadd.f32 %v1472, %v1473
      %1609 = vadd.xlane.f32.xlu0 %v1608
      %v1610 = vpop.xlane.xlu0 %1609
      %v1611 = vadd.f32 %v1474, %v1475
      %1612 = vadd.xlane.f32.xlu0 %v1611
      %v1613 = vpop.xlane.xlu0 %1612
      %v1614 = vadd.f32 %v1476, %v1477
      %1615 = vadd.xlane.f32.xlu0 %v1614
      %v1616 = vpop.xlane.xlu0 %1615
      %v1617 = vadd.f32 %v1478, %v1479
      %1618 = vadd.xlane.f32.xlu0 %v1617
      %v1619 = vpop.xlane.xlu0 %1618
      %v1620 = vadd.f32 %v1480, %v1481
      %1621 = vadd.xlane.f32.xlu0 %v1620
      %v1622 = vpop.xlane.xlu0 %1621
      %v1623 = vadd.f32 %v1482, %v1483
      %1624 = vadd.xlane.f32.xlu0 %v1623
      %v1625 = vpop.xlane.xlu0 %1624
      %v1626 = vadd.f32 %v1484, %v1485
      %1627 = vadd.xlane.f32.xlu0 %v1626
      %v1628 = vpop.xlane.xlu0 %1627
      %v1629 = vadd.f32 %v1486, %v1487
      %1630 = vadd.xlane.f32.xlu0 %v1629
      %v1631 = vpop.xlane.xlu0 %1630
      %v1632 = vadd.f32 %v1488, %v1489
      %1633 = vadd.xlane.f32.xlu0 %v1632
      %v1634 = vpop.xlane.xlu0 %1633
      %v1635 = vadd.f32 %v1490, %v1491
      %1636 = vadd.xlane.f32.xlu0 %v1635
      %v1637 = vpop.xlane.xlu0 %1636
      %v1638 = vadd.f32 %v1492, %v1493
      %1639 = vadd.xlane.f32.xlu0 %v1638
      %v1640 = vpop.xlane.xlu0 %1639
      %v1641 = vadd.f32 %v1494, %v1495
      %1642 = vadd.xlane.f32.xlu0 %v1641
      %v1643 = vpop.xlane.xlu0 %1642
      %v1644 = vadd.f32 %v1496, %v1497
      %1645 = vadd.xlane.f32.xlu0 %v1644
      %v1646 = vpop.xlane.xlu0 %1645
      %v1647 = vadd.f32 %v1498, %v1499
      %1648 = vadd.xlane.f32.xlu0 %v1647
      %v1649 = vpop.xlane.xlu0 %1648
      %v1650 = vadd.f32 %v1500, %v1501
      %1651 = vadd.xlane.f32.xlu0 %v1650
      %v1652 = vpop.xlane.xlu0 %1651
      %v1653 = vadd.f32 %v1502, %v1503
      %1654 = vadd.xlane.f32.xlu0 %v1653
      %v1655 = vpop.xlane.xlu0 %1654
      %v1656 = vadd.f32 %v1504, %v1505
      %1657 = vadd.xlane.f32.xlu0 %v1656
      %v1658 = vpop.xlane.xlu0 %1657
      %v1659 = vadd.f32 %v1506, %v1507
      %1660 = vadd.xlane.f32.xlu0 %v1659
      %v1661 = vpop.xlane.xlu0 %1660
      %v1662 = vadd.f32 %v1508, %v1509
      %1663 = vadd.xlane.f32.xlu0 %v1662
      %v1664 = vpop.xlane.xlu0 %1663
      %v1665 = vadd.f32 %v1510, %v1511
      %1666 = vadd.xlane.f32.xlu0 %v1665
      %v1667 = vpop.xlane.xlu0 %1666
      %v1668 = vadd.f32 %v1512, %v1513
      %1669 = vadd.xlane.f32.xlu0 %v1668
      %v1670 = vpop.xlane.xlu0 %1669
      %v1671 = vadd.f32 %v1514, %v1515
      %1672 = vadd.xlane.f32.xlu0 %v1671
      %v1673 = vpop.xlane.xlu0 %1672
      %v1674 = vadd.f32 %v1516, %v1517
      %1675 = vadd.xlane.f32.xlu0 %v1674
      %v1676 = vpop.xlane.xlu0 %1675
      %v1677 = vadd.f32 %v1518, %v1519
      %1678 = vadd.xlane.f32.xlu0 %v1677
      %v1679 = vpop.xlane.xlu0 %1678
      %v1680 = vadd.f32 %v1520, %v1521
      %1681 = vadd.xlane.f32.xlu0 %v1680
      %v1682 = vpop.xlane.xlu0 %1681
      %v1683 = vadd.f32 %v1522, %v1523
      %1684 = vadd.xlane.f32.xlu0 %v1683
      %v1685 = vpop.xlane.xlu0 %1684
      %v1686 = vadd.f32 %v1524, %v1525
      %1687 = vadd.xlane.f32.xlu0 %v1686
      %v1688 = vpop.xlane.xlu0 %1687
      %v1689 = vadd.f32 %v1526, %v1527
      %1690 = vadd.xlane.f32.xlu0 %v1689
      %v1691 = vpop.xlane.xlu0 %1690
      %v1692 = vadd.f32 %v1528, %v1529
      %1693 = vadd.xlane.f32.xlu0 %v1692
      %v1694 = vpop.xlane.xlu0 %1693
      %v1695 = vadd.f32 %v1530, %v1531
      %1696 = vadd.xlane.f32.xlu0 %v1695
      %v1697 = vpop.xlane.xlu0 %1696
      %v1698 = vadd.f32 %v1532, %v1533
      %1699 = vadd.xlane.f32.xlu0 %v1698
      %v1700 = vpop.xlane.xlu0 %1699
      %v1701 = vadd.f32 %v1534, %v1535
      %1702 = vadd.xlane.f32.xlu0 %v1701
      %v1703 = vpop.xlane.xlu0 %1702
      %vm1704 = vcmask 7168
      %v1705 = vsel %vm1704, %v1258, %v1538
      %v1706 = vsel %vm1704, %v1261, %v1541
      %v1707 = vsel %vm1704, %v1264, %v1544
      %v1708 = vsel %vm1704, %v1267, %v1547
      %v1709 = vsel %vm1704, %v1270, %v1550
      %v1710 = vsel %vm1704, %v1273, %v1553
      %v1711 = vsel %vm1704, %v1276, %v1556
      %v1712 = vsel %vm1704, %v1279, %v1559
      %v1713 = vsel %vm1704, %v1282, %v1562
      %v1714 = vsel %vm1704, %v1285, %v1565
      %v1715 = vsel %vm1704, %v1288, %v1568
      %v1716 = vsel %vm1704, %v1291, %v1571
      %v1717 = vsel %vm1704, %v1294, %v1574
      %v1718 = vsel %vm1704, %v1297, %v1577
      %v1719 = vsel %vm1704, %v1300, %v1580
      %v1720 = vsel %vm1704, %v1303, %v1583
      %v1721 = vsel %vm1704, %v1306, %v1586
      %v1722 = vsel %vm1704, %v1309, %v1589
      %v1723 = vsel %vm1704, %v1312, %v1592
      %v1724 = vsel %vm1704, %v1315, %v1595
      %v1725 = vsel %vm1704, %v1318, %v1598
      %v1726 = vsel %vm1704, %v1321, %v1601
      %v1727 = vsel %vm1704, %v1324, %v1604
      %v1728 = vsel %vm1704, %v1327, %v1607
      %v1729 = vsel %vm1704, %v1330, %v1610
      %v1730 = vsel %vm1704, %v1333, %v1613
      %v1731 = vsel %vm1704, %v1336, %v1616
      %v1732 = vsel %vm1704, %v1339, %v1619
      %v1733 = vsel %vm1704, %v1342, %v1622
      %v1734 = vsel %vm1704, %v1345, %v1625
      %v1735 = vsel %vm1704, %v1348, %v1628
      %v1736 = vsel %vm1704, %v1351, %v1631
      %v1737 = vsel %vm1704, %v1354, %v1634
      %v1738 = vsel %vm1704, %v1357, %v1637
      %v1739 = vsel %vm1704, %v1360, %v1640
      %v1740 = vsel %vm1704, %v1363, %v1643
      %v1741 = vsel %vm1704, %v1366, %v1646
      %v1742 = vsel %vm1704, %v1369, %v1649
      %v1743 = vsel %vm1704, %v1372, %v1652
      %v1744 = vsel %vm1704, %v1375, %v1655
      %v1745 = vsel %vm1704, %v1378, %v1658
      %v1746 = vsel %vm1704, %v1381, %v1661
      %v1747 = vsel %vm1704, %v1384, %v1664
      %v1748 = vsel %vm1704, %v1387, %v1667
      %v1749 = vsel %vm1704, %v1390, %v1670
      %v1750 = vsel %vm1704, %v1393, %v1673
      %v1751 = vsel %vm1704, %v1396, %v1676
      %v1752 = vsel %vm1704, %v1399, %v1679
      %v1753 = vsel %vm1704, %v1402, %v1682
      %v1754 = vsel %vm1704, %v1405, %v1685
      %v1755 = vsel %vm1704, %v1408, %v1688
      %v1756 = vsel %vm1704, %v1411, %v1691
      %v1757 = vsel %vm1704, %v1414, %v1694
      %v1758 = vsel %vm1704, %v1417, %v1697
      %v1759 = vsel %vm1704, %v1420, %v1700
      %v1760 = vsel %vm1704, %v1423, %v1703
      %vm1761 = vcmask 15360
      %1762 = vst.msk [vmem:[%s181] sm:$0xff] %vm1761, %v1705
      %1763 = vst.msk [vmem:[%s181 + $0x8] sm:$0xff] %vm1761, %v1706
      %1764 = vst.msk [vmem:[%s181 + $0x10] sm:$0xff] %vm1761, %v1707
      %1765 = vst.msk [vmem:[%s181 + $0x18] sm:$0xff] %vm1761, %v1708
      %1766 = vst.msk [vmem:[%s181 + $0x20] sm:$0xff] %vm1761, %v1709
      %1767 = vst.msk [vmem:[%s181 + $0x28] sm:$0xff] %vm1761, %v1710
      %1768 = vst.msk [vmem:[%s181 + $0x30] sm:$0xff] %vm1761, %v1711
      %1769 = vst.msk [vmem:[%s181 + $0x38] sm:$0xff] %vm1761, %v1712
      %1770 = vst.msk [vmem:[%s181 + $0x40] sm:$0xff] %vm1761, %v1713
      %1771 = vst.msk [vmem:[%s181 + $0x48] sm:$0xff] %vm1761, %v1714
      %1772 = vst.msk [vmem:[%s181 + $0x50] sm:$0xff] %vm1761, %v1715
      %1773 = vst.msk [vmem:[%s181 + $0x58] sm:$0xff] %vm1761, %v1716
      %1774 = vst.msk [vmem:[%s181 + $0x60] sm:$0xff] %vm1761, %v1717
      %1775 = vst.msk [vmem:[%s181 + $0x68] sm:$0xff] %vm1761, %v1718
      %1776 = vst.msk [vmem:[%s181 + $0x70] sm:$0xff] %vm1761, %v1719
      %1777 = vst.msk [vmem:[%s181 + $0x78] sm:$0xff] %vm1761, %v1720
      %1778 = vst.msk [vmem:[%s181 + $0x80] sm:$0xff] %vm1761, %v1721
      %1779 = vst.msk [vmem:[%s181 + $0x88] sm:$0xff] %vm1761, %v1722
      %1780 = vst.msk [vmem:[%s181 + $0x90] sm:$0xff] %vm1761, %v1723
      %1781 = vst.msk [vmem:[%s181 + $0x98] sm:$0xff] %vm1761, %v1724
      %1782 = vst.msk [vmem:[%s181 + $0xa0] sm:$0xff] %vm1761, %v1725
      %1783 = vst.msk [vmem:[%s181 + $0xa8] sm:$0xff] %vm1761, %v1726
      %1784 = vst.msk [vmem:[%s181 + $0xb0] sm:$0xff] %vm1761, %v1727
      %1785 = vst.msk [vmem:[%s181 + $0xb8] sm:$0xff] %vm1761, %v1728
      %1786 = vst.msk [vmem:[%s181 + $0xc0] sm:$0xff] %vm1761, %v1729
      %1787 = vst.msk [vmem:[%s181 + $0xc8] sm:$0xff] %vm1761, %v1730
      %1788 = vst.msk [vmem:[%s181 + $0xd0] sm:$0xff] %vm1761, %v1731
      %1789 = vst.msk [vmem:[%s181 + $0xd8] sm:$0xff] %vm1761, %v1732
      %1790 = vst.msk [vmem:[%s181 + $0xe0] sm:$0xff] %vm1761, %v1733
      %1791 = vst.msk [vmem:[%s181 + $0xe8] sm:$0xff] %vm1761, %v1734
      %1792 = vst.msk [vmem:[%s181 + $0xf0] sm:$0xff] %vm1761, %v1735
      %1793 = vst.msk [vmem:[%s181 + $0xf8] sm:$0xff] %vm1761, %v1736
      %1794 = vst.msk [vmem:[%s181 + $0x100] sm:$0xff] %vm1761, %v1737
      %1795 = vst.msk [vmem:[%s181 + $0x108] sm:$0xff] %vm1761, %v1738
      %1796 = vst.msk [vmem:[%s181 + $0x110] sm:$0xff] %vm1761, %v1739
      %1797 = vst.msk [vmem:[%s181 + $0x118] sm:$0xff] %vm1761, %v1740
      %1798 = vst.msk [vmem:[%s181 + $0x120] sm:$0xff] %vm1761, %v1741
      %1799 = vst.msk [vmem:[%s181 + $0x128] sm:$0xff] %vm1761, %v1742
      %1800 = vst.msk [vmem:[%s181 + $0x130] sm:$0xff] %vm1761, %v1743
      %1801 = vst.msk [vmem:[%s181 + $0x138] sm:$0xff] %vm1761, %v1744
      %1802 = vst.msk [vmem:[%s181 + $0x140] sm:$0xff] %vm1761, %v1745
      %1803 = vst.msk [vmem:[%s181 + $0x148] sm:$0xff] %vm1761, %v1746
      %1804 = vst.msk [vmem:[%s181 + $0x150] sm:$0xff] %vm1761, %v1747
      %1805 = vst.msk [vmem:[%s181 + $0x158] sm:$0xff] %vm1761, %v1748
      %1806 = vst.msk [vmem:[%s181 + $0x160] sm:$0xff] %vm1761, %v1749
      %1807 = vst.msk [vmem:[%s181 + $0x168] sm:$0xff] %vm1761, %v1750
      %1808 = vst.msk [vmem:[%s181 + $0x170] sm:$0xff] %vm1761, %v1751
      %1809 = vst.msk [vmem:[%s181 + $0x178] sm:$0xff] %vm1761, %v1752
      %1810 = vst.msk [vmem:[%s181 + $0x180] sm:$0xff] %vm1761, %v1753
      %1811 = vst.msk [vmem:[%s181 + $0x188] sm:$0xff] %vm1761, %v1754
      %1812 = vst.msk [vmem:[%s181 + $0x190] sm:$0xff] %vm1761, %v1755
      %1813 = vst.msk [vmem:[%s181 + $0x198] sm:$0xff] %vm1761, %v1756
      %1814 = vst.msk [vmem:[%s181 + $0x1a0] sm:$0xff] %vm1761, %v1757
      %1815 = vst.msk [vmem:[%s181 + $0x1a8] sm:$0xff] %vm1761, %v1758
      %1816 = vst.msk [vmem:[%s181 + $0x1b0] sm:$0xff] %vm1761, %v1759
      %1817 = vst.msk [vmem:[%s181 + $0x1b8] sm:$0xff] %vm1761, %v1760
      %p1818 = scmp.lt.s32.totalorder %s17, 1
      %s1819 = scalar_select %p1818, %s17, 1
      %p1820 = scmp.lt.s32.totalorder %s18, 0
      %s1821 = scalar_select %p1820, %s18, 0
      %s1822 = smul.addr %s1821, 56
      %s1823 = smul.addr %s1819, 56
      %s1824 = sadd.s32 %s1822, %s1823
      %s1825 = smul.addr %s1824, 8
      %s1826 = scalar_lea.vmem %s2, %s1825
      // Predicated region
      $region29: #{res_bottleneck_block3.3} parent=27 // pred_check
        %p1827 = pneg %p94
      $region30: #{res_bottleneck_block3.3} parent=27 // pred_check_branch
        %1829 = sbr.rel (%p1827) target = $region32
      $region31: #{res_bottleneck_block3.3} parent=27 // pred_region
        _
      $region32: #{res_bottleneck_block3.3} parent=27 // pred_fallthru
        _
    $region28: #{res_bottleneck_block3.3} parent=5 // pred_fallthru
      _
    %p1830 = scmp.le.s32.totalorder 2, %s8
    // Predicated region
    $region33: #{res_bottleneck_block3.3} parent=5 // pred_check
      %p1831 = pneg %p1830
    $region34: #{res_bottleneck_block3.3} parent=5 // pred_check_branch
      %1833 = sbr.rel (%p1831) target = $region36
    $region35: #{res_bottleneck_block3.3} parent=5 // pred_region
      %s1834 = ssub.s32 %s8, 2
      // Predicated region
      $region37: #{res_bottleneck_block3.3} parent=35 // pred_check
        %p1835 = pneg %p100
      $region38: #{res_bottleneck_block3.3} parent=35 // pred_check_branch
        %1837 = sbr.rel (%p1835) target = $region40
      $region39: #{res_bottleneck_block3.3} parent=35 // pred_region
        %p1838 = scmp.lt.s32.totalorder %s19, 1
        %s1839 = scalar_select %p1838, %s19, 1
        %p1840 = scmp.lt.s32.totalorder %s20, 0
        %s1841 = scalar_select %p1840, %s20, 0
        %s1842 = smul.addr %s1841, 56
        %s1843 = smul.addr %s1839, 56
        %s1844 = sadd.s32 %s1842, %s1843
        %s1845 = smul.addr %s1844, 8
        %s1846 = scalar_lea.vmem %s2, %s1845
      $region40: #{res_bottleneck_block3.3} parent=35 // pred_fallthru
        _
    $region36: #{res_bottleneck_block3.3} parent=5 // pred_fallthru
      _
  $region6: #{res_bottleneck_block3.3} parent=0 // loop_footer
    %s12 = sadd.s32 1, %s8
  $region7: #{res_bottleneck_block3.3} parent=0 // loop_footer_branch
    %7 = sbr.rel target = $region3
  $region8: #{res_bottleneck_block3.3} parent=0 // loop_exit
    _

// kernel: res_bottleneck_block3.5
$region0: #{res_bottleneck_block3.5}
  #allocation0 [shape = 'u32[]', space=smem, size = 0x4, offset = 0x4, fixed_abs, tag = 'smem constant byte address 0x4 - core index']
  #allocation1 [shape = 'u32[72,128]{1,0:T(1,128)}', space=vmem, size = 0x9000, scoped, tag = 'internal scratch']
  %s0 = inlined_call_operand.vmem [shape: bf16[2,448,256], index: 0, kind: input, shape index: {}]
  %s1 = inlined_call_operand.vmem [shape: f32[448,2], index: 1, kind: input, shape index: {}]
  %s2 = inlined_call_operand.vmem [shape: f32[2,448,256], index: 2, kind: output, shape index: {}]
  %s3 = sld [smem:[#allocation0]]
  $region41: #{res_bottleneck_block3.5} parent=0
    _
  %s5 = ssub.s32 1, %s3
  %s6 = scalar_select 0, %s5, %s3
  loop: start=0, step=1, limit=4
  $region2: #{res_bottleneck_block3.5} parent=0 // loop_pre_header
    _
  $region3: #{res_bottleneck_block3.5} parent=0 // loop_header
    %s8 = sphi 0, %s12
    %p9 = scmp.ge.s32.totalorder %s8, 4
    %s15 = sphi 0, %s27
    %s16 = sphi 0, %s23
    %s17 = sphi 0, %s15
    %s18 = sphi 0, %s16
    %s19 = sphi 0, %s17
    %s20 = sphi 0, %s18
    %s32 = sphi 0, %s34
    %s35 = sphi 0, %s32
    %s36 = sphi 0, %s35
    %s52 = sphi 0, %s36
    %s56 = sphi 0, %s56
    %s58 = sphi 0, %s56
    %s59 = sphi 0, %s58
    %s73 = sphi 0, %s59
    %s81 = sphi 0, %s83
    %s84 = sphi 0, %s81
    %s85 = sphi 0, %s84
    %s101 = sphi 0, %s85
  $region4: #{res_bottleneck_block3.5} parent=0 // loop_header_branch
    %11 = sbr.rel (%p9) target = $region8
  $region5: #{res_bottleneck_block3.5} parent=0 // loop_body
    %s13 = ssub.s32 %s8, 1
    %s14 = ssub.s32 %s8, 2
    %s21 = sadd.s32 1, %s16
    %p22 = scmp.ge.s32.totalorder %s21, 1
    %s23 = scalar_select %p22, 0, %s21
    %s24 = sadd.s32 1, %s15
    %s25 = scalar_select %p22, %s24, %s15
    %p26 = scmp.ge.s32.totalorder %s25, 2
    %s27 = scalar_select %p26, 0, %s25
    %s28 = ssub.s32 %s15, %s27
    %s29 = ssub.s32 %s16, %s23
    %s30 = sor.u32 %s28, %s29
    %p31 = scmp.eq.s32.totalorder %s30, 0
    %s33 = sadd.s32 %s32, 1
    %s34 = scalar_select %p31, %s32, %s33
    %p37 = pneg %p31
    %p38 = scmp.eq.s32.totalorder %s8, 1
    %p39 = por %p37, %p38
    %p40 = scmp.ne.s32.totalorder %s32, %s35
    %p41 = scmp.eq.s32.totalorder %s8, 0
    %p42 = por %p40, %p41
    %p43 = scmp.ne.s32.totalorder %s32, %s35
    %p44 = scmp.eq.s32.totalorder %s13, 1
    %p45 = por %p43, %p44
    %p46 = scmp.ne.s32.totalorder %s35, %s36
    %p47 = scmp.eq.s32.totalorder %s13, 0
    %p48 = por %p46, %p47
    %p49 = scmp.ne.s32.totalorder %s35, %s36
    %p50 = scmp.eq.s32.totalorder %s14, 1
    %p51 = por %p49, %p50
    %p53 = scmp.ne.s32.totalorder %s36, %s52
    %p54 = scmp.eq.s32.totalorder %s14, 0
    %p55 = por %p53, %p54
    %s57 = sadd.s32 %s56, 1
    %p60 = scmp.eq.s32.totalorder %s8, 1
    %p61 = scmp.ne.s32.totalorder %s56, %s58
    %p62 = scmp.eq.s32.totalorder %s8, 0
    %p63 = por %p61, %p62
    %p64 = scmp.ne.s32.totalorder %s56, %s58
    %p65 = scmp.eq.s32.totalorder %s13, 1
    %p66 = por %p64, %p65
    %p67 = scmp.ne.s32.totalorder %s58, %s59
    %p68 = scmp.eq.s32.totalorder %s13, 0
    %p69 = por %p67, %p68
    %p70 = scmp.ne.s32.totalorder %s58, %s59
    %p71 = scmp.eq.s32.totalorder %s14, 1
    %p72 = por %p70, %p71
    %p74 = scmp.ne.s32.totalorder %s59, %s73
    %p75 = scmp.eq.s32.totalorder %s14, 0
    %p76 = por %p74, %p75
    %s77 = ssub.s32 %s15, %s27
    %s78 = ssub.s32 %s16, %s23
    %s79 = sor.u32 %s77, %s78
    %p80 = scmp.eq.s32.totalorder %s79, 0
    %s82 = sadd.s32 %s81, 1
    %s83 = scalar_select %p80, %s81, %s82
    %p86 = pneg %p80
    %p87 = scmp.eq.s32.totalorder %s8, 1
    %p88 = por %p86, %p87
    %p89 = scmp.ne.s32.totalorder %s81, %s84
    %p90 = scmp.eq.s32.totalorder %s8, 0
    %p91 = por %p89, %p90
    %p92 = scmp.ne.s32.totalorder %s81, %s84
    %p93 = scmp.eq.s32.totalorder %s13, 1
    %p94 = por %p92, %p93
    %p95 = scmp.ne.s32.totalorder %s84, %s85
    %p96 = scmp.eq.s32.totalorder %s13, 0
    %p97 = por %p95, %p96
    %p98 = scmp.ne.s32.totalorder %s84, %s85
    %p99 = scmp.eq.s32.totalorder %s14, 1
    %p100 = por %p98, %p99
    %p102 = scmp.ne.s32.totalorder %s85, %s101
    %p103 = scmp.eq.s32.totalorder %s14, 0
    %p104 = por %p102, %p103
    %p105 = scmp.le.s32.totalorder 1, %s8
    %p106 = scmp.lt.s32.totalorder %s8, 3
    %p107 = pnand %p105, %p106
    %p108 = pneg %p107
    // Predicated region
    $region9: #{res_bottleneck_block3.5} parent=5 // pred_check
      _
    $region10: #{res_bottleneck_block3.5} parent=5 // pred_check_branch
      %110 = sbr.rel (%p107) target = $region12
    $region11: #{res_bottleneck_block3.5} parent=5 // pred_region
      %s111 = ssub.s32 %s8, 1
      // Predicated region
      $region13: #{res_bottleneck_block3.5} parent=11 // pred_check
        %p112 = pneg %p69
      $region14: #{res_bottleneck_block3.5} parent=11 // pred_check_branch
        %114 = sbr.rel (%p112) target = $region16
      $region15: #{res_bottleneck_block3.5} parent=11 // pred_region
        _
      $region16: #{res_bottleneck_block3.5} parent=11 // pred_fallthru
        _
    $region12: #{res_bottleneck_block3.5} parent=5 // pred_fallthru
      _
    %p115 = scmp.lt.s32.totalorder %s8, 2
    // Predicated region
    $region17: #{res_bottleneck_block3.5} parent=5 // pred_check
      %p116 = pneg %p115
    $region18: #{res_bottleneck_block3.5} parent=5 // pred_check_branch
      %118 = sbr.rel (%p116) target = $region20
    $region19: #{res_bottleneck_block3.5} parent=5 // pred_region
      // Predicated region
      $region21: #{res_bottleneck_block3.5} parent=19 // pred_check
        %p119 = pneg %p42
      $region22: #{res_bottleneck_block3.5} parent=19 // pred_check_branch
        %121 = sbr.rel (%p119) target = $region24
      $region23: #{res_bottleneck_block3.5} parent=19 // pred_region
        %s122 = smul.u32 2, %s16
        %p123 = scmp.lt.s32.totalorder %s15, 1
        %s124 = scalar_select %p123, %s15, 1
        %p125 = scmp.lt.s32.totalorder %s122, 1
        %s126 = scalar_select %p125, %s122, 1
        %s127 = smul.addr %s124, 112
        %s128 = sadd.s32 %s126, %s127
        %s129 = smul.addr %s128, 4
        %s130 = scalar_lea.vmem %s0, %s129
        %s131 = smul.u32 2, %s16
      $region24: #{res_bottleneck_block3.5} parent=19 // pred_fallthru
        _
    $region20: #{res_bottleneck_block3.5} parent=5 // pred_fallthru
      _
    %p132 = scmp.le.s32.totalorder 1, %s8
    %p133 = scmp.lt.s32.totalorder %s8, 3
    %p134 = pnand %p132, %p133
    %p135 = pneg %p134
    // Predicated region
    $region25: #{res_bottleneck_block3.5} parent=5 // pred_check
      _
    $region26: #{res_bottleneck_block3.5} parent=5 // pred_check_branch
      %137 = sbr.rel (%p134) target = $region28
    $region27: #{res_bottleneck_block3.5} parent=5 // pred_region
      %s138 = ssub.s32 %s8, 1
      %s139 = smul.u32 2, %s18
      %p140 = scmp.lt.s32.totalorder %s17, 1
      %s141 = scalar_select %p140, %s17, 1
      %p142 = scmp.lt.s32.totalorder %s139, 1
      %s143 = scalar_select %p142, %s139, 1
      %s144 = smul.addr %s141, 112
      %s145 = sadd.s32 %s143, %s144
      %s146 = smul.addr %s145, 4
      %s147 = scalar_lea.vmem %s0, %s146
      %p148 = pneg %p48
      %p149 = pneg %p45
      %p150 = pneg %p69
      %p151 = pneg %p66
      %p152 = pneg %p97
      %p153 = pneg %p94
      %s154 = smul.u32 2, %s18
      %p155 = scmp.lt.s32.totalorder %s17, 1
      %s156 = scalar_select %p155, %s17, 1
      %p157 = scmp.lt.s32.totalorder %s154, 1
      %s158 = scalar_select %p157, %s154, 1
      %s159 = smul.addr %s156, 112
      %s160 = sadd.s32 %s158, %s159
      %s161 = smul.addr %s160, 8
      %s162 = scalar_lea.vmem %s2, %s161
      %s163 = smul.u32 2, %s18
      %p164 = scmp.lt.s32.totalorder %s17, 1
      %s165 = scalar_select %p164, %s17, 1
      %p166 = scmp.lt.s32.totalorder %s163, 1
      %s167 = scalar_select %p166, %s163, 1
      %s168 = smul.addr %s165, 112
      %s169 = sadd.s32 %s167, %s168
      %s170 = smul.addr %s169, 4
      %s171 = scalar_lea.vmem %s0, %s170
      %s172 = smul.u32 2, %s18
      %s173 = smul.u32 2, %s18
      %p174 = scmp.lt.s32.totalorder %s17, 1
      %s175 = scalar_select %p174, %s17, 1
      %p176 = scmp.lt.s32.totalorder %s173, 1
      %s177 = scalar_select %p176, %s173, 1
      %s178 = smul.addr %s175, 112
      %s179 = sadd.s32 %s177, %s178
      %s180 = smul.addr %s179, 8
      %s181 = scalar_lea.vmem %s2, %s180
      %s182 = smul.u32 2, %s18
      %v183 = vld [vmem:[%s171] sm:$0xff]
      %v184 = vld [vmem:[%s171 + $0x8] sm:$0xff]
      %v185 = vld [vmem:[%s171 + $0x10] sm:$0xff]
      %v186 = vld [vmem:[%s171 + $0x18] sm:$0xff]
      %v187 = vld [vmem:[%s171 + $0x20] sm:$0xff]
      %v188 = vld [vmem:[%s171 + $0x28] sm:$0xff]
      %v189 = vld [vmem:[%s171 + $0x30] sm:$0xff]
      %v190 = vld [vmem:[%s171 + $0x38] sm:$0xff]
      %v191 = vld [vmem:[%s171 + $0x40] sm:$0xff]
      %v192 = vld [vmem:[%s171 + $0x48] sm:$0xff]
      %v193 = vld [vmem:[%s171 + $0x50] sm:$0xff]
      %v194 = vld [vmem:[%s171 + $0x58] sm:$0xff]
      %v195 = vld [vmem:[%s171 + $0x60] sm:$0xff]
      %v196 = vld [vmem:[%s171 + $0x68] sm:$0xff]
      %v197 = vld [vmem:[%s171 + $0x70] sm:$0xff]
      %v198 = vld [vmem:[%s171 + $0x78] sm:$0xff]
      %v199 = vld [vmem:[%s171 + $0x80] sm:$0xff]
      %v200 = vld [vmem:[%s171 + $0x88] sm:$0xff]
      %v201 = vld [vmem:[%s171 + $0x90] sm:$0xff]
      %v202 = vld [vmem:[%s171 + $0x98] sm:$0xff]
      %v203 = vld [vmem:[%s171 + $0xa0] sm:$0xff]
      %v204 = vld [vmem:[%s171 + $0xa8] sm:$0xff]
      %v205 = vld [vmem:[%s171 + $0xb0] sm:$0xff]
      %v206 = vld [vmem:[%s171 + $0xb8] sm:$0xff]
      %v207 = vld [vmem:[%s171 + $0xc0] sm:$0xff]
      %v208 = vld [vmem:[%s171 + $0xc8] sm:$0xff]
      %v209 = vld [vmem:[%s171 + $0xd0] sm:$0xff]
      %v210 = vld [vmem:[%s171 + $0xd8] sm:$0xff]
      %v211 = vld [vmem:[%s171 + $0xe0] sm:$0xff]
      %v212 = vld [vmem:[%s171 + $0xe8] sm:$0xff]
      %v213 = vld [vmem:[%s171 + $0xf0] sm:$0xff]
      %v214 = vld [vmem:[%s171 + $0xf8] sm:$0xff]
      %v215 = vld [vmem:[%s171 + $0x100] sm:$0xff]
      %v216 = vld [vmem:[%s171 + $0x108] sm:$0xff]
      %v217 = vld [vmem:[%s171 + $0x110] sm:$0xff]
      %v218 = vld [vmem:[%s171 + $0x118] sm:$0xff]
      %v219 = vld [vmem:[%s171 + $0x120] sm:$0xff]
      %v220 = vld [vmem:[%s171 + $0x128] sm:$0xff]
      %v221 = vld [vmem:[%s171 + $0x130] sm:$0xff]
      %v222 = vld [vmem:[%s171 + $0x138] sm:$0xff]
      %v223 = vld [vmem:[%s171 + $0x140] sm:$0xff]
      %v224 = vld [vmem:[%s171 + $0x148] sm:$0xff]
      %v225 = vld [vmem:[%s171 + $0x150] sm:$0xff]
      %v226 = vld [vmem:[%s171 + $0x158] sm:$0xff]
      %v227 = vld [vmem:[%s171 + $0x160] sm:$0xff]
      %v228 = vld [vmem:[%s171 + $0x168] sm:$0xff]
      %v229 = vld [vmem:[%s171 + $0x170] sm:$0xff]
      %v230 = vld [vmem:[%s171 + $0x178] sm:$0xff]
      %v231 = vld [vmem:[%s171 + $0x180] sm:$0xff]
      %v232 = vld [vmem:[%s171 + $0x188] sm:$0xff]
      %v233 = vld [vmem:[%s171 + $0x190] sm:$0xff]
      %v234 = vld [vmem:[%s171 + $0x198] sm:$0xff]
      %v235 = vld [vmem:[%s171 + $0x1a0] sm:$0xff]
      %v236 = vld [vmem:[%s171 + $0x1a8] sm:$0xff]
      %v237 = vld [vmem:[%s171 + $0x1b0] sm:$0xff]
      %v238 = vld [vmem:[%s171 + $0x1b8] sm:$0xff]
      %v239 = vunpack.c.l.bf16 %v183
      %v240 = vunpack.c.h.bf16 %v183
      %v241 = vunpack.c.l.bf16 %v184
      %v242 = vunpack.c.h.bf16 %v184
      %v243 = vunpack.c.l.bf16 %v185
      %v244 = vunpack.c.h.bf16 %v185
      %v245 = vunpack.c.l.bf16 %v186
      %v246 = vunpack.c.h.bf16 %v186
      %v247 = vunpack.c.l.bf16 %v187
      %v248 = vunpack.c.h.bf16 %v187
      %v249 = vunpack.c.l.bf16 %v188
      %v250 = vunpack.c.h.bf16 %v188
      %v251 = vunpack.c.l.bf16 %v189
      %v252 = vunpack.c.h.bf16 %v189
      %v253 = vunpack.c.l.bf16 %v190
      %v254 = vunpack.c.h.bf16 %v190
      %v255 = vunpack.c.l.bf16 %v191
      %v256 = vunpack.c.h.bf16 %v191
      %v257 = vunpack.c.l.bf16 %v192
      %v258 = vunpack.c.h.bf16 %v192
      %v259 = vunpack.c.l.bf16 %v193
      %v260 = vunpack.c.h.bf16 %v193
      %v261 = vunpack.c.l.bf16 %v194
      %v262 = vunpack.c.h.bf16 %v194
      %v263 = vunpack.c.l.bf16 %v195
      %v264 = vunpack.c.h.bf16 %v195
      %v265 = vunpack.c.l.bf16 %v196
      %v266 = vunpack.c.h.bf16 %v196
      %v267 = vunpack.c.l.bf16 %v197
      %v268 = vunpack.c.h.bf16 %v197
      %v269 = vunpack.c.l.bf16 %v198
      %v270 = vunpack.c.h.bf16 %v198
      %v271 = vunpack.c.l.bf16 %v199
      %v272 = vunpack.c.h.bf16 %v199
      %v273 = vunpack.c.l.bf16 %v200
      %v274 = vunpack.c.h.bf16 %v200
      %v275 = vunpack.c.l.bf16 %v201
      %v276 = vunpack.c.h.bf16 %v201
      %v277 = vunpack.c.l.bf16 %v202
      %v278 = vunpack.c.h.bf16 %v202
      %v279 = vunpack.c.l.bf16 %v203
      %v280 = vunpack.c.h.bf16 %v203
      %v281 = vunpack.c.l.bf16 %v204
      %v282 = vunpack.c.h.bf16 %v204
      %v283 = vunpack.c.l.bf16 %v205
      %v284 = vunpack.c.h.bf16 %v205
      %v285 = vunpack.c.l.bf16 %v206
      %v286 = vunpack.c.h.bf16 %v206
      %v287 = vunpack.c.l.bf16 %v207
      %v288 = vunpack.c.h.bf16 %v207
      %v289 = vunpack.c.l.bf16 %v208
      %v290 = vunpack.c.h.bf16 %v208
      %v291 = vunpack.c.l.bf16 %v209
      %v292 = vunpack.c.h.bf16 %v209
      %v293 = vunpack.c.l.bf16 %v210
      %v294 = vunpack.c.h.bf16 %v210
      %v295 = vunpack.c.l.bf16 %v211
      %v296 = vunpack.c.h.bf16 %v211
      %v297 = vunpack.c.l.bf16 %v212
      %v298 = vunpack.c.h.bf16 %v212
      %v299 = vunpack.c.l.bf16 %v213
      %v300 = vunpack.c.h.bf16 %v213
      %v301 = vunpack.c.l.bf16 %v214
      %v302 = vunpack.c.h.bf16 %v214
      %v303 = vunpack.c.l.bf16 %v215
      %v304 = vunpack.c.h.bf16 %v215
      %v305 = vunpack.c.l.bf16 %v216
      %v306 = vunpack.c.h.bf16 %v216
      %v307 = vunpack.c.l.bf16 %v217
      %v308 = vunpack.c.h.bf16 %v217
      %v309 = vunpack.c.l.bf16 %v218
      %v310 = vunpack.c.h.bf16 %v218
      %v311 = vunpack.c.l.bf16 %v219
      %v312 = vunpack.c.h.bf16 %v219
      %v313 = vunpack.c.l.bf16 %v220
      %v314 = vunpack.c.h.bf16 %v220
      %v315 = vunpack.c.l.bf16 %v221
      %v316 = vunpack.c.h.bf16 %v221
      %v317 = vunpack.c.l.bf16 %v222
      %v318 = vunpack.c.h.bf16 %v222
      %v319 = vunpack.c.l.bf16 %v223
      %v320 = vunpack.c.h.bf16 %v223
      %v321 = vunpack.c.l.bf16 %v224
      %v322 = vunpack.c.h.bf16 %v224
      %v323 = vunpack.c.l.bf16 %v225
      %v324 = vunpack.c.h.bf16 %v225
      %v325 = vunpack.c.l.bf16 %v226
      %v326 = vunpack.c.h.bf16 %v226
      %v327 = vunpack.c.l.bf16 %v227
      %v328 = vunpack.c.h.bf16 %v227
      %v329 = vunpack.c.l.bf16 %v228
      %v330 = vunpack.c.h.bf16 %v228
      %v331 = vunpack.c.l.bf16 %v229
      %v332 = vunpack.c.h.bf16 %v229
      %v333 = vunpack.c.l.bf16 %v230
      %v334 = vunpack.c.h.bf16 %v230
      %v335 = vunpack.c.l.bf16 %v231
      %v336 = vunpack.c.h.bf16 %v231
      %v337 = vunpack.c.l.bf16 %v232
      %v338 = vunpack.c.h.bf16 %v232
      %v339 = vunpack.c.l.bf16 %v233
      %v340 = vunpack.c.h.bf16 %v233
      %v341 = vunpack.c.l.bf16 %v234
      %v342 = vunpack.c.h.bf16 %v234
      %v343 = vunpack.c.l.bf16 %v235
      %v344 = vunpack.c.h.bf16 %v235
      %v345 = vunpack.c.l.bf16 %v236
      %v346 = vunpack.c.h.bf16 %v236
      %v347 = vunpack.c.l.bf16 %v237
      %v348 = vunpack.c.h.bf16 %v237
      %v349 = vunpack.c.l.bf16 %v238
      %v350 = vunpack.c.h.bf16 %v238
      %v351 = vld [vmem:[%s1] sm:$0xff]
      %v352 = vld [vmem:[%s1 + $0x8] sm:$0xff]
      %v353 = vld [vmem:[%s1 + $0x10] sm:$0xff]
      %v354 = vld [vmem:[%s1 + $0x18] sm:$0xff]
      %v355 = vld [vmem:[%s1 + $0x20] sm:$0xff]
      %v356 = vld [vmem:[%s1 + $0x28] sm:$0xff]
      %v357 = vld [vmem:[%s1 + $0x30] sm:$0xff]
      %v358 = vld [vmem:[%s1 + $0x38] sm:$0xff]
      %v359 = vld [vmem:[%s1 + $0x40] sm:$0xff]
      %v360 = vld [vmem:[%s1 + $0x48] sm:$0xff]
      %v361 = vld [vmem:[%s1 + $0x50] sm:$0xff]
      %v362 = vld [vmem:[%s1 + $0x58] sm:$0xff]
      %v363 = vld [vmem:[%s1 + $0x60] sm:$0xff]
      %v364 = vld [vmem:[%s1 + $0x68] sm:$0xff]
      %v365 = vld [vmem:[%s1 + $0x70] sm:$0xff]
      %v366 = vld [vmem:[%s1 + $0x78] sm:$0xff]
      %v367 = vld [vmem:[%s1 + $0x80] sm:$0xff]
      %v368 = vld [vmem:[%s1 + $0x88] sm:$0xff]
      %v369 = vld [vmem:[%s1 + $0x90] sm:$0xff]
      %v370 = vld [vmem:[%s1 + $0x98] sm:$0xff]
      %v371 = vld [vmem:[%s1 + $0xa0] sm:$0xff]
      %v372 = vld [vmem:[%s1 + $0xa8] sm:$0xff]
      %v373 = vld [vmem:[%s1 + $0xb0] sm:$0xff]
      %v374 = vld [vmem:[%s1 + $0xb8] sm:$0xff]
      %v375 = vld [vmem:[%s1 + $0xc0] sm:$0xff]
      %v376 = vld [vmem:[%s1 + $0xc8] sm:$0xff]
      %v377 = vld [vmem:[%s1 + $0xd0] sm:$0xff]
      %v378 = vld [vmem:[%s1 + $0xd8] sm:$0xff]
      %v379 = vld [vmem:[%s1 + $0xe0] sm:$0xff]
      %v380 = vld [vmem:[%s1 + $0xe8] sm:$0xff]
      %v381 = vld [vmem:[%s1 + $0xf0] sm:$0xff]
      %v382 = vld [vmem:[%s1 + $0xf8] sm:$0xff]
      %v383 = vld [vmem:[%s1 + $0x100] sm:$0xff]
      %v384 = vld [vmem:[%s1 + $0x108] sm:$0xff]
      %v385 = vld [vmem:[%s1 + $0x110] sm:$0xff]
      %v386 = vld [vmem:[%s1 + $0x118] sm:$0xff]
      %v387 = vld [vmem:[%s1 + $0x120] sm:$0xff]
      %v388 = vld [vmem:[%s1 + $0x128] sm:$0xff]
      %v389 = vld [vmem:[%s1 + $0x130] sm:$0xff]
      %v390 = vld [vmem:[%s1 + $0x138] sm:$0xff]
      %v391 = vld [vmem:[%s1 + $0x140] sm:$0xff]
      %v392 = vld [vmem:[%s1 + $0x148] sm:$0xff]
      %v393 = vld [vmem:[%s1 + $0x150] sm:$0xff]
      %v394 = vld [vmem:[%s1 + $0x158] sm:$0xff]
      %v395 = vld [vmem:[%s1 + $0x160] sm:$0xff]
      %v396 = vld [vmem:[%s1 + $0x168] sm:$0xff]
      %v397 = vld [vmem:[%s1 + $0x170] sm:$0xff]
      %v398 = vld [vmem:[%s1 + $0x178] sm:$0xff]
      %v399 = vld [vmem:[%s1 + $0x180] sm:$0xff]
      %v400 = vld [vmem:[%s1 + $0x188] sm:$0xff]
      %v401 = vld [vmem:[%s1 + $0x190] sm:$0xff]
      %v402 = vld [vmem:[%s1 + $0x198] sm:$0xff]
      %v403 = vld [vmem:[%s1 + $0x1a0] sm:$0xff]
      %v404 = vld [vmem:[%s1 + $0x1a8] sm:$0xff]
      %v405 = vld [vmem:[%s1 + $0x1b0] sm:$0xff]
      %v406 = vld [vmem:[%s1 + $0x1b8] sm:$0xff]
      %408 = vset.pattern.permute.xlu0 0
      %409 = vperm.xlu0 %408, %v351
      %v410 = vpop.permute.xlu0 %409
      %413 = vset.pattern.permute.xlu0 0
      %414 = vperm.xlu0 %413, %v352
      %v415 = vpop.permute.xlu0 %414
      %418 = vset.pattern.permute.xlu0 0
      %419 = vperm.xlu0 %418, %v353
      %v420 = vpop.permute.xlu0 %419
      %423 = vset.pattern.permute.xlu0 0
      %424 = vperm.xlu0 %423, %v354
      %v425 = vpop.permute.xlu0 %424
      %428 = vset.pattern.permute.xlu0 0
      %429 = vperm.xlu0 %428, %v355
      %v430 = vpop.permute.xlu0 %429
      %433 = vset.pattern.permute.xlu0 0
      %434 = vperm.xlu0 %433, %v356
      %v435 = vpop.permute.xlu0 %434
      %438 = vset.pattern.permute.xlu0 0
      %439 = vperm.xlu0 %438, %v357
      %v440 = vpop.permute.xlu0 %439
      %443 = vset.pattern.permute.xlu0 0
      %444 = vperm.xlu0 %443, %v358
      %v445 = vpop.permute.xlu0 %444
      %448 = vset.pattern.permute.xlu0 0
      %449 = vperm.xlu0 %448, %v359
      %v450 = vpop.permute.xlu0 %449
      %453 = vset.pattern.permute.xlu0 0
      %454 = vperm.xlu0 %453, %v360
      %v455 = vpop.permute.xlu0 %454
      %458 = vset.pattern.permute.xlu0 0
      %459 = vperm.xlu0 %458, %v361
      %v460 = vpop.permute.xlu0 %459
      %463 = vset.pattern.permute.xlu0 0
      %464 = vperm.xlu0 %463, %v362
      %v465 = vpop.permute.xlu0 %464
      %468 = vset.pattern.permute.xlu0 0
      %469 = vperm.xlu0 %468, %v363
      %v470 = vpop.permute.xlu0 %469
      %473 = vset.pattern.permute.xlu0 0
      %474 = vperm.xlu0 %473, %v364
      %v475 = vpop.permute.xlu0 %474
      %478 = vset.pattern.permute.xlu0 0
      %479 = vperm.xlu0 %478, %v365
      %v480 = vpop.permute.xlu0 %479
      %483 = vset.pattern.permute.xlu0 0
      %484 = vperm.xlu0 %483, %v366
      %v485 = vpop.permute.xlu0 %484
      %488 = vset.pattern.permute.xlu0 0
      %489 = vperm.xlu0 %488, %v367
      %v490 = vpop.permute.xlu0 %489
      %493 = vset.pattern.permute.xlu0 0
      %494 = vperm.xlu0 %493, %v368
      %v495 = vpop.permute.xlu0 %494
      %498 = vset.pattern.permute.xlu0 0
      %499 = vperm.xlu0 %498, %v369
      %v500 = vpop.permute.xlu0 %499
      %503 = vset.pattern.permute.xlu0 0
      %504 = vperm.xlu0 %503, %v370
      %v505 = vpop.permute.xlu0 %504
      %508 = vset.pattern.permute.xlu0 0
      %509 = vperm.xlu0 %508, %v371
      %v510 = vpop.permute.xlu0 %509
      %513 = vset.pattern.permute.xlu0 0
      %514 = vperm.xlu0 %513, %v372
      %v515 = vpop.permute.xlu0 %514
      %518 = vset.pattern.permute.xlu0 0
      %519 = vperm.xlu0 %518, %v373
      %v520 = vpop.permute.xlu0 %519
      %523 = vset.pattern.permute.xlu0 0
      %524 = vperm.xlu0 %523, %v374
      %v525 = vpop.permute.xlu0 %524
      %528 = vset.pattern.permute.xlu0 0
      %529 = vperm.xlu0 %528, %v375
      %v530 = vpop.permute.xlu0 %529
      %533 = vset.pattern.permute.xlu0 0
      %534 = vperm.xlu0 %533, %v376
      %v535 = vpop.permute.xlu0 %534
      %538 = vset.pattern.permute.xlu0 0
      %539 = vperm.xlu0 %538, %v377
      %v540 = vpop.permute.xlu0 %539
      %543 = vset.pattern.permute.xlu0 0
      %544 = vperm.xlu0 %543, %v378
      %v545 = vpop.permute.xlu0 %544
      %548 = vset.pattern.permute.xlu0 0
      %549 = vperm.xlu0 %548, %v379
      %v550 = vpop.permute.xlu0 %549
      %553 = vset.pattern.permute.xlu0 0
      %554 = vperm.xlu0 %553, %v380
      %v555 = vpop.permute.xlu0 %554
      %558 = vset.pattern.permute.xlu0 0
      %559 = vperm.xlu0 %558, %v381
      %v560 = vpop.permute.xlu0 %559
      %563 = vset.pattern.permute.xlu0 0
      %564 = vperm.xlu0 %563, %v382
      %v565 = vpop.permute.xlu0 %564
      %568 = vset.pattern.permute.xlu0 0
      %569 = vperm.xlu0 %568, %v383
      %v570 = vpop.permute.xlu0 %569
      %573 = vset.pattern.permute.xlu0 0
      %574 = vperm.xlu0 %573, %v384
      %v575 = vpop.permute.xlu0 %574
      %578 = vset.pattern.permute.xlu0 0
      %579 = vperm.xlu0 %578, %v385
      %v580 = vpop.permute.xlu0 %579
      %583 = vset.pattern.permute.xlu0 0
      %584 = vperm.xlu0 %583, %v386
      %v585 = vpop.permute.xlu0 %584
      %588 = vset.pattern.permute.xlu0 0
      %589 = vperm.xlu0 %588, %v387
      %v590 = vpop.permute.xlu0 %589
      %593 = vset.pattern.permute.xlu0 0
      %594 = vperm.xlu0 %593, %v388
      %v595 = vpop.permute.xlu0 %594
      %598 = vset.pattern.permute.xlu0 0
      %599 = vperm.xlu0 %598, %v389
      %v600 = vpop.permute.xlu0 %599
      %603 = vset.pattern.permute.xlu0 0
      %604 = vperm.xlu0 %603, %v390
      %v605 = vpop.permute.xlu0 %604
      %608 = vset.pattern.permute.xlu0 0
      %609 = vperm.xlu0 %608, %v391
      %v610 = vpop.permute.xlu0 %609
      %613 = vset.pattern.permute.xlu0 0
      %614 = vperm.xlu0 %613, %v392
      %v615 = vpop.permute.xlu0 %614
      %618 = vset.pattern.permute.xlu0 0
      %619 = vperm.xlu0 %618, %v393
      %v620 = vpop.permute.xlu0 %619
      %623 = vset.pattern.permute.xlu0 0
      %624 = vperm.xlu0 %623, %v394
      %v625 = vpop.permute.xlu0 %624
      %628 = vset.pattern.permute.xlu0 0
      %629 = vperm.xlu0 %628, %v395
      %v630 = vpop.permute.xlu0 %629
      %633 = vset.pattern.permute.xlu0 0
      %634 = vperm.xlu0 %633, %v396
      %v635 = vpop.permute.xlu0 %634
      %638 = vset.pattern.permute.xlu0 0
      %639 = vperm.xlu0 %638, %v397
      %v640 = vpop.permute.xlu0 %639
      %643 = vset.pattern.permute.xlu0 0
      %644 = vperm.xlu0 %643, %v398
      %v645 = vpop.permute.xlu0 %644
      %648 = vset.pattern.permute.xlu0 0
      %649 = vperm.xlu0 %648, %v399
      %v650 = vpop.permute.xlu0 %649
      %653 = vset.pattern.permute.xlu0 0
      %654 = vperm.xlu0 %653, %v400
      %v655 = vpop.permute.xlu0 %654
      %658 = vset.pattern.permute.xlu0 0
      %659 = vperm.xlu0 %658, %v401
      %v660 = vpop.permute.xlu0 %659
      %663 = vset.pattern.permute.xlu0 0
      %664 = vperm.xlu0 %663, %v402
      %v665 = vpop.permute.xlu0 %664
      %668 = vset.pattern.permute.xlu0 0
      %669 = vperm.xlu0 %668, %v403
      %v670 = vpop.permute.xlu0 %669
      %673 = vset.pattern.permute.xlu0 0
      %674 = vperm.xlu0 %673, %v404
      %v675 = vpop.permute.xlu0 %674
      %678 = vset.pattern.permute.xlu0 0
      %679 = vperm.xlu0 %678, %v405
      %v680 = vpop.permute.xlu0 %679
      %683 = vset.pattern.permute.xlu0 0
      %684 = vperm.xlu0 %683, %v406
      %v685 = vpop.permute.xlu0 %684
      %v687 = vmul.f32 %v239, %v410
      %v688 = vmul.f32 %v240, %v410
      %v689 = vmul.f32 %v241, %v415
      %v690 = vmul.f32 %v242, %v415
      %v691 = vmul.f32 %v243, %v420
      %v692 = vmul.f32 %v244, %v420
      %v693 = vmul.f32 %v245, %v425
      %v694 = vmul.f32 %v246, %v425
      %v695 = vmul.f32 %v247, %v430
      %v696 = vmul.f32 %v248, %v430
      %v697 = vmul.f32 %v249, %v435
      %v698 = vmul.f32 %v250, %v435
      %v699 = vmul.f32 %v251, %v440
      %v700 = vmul.f32 %v252, %v440
      %v701 = vmul.f32 %v253, %v445
      %v702 = vmul.f32 %v254, %v445
      %v703 = vmul.f32 %v255, %v450
      %v704 = vmul.f32 %v256, %v450
      %v705 = vmul.f32 %v257, %v455
      %v706 = vmul.f32 %v258, %v455
      %v707 = vmul.f32 %v259, %v460
      %v708 = vmul.f32 %v260, %v460
      %v709 = vmul.f32 %v261, %v465
      %v710 = vmul.f32 %v262, %v465
      %v711 = vmul.f32 %v263, %v470
      %v712 = vmul.f32 %v264, %v470
      %v713 = vmul.f32 %v265, %v475
      %v714 = vmul.f32 %v266, %v475
      %v715 = vmul.f32 %v267, %v480
      %v716 = vmul.f32 %v268, %v480
      %v717 = vmul.f32 %v269, %v485
      %v718 = vmul.f32 %v270, %v485
      %v719 = vmul.f32 %v271, %v490
      %v720 = vmul.f32 %v272, %v490
      %v721 = vmul.f32 %v273, %v495
      %v722 = vmul.f32 %v274, %v495
      %v723 = vmul.f32 %v275, %v500
      %v724 = vmul.f32 %v276, %v500
      %v725 = vmul.f32 %v277, %v505
      %v726 = vmul.f32 %v278, %v505
      %v727 = vmul.f32 %v279, %v510
      %v728 = vmul.f32 %v280, %v510
      %v729 = vmul.f32 %v281, %v515
      %v730 = vmul.f32 %v282, %v515
      %v731 = vmul.f32 %v283, %v520
      %v732 = vmul.f32 %v284, %v520
      %v733 = vmul.f32 %v285, %v525
      %v734 = vmul.f32 %v286, %v525
      %v735 = vmul.f32 %v287, %v530
      %v736 = vmul.f32 %v288, %v530
      %v737 = vmul.f32 %v289, %v535
      %v738 = vmul.f32 %v290, %v535
      %v739 = vmul.f32 %v291, %v540
      %v740 = vmul.f32 %v292, %v540
      %v741 = vmul.f32 %v293, %v545
      %v742 = vmul.f32 %v294, %v545
      %v743 = vmul.f32 %v295, %v550
      %v744 = vmul.f32 %v296, %v550
      %v745 = vmul.f32 %v297, %v555
      %v746 = vmul.f32 %v298, %v555
      %v747 = vmul.f32 %v299, %v560
      %v748 = vmul.f32 %v300, %v560
      %v749 = vmul.f32 %v301, %v565
      %v750 = vmul.f32 %v302, %v565
      %v751 = vmul.f32 %v303, %v570
      %v752 = vmul.f32 %v304, %v570
      %v753 = vmul.f32 %v305, %v575
      %v754 = vmul.f32 %v306, %v575
      %v755 = vmul.f32 %v307, %v580
      %v756 = vmul.f32 %v308, %v580
      %v757 = vmul.f32 %v309, %v585
      %v758 = vmul.f32 %v310, %v585
      %v759 = vmul.f32 %v311, %v590
      %v760 = vmul.f32 %v312, %v590
      %v761 = vmul.f32 %v313, %v595
      %v762 = vmul.f32 %v314, %v595
      %v763 = vmul.f32 %v315, %v600
      %v764 = vmul.f32 %v316, %v600
      %v765 = vmul.f32 %v317, %v605
      %v766 = vmul.f32 %v318, %v605
      %v767 = vmul.f32 %v319, %v610
      %v768 = vmul.f32 %v320, %v610
      %v769 = vmul.f32 %v321, %v615
      %v770 = vmul.f32 %v322, %v615
      %v771 = vmul.f32 %v323, %v620
      %v772 = vmul.f32 %v324, %v620
      %v773 = vmul.f32 %v325, %v625
      %v774 = vmul.f32 %v326, %v625
      %v775 = vmul.f32 %v327, %v630
      %v776 = vmul.f32 %v328, %v630
      %v777 = vmul.f32 %v329, %v635
      %v778 = vmul.f32 %v330, %v635
      %v779 = vmul.f32 %v331, %v640
      %v780 = vmul.f32 %v332, %v640
      %v781 = vmul.f32 %v333, %v645
      %v782 = vmul.f32 %v334, %v645
      %v783 = vmul.f32 %v335, %v650
      %v784 = vmul.f32 %v336, %v650
      %v785 = vmul.f32 %v337, %v655
      %v786 = vmul.f32 %v338, %v655
      %v787 = vmul.f32 %v339, %v660
      %v788 = vmul.f32 %v340, %v660
      %v789 = vmul.f32 %v341, %v665
      %v790 = vmul.f32 %v342, %v665
      %v791 = vmul.f32 %v343, %v670
      %v792 = vmul.f32 %v344, %v670
      %v793 = vmul.f32 %v345, %v675
      %v794 = vmul.f32 %v346, %v675
      %v795 = vmul.f32 %v347, %v680
      %v796 = vmul.f32 %v348, %v680
      %v797 = vmul.f32 %v349, %v685
      %v798 = vmul.f32 %v350, %v685
      %799 = vset.pattern.permute.xlu0 1
      %800 = vperm.xlu0 %799, %v351
      %v801 = vpop.permute.xlu0 %800
      %803 = vset.pattern.permute.xlu0 1
      %804 = vperm.xlu0 %803, %v352
      %v805 = vpop.permute.xlu0 %804
      %807 = vset.pattern.permute.xlu0 1
      %808 = vperm.xlu0 %807, %v353
      %v809 = vpop.permute.xlu0 %808
      %811 = vset.pattern.permute.xlu0 1
      %812 = vperm.xlu0 %811, %v354
      %v813 = vpop.permute.xlu0 %812
      %815 = vset.pattern.permute.xlu0 1
      %816 = vperm.xlu0 %815, %v355
      %v817 = vpop.permute.xlu0 %816
      %819 = vset.pattern.permute.xlu0 1
      %820 = vperm.xlu0 %819, %v356
      %v821 = vpop.permute.xlu0 %820
      %823 = vset.pattern.permute.xlu0 1
      %824 = vperm.xlu0 %823, %v357
      %v825 = vpop.permute.xlu0 %824
      %827 = vset.pattern.permute.xlu0 1
      %828 = vperm.xlu0 %827, %v358
      %v829 = vpop.permute.xlu0 %828
      %831 = vset.pattern.permute.xlu0 1
      %832 = vperm.xlu0 %831, %v359
      %v833 = vpop.permute.xlu0 %832
      %835 = vset.pattern.permute.xlu0 1
      %836 = vperm.xlu0 %835, %v360
      %v837 = vpop.permute.xlu0 %836
      %839 = vset.pattern.permute.xlu0 1
      %840 = vperm.xlu0 %839, %v361
      %v841 = vpop.permute.xlu0 %840
      %843 = vset.pattern.permute.xlu0 1
      %844 = vperm.xlu0 %843, %v362
      %v845 = vpop.permute.xlu0 %844
      %847 = vset.pattern.permute.xlu0 1
      %848 = vperm.xlu0 %847, %v363
      %v849 = vpop.permute.xlu0 %848
      %851 = vset.pattern.permute.xlu0 1
      %852 = vperm.xlu0 %851, %v364
      %v853 = vpop.permute.xlu0 %852
      %855 = vset.pattern.permute.xlu0 1
      %856 = vperm.xlu0 %855, %v365
      %v857 = vpop.permute.xlu0 %856
      %859 = vset.pattern.permute.xlu0 1
      %860 = vperm.xlu0 %859, %v366
      %v861 = vpop.permute.xlu0 %860
      %863 = vset.pattern.permute.xlu0 1
      %864 = vperm.xlu0 %863, %v367
      %v865 = vpop.permute.xlu0 %864
      %867 = vset.pattern.permute.xlu0 1
      %868 = vperm.xlu0 %867, %v368
      %v869 = vpop.permute.xlu0 %868
      %871 = vset.pattern.permute.xlu0 1
      %872 = vperm.xlu0 %871, %v369
      %v873 = vpop.permute.xlu0 %872
      %875 = vset.pattern.permute.xlu0 1
      %876 = vperm.xlu0 %875, %v370
      %v877 = vpop.permute.xlu0 %876
      %879 = vset.pattern.permute.xlu0 1
      %880 = vperm.xlu0 %879, %v371
      %v881 = vpop.permute.xlu0 %880
      %883 = vset.pattern.permute.xlu0 1
      %884 = vperm.xlu0 %883, %v372
      %v885 = vpop.permute.xlu0 %884
      %887 = vset.pattern.permute.xlu0 1
      %888 = vperm.xlu0 %887, %v373
      %v889 = vpop.permute.xlu0 %888
      %891 = vset.pattern.permute.xlu0 1
      %892 = vperm.xlu0 %891, %v374
      %v893 = vpop.permute.xlu0 %892
      %895 = vset.pattern.permute.xlu0 1
      %896 = vperm.xlu0 %895, %v375
      %v897 = vpop.permute.xlu0 %896
      %899 = vset.pattern.permute.xlu0 1
      %900 = vperm.xlu0 %899, %v376
      %v901 = vpop.permute.xlu0 %900
      %903 = vset.pattern.permute.xlu0 1
      %904 = vperm.xlu0 %903, %v377
      %v905 = vpop.permute.xlu0 %904
      %907 = vset.pattern.permute.xlu0 1
      %908 = vperm.xlu0 %907, %v378
      %v909 = vpop.permute.xlu0 %908
      %911 = vset.pattern.permute.xlu0 1
      %912 = vperm.xlu0 %911, %v379
      %v913 = vpop.permute.xlu0 %912
      %915 = vset.pattern.permute.xlu0 1
      %916 = vperm.xlu0 %915, %v380
      %v917 = vpop.permute.xlu0 %916
      %919 = vset.pattern.permute.xlu0 1
      %920 = vperm.xlu0 %919, %v381
      %v921 = vpop.permute.xlu0 %920
      %923 = vset.pattern.permute.xlu0 1
      %924 = vperm.xlu0 %923, %v382
      %v925 = vpop.permute.xlu0 %924
      %927 = vset.pattern.permute.xlu0 1
      %928 = vperm.xlu0 %927, %v383
      %v929 = vpop.permute.xlu0 %928
      %931 = vset.pattern.permute.xlu0 1
      %932 = vperm.xlu0 %931, %v384
      %v933 = vpop.permute.xlu0 %932
      %935 = vset.pattern.permute.xlu0 1
      %936 = vperm.xlu0 %935, %v385
      %v937 = vpop.permute.xlu0 %936
      %939 = vset.pattern.permute.xlu0 1
      %940 = vperm.xlu0 %939, %v386
      %v941 = vpop.permute.xlu0 %940
      %943 = vset.pattern.permute.xlu0 1
      %944 = vperm.xlu0 %943, %v387
      %v945 = vpop.permute.xlu0 %944
      %947 = vset.pattern.permute.xlu0 1
      %948 = vperm.xlu0 %947, %v388
      %v949 = vpop.permute.xlu0 %948
      %951 = vset.pattern.permute.xlu0 1
      %952 = vperm.xlu0 %951, %v389
      %v953 = vpop.permute.xlu0 %952
      %955 = vset.pattern.permute.xlu0 1
      %956 = vperm.xlu0 %955, %v390
      %v957 = vpop.permute.xlu0 %956
      %959 = vset.pattern.permute.xlu0 1
      %960 = vperm.xlu0 %959, %v391
      %v961 = vpop.permute.xlu0 %960
      %963 = vset.pattern.permute.xlu0 1
      %964 = vperm.xlu0 %963, %v392
      %v965 = vpop.permute.xlu0 %964
      %967 = vset.pattern.permute.xlu0 1
      %968 = vperm.xlu0 %967, %v393
      %v969 = vpop.permute.xlu0 %968
      %971 = vset.pattern.permute.xlu0 1
      %972 = vperm.xlu0 %971, %v394
      %v973 = vpop.permute.xlu0 %972
      %975 = vset.pattern.permute.xlu0 1
      %976 = vperm.xlu0 %975, %v395
      %v977 = vpop.permute.xlu0 %976
      %979 = vset.pattern.permute.xlu0 1
      %980 = vperm.xlu0 %979, %v396
      %v981 = vpop.permute.xlu0 %980
      %983 = vset.pattern.permute.xlu0 1
      %984 = vperm.xlu0 %983, %v397
      %v985 = vpop.permute.xlu0 %984
      %987 = vset.pattern.permute.xlu0 1
      %988 = vperm.xlu0 %987, %v398
      %v989 = vpop.permute.xlu0 %988
      %991 = vset.pattern.permute.xlu0 1
      %992 = vperm.xlu0 %991, %v399
      %v993 = vpop.permute.xlu0 %992
      %995 = vset.pattern.permute.xlu0 1
      %996 = vperm.xlu0 %995, %v400
      %v997 = vpop.permute.xlu0 %996
      %999 = vset.pattern.permute.xlu0 1
      %1000 = vperm.xlu0 %999, %v401
      %v1001 = vpop.permute.xlu0 %1000
      %1003 = vset.pattern.permute.xlu0 1
      %1004 = vperm.xlu0 %1003, %v402
      %v1005 = vpop.permute.xlu0 %1004
      %1007 = vset.pattern.permute.xlu0 1
      %1008 = vperm.xlu0 %1007, %v403
      %v1009 = vpop.permute.xlu0 %1008
      %1011 = vset.pattern.permute.xlu0 1
      %1012 = vperm.xlu0 %1011, %v404
      %v1013 = vpop.permute.xlu0 %1012
      %1015 = vset.pattern.permute.xlu0 1
      %1016 = vperm.xlu0 %1015, %v405
      %v1017 = vpop.permute.xlu0 %1016
      %1019 = vset.pattern.permute.xlu0 1
      %1020 = vperm.xlu0 %1019, %v406
      %v1021 = vpop.permute.xlu0 %1020
      %v1023 = vadd.f32 %v687, %v801
      %v1024 = vadd.f32 %v688, %v801
      %v1025 = vadd.f32 %v689, %v805
      %v1026 = vadd.f32 %v690, %v805
      %v1027 = vadd.f32 %v691, %v809
      %v1028 = vadd.f32 %v692, %v809
      %v1029 = vadd.f32 %v693, %v813
      %v1030 = vadd.f32 %v694, %v813
      %v1031 = vadd.f32 %v695, %v817
      %v1032 = vadd.f32 %v696, %v817
      %v1033 = vadd.f32 %v697, %v821
      %v1034 = vadd.f32 %v698, %v821
      %v1035 = vadd.f32 %v699, %v825
      %v1036 = vadd.f32 %v700, %v825
      %v1037 = vadd.f32 %v701, %v829
      %v1038 = vadd.f32 %v702, %v829
      %v1039 = vadd.f32 %v703, %v833
      %v1040 = vadd.f32 %v704, %v833
      %v1041 = vadd.f32 %v705, %v837
      %v1042 = vadd.f32 %v706, %v837
      %v1043 = vadd.f32 %v707, %v841
      %v1044 = vadd.f32 %v708, %v841
      %v1045 = vadd.f32 %v709, %v845
      %v1046 = vadd.f32 %v710, %v845
      %v1047 = vadd.f32 %v711, %v849
      %v1048 = vadd.f32 %v712, %v849
      %v1049 = vadd.f32 %v713, %v853
      %v1050 = vadd.f32 %v714, %v853
      %v1051 = vadd.f32 %v715, %v857
      %v1052 = vadd.f32 %v716, %v857
      %v1053 = vadd.f32 %v717, %v861
      %v1054 = vadd.f32 %v718, %v861
      %v1055 = vadd.f32 %v719, %v865
      %v1056 = vadd.f32 %v720, %v865
      %v1057 = vadd.f32 %v721, %v869
      %v1058 = vadd.f32 %v722, %v869
      %v1059 = vadd.f32 %v723, %v873
      %v1060 = vadd.f32 %v724, %v873
      %v1061 = vadd.f32 %v725, %v877
      %v1062 = vadd.f32 %v726, %v877
      %v1063 = vadd.f32 %v727, %v881
      %v1064 = vadd.f32 %v728, %v881
      %v1065 = vadd.f32 %v729, %v885
      %v1066 = vadd.f32 %v730, %v885
      %v1067 = vadd.f32 %v731, %v889
      %v1068 = vadd.f32 %v732, %v889
      %v1069 = vadd.f32 %v733, %v893
      %v1070 = vadd.f32 %v734, %v893
      %v1071 = vadd.f32 %v735, %v897
      %v1072 = vadd.f32 %v736, %v897
      %v1073 = vadd.f32 %v737, %v901
      %v1074 = vadd.f32 %v738, %v901
      %v1075 = vadd.f32 %v739, %v905
      %v1076 = vadd.f32 %v740, %v905
      %v1077 = vadd.f32 %v741, %v909
      %v1078 = vadd.f32 %v742, %v909
      %v1079 = vadd.f32 %v743, %v913
      %v1080 = vadd.f32 %v744, %v913
      %v1081 = vadd.f32 %v745, %v917
      %v1082 = vadd.f32 %v746, %v917
      %v1083 = vadd.f32 %v747, %v921
      %v1084 = vadd.f32 %v748, %v921
      %v1085 = vadd.f32 %v749, %v925
      %v1086 = vadd.f32 %v750, %v925
      %v1087 = vadd.f32 %v751, %v929
      %v1088 = vadd.f32 %v752, %v929
      %v1089 = vadd.f32 %v753, %v933
      %v1090 = vadd.f32 %v754, %v933
      %v1091 = vadd.f32 %v755, %v937
      %v1092 = vadd.f32 %v756, %v937
      %v1093 = vadd.f32 %v757, %v941
      %v1094 = vadd.f32 %v758, %v941
      %v1095 = vadd.f32 %v759, %v945
      %v1096 = vadd.f32 %v760, %v945
      %v1097 = vadd.f32 %v761, %v949
      %v1098 = vadd.f32 %v762, %v949
      %v1099 = vadd.f32 %v763, %v953
      %v1100 = vadd.f32 %v764, %v953
      %v1101 = vadd.f32 %v765, %v957
      %v1102 = vadd.f32 %v766, %v957
      %v1103 = vadd.f32 %v767, %v961
      %v1104 = vadd.f32 %v768, %v961
      %v1105 = vadd.f32 %v769, %v965
      %v1106 = vadd.f32 %v770, %v965
      %v1107 = vadd.f32 %v771, %v969
      %v1108 = vadd.f32 %v772, %v969
      %v1109 = vadd.f32 %v773, %v973
      %v1110 = vadd.f32 %v774, %v973
      %v1111 = vadd.f32 %v775, %v977
      %v1112 = vadd.f32 %v776, %v977
      %v1113 = vadd.f32 %v777, %v981
      %v1114 = vadd.f32 %v778, %v981
      %v1115 = vadd.f32 %v779, %v985
      %v1116 = vadd.f32 %v780, %v985
      %v1117 = vadd.f32 %v781, %v989
      %v1118 = vadd.f32 %v782, %v989
      %v1119 = vadd.f32 %v783, %v993
      %v1120 = vadd.f32 %v784, %v993
      %v1121 = vadd.f32 %v785, %v997
      %v1122 = vadd.f32 %v786, %v997
      %v1123 = vadd.f32 %v787, %v1001
      %v1124 = vadd.f32 %v788, %v1001
      %v1125 = vadd.f32 %v789, %v1005
      %v1126 = vadd.f32 %v790, %v1005
      %v1127 = vadd.f32 %v791, %v1009
      %v1128 = vadd.f32 %v792, %v1009
      %v1129 = vadd.f32 %v793, %v1013
      %v1130 = vadd.f32 %v794, %v1013
      %v1131 = vadd.f32 %v795, %v1017
      %v1132 = vadd.f32 %v796, %v1017
      %v1133 = vadd.f32 %v797, %v1021
      %v1134 = vadd.f32 %v798, %v1021
      %v1135 = vmax.f32 %v1023, 0.0
      %v1136 = vmax.f32 %v1024, 0.0
      %v1137 = vmax.f32 %v1025, 0.0
      %v1138 = vmax.f32 %v1026, 0.0
      %v1139 = vmax.f32 %v1027, 0.0
      %v1140 = vmax.f32 %v1028, 0.0
      %v1141 = vmax.f32 %v1029, 0.0
      %v1142 = vmax.f32 %v1030, 0.0
      %v1143 = vmax.f32 %v1031, 0.0
      %v1144 = vmax.f32 %v1032, 0.0
      %v1145 = vmax.f32 %v1033, 0.0
      %v1146 = vmax.f32 %v1034, 0.0
      %v1147 = vmax.f32 %v1035, 0.0
      %v1148 = vmax.f32 %v1036, 0.0
      %v1149 = vmax.f32 %v1037, 0.0
      %v1150 = vmax.f32 %v1038, 0.0
      %v1151 = vmax.f32 %v1039, 0.0
      %v1152 = vmax.f32 %v1040, 0.0
      %v1153 = vmax.f32 %v1041, 0.0
      %v1154 = vmax.f32 %v1042, 0.0
      %v1155 = vmax.f32 %v1043, 0.0
      %v1156 = vmax.f32 %v1044, 0.0
      %v1157 = vmax.f32 %v1045, 0.0
      %v1158 = vmax.f32 %v1046, 0.0
      %v1159 = vmax.f32 %v1047, 0.0
      %v1160 = vmax.f32 %v1048, 0.0
      %v1161 = vmax.f32 %v1049, 0.0
      %v1162 = vmax.f32 %v1050, 0.0
      %v1163 = vmax.f32 %v1051, 0.0
      %v1164 = vmax.f32 %v1052, 0.0
      %v1165 = vmax.f32 %v1053, 0.0
      %v1166 = vmax.f32 %v1054, 0.0
      %v1167 = vmax.f32 %v1055, 0.0
      %v1168 = vmax.f32 %v1056, 0.0
      %v1169 = vmax.f32 %v1057, 0.0
      %v1170 = vmax.f32 %v1058, 0.0
      %v1171 = vmax.f32 %v1059, 0.0
      %v1172 = vmax.f32 %v1060, 0.0
      %v1173 = vmax.f32 %v1061, 0.0
      %v1174 = vmax.f32 %v1062, 0.0
      %v1175 = vmax.f32 %v1063, 0.0
      %v1176 = vmax.f32 %v1064, 0.0
      %v1177 = vmax.f32 %v1065, 0.0
      %v1178 = vmax.f32 %v1066, 0.0
      %v1179 = vmax.f32 %v1067, 0.0
      %v1180 = vmax.f32 %v1068, 0.0
      %v1181 = vmax.f32 %v1069, 0.0
      %v1182 = vmax.f32 %v1070, 0.0
      %v1183 = vmax.f32 %v1071, 0.0
      %v1184 = vmax.f32 %v1072, 0.0
      %v1185 = vmax.f32 %v1073, 0.0
      %v1186 = vmax.f32 %v1074, 0.0
      %v1187 = vmax.f32 %v1075, 0.0
      %v1188 = vmax.f32 %v1076, 0.0
      %v1189 = vmax.f32 %v1077, 0.0
      %v1190 = vmax.f32 %v1078, 0.0
      %v1191 = vmax.f32 %v1079, 0.0
      %v1192 = vmax.f32 %v1080, 0.0
      %v1193 = vmax.f32 %v1081, 0.0
      %v1194 = vmax.f32 %v1082, 0.0
      %v1195 = vmax.f32 %v1083, 0.0
      %v1196 = vmax.f32 %v1084, 0.0
      %v1197 = vmax.f32 %v1085, 0.0
      %v1198 = vmax.f32 %v1086, 0.0
      %v1199 = vmax.f32 %v1087, 0.0
      %v1200 = vmax.f32 %v1088, 0.0
      %v1201 = vmax.f32 %v1089, 0.0
      %v1202 = vmax.f32 %v1090, 0.0
      %v1203 = vmax.f32 %v1091, 0.0
      %v1204 = vmax.f32 %v1092, 0.0
      %v1205 = vmax.f32 %v1093, 0.0
      %v1206 = vmax.f32 %v1094, 0.0
      %v1207 = vmax.f32 %v1095, 0.0
      %v1208 = vmax.f32 %v1096, 0.0
      %v1209 = vmax.f32 %v1097, 0.0
      %v1210 = vmax.f32 %v1098, 0.0
      %v1211 = vmax.f32 %v1099, 0.0
      %v1212 = vmax.f32 %v1100, 0.0
      %v1213 = vmax.f32 %v1101, 0.0
      %v1214 = vmax.f32 %v1102, 0.0
      %v1215 = vmax.f32 %v1103, 0.0
      %v1216 = vmax.f32 %v1104, 0.0
      %v1217 = vmax.f32 %v1105, 0.0
      %v1218 = vmax.f32 %v1106, 0.0
      %v1219 = vmax.f32 %v1107, 0.0
      %v1220 = vmax.f32 %v1108, 0.0
      %v1221 = vmax.f32 %v1109, 0.0
      %v1222 = vmax.f32 %v1110, 0.0
      %v1223 = vmax.f32 %v1111, 0.0
      %v1224 = vmax.f32 %v1112, 0.0
      %v1225 = vmax.f32 %v1113, 0.0
      %v1226 = vmax.f32 %v1114, 0.0
      %v1227 = vmax.f32 %v1115, 0.0
      %v1228 = vmax.f32 %v1116, 0.0
      %v1229 = vmax.f32 %v1117, 0.0
      %v1230 = vmax.f32 %v1118, 0.0
      %v1231 = vmax.f32 %v1119, 0.0
      %v1232 = vmax.f32 %v1120, 0.0
      %v1233 = vmax.f32 %v1121, 0.0
      %v1234 = vmax.f32 %v1122, 0.0
      %v1235 = vmax.f32 %v1123, 0.0
      %v1236 = vmax.f32 %v1124, 0.0
      %v1237 = vmax.f32 %v1125, 0.0
      %v1238 = vmax.f32 %v1126, 0.0
      %v1239 = vmax.f32 %v1127, 0.0
      %v1240 = vmax.f32 %v1128, 0.0
      %v1241 = vmax.f32 %v1129, 0.0
      %v1242 = vmax.f32 %v1130, 0.0
      %v1243 = vmax.f32 %v1131, 0.0
      %v1244 = vmax.f32 %v1132, 0.0
      %v1245 = vmax.f32 %v1133, 0.0
      %v1246 = vmax.f32 %v1134, 0.0
      %1247 = vst [vmem:[%s181] sm:$0xff] %v1135
      %1248 = vst [vmem:[%s181 + $0x8] sm:$0xff] %v1136
      %1249 = vst [vmem:[%s181 + $0x10] sm:$0xff] %v1137
      %1250 = vst [vmem:[%s181 + $0x18] sm:$0xff] %v1138
      %1251 = vst [vmem:[%s181 + $0x20] sm:$0xff] %v1139
      %1252 = vst [vmem:[%s181 + $0x28] sm:$0xff] %v1140
      %1253 = vst [vmem:[%s181 + $0x30] sm:$0xff] %v1141
      %1254 = vst [vmem:[%s181 + $0x38] sm:$0xff] %v1142
      %1255 = vst [vmem:[%s181 + $0x40] sm:$0xff] %v1143
      %1256 = vst [vmem:[%s181 + $0x48] sm:$0xff] %v1144
      %1257 = vst [vmem:[%s181 + $0x50] sm:$0xff] %v1145
      %1258 = vst [vmem:[%s181 + $0x58] sm:$0xff] %v1146
      %1259 = vst [vmem:[%s181 + $0x60] sm:$0xff] %v1147
      %1260 = vst [vmem:[%s181 + $0x68] sm:$0xff] %v1148
      %1261 = vst [vmem:[%s181 + $0x70] sm:$0xff] %v1149
      %1262 = vst [vmem:[%s181 + $0x78] sm:$0xff] %v1150
      %1263 = vst [vmem:[%s181 + $0x80] sm:$0xff] %v1151
      %1264 = vst [vmem:[%s181 + $0x88] sm:$0xff] %v1152
      %1265 = vst [vmem:[%s181 + $0x90] sm:$0xff] %v1153
      %1266 = vst [vmem:[%s181 + $0x98] sm:$0xff] %v1154
      %1267 = vst [vmem:[%s181 + $0xa0] sm:$0xff] %v1155
      %1268 = vst [vmem:[%s181 + $0xa8] sm:$0xff] %v1156
      %1269 = vst [vmem:[%s181 + $0xb0] sm:$0xff] %v1157
      %1270 = vst [vmem:[%s181 + $0xb8] sm:$0xff] %v1158
      %1271 = vst [vmem:[%s181 + $0xc0] sm:$0xff] %v1159
      %1272 = vst [vmem:[%s181 + $0xc8] sm:$0xff] %v1160
      %1273 = vst [vmem:[%s181 + $0xd0] sm:$0xff] %v1161
      %1274 = vst [vmem:[%s181 + $0xd8] sm:$0xff] %v1162
      %1275 = vst [vmem:[%s181 + $0xe0] sm:$0xff] %v1163
      %1276 = vst [vmem:[%s181 + $0xe8] sm:$0xff] %v1164
      %1277 = vst [vmem:[%s181 + $0xf0] sm:$0xff] %v1165
      %1278 = vst [vmem:[%s181 + $0xf8] sm:$0xff] %v1166
      %1279 = vst [vmem:[%s181 + $0x100] sm:$0xff] %v1167
      %1280 = vst [vmem:[%s181 + $0x108] sm:$0xff] %v1168
      %1281 = vst [vmem:[%s181 + $0x110] sm:$0xff] %v1169
      %1282 = vst [vmem:[%s181 + $0x118] sm:$0xff] %v1170
      %1283 = vst [vmem:[%s181 + $0x120] sm:$0xff] %v1171
      %1284 = vst [vmem:[%s181 + $0x128] sm:$0xff] %v1172
      %1285 = vst [vmem:[%s181 + $0x130] sm:$0xff] %v1173
      %1286 = vst [vmem:[%s181 + $0x138] sm:$0xff] %v1174
      %1287 = vst [vmem:[%s181 + $0x140] sm:$0xff] %v1175
      %1288 = vst [vmem:[%s181 + $0x148] sm:$0xff] %v1176
      %1289 = vst [vmem:[%s181 + $0x150] sm:$0xff] %v1177
      %1290 = vst [vmem:[%s181 + $0x158] sm:$0xff] %v1178
      %1291 = vst [vmem:[%s181 + $0x160] sm:$0xff] %v1179
      %1292 = vst [vmem:[%s181 + $0x168] sm:$0xff] %v1180
      %1293 = vst [vmem:[%s181 + $0x170] sm:$0xff] %v1181
      %1294 = vst [vmem:[%s181 + $0x178] sm:$0xff] %v1182
      %1295 = vst [vmem:[%s181 + $0x180] sm:$0xff] %v1183
      %1296 = vst [vmem:[%s181 + $0x188] sm:$0xff] %v1184
      %1297 = vst [vmem:[%s181 + $0x190] sm:$0xff] %v1185
      %1298 = vst [vmem:[%s181 + $0x198] sm:$0xff] %v1186
      %1299 = vst [vmem:[%s181 + $0x1a0] sm:$0xff] %v1187
      %1300 = vst [vmem:[%s181 + $0x1a8] sm:$0xff] %v1188
      %1301 = vst [vmem:[%s181 + $0x1b0] sm:$0xff] %v1189
      %1302 = vst [vmem:[%s181 + $0x1b8] sm:$0xff] %v1190
      %1303 = vst [vmem:[%s181 + $0x1c0] sm:$0xff] %v1191
      %1304 = vst [vmem:[%s181 + $0x1c8] sm:$0xff] %v1192
      %1305 = vst [vmem:[%s181 + $0x1d0] sm:$0xff] %v1193
      %1306 = vst [vmem:[%s181 + $0x1d8] sm:$0xff] %v1194
      %1307 = vst [vmem:[%s181 + $0x1e0] sm:$0xff] %v1195
      %1308 = vst [vmem:[%s181 + $0x1e8] sm:$0xff] %v1196
      %1309 = vst [vmem:[%s181 + $0x1f0] sm:$0xff] %v1197
      %1310 = vst [vmem:[%s181 + $0x1f8] sm:$0xff] %v1198
      %1311 = vst [vmem:[%s181 + $0x200] sm:$0xff] %v1199
      %1312 = vst [vmem:[%s181 + $0x208] sm:$0xff] %v1200
      %1313 = vst [vmem:[%s181 + $0x210] sm:$0xff] %v1201
      %1314 = vst [vmem:[%s181 + $0x218] sm:$0xff] %v1202
      %1315 = vst [vmem:[%s181 + $0x220] sm:$0xff] %v1203
      %1316 = vst [vmem:[%s181 + $0x228] sm:$0xff] %v1204
      %1317 = vst [vmem:[%s181 + $0x230] sm:$0xff] %v1205
      %1318 = vst [vmem:[%s181 + $0x238] sm:$0xff] %v1206
      %1319 = vst [vmem:[%s181 + $0x240] sm:$0xff] %v1207
      %1320 = vst [vmem:[%s181 + $0x248] sm:$0xff] %v1208
      %1321 = vst [vmem:[%s181 + $0x250] sm:$0xff] %v1209
      %1322 = vst [vmem:[%s181 + $0x258] sm:$0xff] %v1210
      %1323 = vst [vmem:[%s181 + $0x260] sm:$0xff] %v1211
      %1324 = vst [vmem:[%s181 + $0x268] sm:$0xff] %v1212
      %1325 = vst [vmem:[%s181 + $0x270] sm:$0xff] %v1213
      %1326 = vst [vmem:[%s181 + $0x278] sm:$0xff] %v1214
      %1327 = vst [vmem:[%s181 + $0x280] sm:$0xff] %v1215
      %1328 = vst [vmem:[%s181 + $0x288] sm:$0xff] %v1216
      %1329 = vst [vmem:[%s181 + $0x290] sm:$0xff] %v1217
      %1330 = vst [vmem:[%s181 + $0x298] sm:$0xff] %v1218
      %1331 = vst [vmem:[%s181 + $0x2a0] sm:$0xff] %v1219
      %1332 = vst [vmem:[%s181 + $0x2a8] sm:$0xff] %v1220
      %1333 = vst [vmem:[%s181 + $0x2b0] sm:$0xff] %v1221
      %1334 = vst [vmem:[%s181 + $0x2b8] sm:$0xff] %v1222
      %1335 = vst [vmem:[%s181 + $0x2c0] sm:$0xff] %v1223
      %1336 = vst [vmem:[%s181 + $0x2c8] sm:$0xff] %v1224
      %1337 = vst [vmem:[%s181 + $0x2d0] sm:$0xff] %v1225
      %1338 = vst [vmem:[%s181 + $0x2d8] sm:$0xff] %v1226
      %1339 = vst [vmem:[%s181 + $0x2e0] sm:$0xff] %v1227
      %1340 = vst [vmem:[%s181 + $0x2e8] sm:$0xff] %v1228
      %1341 = vst [vmem:[%s181 + $0x2f0] sm:$0xff] %v1229
      %1342 = vst [vmem:[%s181 + $0x2f8] sm:$0xff] %v1230
      %1343 = vst [vmem:[%s181 + $0x300] sm:$0xff] %v1231
      %1344 = vst [vmem:[%s181 + $0x308] sm:$0xff] %v1232
      %1345 = vst [vmem:[%s181 + $0x310] sm:$0xff] %v1233
      %1346 = vst [vmem:[%s181 + $0x318] sm:$0xff] %v1234
      %1347 = vst [vmem:[%s181 + $0x320] sm:$0xff] %v1235
      %1348 = vst [vmem:[%s181 + $0x328] sm:$0xff] %v1236
      %1349 = vst [vmem:[%s181 + $0x330] sm:$0xff] %v1237
      %1350 = vst [vmem:[%s181 + $0x338] sm:$0xff] %v1238
      %1351 = vst [vmem:[%s181 + $0x340] sm:$0xff] %v1239
      %1352 = vst [vmem:[%s181 + $0x348] sm:$0xff] %v1240
      %1353 = vst [vmem:[%s181 + $0x350] sm:$0xff] %v1241
      %1354 = vst [vmem:[%s181 + $0x358] sm:$0xff] %v1242
      %1355 = vst [vmem:[%s181 + $0x360] sm:$0xff] %v1243
      %1356 = vst [vmem:[%s181 + $0x368] sm:$0xff] %v1244
      %1357 = vst [vmem:[%s181 + $0x370] sm:$0xff] %v1245
      %1358 = vst [vmem:[%s181 + $0x378] sm:$0xff] %v1246
      %s1359 = smul.u32 2, %s18
      %p1360 = scmp.lt.s32.totalorder %s17, 1
      %s1361 = scalar_select %p1360, %s17, 1
      %p1362 = scmp.lt.s32.totalorder %s1359, 1
      %s1363 = scalar_select %p1362, %s1359, 1
      %s1364 = smul.addr %s1361, 112
      %s1365 = sadd.s32 %s1363, %s1364
      %s1366 = smul.addr %s1365, 8
      %s1367 = scalar_lea.vmem %s2, %s1366
      // Predicated region
      $region29: #{res_bottleneck_block3.5} parent=27 // pred_check
        %p1368 = pneg %p94
      $region30: #{res_bottleneck_block3.5} parent=27 // pred_check_branch
        %1370 = sbr.rel (%p1368) target = $region32
      $region31: #{res_bottleneck_block3.5} parent=27 // pred_region
        %s1371 = smul.u32 2, %s18
      $region32: #{res_bottleneck_block3.5} parent=27 // pred_fallthru
        _
    $region28: #{res_bottleneck_block3.5} parent=5 // pred_fallthru
      _
    %p1372 = scmp.le.s32.totalorder 2, %s8
    // Predicated region
    $region33: #{res_bottleneck_block3.5} parent=5 // pred_check
      %p1373 = pneg %p1372
    $region34: #{res_bottleneck_block3.5} parent=5 // pred_check_branch
      %1375 = sbr.rel (%p1373) target = $region36
    $region35: #{res_bottleneck_block3.5} parent=5 // pred_region
      %s1376 = ssub.s32 %s8, 2
      // Predicated region
      $region37: #{res_bottleneck_block3.5} parent=35 // pred_check
        %p1377 = pneg %p100
      $region38: #{res_bottleneck_block3.5} parent=35 // pred_check_branch
        %1379 = sbr.rel (%p1377) target = $region40
      $region39: #{res_bottleneck_block3.5} parent=35 // pred_region
        %s1380 = smul.u32 2, %s20
        %p1381 = scmp.lt.s32.totalorder %s19, 1
        %s1382 = scalar_select %p1381, %s19, 1
        %p1383 = scmp.lt.s32.totalorder %s1380, 1
        %s1384 = scalar_select %p1383, %s1380, 1
        %s1385 = smul.addr %s1382, 112
        %s1386 = sadd.s32 %s1384, %s1385
        %s1387 = smul.addr %s1386, 8
        %s1388 = scalar_lea.vmem %s2, %s1387
      $region40: #{res_bottleneck_block3.5} parent=35 // pred_fallthru
        _
    $region36: #{res_bottleneck_block3.5} parent=5 // pred_fallthru
      _
  $region6: #{res_bottleneck_block3.5} parent=0 // loop_footer
    %s12 = sadd.s32 1, %s8
  $region7: #{res_bottleneck_block3.5} parent=0 // loop_footer_branch
    %7 = sbr.rel target = $region3
  $region8: #{res_bottleneck_block3.5} parent=0 // loop_exit
    _

// kernel: res_bottleneck_block3.4
$region0: #{res_bottleneck_block3.4}
  #allocation0 [shape = 'u32[]', space=smem, size = 0x4, offset = 0x4, fixed_abs, tag = 'smem constant byte address 0x4 - core index']
  #allocation1 [shape = 'u32[72,128]{1,0:T(1,128)}', space=vmem, size = 0x9000, scoped, tag = 'internal scratch']
  %s0 = inlined_call_operand.vmem [shape: f32[2,224,256], index: 0, kind: input, shape index: {}]
  %s1 = inlined_call_operand.vmem [shape: bf16[448,224], index: 1, kind: input, shape index: {}]
  %s2 = inlined_call_operand.vmem [shape: f32[448,1], index: 2, kind: input, shape index: {}]
  %s3 = inlined_call_operand.vmem [shape: bf16[448,448], index: 3, kind: input, shape index: {}]
  %s4 = inlined_call_operand.vmem [shape: bf16[2,448,256], index: 4, kind: output, shape index: {0}]
  %s5 = inlined_call_operand.vmem [shape: f32[2,1,448,2], index: 5, kind: output, shape index: {1}]
  %6 = xla_tuple %s4, %s5
  %s7 = sld [smem:[#allocation0]]
  $region57: #{res_bottleneck_block3.4} parent=0
    _
  %s9 = ssub.s32 1, %s7
  %s10 = scalar_select 0, %s9, %s7
  loop: start=0, step=1, limit=4
  $region2: #{res_bottleneck_block3.4} parent=0 // loop_pre_header
    _
  $region3: #{res_bottleneck_block3.4} parent=0 // loop_header
    %s12 = sphi 0, %s16
    %p13 = scmp.ge.s32.totalorder %s12, 4
    %s19 = sphi 0, %s31
    %s20 = sphi 0, %s27
    %s21 = sphi 0, %s19
    %s22 = sphi 0, %s20
    %s23 = sphi 0, %s21
    %s24 = sphi 0, %s22
    %s36 = sphi 0, %s38
    %s39 = sphi 0, %s36
    %s40 = sphi 0, %s39
    %s56 = sphi 0, %s40
    %s60 = sphi 0, %s60
    %s62 = sphi 0, %s60
    %s63 = sphi 0, %s62
    %s77 = sphi 0, %s63
    %s81 = sphi 0, %s81
    %s83 = sphi 0, %s81
    %s84 = sphi 0, %s83
    %s98 = sphi 0, %s84
    %s102 = sphi 0, %s102
    %s104 = sphi 0, %s102
    %s105 = sphi 0, %s104
    %s119 = sphi 0, %s105
    %s127 = sphi 0, %s129
    %s130 = sphi 0, %s127
    %s131 = sphi 0, %s130
    %s147 = sphi 0, %s131
    %s155 = sphi 0, %s157
    %s158 = sphi 0, %s155
    %s159 = sphi 0, %s158
    %s175 = sphi 0, %s159
  $region4: #{res_bottleneck_block3.4} parent=0 // loop_header_branch
    %15 = sbr.rel (%p13) target = $region8
  $region5: #{res_bottleneck_block3.4} parent=0 // loop_body
    %s17 = ssub.s32 %s12, 1
    %s18 = ssub.s32 %s12, 2
    %s25 = sadd.s32 1, %s20
    %p26 = scmp.ge.s32.totalorder %s25, 1
    %s27 = scalar_select %p26, 0, %s25
    %s28 = sadd.s32 1, %s19
    %s29 = scalar_select %p26, %s28, %s19
    %p30 = scmp.ge.s32.totalorder %s29, 2
    %s31 = scalar_select %p30, 0, %s29
    %s32 = ssub.s32 %s19, %s31
    %s33 = ssub.s32 %s20, %s27
    %s34 = sor.u32 %s32, %s33
    %p35 = scmp.eq.s32.totalorder %s34, 0
    %s37 = sadd.s32 %s36, 1
    %s38 = scalar_select %p35, %s36, %s37
    %p41 = pneg %p35
    %p42 = scmp.eq.s32.totalorder %s12, 1
    %p43 = por %p41, %p42
    %p44 = scmp.ne.s32.totalorder %s36, %s39
    %p45 = scmp.eq.s32.totalorder %s12, 0
    %p46 = por %p44, %p45
    %p47 = scmp.ne.s32.totalorder %s36, %s39
    %p48 = scmp.eq.s32.totalorder %s17, 1
    %p49 = por %p47, %p48
    %p50 = scmp.ne.s32.totalorder %s39, %s40
    %p51 = scmp.eq.s32.totalorder %s17, 0
    %p52 = por %p50, %p51
    %p53 = scmp.ne.s32.totalorder %s39, %s40
    %p54 = scmp.eq.s32.totalorder %s18, 1
    %p55 = por %p53, %p54
    %p57 = scmp.ne.s32.totalorder %s40, %s56
    %p58 = scmp.eq.s32.totalorder %s18, 0
    %p59 = por %p57, %p58
    %s61 = sadd.s32 %s60, 1
    %p64 = scmp.eq.s32.totalorder %s12, 1
    %p65 = scmp.ne.s32.totalorder %s60, %s62
    %p66 = scmp.eq.s32.totalorder %s12, 0
    %p67 = por %p65, %p66
    %p68 = scmp.ne.s32.totalorder %s60, %s62
    %p69 = scmp.eq.s32.totalorder %s17, 1
    %p70 = por %p68, %p69
    %p71 = scmp.ne.s32.totalorder %s62, %s63
    %p72 = scmp.eq.s32.totalorder %s17, 0
    %p73 = por %p71, %p72
    %p74 = scmp.ne.s32.totalorder %s62, %s63
    %p75 = scmp.eq.s32.totalorder %s18, 1
    %p76 = por %p74, %p75
    %p78 = scmp.ne.s32.totalorder %s63, %s77
    %p79 = scmp.eq.s32.totalorder %s18, 0
    %p80 = por %p78, %p79
    %s82 = sadd.s32 %s81, 1
    %p85 = scmp.eq.s32.totalorder %s12, 1
    %p86 = scmp.ne.s32.totalorder %s81, %s83
    %p87 = scmp.eq.s32.totalorder %s12, 0
    %p88 = por %p86, %p87
    %p89 = scmp.ne.s32.totalorder %s81, %s83
    %p90 = scmp.eq.s32.totalorder %s17, 1
    %p91 = por %p89, %p90
    %p92 = scmp.ne.s32.totalorder %s83, %s84
    %p93 = scmp.eq.s32.totalorder %s17, 0
    %p94 = por %p92, %p93
    %p95 = scmp.ne.s32.totalorder %s83, %s84
    %p96 = scmp.eq.s32.totalorder %s18, 1
    %p97 = por %p95, %p96
    %p99 = scmp.ne.s32.totalorder %s84, %s98
    %p100 = scmp.eq.s32.totalorder %s18, 0
    %p101 = por %p99, %p100
    %s103 = sadd.s32 %s102, 1
    %p106 = scmp.eq.s32.totalorder %s12, 1
    %p107 = scmp.ne.s32.totalorder %s102, %s104
    %p108 = scmp.eq.s32.totalorder %s12, 0
    %p109 = por %p107, %p108
    %p110 = scmp.ne.s32.totalorder %s102, %s104
    %p111 = scmp.eq.s32.totalorder %s17, 1
    %p112 = por %p110, %p111
    %p113 = scmp.ne.s32.totalorder %s104, %s105
    %p114 = scmp.eq.s32.totalorder %s17, 0
    %p115 = por %p113, %p114
    %p116 = scmp.ne.s32.totalorder %s104, %s105
    %p117 = scmp.eq.s32.totalorder %s18, 1
    %p118 = por %p116, %p117
    %p120 = scmp.ne.s32.totalorder %s105, %s119
    %p121 = scmp.eq.s32.totalorder %s18, 0
    %p122 = por %p120, %p121
    %s123 = ssub.s32 %s19, %s31
    %s124 = ssub.s32 %s20, %s27
    %s125 = sor.u32 %s123, %s124
    %p126 = scmp.eq.s32.totalorder %s125, 0
    %s128 = sadd.s32 %s127, 1
    %s129 = scalar_select %p126, %s127, %s128
    %p132 = pneg %p126
    %p133 = scmp.eq.s32.totalorder %s12, 1
    %p134 = por %p132, %p133
    %p135 = scmp.ne.s32.totalorder %s127, %s130
    %p136 = scmp.eq.s32.totalorder %s12, 0
    %p137 = por %p135, %p136
    %p138 = scmp.ne.s32.totalorder %s127, %s130
    %p139 = scmp.eq.s32.totalorder %s17, 1
    %p140 = por %p138, %p139
    %p141 = scmp.ne.s32.totalorder %s130, %s131
    %p142 = scmp.eq.s32.totalorder %s17, 0
    %p143 = por %p141, %p142
    %p144 = scmp.ne.s32.totalorder %s130, %s131
    %p145 = scmp.eq.s32.totalorder %s18, 1
    %p146 = por %p144, %p145
    %p148 = scmp.ne.s32.totalorder %s131, %s147
    %p149 = scmp.eq.s32.totalorder %s18, 0
    %p150 = por %p148, %p149
    %s151 = ssub.s32 %s19, %s31
    %s152 = ssub.s32 %s20, %s27
    %s153 = sor.u32 %s151, %s152
    %p154 = scmp.eq.s32.totalorder %s153, 0
    %s156 = sadd.s32 %s155, 1
    %s157 = scalar_select %p154, %s155, %s156
    %p160 = pneg %p154
    %p161 = scmp.eq.s32.totalorder %s12, 1
    %p162 = por %p160, %p161
    %p163 = scmp.ne.s32.totalorder %s155, %s158
    %p164 = scmp.eq.s32.totalorder %s12, 0
    %p165 = por %p163, %p164
    %p166 = scmp.ne.s32.totalorder %s155, %s158
    %p167 = scmp.eq.s32.totalorder %s17, 1
    %p168 = por %p166, %p167
    %p169 = scmp.ne.s32.totalorder %s158, %s159
    %p170 = scmp.eq.s32.totalorder %s17, 0
    %p171 = por %p169, %p170
    %p172 = scmp.ne.s32.totalorder %s158, %s159
    %p173 = scmp.eq.s32.totalorder %s18, 1
    %p174 = por %p172, %p173
    %p176 = scmp.ne.s32.totalorder %s159, %s175
    %p177 = scmp.eq.s32.totalorder %s18, 0
    %p178 = por %p176, %p177
    %p179 = scmp.le.s32.totalorder 1, %s12
    %p180 = scmp.lt.s32.totalorder %s12, 3
    %p181 = pnand %p179, %p180
    %p182 = pneg %p181
    // Predicated region
    $region9: #{res_bottleneck_block3.4} parent=5 // pred_check
      _
    $region10: #{res_bottleneck_block3.4} parent=5 // pred_check_branch
      %184 = sbr.rel (%p181) target = $region12
    $region11: #{res_bottleneck_block3.4} parent=5 // pred_region
      %s185 = ssub.s32 %s12, 1
      // Predicated region
      $region13: #{res_bottleneck_block3.4} parent=11 // pred_check
        %p186 = pneg %p73
      $region14: #{res_bottleneck_block3.4} parent=11 // pred_check_branch
        %188 = sbr.rel (%p186) target = $region16
      $region15: #{res_bottleneck_block3.4} parent=11 // pred_region
        _
      $region16: #{res_bottleneck_block3.4} parent=11 // pred_fallthru
        _
      // Predicated region
      $region17: #{res_bottleneck_block3.4} parent=11 // pred_check
        %p189 = pneg %p94
      $region18: #{res_bottleneck_block3.4} parent=11 // pred_check_branch
        %191 = sbr.rel (%p189) target = $region20
      $region19: #{res_bottleneck_block3.4} parent=11 // pred_region
        _
      $region20: #{res_bottleneck_block3.4} parent=11 // pred_fallthru
        _
      // Predicated region
      $region21: #{res_bottleneck_block3.4} parent=11 // pred_check
        %p192 = pneg %p115
      $region22: #{res_bottleneck_block3.4} parent=11 // pred_check_branch
        %194 = sbr.rel (%p192) target = $region24
      $region23: #{res_bottleneck_block3.4} parent=11 // pred_region
        _
      $region24: #{res_bottleneck_block3.4} parent=11 // pred_fallthru
        _
    $region12: #{res_bottleneck_block3.4} parent=5 // pred_fallthru
      _
    %p195 = scmp.lt.s32.totalorder %s12, 2
    // Predicated region
    $region25: #{res_bottleneck_block3.4} parent=5 // pred_check
      %p196 = pneg %p195
    $region26: #{res_bottleneck_block3.4} parent=5 // pred_check_branch
      %198 = sbr.rel (%p196) target = $region28
    $region27: #{res_bottleneck_block3.4} parent=5 // pred_region
      // Predicated region
      $region29: #{res_bottleneck_block3.4} parent=27 // pred_check
        %p199 = pneg %p46
      $region30: #{res_bottleneck_block3.4} parent=27 // pred_check_branch
        %201 = sbr.rel (%p199) target = $region32
      $region31: #{res_bottleneck_block3.4} parent=27 // pred_region
        %s202 = smul.u32 2, %s20
        %p203 = scmp.lt.s32.totalorder %s19, 1
        %s204 = scalar_select %p203, %s19, 1
        %p205 = scmp.lt.s32.totalorder %s202, 1
        %s206 = scalar_select %p205, %s202, 1
        %s207 = smul.addr %s204, 56
        %s208 = sadd.s32 %s206, %s207
        %s209 = smul.addr %s208, 8
        %s210 = scalar_lea.vmem %s0, %s209
        %s211 = smul.u32 2, %s20
      $region32: #{res_bottleneck_block3.4} parent=27 // pred_fallthru
        _
    $region28: #{res_bottleneck_block3.4} parent=5 // pred_fallthru
      _
    %p212 = scmp.le.s32.totalorder 1, %s12
    %p213 = scmp.lt.s32.totalorder %s12, 3
    %p214 = pnand %p212, %p213
    %p215 = pneg %p214
    // Predicated region
    $region33: #{res_bottleneck_block3.4} parent=5 // pred_check
      _
    $region34: #{res_bottleneck_block3.4} parent=5 // pred_check_branch
      %217 = sbr.rel (%p214) target = $region36
    $region35: #{res_bottleneck_block3.4} parent=5 // pred_region
      %s218 = ssub.s32 %s12, 1
      %s219 = smul.u32 2, %s22
      %p220 = scmp.lt.s32.totalorder %s21, 1
      %s221 = scalar_select %p220, %s21, 1
      %p222 = scmp.lt.s32.totalorder %s219, 1
      %s223 = scalar_select %p222, %s219, 1
      %s224 = smul.addr %s221, 56
      %s225 = sadd.s32 %s223, %s224
      %s226 = smul.addr %s225, 8
      %s227 = scalar_lea.vmem %s0, %s226
      %p228 = pneg %p52
      %p229 = pneg %p49
      %p230 = pneg %p73
      %p231 = pneg %p70
      %p232 = pneg %p94
      %p233 = pneg %p91
      %p234 = pneg %p115
      %p235 = pneg %p112
      %p236 = pneg %p143
      %p237 = pneg %p140
      %s238 = smul.u32 2, %s22
      %p239 = scmp.lt.s32.totalorder %s21, 1
      %s240 = scalar_select %p239, %s21, 1
      %p241 = scmp.lt.s32.totalorder %s238, 1
      %s242 = scalar_select %p241, %s238, 1
      %s243 = smul.addr %s240, 112
      %s244 = sadd.s32 %s242, %s243
      %s245 = smul.addr %s244, 4
      %s246 = scalar_lea.vmem %s4, %s245
      %p247 = pneg %p171
      %p248 = pneg %p168
      %p249 = scmp.lt.s32.totalorder %s21, 1
      %s250 = scalar_select %p249, %s21, 1
      %p251 = scmp.lt.s32.totalorder %s22, 0
      %s252 = scalar_select %p251, %s22, 0
      %s253 = smul.addr %s252, 56
      %s254 = smul.addr %s250, 56
      %s255 = sadd.s32 %s253, %s254
      %s256 = smul.addr %s255, 8
      %s257 = scalar_lea.vmem %s5, %s256
      %s258 = smul.u32 2, %s22
      %p259 = scmp.lt.s32.totalorder %s21, 1
      %s260 = scalar_select %p259, %s21, 1
      %p261 = scmp.lt.s32.totalorder %s258, 1
      %s262 = scalar_select %p261, %s258, 1
      %s263 = smul.addr %s260, 56
      %s264 = sadd.s32 %s262, %s263
      %s265 = smul.addr %s264, 8
      %s266 = scalar_lea.vmem %s0, %s265
      %s267 = smul.u32 2, %s22
      %s268 = smul.u32 2, %s22
      %p269 = scmp.lt.s32.totalorder %s21, 1
      %s270 = scalar_select %p269, %s21, 1
      %p271 = scmp.lt.s32.totalorder %s268, 1
      %s272 = scalar_select %p271, %s268, 1
      %s273 = smul.addr %s270, 112
      %s274 = sadd.s32 %s272, %s273
      %s275 = smul.addr %s274, 4
      %s276 = scalar_lea.vmem %s4, %s275
      %s277 = smul.u32 2, %s22
      %p278 = scmp.lt.s32.totalorder %s21, 1
      %s279 = scalar_select %p278, %s21, 1
      %p280 = scmp.lt.s32.totalorder %s22, 0
      %s281 = scalar_select %p280, %s22, 0
      %s282 = smul.addr %s281, 56
      %s283 = smul.addr %s279, 56
      %s284 = sadd.s32 %s282, %s283
      %s285 = smul.addr %s284, 8
      %s286 = scalar_lea.vmem %s5, %s285
      %v288 = vld [vmem:[%s266] sm:$0xff]
      %v289 = vld [vmem:[%s266 + $0x8] sm:$0xff]
      %v290 = vld [vmem:[%s266 + $0x10] sm:$0xff]
      %v291 = vld [vmem:[%s266 + $0x18] sm:$0xff]
      %v292 = vld [vmem:[%s266 + $0x20] sm:$0xff]
      %v293 = vld [vmem:[%s266 + $0x28] sm:$0xff]
      %v294 = vld [vmem:[%s266 + $0x30] sm:$0xff]
      %v295 = vld [vmem:[%s266 + $0x38] sm:$0xff]
      %v296 = vld [vmem:[%s266 + $0x40] sm:$0xff]
      %v297 = vld [vmem:[%s266 + $0x48] sm:$0xff]
      %v298 = vld [vmem:[%s266 + $0x50] sm:$0xff]
      %v299 = vld [vmem:[%s266 + $0x58] sm:$0xff]
      %v300 = vld [vmem:[%s266 + $0x60] sm:$0xff]
      %v301 = vld [vmem:[%s266 + $0x68] sm:$0xff]
      %v302 = vld [vmem:[%s266 + $0x70] sm:$0xff]
      %v303 = vld [vmem:[%s266 + $0x78] sm:$0xff]
      %v304 = vld [vmem:[%s266 + $0x80] sm:$0xff]
      %v305 = vld [vmem:[%s266 + $0x88] sm:$0xff]
      %v306 = vld [vmem:[%s266 + $0x90] sm:$0xff]
      %v307 = vld [vmem:[%s266 + $0x98] sm:$0xff]
      %v308 = vld [vmem:[%s266 + $0xa0] sm:$0xff]
      %v309 = vld [vmem:[%s266 + $0xa8] sm:$0xff]
      %v310 = vld [vmem:[%s266 + $0xb0] sm:$0xff]
      %v311 = vld [vmem:[%s266 + $0xb8] sm:$0xff]
      %v312 = vld [vmem:[%s266 + $0xc0] sm:$0xff]
      %v313 = vld [vmem:[%s266 + $0xc8] sm:$0xff]
      %v314 = vld [vmem:[%s266 + $0xd0] sm:$0xff]
      %v315 = vld [vmem:[%s266 + $0xd8] sm:$0xff]
      %v316 = vld [vmem:[%s266 + $0xe0] sm:$0xff]
      %v317 = vld [vmem:[%s266 + $0xe8] sm:$0xff]
      %v318 = vld [vmem:[%s266 + $0xf0] sm:$0xff]
      %v319 = vld [vmem:[%s266 + $0xf8] sm:$0xff]
      %v320 = vld [vmem:[%s266 + $0x100] sm:$0xff]
      %v321 = vld [vmem:[%s266 + $0x108] sm:$0xff]
      %v322 = vld [vmem:[%s266 + $0x110] sm:$0xff]
      %v323 = vld [vmem:[%s266 + $0x118] sm:$0xff]
      %v324 = vld [vmem:[%s266 + $0x120] sm:$0xff]
      %v325 = vld [vmem:[%s266 + $0x128] sm:$0xff]
      %v326 = vld [vmem:[%s266 + $0x130] sm:$0xff]
      %v327 = vld [vmem:[%s266 + $0x138] sm:$0xff]
      %v328 = vld [vmem:[%s266 + $0x140] sm:$0xff]
      %v329 = vld [vmem:[%s266 + $0x148] sm:$0xff]
      %v330 = vld [vmem:[%s266 + $0x150] sm:$0xff]
      %v331 = vld [vmem:[%s266 + $0x158] sm:$0xff]
      %v332 = vld [vmem:[%s266 + $0x160] sm:$0xff]
      %v333 = vld [vmem:[%s266 + $0x168] sm:$0xff]
      %v334 = vld [vmem:[%s266 + $0x170] sm:$0xff]
      %v335 = vld [vmem:[%s266 + $0x178] sm:$0xff]
      %v336 = vld [vmem:[%s266 + $0x180] sm:$0xff]
      %v337 = vld [vmem:[%s266 + $0x188] sm:$0xff]
      %v338 = vld [vmem:[%s266 + $0x190] sm:$0xff]
      %v339 = vld [vmem:[%s266 + $0x198] sm:$0xff]
      %v340 = vld [vmem:[%s266 + $0x1a0] sm:$0xff]
      %v341 = vld [vmem:[%s266 + $0x1a8] sm:$0xff]
      %v342 = vld [vmem:[%s266 + $0x1b0] sm:$0xff]
      %v343 = vld [vmem:[%s266 + $0x1b8] sm:$0xff]
      %v344 = vpack.c.bf16 %v290, %v288
      %v345 = vpack.c.bf16 %v291, %v289
      %v346 = vpack.c.bf16 %v294, %v292
      %v347 = vpack.c.bf16 %v295, %v293
      %v348 = vpack.c.bf16 %v298, %v296
      %v349 = vpack.c.bf16 %v299, %v297
      %v350 = vpack.c.bf16 %v302, %v300
      %v351 = vpack.c.bf16 %v303, %v301
      %v352 = vpack.c.bf16 %v306, %v304
      %v353 = vpack.c.bf16 %v307, %v305
      %v354 = vpack.c.bf16 %v310, %v308
      %v355 = vpack.c.bf16 %v311, %v309
      %v356 = vpack.c.bf16 %v314, %v312
      %v357 = vpack.c.bf16 %v315, %v313
      %v358 = vpack.c.bf16 %v318, %v316
      %v359 = vpack.c.bf16 %v319, %v317
      %v360 = vpack.c.bf16 %v322, %v320
      %v361 = vpack.c.bf16 %v323, %v321
      %v362 = vpack.c.bf16 %v326, %v324
      %v363 = vpack.c.bf16 %v327, %v325
      %v364 = vpack.c.bf16 %v330, %v328
      %v365 = vpack.c.bf16 %v331, %v329
      %v366 = vpack.c.bf16 %v334, %v332
      %v367 = vpack.c.bf16 %v335, %v333
      %v368 = vpack.c.bf16 %v338, %v336
      %v369 = vpack.c.bf16 %v339, %v337
      %v370 = vpack.c.bf16 %v342, %v340
      %v371 = vpack.c.bf16 %v343, %v341
      %v372 = vld [vmem:[%s1] sm:$0xff]
      %v373 = vld [vmem:[%s1 + $0x8] sm:$0xff]
      %v374 = vld [vmem:[%s1 + $0x10] sm:$0xff]
      %v375 = vld [vmem:[%s1 + $0x18] sm:$0xff]
      %v376 = vld [vmem:[%s1 + $0x20] sm:$0xff]
      %v377 = vld [vmem:[%s1 + $0x28] sm:$0xff]
      %v378 = vld [vmem:[%s1 + $0x30] sm:$0xff]
      %v379 = vld [vmem:[%s1 + $0x38] sm:$0xff]
      %v380 = vld [vmem:[%s1 + $0x40] sm:$0xff]
      %v381 = vld [vmem:[%s1 + $0x48] sm:$0xff]
      %v382 = vld [vmem:[%s1 + $0x50] sm:$0xff]
      %v383 = vld [vmem:[%s1 + $0x58] sm:$0xff]
      %v384 = vld [vmem:[%s1 + $0x60] sm:$0xff]
      %v385 = vld [vmem:[%s1 + $0x68] sm:$0xff]
      %v386 = vld [vmem:[%s1 + $0x70] sm:$0xff]
      %v387 = vld [vmem:[%s1 + $0x78] sm:$0xff]
      %v388 = vld [vmem:[%s1 + $0x80] sm:$0xff]
      %v389 = vld [vmem:[%s1 + $0x88] sm:$0xff]
      %v390 = vld [vmem:[%s1 + $0x90] sm:$0xff]
      %v391 = vld [vmem:[%s1 + $0x98] sm:$0xff]
      %v392 = vld [vmem:[%s1 + $0xa0] sm:$0xff]
      %v393 = vld [vmem:[%s1 + $0xa8] sm:$0xff]
      %v394 = vld [vmem:[%s1 + $0xb0] sm:$0xff]
      %v395 = vld [vmem:[%s1 + $0xb8] sm:$0xff]
      %v396 = vld [vmem:[%s1 + $0xc0] sm:$0xff]
      %v397 = vld [vmem:[%s1 + $0xc8] sm:$0xff]
      %v398 = vld [vmem:[%s1 + $0xd0] sm:$0xff]
      %v399 = vld [vmem:[%s1 + $0xd8] sm:$0xff]
      %v400 = vld [vmem:[%s1 + $0xe0] sm:$0xff]
      %v401 = vld [vmem:[%s1 + $0xe8] sm:$0xff]
      %v402 = vld [vmem:[%s1 + $0xf0] sm:$0xff]
      %v403 = vld [vmem:[%s1 + $0xf8] sm:$0xff]
      %v404 = vld [vmem:[%s1 + $0x100] sm:$0xff]
      %v405 = vld [vmem:[%s1 + $0x108] sm:$0xff]
      %v406 = vld [vmem:[%s1 + $0x110] sm:$0xff]
      %v407 = vld [vmem:[%s1 + $0x118] sm:$0xff]
      %v408 = vld [vmem:[%s1 + $0x120] sm:$0xff]
      %v409 = vld [vmem:[%s1 + $0x128] sm:$0xff]
      %v410 = vld [vmem:[%s1 + $0x130] sm:$0xff]
      %v411 = vld [vmem:[%s1 + $0x138] sm:$0xff]
      %v412 = vld [vmem:[%s1 + $0x140] sm:$0xff]
      %v413 = vld [vmem:[%s1 + $0x148] sm:$0xff]
      %v414 = vld [vmem:[%s1 + $0x150] sm:$0xff]
      %v415 = vld [vmem:[%s1 + $0x158] sm:$0xff]
      %v416 = vld [vmem:[%s1 + $0x160] sm:$0xff]
      %v417 = vld [vmem:[%s1 + $0x168] sm:$0xff]
      %v418 = vld [vmem:[%s1 + $0x170] sm:$0xff]
      %v419 = vld [vmem:[%s1 + $0x178] sm:$0xff]
      %v420 = vld [vmem:[%s1 + $0x180] sm:$0xff]
      %v421 = vld [vmem:[%s1 + $0x188] sm:$0xff]
      %v422 = vld [vmem:[%s1 + $0x190] sm:$0xff]
      %v423 = vld [vmem:[%s1 + $0x198] sm:$0xff]
      %v424 = vld [vmem:[%s1 + $0x1a0] sm:$0xff]
      %v425 = vld [vmem:[%s1 + $0x1a8] sm:$0xff]
      %v426 = vld [vmem:[%s1 + $0x1b0] sm:$0xff]
      %v427 = vld [vmem:[%s1 + $0x1b8] sm:$0xff]
      %v428 = vld [vmem:[%s2] sm:$0xff]
      %v429 = vld [vmem:[%s2 + $0x8] sm:$0xff]
      %v430 = vld [vmem:[%s2 + $0x10] sm:$0xff]
      %v431 = vld [vmem:[%s2 + $0x18] sm:$0xff]
      %v432 = vld [vmem:[%s2 + $0x20] sm:$0xff]
      %v433 = vld [vmem:[%s2 + $0x28] sm:$0xff]
      %v434 = vld [vmem:[%s2 + $0x30] sm:$0xff]
      %v435 = vld [vmem:[%s2 + $0x38] sm:$0xff]
      %v436 = vld [vmem:[%s2 + $0x40] sm:$0xff]
      %v437 = vld [vmem:[%s2 + $0x48] sm:$0xff]
      %v438 = vld [vmem:[%s2 + $0x50] sm:$0xff]
      %v439 = vld [vmem:[%s2 + $0x58] sm:$0xff]
      %v440 = vld [vmem:[%s2 + $0x60] sm:$0xff]
      %v441 = vld [vmem:[%s2 + $0x68] sm:$0xff]
      %v442 = vld [vmem:[%s2 + $0x70] sm:$0xff]
      %v443 = vld [vmem:[%s2 + $0x78] sm:$0xff]
      %v444 = vld [vmem:[%s2 + $0x80] sm:$0xff]
      %v445 = vld [vmem:[%s2 + $0x88] sm:$0xff]
      %v446 = vld [vmem:[%s2 + $0x90] sm:$0xff]
      %v447 = vld [vmem:[%s2 + $0x98] sm:$0xff]
      %v448 = vld [vmem:[%s2 + $0xa0] sm:$0xff]
      %v449 = vld [vmem:[%s2 + $0xa8] sm:$0xff]
      %v450 = vld [vmem:[%s2 + $0xb0] sm:$0xff]
      %v451 = vld [vmem:[%s2 + $0xb8] sm:$0xff]
      %v452 = vld [vmem:[%s2 + $0xc0] sm:$0xff]
      %v453 = vld [vmem:[%s2 + $0xc8] sm:$0xff]
      %v454 = vld [vmem:[%s2 + $0xd0] sm:$0xff]
      %v455 = vld [vmem:[%s2 + $0xd8] sm:$0xff]
      %v456 = vld [vmem:[%s2 + $0xe0] sm:$0xff]
      %v457 = vld [vmem:[%s2 + $0xe8] sm:$0xff]
      %v458 = vld [vmem:[%s2 + $0xf0] sm:$0xff]
      %v459 = vld [vmem:[%s2 + $0xf8] sm:$0xff]
      %v460 = vld [vmem:[%s2 + $0x100] sm:$0xff]
      %v461 = vld [vmem:[%s2 + $0x108] sm:$0xff]
      %v462 = vld [vmem:[%s2 + $0x110] sm:$0xff]
      %v463 = vld [vmem:[%s2 + $0x118] sm:$0xff]
      %v464 = vld [vmem:[%s2 + $0x120] sm:$0xff]
      %v465 = vld [vmem:[%s2 + $0x128] sm:$0xff]
      %v466 = vld [vmem:[%s2 + $0x130] sm:$0xff]
      %v467 = vld [vmem:[%s2 + $0x138] sm:$0xff]
      %v468 = vld [vmem:[%s2 + $0x140] sm:$0xff]
      %v469 = vld [vmem:[%s2 + $0x148] sm:$0xff]
      %v470 = vld [vmem:[%s2 + $0x150] sm:$0xff]
      %v471 = vld [vmem:[%s2 + $0x158] sm:$0xff]
      %v472 = vld [vmem:[%s2 + $0x160] sm:$0xff]
      %v473 = vld [vmem:[%s2 + $0x168] sm:$0xff]
      %v474 = vld [vmem:[%s2 + $0x170] sm:$0xff]
      %v475 = vld [vmem:[%s2 + $0x178] sm:$0xff]
      %v476 = vld [vmem:[%s2 + $0x180] sm:$0xff]
      %v477 = vld [vmem:[%s2 + $0x188] sm:$0xff]
      %v478 = vld [vmem:[%s2 + $0x190] sm:$0xff]
      %v479 = vld [vmem:[%s2 + $0x198] sm:$0xff]
      %v480 = vld [vmem:[%s2 + $0x1a0] sm:$0xff]
      %v481 = vld [vmem:[%s2 + $0x1a8] sm:$0xff]
      %v482 = vld [vmem:[%s2 + $0x1b0] sm:$0xff]
      %v483 = vld [vmem:[%s2 + $0x1b8] sm:$0xff]
      %485 = vset.pattern.permute.xlu0 0
      %486 = vperm.xlu0 %485, %v428
      %v487 = vpop.permute.xlu0 %486
      %490 = vset.pattern.permute.xlu0 0
      %491 = vperm.xlu0 %490, %v429
      %v492 = vpop.permute.xlu0 %491
      %495 = vset.pattern.permute.xlu0 0
      %496 = vperm.xlu0 %495, %v430
      %v497 = vpop.permute.xlu0 %496
      %500 = vset.pattern.permute.xlu0 0
      %501 = vperm.xlu0 %500, %v431
      %v502 = vpop.permute.xlu0 %501
      %505 = vset.pattern.permute.xlu0 0
      %506 = vperm.xlu0 %505, %v432
      %v507 = vpop.permute.xlu0 %506
      %510 = vset.pattern.permute.xlu0 0
      %511 = vperm.xlu0 %510, %v433
      %v512 = vpop.permute.xlu0 %511
      %515 = vset.pattern.permute.xlu0 0
      %516 = vperm.xlu0 %515, %v434
      %v517 = vpop.permute.xlu0 %516
      %520 = vset.pattern.permute.xlu0 0
      %521 = vperm.xlu0 %520, %v435
      %v522 = vpop.permute.xlu0 %521
      %525 = vset.pattern.permute.xlu0 0
      %526 = vperm.xlu0 %525, %v436
      %v527 = vpop.permute.xlu0 %526
      %530 = vset.pattern.permute.xlu0 0
      %531 = vperm.xlu0 %530, %v437
      %v532 = vpop.permute.xlu0 %531
      %535 = vset.pattern.permute.xlu0 0
      %536 = vperm.xlu0 %535, %v438
      %v537 = vpop.permute.xlu0 %536
      %540 = vset.pattern.permute.xlu0 0
      %541 = vperm.xlu0 %540, %v439
      %v542 = vpop.permute.xlu0 %541
      %545 = vset.pattern.permute.xlu0 0
      %546 = vperm.xlu0 %545, %v440
      %v547 = vpop.permute.xlu0 %546
      %550 = vset.pattern.permute.xlu0 0
      %551 = vperm.xlu0 %550, %v441
      %v552 = vpop.permute.xlu0 %551
      %555 = vset.pattern.permute.xlu0 0
      %556 = vperm.xlu0 %555, %v442
      %v557 = vpop.permute.xlu0 %556
      %560 = vset.pattern.permute.xlu0 0
      %561 = vperm.xlu0 %560, %v443
      %v562 = vpop.permute.xlu0 %561
      %565 = vset.pattern.permute.xlu0 0
      %566 = vperm.xlu0 %565, %v444
      %v567 = vpop.permute.xlu0 %566
      %570 = vset.pattern.permute.xlu0 0
      %571 = vperm.xlu0 %570, %v445
      %v572 = vpop.permute.xlu0 %571
      %575 = vset.pattern.permute.xlu0 0
      %576 = vperm.xlu0 %575, %v446
      %v577 = vpop.permute.xlu0 %576
      %580 = vset.pattern.permute.xlu0 0
      %581 = vperm.xlu0 %580, %v447
      %v582 = vpop.permute.xlu0 %581
      %585 = vset.pattern.permute.xlu0 0
      %586 = vperm.xlu0 %585, %v448
      %v587 = vpop.permute.xlu0 %586
      %590 = vset.pattern.permute.xlu0 0
      %591 = vperm.xlu0 %590, %v449
      %v592 = vpop.permute.xlu0 %591
      %595 = vset.pattern.permute.xlu0 0
      %596 = vperm.xlu0 %595, %v450
      %v597 = vpop.permute.xlu0 %596
      %600 = vset.pattern.permute.xlu0 0
      %601 = vperm.xlu0 %600, %v451
      %v602 = vpop.permute.xlu0 %601
      %605 = vset.pattern.permute.xlu0 0
      %606 = vperm.xlu0 %605, %v452
      %v607 = vpop.permute.xlu0 %606
      %610 = vset.pattern.permute.xlu0 0
      %611 = vperm.xlu0 %610, %v453
      %v612 = vpop.permute.xlu0 %611
      %615 = vset.pattern.permute.xlu0 0
      %616 = vperm.xlu0 %615, %v454
      %v617 = vpop.permute.xlu0 %616
      %620 = vset.pattern.permute.xlu0 0
      %621 = vperm.xlu0 %620, %v455
      %v622 = vpop.permute.xlu0 %621
      %625 = vset.pattern.permute.xlu0 0
      %626 = vperm.xlu0 %625, %v456
      %v627 = vpop.permute.xlu0 %626
      %630 = vset.pattern.permute.xlu0 0
      %631 = vperm.xlu0 %630, %v457
      %v632 = vpop.permute.xlu0 %631
      %635 = vset.pattern.permute.xlu0 0
      %636 = vperm.xlu0 %635, %v458
      %v637 = vpop.permute.xlu0 %636
      %640 = vset.pattern.permute.xlu0 0
      %641 = vperm.xlu0 %640, %v459
      %v642 = vpop.permute.xlu0 %641
      %645 = vset.pattern.permute.xlu0 0
      %646 = vperm.xlu0 %645, %v460
      %v647 = vpop.permute.xlu0 %646
      %650 = vset.pattern.permute.xlu0 0
      %651 = vperm.xlu0 %650, %v461
      %v652 = vpop.permute.xlu0 %651
      %655 = vset.pattern.permute.xlu0 0
      %656 = vperm.xlu0 %655, %v462
      %v657 = vpop.permute.xlu0 %656
      %660 = vset.pattern.permute.xlu0 0
      %661 = vperm.xlu0 %660, %v463
      %v662 = vpop.permute.xlu0 %661
      %665 = vset.pattern.permute.xlu0 0
      %666 = vperm.xlu0 %665, %v464
      %v667 = vpop.permute.xlu0 %666
      %670 = vset.pattern.permute.xlu0 0
      %671 = vperm.xlu0 %670, %v465
      %v672 = vpop.permute.xlu0 %671
      %675 = vset.pattern.permute.xlu0 0
      %676 = vperm.xlu0 %675, %v466
      %v677 = vpop.permute.xlu0 %676
      %680 = vset.pattern.permute.xlu0 0
      %681 = vperm.xlu0 %680, %v467
      %v682 = vpop.permute.xlu0 %681
      %685 = vset.pattern.permute.xlu0 0
      %686 = vperm.xlu0 %685, %v468
      %v687 = vpop.permute.xlu0 %686
      %690 = vset.pattern.permute.xlu0 0
      %691 = vperm.xlu0 %690, %v469
      %v692 = vpop.permute.xlu0 %691
      %695 = vset.pattern.permute.xlu0 0
      %696 = vperm.xlu0 %695, %v470
      %v697 = vpop.permute.xlu0 %696
      %700 = vset.pattern.permute.xlu0 0
      %701 = vperm.xlu0 %700, %v471
      %v702 = vpop.permute.xlu0 %701
      %705 = vset.pattern.permute.xlu0 0
      %706 = vperm.xlu0 %705, %v472
      %v707 = vpop.permute.xlu0 %706
      %710 = vset.pattern.permute.xlu0 0
      %711 = vperm.xlu0 %710, %v473
      %v712 = vpop.permute.xlu0 %711
      %715 = vset.pattern.permute.xlu0 0
      %716 = vperm.xlu0 %715, %v474
      %v717 = vpop.permute.xlu0 %716
      %720 = vset.pattern.permute.xlu0 0
      %721 = vperm.xlu0 %720, %v475
      %v722 = vpop.permute.xlu0 %721
      %725 = vset.pattern.permute.xlu0 0
      %726 = vperm.xlu0 %725, %v476
      %v727 = vpop.permute.xlu0 %726
      %730 = vset.pattern.permute.xlu0 0
      %731 = vperm.xlu0 %730, %v477
      %v732 = vpop.permute.xlu0 %731
      %735 = vset.pattern.permute.xlu0 0
      %736 = vperm.xlu0 %735, %v478
      %v737 = vpop.permute.xlu0 %736
      %740 = vset.pattern.permute.xlu0 0
      %741 = vperm.xlu0 %740, %v479
      %v742 = vpop.permute.xlu0 %741
      %745 = vset.pattern.permute.xlu0 0
      %746 = vperm.xlu0 %745, %v480
      %v747 = vpop.permute.xlu0 %746
      %750 = vset.pattern.permute.xlu0 0
      %751 = vperm.xlu0 %750, %v481
      %v752 = vpop.permute.xlu0 %751
      %755 = vset.pattern.permute.xlu0 0
      %756 = vperm.xlu0 %755, %v482
      %v757 = vpop.permute.xlu0 %756
      %760 = vset.pattern.permute.xlu0 0
      %761 = vperm.xlu0 %760, %v483
      %v762 = vpop.permute.xlu0 %761
      %v820 = vunpack.c.l.b16 %v372
      %v821 = vunpack.c.h.b16 %v372
      %v822 = vunpack.c.l.b16 %v373
      %v823 = vunpack.c.h.b16 %v373
      %v824 = vunpack.c.l.b16 %v374
      %v825 = vunpack.c.h.b16 %v374
      %v826 = vunpack.c.l.b16 %v375
      %v827 = vunpack.c.h.b16 %v375
      %v828 = vunpack.c.l.b16 %v376
      %v829 = vunpack.c.h.b16 %v376
      %v830 = vunpack.c.l.b16 %v377
      %v831 = vunpack.c.h.b16 %v377
      %v832 = vunpack.c.l.b16 %v378
      %v833 = vunpack.c.h.b16 %v378
      %v834 = vunpack.c.l.b16 %v379
      %v835 = vunpack.c.h.b16 %v379
      %v836 = vunpack.c.l.b16 %v380
      %v837 = vunpack.c.h.b16 %v380
      %v838 = vunpack.c.l.b16 %v381
      %v839 = vunpack.c.h.b16 %v381
      %v840 = vunpack.c.l.b16 %v382
      %v841 = vunpack.c.h.b16 %v382
      %v842 = vunpack.c.l.b16 %v383
      %v843 = vunpack.c.h.b16 %v383
      %v844 = vunpack.c.l.b16 %v384
      %v845 = vunpack.c.h.b16 %v384
      %v846 = vunpack.c.l.b16 %v385
      %v847 = vunpack.c.h.b16 %v385
      %v848 = vunpack.c.l.b16 %v386
      %v849 = vunpack.c.h.b16 %v386
      %v850 = vunpack.c.l.b16 %v387
      %v851 = vunpack.c.h.b16 %v387
      %v852 = vunpack.c.l.b16 %v388
      %v853 = vunpack.c.h.b16 %v388
      %v854 = vunpack.c.l.b16 %v389
      %v855 = vunpack.c.h.b16 %v389
      %v856 = vunpack.c.l.b16 %v390
      %v857 = vunpack.c.h.b16 %v390
      %v858 = vunpack.c.l.b16 %v391
      %v859 = vunpack.c.h.b16 %v391
      %v860 = vunpack.c.l.b16 %v392
      %v861 = vunpack.c.h.b16 %v392
      %v862 = vunpack.c.l.b16 %v393
      %v863 = vunpack.c.h.b16 %v393
      %v864 = vunpack.c.l.b16 %v394
      %v865 = vunpack.c.h.b16 %v394
      %v866 = vunpack.c.l.b16 %v395
      %v867 = vunpack.c.h.b16 %v395
      %v868 = vunpack.c.l.b16 %v396
      %v869 = vunpack.c.h.b16 %v396
      %v870 = vunpack.c.l.b16 %v397
      %v871 = vunpack.c.h.b16 %v397
      %v872 = vunpack.c.l.b16 %v398
      %v873 = vunpack.c.h.b16 %v398
      %v874 = vunpack.c.l.b16 %v399
      %v875 = vunpack.c.h.b16 %v399
      %v876 = vunpack.c.l.b16 %v400
      %v877 = vunpack.c.h.b16 %v400
      %v878 = vunpack.c.l.b16 %v401
      %v879 = vunpack.c.h.b16 %v401
      %v880 = vunpack.c.l.b16 %v402
      %v881 = vunpack.c.h.b16 %v402
      %v882 = vunpack.c.l.b16 %v403
      %v883 = vunpack.c.h.b16 %v403
      %v884 = vunpack.c.l.b16 %v404
      %v885 = vunpack.c.h.b16 %v404
      %v886 = vunpack.c.l.b16 %v405
      %v887 = vunpack.c.h.b16 %v405
      %v888 = vunpack.c.l.b16 %v406
      %v889 = vunpack.c.h.b16 %v406
      %v890 = vunpack.c.l.b16 %v407
      %v891 = vunpack.c.h.b16 %v407
      %v892 = vunpack.c.l.b16 %v408
      %v893 = vunpack.c.h.b16 %v408
      %v894 = vunpack.c.l.b16 %v409
      %v895 = vunpack.c.h.b16 %v409
      %v896 = vunpack.c.l.b16 %v410
      %v897 = vunpack.c.h.b16 %v410
      %v898 = vunpack.c.l.b16 %v411
      %v899 = vunpack.c.h.b16 %v411
      %v900 = vunpack.c.l.b16 %v412
      %v901 = vunpack.c.h.b16 %v412
      %v902 = vunpack.c.l.b16 %v413
      %v903 = vunpack.c.h.b16 %v413
      %v904 = vunpack.c.l.b16 %v414
      %v905 = vunpack.c.h.b16 %v414
      %v906 = vunpack.c.l.b16 %v415
      %v907 = vunpack.c.h.b16 %v415
      %v908 = vunpack.c.l.b16 %v416
      %v909 = vunpack.c.h.b16 %v416
      %v910 = vunpack.c.l.b16 %v417
      %v911 = vunpack.c.h.b16 %v417
      %v912 = vunpack.c.l.b16 %v418
      %v913 = vunpack.c.h.b16 %v418
      %v914 = vunpack.c.l.b16 %v419
      %v915 = vunpack.c.h.b16 %v419
      %v916 = vunpack.c.l.b16 %v420
      %v917 = vunpack.c.h.b16 %v420
      %v918 = vunpack.c.l.b16 %v421
      %v919 = vunpack.c.h.b16 %v421
      %v920 = vunpack.c.l.b16 %v422
      %v921 = vunpack.c.h.b16 %v422
      %v922 = vunpack.c.l.b16 %v423
      %v923 = vunpack.c.h.b16 %v423
      %v924 = vunpack.c.l.b16 %v424
      %v925 = vunpack.c.h.b16 %v424
      %v926 = vunpack.c.l.b16 %v425
      %v927 = vunpack.c.h.b16 %v425
      %v928 = vunpack.c.l.b16 %v426
      %v929 = vunpack.c.h.b16 %v426
      %v930 = vunpack.c.l.b16 %v427
      %v931 = vunpack.c.h.b16 %v427
      %v932 = vpack.c.b16 %v822, %v820
      %v933 = vpack.c.b16 %v823, %v821
      %v934 = vpack.c.b16 %v826, %v824
      %v935 = vpack.c.b16 %v827, %v825
      %v936 = vpack.c.b16 %v830, %v828
      %v937 = vpack.c.b16 %v831, %v829
      %v938 = vpack.c.b16 %v834, %v832
      %v939 = vpack.c.b16 %v835, %v833
      %v940 = vpack.c.b16 %v838, %v836
      %v941 = vpack.c.b16 %v839, %v837
      %v942 = vpack.c.b16 %v842, %v840
      %v943 = vpack.c.b16 %v843, %v841
      %v944 = vpack.c.b16 %v846, %v844
      %v945 = vpack.c.b16 %v847, %v845
      %v946 = vpack.c.b16 %v850, %v848
      %v947 = vpack.c.b16 %v851, %v849
      %v948 = vpack.c.b16 %v854, %v852
      %v949 = vpack.c.b16 %v855, %v853
      %v950 = vpack.c.b16 %v858, %v856
      %v951 = vpack.c.b16 %v859, %v857
      %v952 = vpack.c.b16 %v862, %v860
      %v953 = vpack.c.b16 %v863, %v861
      %v954 = vpack.c.b16 %v866, %v864
      %v955 = vpack.c.b16 %v867, %v865
      %v956 = vpack.c.b16 %v870, %v868
      %v957 = vpack.c.b16 %v871, %v869
      %v958 = vpack.c.b16 %v874, %v872
      %v959 = vpack.c.b16 %v875, %v873
      %v960 = vpack.c.b16 %v878, %v876
      %v961 = vpack.c.b16 %v879, %v877
      %v962 = vpack.c.b16 %v882, %v880
      %v963 = vpack.c.b16 %v883, %v881
      %v964 = vpack.c.b16 %v886, %v884
      %v965 = vpack.c.b16 %v887, %v885
      %v966 = vpack.c.b16 %v890, %v888
      %v967 = vpack.c.b16 %v891, %v889
      %v968 = vpack.c.b16 %v894, %v892
      %v969 = vpack.c.b16 %v895, %v893
      %v970 = vpack.c.b16 %v898, %v896
      %v971 = vpack.c.b16 %v899, %v897
      %v972 = vpack.c.b16 %v902, %v900
      %v973 = vpack.c.b16 %v903, %v901
      %v974 = vpack.c.b16 %v906, %v904
      %v975 = vpack.c.b16 %v907, %v905
      %v976 = vpack.c.b16 %v910, %v908
      %v977 = vpack.c.b16 %v911, %v909
      %v978 = vpack.c.b16 %v914, %v912
      %v979 = vpack.c.b16 %v915, %v913
      %v980 = vpack.c.b16 %v918, %v916
      %v981 = vpack.c.b16 %v919, %v917
      %v982 = vpack.c.b16 %v922, %v920
      %v983 = vpack.c.b16 %v923, %v921
      %v984 = vpack.c.b16 %v926, %v924
      %v985 = vpack.c.b16 %v927, %v925
      %v986 = vpack.c.b16 %v930, %v928
      %v987 = vpack.c.b16 %v931, %v929
      %vm1016 = vcmask 785408
      %v1018 = vsel %vm1016, %v933, 0
      %v1021 = vsel %vm1016, %v935, 0
      %v1024 = vsel %vm1016, %v937, 0
      %v1027 = vsel %vm1016, %v939, 0
      %v1030 = vsel %vm1016, %v941, 0
      %v1033 = vsel %vm1016, %v943, 0
      %v1036 = vsel %vm1016, %v945, 0
      %v1039 = vsel %vm1016, %v947, 0
      %v1042 = vsel %vm1016, %v949, 0
      %v1045 = vsel %vm1016, %v951, 0
      %v1048 = vsel %vm1016, %v953, 0
      %v1051 = vsel %vm1016, %v955, 0
      %v1054 = vsel %vm1016, %v957, 0
      %v1057 = vsel %vm1016, %v959, 0
      %v1060 = vsel %vm1016, %v961, 0
      %v1063 = vsel %vm1016, %v963, 0
      %v1066 = vsel %vm1016, %v965, 0
      %v1069 = vsel %vm1016, %v967, 0
      %v1072 = vsel %vm1016, %v969, 0
      %v1075 = vsel %vm1016, %v971, 0
      %v1078 = vsel %vm1016, %v973, 0
      %v1081 = vsel %vm1016, %v975, 0
      %v1084 = vsel %vm1016, %v977, 0
      %v1087 = vsel %vm1016, %v979, 0
      %v1090 = vsel %vm1016, %v981, 0
      %v1093 = vsel %vm1016, %v983, 0
      %v1096 = vsel %vm1016, %v985, 0
      %v1099 = vsel %vm1016, %v987, 0
      %1101 = vmatpush.bf16.msra.mxu0 %v358
      %1102 = vmatpush.bf16.msra.mxu0 %v356
      %1103 = vmatpush.bf16.msra.mxu0 %v354
      %1104 = vmatpush.bf16.msra.mxu0 %v352
      %1105 = vmatpush.bf16.msra.mxu0 %v350
      %1106 = vmatpush.bf16.msra.mxu0 %v348
      %1107 = vmatpush.bf16.msra.mxu0 %v346
      %1108 = vmatpush.bf16.msra.mxu0 %v344
      %1109 = vmatmul.bf16.gmra.mxu0 %v932
      %v1110 = vpop.f32.mrf.mxu0
      %v1111 = vadd.f32 %v487, %v1110
      %v1112 = vpop.f32.mrf.mxu0
      %v1113 = vadd.f32 %v492, %v1112
      %1114 = vmatmul.bf16.gmra.mxu0 %v934
      %v1115 = vpop.f32.mrf.mxu0
      %v1116 = vadd.f32 %v497, %v1115
      %v1117 = vpop.f32.mrf.mxu0
      %v1118 = vadd.f32 %v502, %v1117
      %1119 = vmatmul.bf16.gmra.mxu0 %v936
      %v1120 = vpop.f32.mrf.mxu0
      %v1121 = vadd.f32 %v507, %v1120
      %v1122 = vpop.f32.mrf.mxu0
      %v1123 = vadd.f32 %v512, %v1122
      %1124 = vmatmul.bf16.gmra.mxu0 %v938
      %v1125 = vpop.f32.mrf.mxu0
      %v1126 = vadd.f32 %v517, %v1125
      %v1127 = vpop.f32.mrf.mxu0
      %v1128 = vadd.f32 %v522, %v1127
      %1129 = vmatmul.bf16.gmra.mxu0 %v940
      %v1130 = vpop.f32.mrf.mxu0
      %v1131 = vadd.f32 %v527, %v1130
      %v1132 = vpop.f32.mrf.mxu0
      %v1133 = vadd.f32 %v532, %v1132
      %1134 = vmatmul.bf16.gmra.mxu0 %v942
      %v1135 = vpop.f32.mrf.mxu0
      %v1136 = vadd.f32 %v537, %v1135
      %v1137 = vpop.f32.mrf.mxu0
      %v1138 = vadd.f32 %v542, %v1137
      %1139 = vmatmul.bf16.gmra.mxu0 %v944
      %v1140 = vpop.f32.mrf.mxu0
      %v1141 = vadd.f32 %v547, %v1140
      %v1142 = vpop.f32.mrf.mxu0
      %v1143 = vadd.f32 %v552, %v1142
      %1144 = vmatmul.bf16.gmra.mxu0 %v946
      %v1145 = vpop.f32.mrf.mxu0
      %v1146 = vadd.f32 %v557, %v1145
      %v1147 = vpop.f32.mrf.mxu0
      %v1148 = vadd.f32 %v562, %v1147
      %1149 = vmatmul.bf16.gmra.mxu0 %v948
      %v1150 = vpop.f32.mrf.mxu0
      %v1151 = vadd.f32 %v567, %v1150
      %v1152 = vpop.f32.mrf.mxu0
      %v1153 = vadd.f32 %v572, %v1152
      %1154 = vmatmul.bf16.gmra.mxu0 %v950
      %v1155 = vpop.f32.mrf.mxu0
      %v1156 = vadd.f32 %v577, %v1155
      %v1157 = vpop.f32.mrf.mxu0
      %v1158 = vadd.f32 %v582, %v1157
      %1159 = vmatmul.bf16.gmra.mxu0 %v952
      %v1160 = vpop.f32.mrf.mxu0
      %v1161 = vadd.f32 %v587, %v1160
      %v1162 = vpop.f32.mrf.mxu0
      %v1163 = vadd.f32 %v592, %v1162
      %1164 = vmatmul.bf16.gmra.mxu0 %v954
      %v1165 = vpop.f32.mrf.mxu0
      %v1166 = vadd.f32 %v597, %v1165
      %v1167 = vpop.f32.mrf.mxu0
      %v1168 = vadd.f32 %v602, %v1167
      %1169 = vmatmul.bf16.gmra.mxu0 %v956
      %v1170 = vpop.f32.mrf.mxu0
      %v1171 = vadd.f32 %v607, %v1170
      %v1172 = vpop.f32.mrf.mxu0
      %v1173 = vadd.f32 %v612, %v1172
      %1174 = vmatmul.bf16.gmra.mxu0 %v958
      %v1175 = vpop.f32.mrf.mxu0
      %v1176 = vadd.f32 %v617, %v1175
      %v1177 = vpop.f32.mrf.mxu0
      %v1178 = vadd.f32 %v622, %v1177
      %1179 = vmatmul.bf16.gmra.mxu0 %v960
      %v1180 = vpop.f32.mrf.mxu0
      %v1181 = vadd.f32 %v627, %v1180
      %v1182 = vpop.f32.mrf.mxu0
      %v1183 = vadd.f32 %v632, %v1182
      %1184 = vmatmul.bf16.gmra.mxu0 %v962
      %v1185 = vpop.f32.mrf.mxu0
      %v1186 = vadd.f32 %v637, %v1185
      %v1187 = vpop.f32.mrf.mxu0
      %v1188 = vadd.f32 %v642, %v1187
      %1189 = vmatmul.bf16.gmra.mxu0 %v964
      %v1190 = vpop.f32.mrf.mxu0
      %v1191 = vadd.f32 %v647, %v1190
      %v1192 = vpop.f32.mrf.mxu0
      %v1193 = vadd.f32 %v652, %v1192
      %1194 = vmatmul.bf16.gmra.mxu0 %v966
      %v1195 = vpop.f32.mrf.mxu0
      %v1196 = vadd.f32 %v657, %v1195
      %v1197 = vpop.f32.mrf.mxu0
      %v1198 = vadd.f32 %v662, %v1197
      %1199 = vmatmul.bf16.gmra.mxu0 %v968
      %v1200 = vpop.f32.mrf.mxu0
      %v1201 = vadd.f32 %v667, %v1200
      %v1202 = vpop.f32.mrf.mxu0
      %v1203 = vadd.f32 %v672, %v1202
      %1204 = vmatmul.bf16.gmra.mxu0 %v970
      %v1205 = vpop.f32.mrf.mxu0
      %v1206 = vadd.f32 %v677, %v1205
      %v1207 = vpop.f32.mrf.mxu0
      %v1208 = vadd.f32 %v682, %v1207
      %1209 = vmatmul.bf16.gmra.mxu0 %v972
      %v1210 = vpop.f32.mrf.mxu0
      %v1211 = vadd.f32 %v687, %v1210
      %v1212 = vpop.f32.mrf.mxu0
      %v1213 = vadd.f32 %v692, %v1212
      %1214 = vmatmul.bf16.gmra.mxu0 %v974
      %v1215 = vpop.f32.mrf.mxu0
      %v1216 = vadd.f32 %v697, %v1215
      %v1217 = vpop.f32.mrf.mxu0
      %v1218 = vadd.f32 %v702, %v1217
      %1219 = vmatmul.bf16.gmra.mxu0 %v976
      %v1220 = vpop.f32.mrf.mxu0
      %v1221 = vadd.f32 %v707, %v1220
      %v1222 = vpop.f32.mrf.mxu0
      %v1223 = vadd.f32 %v712, %v1222
      %1224 = vmatmul.bf16.gmra.mxu0 %v978
      %v1225 = vpop.f32.mrf.mxu0
      %v1226 = vadd.f32 %v717, %v1225
      %v1227 = vpop.f32.mrf.mxu0
      %v1228 = vadd.f32 %v722, %v1227
      %1229 = vmatmul.bf16.gmra.mxu0 %v980
      %v1230 = vpop.f32.mrf.mxu0
      %v1231 = vadd.f32 %v727, %v1230
      %v1232 = vpop.f32.mrf.mxu0
      %v1233 = vadd.f32 %v732, %v1232
      %1234 = vmatmul.bf16.gmra.mxu0 %v982
      %v1235 = vpop.f32.mrf.mxu0
      %v1236 = vadd.f32 %v737, %v1235
      %v1237 = vpop.f32.mrf.mxu0
      %v1238 = vadd.f32 %v742, %v1237
      %1239 = vmatmul.bf16.gmra.mxu0 %v984
      %v1240 = vpop.f32.mrf.mxu0
      %v1241 = vadd.f32 %v747, %v1240
      %v1242 = vpop.f32.mrf.mxu0
      %v1243 = vadd.f32 %v752, %v1242
      %1244 = vmatmul.bf16.gmra.mxu0 %v986
      %v1245 = vpop.f32.mrf.mxu0
      %v1246 = vadd.f32 %v757, %v1245
      %v1247 = vpop.f32.mrf.mxu0
      %v1248 = vadd.f32 %v762, %v1247
      %1249 = vdwg.mxu0
      %1250 = vmatpush.bf16.msra.mxu0 0
      %1251 = vmatpush.bf16.msra.mxu0 0
      %1252 = vmatpush.bf16.msra.mxu0 %v370
      %1253 = vmatpush.bf16.msra.mxu0 %v368
      %1254 = vmatpush.bf16.msra.mxu0 %v366
      %1255 = vmatpush.bf16.msra.mxu0 %v364
      %1256 = vmatpush.bf16.msra.mxu0 %v362
      %1257 = vmatpush.bf16.msra.mxu0 %v360
      %1258 = vmatmul.bf16.gmra.mxu0 %v1018
      %v1259 = vpop.f32.mrf.mxu0
      %v1260 = vadd.f32 %v1111, %v1259
      %v1261 = vpop.f32.mrf.mxu0
      %v1262 = vadd.f32 %v1113, %v1261
      %1263 = vmatmul.bf16.gmra.mxu0 %v1021
      %v1264 = vpop.f32.mrf.mxu0
      %v1265 = vadd.f32 %v1116, %v1264
      %v1266 = vpop.f32.mrf.mxu0
      %v1267 = vadd.f32 %v1118, %v1266
      %1268 = vmatmul.bf16.gmra.mxu0 %v1024
      %v1269 = vpop.f32.mrf.mxu0
      %v1270 = vadd.f32 %v1121, %v1269
      %v1271 = vpop.f32.mrf.mxu0
      %v1272 = vadd.f32 %v1123, %v1271
      %1273 = vmatmul.bf16.gmra.mxu0 %v1027
      %v1274 = vpop.f32.mrf.mxu0
      %v1275 = vadd.f32 %v1126, %v1274
      %v1276 = vpop.f32.mrf.mxu0
      %v1277 = vadd.f32 %v1128, %v1276
      %1278 = vmatmul.bf16.gmra.mxu0 %v1030
      %v1279 = vpop.f32.mrf.mxu0
      %v1280 = vadd.f32 %v1131, %v1279
      %v1281 = vpop.f32.mrf.mxu0
      %v1282 = vadd.f32 %v1133, %v1281
      %1283 = vmatmul.bf16.gmra.mxu0 %v1033
      %v1284 = vpop.f32.mrf.mxu0
      %v1285 = vadd.f32 %v1136, %v1284
      %v1286 = vpop.f32.mrf.mxu0
      %v1287 = vadd.f32 %v1138, %v1286
      %1288 = vmatmul.bf16.gmra.mxu0 %v1036
      %v1289 = vpop.f32.mrf.mxu0
      %v1290 = vadd.f32 %v1141, %v1289
      %v1291 = vpop.f32.mrf.mxu0
      %v1292 = vadd.f32 %v1143, %v1291
      %1293 = vmatmul.bf16.gmra.mxu0 %v1039
      %v1294 = vpop.f32.mrf.mxu0
      %v1295 = vadd.f32 %v1146, %v1294
      %v1296 = vpop.f32.mrf.mxu0
      %v1297 = vadd.f32 %v1148, %v1296
      %1298 = vmatmul.bf16.gmra.mxu0 %v1042
      %v1299 = vpop.f32.mrf.mxu0
      %v1300 = vadd.f32 %v1151, %v1299
      %v1301 = vpop.f32.mrf.mxu0
      %v1302 = vadd.f32 %v1153, %v1301
      %1303 = vmatmul.bf16.gmra.mxu0 %v1045
      %v1304 = vpop.f32.mrf.mxu0
      %v1305 = vadd.f32 %v1156, %v1304
      %v1306 = vpop.f32.mrf.mxu0
      %v1307 = vadd.f32 %v1158, %v1306
      %1308 = vmatmul.bf16.gmra.mxu0 %v1048
      %v1309 = vpop.f32.mrf.mxu0
      %v1310 = vadd.f32 %v1161, %v1309
      %v1311 = vpop.f32.mrf.mxu0
      %v1312 = vadd.f32 %v1163, %v1311
      %1313 = vmatmul.bf16.gmra.mxu0 %v1051
      %v1314 = vpop.f32.mrf.mxu0
      %v1315 = vadd.f32 %v1166, %v1314
      %v1316 = vpop.f32.mrf.mxu0
      %v1317 = vadd.f32 %v1168, %v1316
      %1318 = vmatmul.bf16.gmra.mxu0 %v1054
      %v1319 = vpop.f32.mrf.mxu0
      %v1320 = vadd.f32 %v1171, %v1319
      %v1321 = vpop.f32.mrf.mxu0
      %v1322 = vadd.f32 %v1173, %v1321
      %1323 = vmatmul.bf16.gmra.mxu0 %v1057
      %v1324 = vpop.f32.mrf.mxu0
      %v1325 = vadd.f32 %v1176, %v1324
      %v1326 = vpop.f32.mrf.mxu0
      %v1327 = vadd.f32 %v1178, %v1326
      %1328 = vmatmul.bf16.gmra.mxu0 %v1060
      %v1329 = vpop.f32.mrf.mxu0
      %v1330 = vadd.f32 %v1181, %v1329
      %v1331 = vpop.f32.mrf.mxu0
      %v1332 = vadd.f32 %v1183, %v1331
      %1333 = vmatmul.bf16.gmra.mxu0 %v1063
      %v1334 = vpop.f32.mrf.mxu0
      %v1335 = vadd.f32 %v1186, %v1334
      %v1336 = vpop.f32.mrf.mxu0
      %v1337 = vadd.f32 %v1188, %v1336
      %1338 = vmatmul.bf16.gmra.mxu0 %v1066
      %v1339 = vpop.f32.mrf.mxu0
      %v1340 = vadd.f32 %v1191, %v1339
      %v1341 = vpop.f32.mrf.mxu0
      %v1342 = vadd.f32 %v1193, %v1341
      %1343 = vmatmul.bf16.gmra.mxu0 %v1069
      %v1344 = vpop.f32.mrf.mxu0
      %v1345 = vadd.f32 %v1196, %v1344
      %v1346 = vpop.f32.mrf.mxu0
      %v1347 = vadd.f32 %v1198, %v1346
      %1348 = vmatmul.bf16.gmra.mxu0 %v1072
      %v1349 = vpop.f32.mrf.mxu0
      %v1350 = vadd.f32 %v1201, %v1349
      %v1351 = vpop.f32.mrf.mxu0
      %v1352 = vadd.f32 %v1203, %v1351
      %1353 = vmatmul.bf16.gmra.mxu0 %v1075
      %v1354 = vpop.f32.mrf.mxu0
      %v1355 = vadd.f32 %v1206, %v1354
      %v1356 = vpop.f32.mrf.mxu0
      %v1357 = vadd.f32 %v1208, %v1356
      %1358 = vmatmul.bf16.gmra.mxu0 %v1078
      %v1359 = vpop.f32.mrf.mxu0
      %v1360 = vadd.f32 %v1211, %v1359
      %v1361 = vpop.f32.mrf.mxu0
      %v1362 = vadd.f32 %v1213, %v1361
      %1363 = vmatmul.bf16.gmra.mxu0 %v1081
      %v1364 = vpop.f32.mrf.mxu0
      %v1365 = vadd.f32 %v1216, %v1364
      %v1366 = vpop.f32.mrf.mxu0
      %v1367 = vadd.f32 %v1218, %v1366
      %1368 = vmatmul.bf16.gmra.mxu0 %v1084
      %v1369 = vpop.f32.mrf.mxu0
      %v1370 = vadd.f32 %v1221, %v1369
      %v1371 = vpop.f32.mrf.mxu0
      %v1372 = vadd.f32 %v1223, %v1371
      %1373 = vmatmul.bf16.gmra.mxu0 %v1087
      %v1374 = vpop.f32.mrf.mxu0
      %v1375 = vadd.f32 %v1226, %v1374
      %v1376 = vpop.f32.mrf.mxu0
      %v1377 = vadd.f32 %v1228, %v1376
      %1378 = vmatmul.bf16.gmra.mxu0 %v1090
      %v1379 = vpop.f32.mrf.mxu0
      %v1380 = vadd.f32 %v1231, %v1379
      %v1381 = vpop.f32.mrf.mxu0
      %v1382 = vadd.f32 %v1233, %v1381
      %1383 = vmatmul.bf16.gmra.mxu0 %v1093
      %v1384 = vpop.f32.mrf.mxu0
      %v1385 = vadd.f32 %v1236, %v1384
      %v1386 = vpop.f32.mrf.mxu0
      %v1387 = vadd.f32 %v1238, %v1386
      %1388 = vmatmul.bf16.gmra.mxu0 %v1096
      %v1389 = vpop.f32.mrf.mxu0
      %v1390 = vadd.f32 %v1241, %v1389
      %v1391 = vpop.f32.mrf.mxu0
      %v1392 = vadd.f32 %v1243, %v1391
      %1393 = vmatmul.bf16.gmra.mxu0 %v1099
      %v1394 = vpop.f32.mrf.mxu0
      %v1395 = vadd.f32 %v1246, %v1394
      %v1396 = vpop.f32.mrf.mxu0
      %v1397 = vadd.f32 %v1248, %v1396
      %1398 = vdwg.mxu0
      %1399 = vmatpush.bf16.msra.mxu0 %v359
      %1400 = vmatpush.bf16.msra.mxu0 %v357
      %1401 = vmatpush.bf16.msra.mxu0 %v355
      %1402 = vmatpush.bf16.msra.mxu0 %v353
      %1403 = vmatpush.bf16.msra.mxu0 %v351
      %1404 = vmatpush.bf16.msra.mxu0 %v349
      %1405 = vmatpush.bf16.msra.mxu0 %v347
      %1406 = vmatpush.bf16.msra.mxu0 %v345
      %1407 = vmatmul.bf16.gmra.mxu0 %v932
      %v1408 = vpop.f32.mrf.mxu0
      %v1409 = vadd.f32 %v487, %v1408
      %v1410 = vpop.f32.mrf.mxu0
      %v1411 = vadd.f32 %v492, %v1410
      %1412 = vmatmul.bf16.gmra.mxu0 %v934
      %v1413 = vpop.f32.mrf.mxu0
      %v1414 = vadd.f32 %v497, %v1413
      %v1415 = vpop.f32.mrf.mxu0
      %v1416 = vadd.f32 %v502, %v1415
      %1417 = vmatmul.bf16.gmra.mxu0 %v936
      %v1418 = vpop.f32.mrf.mxu0
      %v1419 = vadd.f32 %v507, %v1418
      %v1420 = vpop.f32.mrf.mxu0
      %v1421 = vadd.f32 %v512, %v1420
      %1422 = vmatmul.bf16.gmra.mxu0 %v938
      %v1423 = vpop.f32.mrf.mxu0
      %v1424 = vadd.f32 %v517, %v1423
      %v1425 = vpop.f32.mrf.mxu0
      %v1426 = vadd.f32 %v522, %v1425
      %1427 = vmatmul.bf16.gmra.mxu0 %v940
      %v1428 = vpop.f32.mrf.mxu0
      %v1429 = vadd.f32 %v527, %v1428
      %v1430 = vpop.f32.mrf.mxu0
      %v1431 = vadd.f32 %v532, %v1430
      %1432 = vmatmul.bf16.gmra.mxu0 %v942
      %v1433 = vpop.f32.mrf.mxu0
      %v1434 = vadd.f32 %v537, %v1433
      %v1435 = vpop.f32.mrf.mxu0
      %v1436 = vadd.f32 %v542, %v1435
      %1437 = vmatmul.bf16.gmra.mxu0 %v944
      %v1438 = vpop.f32.mrf.mxu0
      %v1439 = vadd.f32 %v547, %v1438
      %v1440 = vpop.f32.mrf.mxu0
      %v1441 = vadd.f32 %v552, %v1440
      %1442 = vmatmul.bf16.gmra.mxu0 %v946
      %v1443 = vpop.f32.mrf.mxu0
      %v1444 = vadd.f32 %v557, %v1443
      %v1445 = vpop.f32.mrf.mxu0
      %v1446 = vadd.f32 %v562, %v1445
      %1447 = vmatmul.bf16.gmra.mxu0 %v948
      %v1448 = vpop.f32.mrf.mxu0
      %v1449 = vadd.f32 %v567, %v1448
      %v1450 = vpop.f32.mrf.mxu0
      %v1451 = vadd.f32 %v572, %v1450
      %1452 = vmatmul.bf16.gmra.mxu0 %v950
      %v1453 = vpop.f32.mrf.mxu0
      %v1454 = vadd.f32 %v577, %v1453
      %v1455 = vpop.f32.mrf.mxu0
      %v1456 = vadd.f32 %v582, %v1455
      %1457 = vmatmul.bf16.gmra.mxu0 %v952
      %v1458 = vpop.f32.mrf.mxu0
      %v1459 = vadd.f32 %v587, %v1458
      %v1460 = vpop.f32.mrf.mxu0
      %v1461 = vadd.f32 %v592, %v1460
      %1462 = vmatmul.bf16.gmra.mxu0 %v954
      %v1463 = vpop.f32.mrf.mxu0
      %v1464 = vadd.f32 %v597, %v1463
      %v1465 = vpop.f32.mrf.mxu0
      %v1466 = vadd.f32 %v602, %v1465
      %1467 = vmatmul.bf16.gmra.mxu0 %v956
      %v1468 = vpop.f32.mrf.mxu0
      %v1469 = vadd.f32 %v607, %v1468
      %v1470 = vpop.f32.mrf.mxu0
      %v1471 = vadd.f32 %v612, %v1470
      %1472 = vmatmul.bf16.gmra.mxu0 %v958
      %v1473 = vpop.f32.mrf.mxu0
      %v1474 = vadd.f32 %v617, %v1473
      %v1475 = vpop.f32.mrf.mxu0
      %v1476 = vadd.f32 %v622, %v1475
      %1477 = vmatmul.bf16.gmra.mxu0 %v960
      %v1478 = vpop.f32.mrf.mxu0
      %v1479 = vadd.f32 %v627, %v1478
      %v1480 = vpop.f32.mrf.mxu0
      %v1481 = vadd.f32 %v632, %v1480
      %1482 = vmatmul.bf16.gmra.mxu0 %v962
      %v1483 = vpop.f32.mrf.mxu0
      %v1484 = vadd.f32 %v637, %v1483
      %v1485 = vpop.f32.mrf.mxu0
      %v1486 = vadd.f32 %v642, %v1485
      %1487 = vmatmul.bf16.gmra.mxu0 %v964
      %v1488 = vpop.f32.mrf.mxu0
      %v1489 = vadd.f32 %v647, %v1488
      %v1490 = vpop.f32.mrf.mxu0
      %v1491 = vadd.f32 %v652, %v1490
      %1492 = vmatmul.bf16.gmra.mxu0 %v966
      %v1493 = vpop.f32.mrf.mxu0
      %v1494 = vadd.f32 %v657, %v1493
      %v1495 = vpop.f32.mrf.mxu0
      %v1496 = vadd.f32 %v662, %v1495
      %1497 = vmatmul.bf16.gmra.mxu0 %v968
      %v1498 = vpop.f32.mrf.mxu0
      %v1499 = vadd.f32 %v667, %v1498
      %v1500 = vpop.f32.mrf.mxu0
      %v1501 = vadd.f32 %v672, %v1500
      %1502 = vmatmul.bf16.gmra.mxu0 %v970
      %v1503 = vpop.f32.mrf.mxu0
      %v1504 = vadd.f32 %v677, %v1503
      %v1505 = vpop.f32.mrf.mxu0
      %v1506 = vadd.f32 %v682, %v1505
      %1507 = vmatmul.bf16.gmra.mxu0 %v972
      %v1508 = vpop.f32.mrf.mxu0
      %v1509 = vadd.f32 %v687, %v1508
      %v1510 = vpop.f32.mrf.mxu0
      %v1511 = vadd.f32 %v692, %v1510
      %1512 = vmatmul.bf16.gmra.mxu0 %v974
      %v1513 = vpop.f32.mrf.mxu0
      %v1514 = vadd.f32 %v697, %v1513
      %v1515 = vpop.f32.mrf.mxu0
      %v1516 = vadd.f32 %v702, %v1515
      %1517 = vmatmul.bf16.gmra.mxu0 %v976
      %v1518 = vpop.f32.mrf.mxu0
      %v1519 = vadd.f32 %v707, %v1518
      %v1520 = vpop.f32.mrf.mxu0
      %v1521 = vadd.f32 %v712, %v1520
      %1522 = vmatmul.bf16.gmra.mxu0 %v978
      %v1523 = vpop.f32.mrf.mxu0
      %v1524 = vadd.f32 %v717, %v1523
      %v1525 = vpop.f32.mrf.mxu0
      %v1526 = vadd.f32 %v722, %v1525
      %1527 = vmatmul.bf16.gmra.mxu0 %v980
      %v1528 = vpop.f32.mrf.mxu0
      %v1529 = vadd.f32 %v727, %v1528
      %v1530 = vpop.f32.mrf.mxu0
      %v1531 = vadd.f32 %v732, %v1530
      %1532 = vmatmul.bf16.gmra.mxu0 %v982
      %v1533 = vpop.f32.mrf.mxu0
      %v1534 = vadd.f32 %v737, %v1533
      %v1535 = vpop.f32.mrf.mxu0
      %v1536 = vadd.f32 %v742, %v1535
      %1537 = vmatmul.bf16.gmra.mxu0 %v984
      %v1538 = vpop.f32.mrf.mxu0
      %v1539 = vadd.f32 %v747, %v1538
      %v1540 = vpop.f32.mrf.mxu0
      %v1541 = vadd.f32 %v752, %v1540
      %1542 = vmatmul.bf16.gmra.mxu0 %v986
      %v1543 = vpop.f32.mrf.mxu0
      %v1544 = vadd.f32 %v757, %v1543
      %v1545 = vpop.f32.mrf.mxu0
      %v1546 = vadd.f32 %v762, %v1545
      %1547 = vdwg.mxu0
      %1548 = vmatpush.bf16.msra.mxu0 0
      %1549 = vmatpush.bf16.msra.mxu0 0
      %1550 = vmatpush.bf16.msra.mxu0 %v371
      %1551 = vmatpush.bf16.msra.mxu0 %v369
      %1552 = vmatpush.bf16.msra.mxu0 %v367
      %1553 = vmatpush.bf16.msra.mxu0 %v365
      %1554 = vmatpush.bf16.msra.mxu0 %v363
      %1555 = vmatpush.bf16.msra.mxu0 %v361
      %1556 = vmatmul.bf16.gmra.mxu0 %v1018
      %v1557 = vpop.f32.mrf.mxu0
      %v1558 = vadd.f32 %v1409, %v1557
      %v1559 = vpop.f32.mrf.mxu0
      %v1560 = vadd.f32 %v1411, %v1559
      %1561 = vmatmul.bf16.gmra.mxu0 %v1021
      %v1562 = vpop.f32.mrf.mxu0
      %v1563 = vadd.f32 %v1414, %v1562
      %v1564 = vpop.f32.mrf.mxu0
      %v1565 = vadd.f32 %v1416, %v1564
      %1566 = vmatmul.bf16.gmra.mxu0 %v1024
      %v1567 = vpop.f32.mrf.mxu0
      %v1568 = vadd.f32 %v1419, %v1567
      %v1569 = vpop.f32.mrf.mxu0
      %v1570 = vadd.f32 %v1421, %v1569
      %1571 = vmatmul.bf16.gmra.mxu0 %v1027
      %v1572 = vpop.f32.mrf.mxu0
      %v1573 = vadd.f32 %v1424, %v1572
      %v1574 = vpop.f32.mrf.mxu0
      %v1575 = vadd.f32 %v1426, %v1574
      %1576 = vmatmul.bf16.gmra.mxu0 %v1030
      %v1577 = vpop.f32.mrf.mxu0
      %v1578 = vadd.f32 %v1429, %v1577
      %v1579 = vpop.f32.mrf.mxu0
      %v1580 = vadd.f32 %v1431, %v1579
      %1581 = vmatmul.bf16.gmra.mxu0 %v1033
      %v1582 = vpop.f32.mrf.mxu0
      %v1583 = vadd.f32 %v1434, %v1582
      %v1584 = vpop.f32.mrf.mxu0
      %v1585 = vadd.f32 %v1436, %v1584
      %1586 = vmatmul.bf16.gmra.mxu0 %v1036
      %v1587 = vpop.f32.mrf.mxu0
      %v1588 = vadd.f32 %v1439, %v1587
      %v1589 = vpop.f32.mrf.mxu0
      %v1590 = vadd.f32 %v1441, %v1589
      %1591 = vmatmul.bf16.gmra.mxu0 %v1039
      %v1592 = vpop.f32.mrf.mxu0
      %v1593 = vadd.f32 %v1444, %v1592
      %v1594 = vpop.f32.mrf.mxu0
      %v1595 = vadd.f32 %v1446, %v1594
      %1596 = vmatmul.bf16.gmra.mxu0 %v1042
      %v1597 = vpop.f32.mrf.mxu0
      %v1598 = vadd.f32 %v1449, %v1597
      %v1599 = vpop.f32.mrf.mxu0
      %v1600 = vadd.f32 %v1451, %v1599
      %1601 = vmatmul.bf16.gmra.mxu0 %v1045
      %v1602 = vpop.f32.mrf.mxu0
      %v1603 = vadd.f32 %v1454, %v1602
      %v1604 = vpop.f32.mrf.mxu0
      %v1605 = vadd.f32 %v1456, %v1604
      %1606 = vmatmul.bf16.gmra.mxu0 %v1048
      %v1607 = vpop.f32.mrf.mxu0
      %v1608 = vadd.f32 %v1459, %v1607
      %v1609 = vpop.f32.mrf.mxu0
      %v1610 = vadd.f32 %v1461, %v1609
      %1611 = vmatmul.bf16.gmra.mxu0 %v1051
      %v1612 = vpop.f32.mrf.mxu0
      %v1613 = vadd.f32 %v1464, %v1612
      %v1614 = vpop.f32.mrf.mxu0
      %v1615 = vadd.f32 %v1466, %v1614
      %1616 = vmatmul.bf16.gmra.mxu0 %v1054
      %v1617 = vpop.f32.mrf.mxu0
      %v1618 = vadd.f32 %v1469, %v1617
      %v1619 = vpop.f32.mrf.mxu0
      %v1620 = vadd.f32 %v1471, %v1619
      %1621 = vmatmul.bf16.gmra.mxu0 %v1057
      %v1622 = vpop.f32.mrf.mxu0
      %v1623 = vadd.f32 %v1474, %v1622
      %v1624 = vpop.f32.mrf.mxu0
      %v1625 = vadd.f32 %v1476, %v1624
      %1626 = vmatmul.bf16.gmra.mxu0 %v1060
      %v1627 = vpop.f32.mrf.mxu0
      %v1628 = vadd.f32 %v1479, %v1627
      %v1629 = vpop.f32.mrf.mxu0
      %v1630 = vadd.f32 %v1481, %v1629
      %1631 = vmatmul.bf16.gmra.mxu0 %v1063
      %v1632 = vpop.f32.mrf.mxu0
      %v1633 = vadd.f32 %v1484, %v1632
      %v1634 = vpop.f32.mrf.mxu0
      %v1635 = vadd.f32 %v1486, %v1634
      %1636 = vmatmul.bf16.gmra.mxu0 %v1066
      %v1637 = vpop.f32.mrf.mxu0
      %v1638 = vadd.f32 %v1489, %v1637
      %v1639 = vpop.f32.mrf.mxu0
      %v1640 = vadd.f32 %v1491, %v1639
      %1641 = vmatmul.bf16.gmra.mxu0 %v1069
      %v1642 = vpop.f32.mrf.mxu0
      %v1643 = vadd.f32 %v1494, %v1642
      %v1644 = vpop.f32.mrf.mxu0
      %v1645 = vadd.f32 %v1496, %v1644
      %1646 = vmatmul.bf16.gmra.mxu0 %v1072
      %v1647 = vpop.f32.mrf.mxu0
      %v1648 = vadd.f32 %v1499, %v1647
      %v1649 = vpop.f32.mrf.mxu0
      %v1650 = vadd.f32 %v1501, %v1649
      %1651 = vmatmul.bf16.gmra.mxu0 %v1075
      %v1652 = vpop.f32.mrf.mxu0
      %v1653 = vadd.f32 %v1504, %v1652
      %v1654 = vpop.f32.mrf.mxu0
      %v1655 = vadd.f32 %v1506, %v1654
      %1656 = vmatmul.bf16.gmra.mxu0 %v1078
      %v1657 = vpop.f32.mrf.mxu0
      %v1658 = vadd.f32 %v1509, %v1657
      %v1659 = vpop.f32.mrf.mxu0
      %v1660 = vadd.f32 %v1511, %v1659
      %1661 = vmatmul.bf16.gmra.mxu0 %v1081
      %v1662 = vpop.f32.mrf.mxu0
      %v1663 = vadd.f32 %v1514, %v1662
      %v1664 = vpop.f32.mrf.mxu0
      %v1665 = vadd.f32 %v1516, %v1664
      %1666 = vmatmul.bf16.gmra.mxu0 %v1084
      %v1667 = vpop.f32.mrf.mxu0
      %v1668 = vadd.f32 %v1519, %v1667
      %v1669 = vpop.f32.mrf.mxu0
      %v1670 = vadd.f32 %v1521, %v1669
      %1671 = vmatmul.bf16.gmra.mxu0 %v1087
      %v1672 = vpop.f32.mrf.mxu0
      %v1673 = vadd.f32 %v1524, %v1672
      %v1674 = vpop.f32.mrf.mxu0
      %v1675 = vadd.f32 %v1526, %v1674
      %1676 = vmatmul.bf16.gmra.mxu0 %v1090
      %v1677 = vpop.f32.mrf.mxu0
      %v1678 = vadd.f32 %v1529, %v1677
      %v1679 = vpop.f32.mrf.mxu0
      %v1680 = vadd.f32 %v1531, %v1679
      %1681 = vmatmul.bf16.gmra.mxu0 %v1093
      %v1682 = vpop.f32.mrf.mxu0
      %v1683 = vadd.f32 %v1534, %v1682
      %v1684 = vpop.f32.mrf.mxu0
      %v1685 = vadd.f32 %v1536, %v1684
      %1686 = vmatmul.bf16.gmra.mxu0 %v1096
      %v1687 = vpop.f32.mrf.mxu0
      %v1688 = vadd.f32 %v1539, %v1687
      %v1689 = vpop.f32.mrf.mxu0
      %v1690 = vadd.f32 %v1541, %v1689
      %1691 = vmatmul.bf16.gmra.mxu0 %v1099
      %v1692 = vpop.f32.mrf.mxu0
      %v1693 = vadd.f32 %v1544, %v1692
      %v1694 = vpop.f32.mrf.mxu0
      %v1695 = vadd.f32 %v1546, %v1694
      %1696 = vdwg.mxu0
      %v1697 = vmax.f32 %v1260, 0.0
      %v1698 = vmax.f32 %v1558, 0.0
      %v1699 = vmax.f32 %v1262, 0.0
      %v1700 = vmax.f32 %v1560, 0.0
      %v1701 = vmax.f32 %v1265, 0.0
      %v1702 = vmax.f32 %v1563, 0.0
      %v1703 = vmax.f32 %v1267, 0.0
      %v1704 = vmax.f32 %v1565, 0.0
      %v1705 = vmax.f32 %v1270, 0.0
      %v1706 = vmax.f32 %v1568, 0.0
      %v1707 = vmax.f32 %v1272, 0.0
      %v1708 = vmax.f32 %v1570, 0.0
      %v1709 = vmax.f32 %v1275, 0.0
      %v1710 = vmax.f32 %v1573, 0.0
      %v1711 = vmax.f32 %v1277, 0.0
      %v1712 = vmax.f32 %v1575, 0.0
      %v1713 = vmax.f32 %v1280, 0.0
      %v1714 = vmax.f32 %v1578, 0.0
      %v1715 = vmax.f32 %v1282, 0.0
      %v1716 = vmax.f32 %v1580, 0.0
      %v1717 = vmax.f32 %v1285, 0.0
      %v1718 = vmax.f32 %v1583, 0.0
      %v1719 = vmax.f32 %v1287, 0.0
      %v1720 = vmax.f32 %v1585, 0.0
      %v1721 = vmax.f32 %v1290, 0.0
      %v1722 = vmax.f32 %v1588, 0.0
      %v1723 = vmax.f32 %v1292, 0.0
      %v1724 = vmax.f32 %v1590, 0.0
      %v1725 = vmax.f32 %v1295, 0.0
      %v1726 = vmax.f32 %v1593, 0.0
      %v1727 = vmax.f32 %v1297, 0.0
      %v1728 = vmax.f32 %v1595, 0.0
      %v1729 = vmax.f32 %v1300, 0.0
      %v1730 = vmax.f32 %v1598, 0.0
      %v1731 = vmax.f32 %v1302, 0.0
      %v1732 = vmax.f32 %v1600, 0.0
      %v1733 = vmax.f32 %v1305, 0.0
      %v1734 = vmax.f32 %v1603, 0.0
      %v1735 = vmax.f32 %v1307, 0.0
      %v1736 = vmax.f32 %v1605, 0.0
      %v1737 = vmax.f32 %v1310, 0.0
      %v1738 = vmax.f32 %v1608, 0.0
      %v1739 = vmax.f32 %v1312, 0.0
      %v1740 = vmax.f32 %v1610, 0.0
      %v1741 = vmax.f32 %v1315, 0.0
      %v1742 = vmax.f32 %v1613, 0.0
      %v1743 = vmax.f32 %v1317, 0.0
      %v1744 = vmax.f32 %v1615, 0.0
      %v1745 = vmax.f32 %v1320, 0.0
      %v1746 = vmax.f32 %v1618, 0.0
      %v1747 = vmax.f32 %v1322, 0.0
      %v1748 = vmax.f32 %v1620, 0.0
      %v1749 = vmax.f32 %v1325, 0.0
      %v1750 = vmax.f32 %v1623, 0.0
      %v1751 = vmax.f32 %v1327, 0.0
      %v1752 = vmax.f32 %v1625, 0.0
      %v1753 = vmax.f32 %v1330, 0.0
      %v1754 = vmax.f32 %v1628, 0.0
      %v1755 = vmax.f32 %v1332, 0.0
      %v1756 = vmax.f32 %v1630, 0.0
      %v1757 = vmax.f32 %v1335, 0.0
      %v1758 = vmax.f32 %v1633, 0.0
      %v1759 = vmax.f32 %v1337, 0.0
      %v1760 = vmax.f32 %v1635, 0.0
      %v1761 = vmax.f32 %v1340, 0.0
      %v1762 = vmax.f32 %v1638, 0.0
      %v1763 = vmax.f32 %v1342, 0.0
      %v1764 = vmax.f32 %v1640, 0.0
      %v1765 = vmax.f32 %v1345, 0.0
      %v1766 = vmax.f32 %v1643, 0.0
      %v1767 = vmax.f32 %v1347, 0.0
      %v1768 = vmax.f32 %v1645, 0.0
      %v1769 = vmax.f32 %v1350, 0.0
      %v1770 = vmax.f32 %v1648, 0.0
      %v1771 = vmax.f32 %v1352, 0.0
      %v1772 = vmax.f32 %v1650, 0.0
      %v1773 = vmax.f32 %v1355, 0.0
      %v1774 = vmax.f32 %v1653, 0.0
      %v1775 = vmax.f32 %v1357, 0.0
      %v1776 = vmax.f32 %v1655, 0.0
      %v1777 = vmax.f32 %v1360, 0.0
      %v1778 = vmax.f32 %v1658, 0.0
      %v1779 = vmax.f32 %v1362, 0.0
      %v1780 = vmax.f32 %v1660, 0.0
      %v1781 = vmax.f32 %v1365, 0.0
      %v1782 = vmax.f32 %v1663, 0.0
      %v1783 = vmax.f32 %v1367, 0.0
      %v1784 = vmax.f32 %v1665, 0.0
      %v1785 = vmax.f32 %v1370, 0.0
      %v1786 = vmax.f32 %v1668, 0.0
      %v1787 = vmax.f32 %v1372, 0.0
      %v1788 = vmax.f32 %v1670, 0.0
      %v1789 = vmax.f32 %v1375, 0.0
      %v1790 = vmax.f32 %v1673, 0.0
      %v1791 = vmax.f32 %v1377, 0.0
      %v1792 = vmax.f32 %v1675, 0.0
      %v1793 = vmax.f32 %v1380, 0.0
      %v1794 = vmax.f32 %v1678, 0.0
      %v1795 = vmax.f32 %v1382, 0.0
      %v1796 = vmax.f32 %v1680, 0.0
      %v1797 = vmax.f32 %v1385, 0.0
      %v1798 = vmax.f32 %v1683, 0.0
      %v1799 = vmax.f32 %v1387, 0.0
      %v1800 = vmax.f32 %v1685, 0.0
      %v1801 = vmax.f32 %v1390, 0.0
      %v1802 = vmax.f32 %v1688, 0.0
      %v1803 = vmax.f32 %v1392, 0.0
      %v1804 = vmax.f32 %v1690, 0.0
      %v1805 = vmax.f32 %v1395, 0.0
      %v1806 = vmax.f32 %v1693, 0.0
      %v1807 = vmax.f32 %v1397, 0.0
      %v1808 = vmax.f32 %v1695, 0.0
      %v1809 = vld [vmem:[%s3] sm:$0xff]
      %v1810 = vld [vmem:[%s3 + $0x8] sm:$0xff]
      %v1811 = vld [vmem:[%s3 + $0x10] sm:$0xff]
      %v1812 = vld [vmem:[%s3 + $0x18] sm:$0xff]
      %v1813 = vld [vmem:[%s3 + $0x20] sm:$0xff]
      %v1814 = vld [vmem:[%s3 + $0x28] sm:$0xff]
      %v1815 = vld [vmem:[%s3 + $0x30] sm:$0xff]
      %v1816 = vld [vmem:[%s3 + $0x38] sm:$0xff]
      %v1817 = vld [vmem:[%s3 + $0x40] sm:$0xff]
      %v1818 = vld [vmem:[%s3 + $0x48] sm:$0xff]
      %v1819 = vld [vmem:[%s3 + $0x50] sm:$0xff]
      %v1820 = vld [vmem:[%s3 + $0x58] sm:$0xff]
      %v1821 = vld [vmem:[%s3 + $0x60] sm:$0xff]
      %v1822 = vld [vmem:[%s3 + $0x68] sm:$0xff]
      %v1823 = vld [vmem:[%s3 + $0x70] sm:$0xff]
      %v1824 = vld [vmem:[%s3 + $0x78] sm:$0xff]
      %v1825 = vld [vmem:[%s3 + $0x80] sm:$0xff]
      %v1826 = vld [vmem:[%s3 + $0x88] sm:$0xff]
      %v1827 = vld [vmem:[%s3 + $0x90] sm:$0xff]
      %v1828 = vld [vmem:[%s3 + $0x98] sm:$0xff]
      %v1829 = vld [vmem:[%s3 + $0xa0] sm:$0xff]
      %v1830 = vld [vmem:[%s3 + $0xa8] sm:$0xff]
      %v1831 = vld [vmem:[%s3 + $0xb0] sm:$0xff]
      %v1832 = vld [vmem:[%s3 + $0xb8] sm:$0xff]
      %v1833 = vld [vmem:[%s3 + $0xc0] sm:$0xff]
      %v1834 = vld [vmem:[%s3 + $0xc8] sm:$0xff]
      %v1835 = vld [vmem:[%s3 + $0xd0] sm:$0xff]
      %v1836 = vld [vmem:[%s3 + $0xd8] sm:$0xff]
      %v1837 = vld [vmem:[%s3 + $0xe0] sm:$0xff]
      %v1838 = vld [vmem:[%s3 + $0xe8] sm:$0xff]
      %v1839 = vld [vmem:[%s3 + $0xf0] sm:$0xff]
      %v1840 = vld [vmem:[%s3 + $0xf8] sm:$0xff]
      %v1841 = vld [vmem:[%s3 + $0x100] sm:$0xff]
      %v1842 = vld [vmem:[%s3 + $0x108] sm:$0xff]
      %v1843 = vld [vmem:[%s3 + $0x110] sm:$0xff]
      %v1844 = vld [vmem:[%s3 + $0x118] sm:$0xff]
      %v1845 = vld [vmem:[%s3 + $0x120] sm:$0xff]
      %v1846 = vld [vmem:[%s3 + $0x128] sm:$0xff]
      %v1847 = vld [vmem:[%s3 + $0x130] sm:$0xff]
      %v1848 = vld [vmem:[%s3 + $0x138] sm:$0xff]
      %v1849 = vld [vmem:[%s3 + $0x140] sm:$0xff]
      %v1850 = vld [vmem:[%s3 + $0x148] sm:$0xff]
      %v1851 = vld [vmem:[%s3 + $0x150] sm:$0xff]
      %v1852 = vld [vmem:[%s3 + $0x158] sm:$0xff]
      %v1853 = vld [vmem:[%s3 + $0x160] sm:$0xff]
      %v1854 = vld [vmem:[%s3 + $0x168] sm:$0xff]
      %v1855 = vld [vmem:[%s3 + $0x170] sm:$0xff]
      %v1856 = vld [vmem:[%s3 + $0x178] sm:$0xff]
      %v1857 = vld [vmem:[%s3 + $0x180] sm:$0xff]
      %v1858 = vld [vmem:[%s3 + $0x188] sm:$0xff]
      %v1859 = vld [vmem:[%s3 + $0x190] sm:$0xff]
      %v1860 = vld [vmem:[%s3 + $0x198] sm:$0xff]
      %v1861 = vld [vmem:[%s3 + $0x1a0] sm:$0xff]
      %v1862 = vld [vmem:[%s3 + $0x1a8] sm:$0xff]
      %v1863 = vld [vmem:[%s3 + $0x1b0] sm:$0xff]
      %v1864 = vld [vmem:[%s3 + $0x1b8] sm:$0xff]
      %v1865 = vld [vmem:[%s3 + $0x1c0] sm:$0xff]
      %v1866 = vld [vmem:[%s3 + $0x1c8] sm:$0xff]
      %v1867 = vld [vmem:[%s3 + $0x1d0] sm:$0xff]
      %v1868 = vld [vmem:[%s3 + $0x1d8] sm:$0xff]
      %v1869 = vld [vmem:[%s3 + $0x1e0] sm:$0xff]
      %v1870 = vld [vmem:[%s3 + $0x1e8] sm:$0xff]
      %v1871 = vld [vmem:[%s3 + $0x1f0] sm:$0xff]
      %v1872 = vld [vmem:[%s3 + $0x1f8] sm:$0xff]
      %v1873 = vld [vmem:[%s3 + $0x200] sm:$0xff]
      %v1874 = vld [vmem:[%s3 + $0x208] sm:$0xff]
      %v1875 = vld [vmem:[%s3 + $0x210] sm:$0xff]
      %v1876 = vld [vmem:[%s3 + $0x218] sm:$0xff]
      %v1877 = vld [vmem:[%s3 + $0x220] sm:$0xff]
      %v1878 = vld [vmem:[%s3 + $0x228] sm:$0xff]
      %v1879 = vld [vmem:[%s3 + $0x230] sm:$0xff]
      %v1880 = vld [vmem:[%s3 + $0x238] sm:$0xff]
      %v1881 = vld [vmem:[%s3 + $0x240] sm:$0xff]
      %v1882 = vld [vmem:[%s3 + $0x248] sm:$0xff]
      %v1883 = vld [vmem:[%s3 + $0x250] sm:$0xff]
      %v1884 = vld [vmem:[%s3 + $0x258] sm:$0xff]
      %v1885 = vld [vmem:[%s3 + $0x260] sm:$0xff]
      %v1886 = vld [vmem:[%s3 + $0x268] sm:$0xff]
      %v1887 = vld [vmem:[%s3 + $0x270] sm:$0xff]
      %v1888 = vld [vmem:[%s3 + $0x278] sm:$0xff]
      %v1889 = vld [vmem:[%s3 + $0x280] sm:$0xff]
      %v1890 = vld [vmem:[%s3 + $0x288] sm:$0xff]
      %v1891 = vld [vmem:[%s3 + $0x290] sm:$0xff]
      %v1892 = vld [vmem:[%s3 + $0x298] sm:$0xff]
      %v1893 = vld [vmem:[%s3 + $0x2a0] sm:$0xff]
      %v1894 = vld [vmem:[%s3 + $0x2a8] sm:$0xff]
      %v1895 = vld [vmem:[%s3 + $0x2b0] sm:$0xff]
      %v1896 = vld [vmem:[%s3 + $0x2b8] sm:$0xff]
      %v1897 = vld [vmem:[%s3 + $0x2c0] sm:$0xff]
      %v1898 = vld [vmem:[%s3 + $0x2c8] sm:$0xff]
      %v1899 = vld [vmem:[%s3 + $0x2d0] sm:$0xff]
      %v1900 = vld [vmem:[%s3 + $0x2d8] sm:$0xff]
      %v1901 = vld [vmem:[%s3 + $0x2e0] sm:$0xff]
      %v1902 = vld [vmem:[%s3 + $0x2e8] sm:$0xff]
      %v1903 = vld [vmem:[%s3 + $0x2f0] sm:$0xff]
      %v1904 = vld [vmem:[%s3 + $0x2f8] sm:$0xff]
      %v1905 = vld [vmem:[%s3 + $0x300] sm:$0xff]
      %v1906 = vld [vmem:[%s3 + $0x308] sm:$0xff]
      %v1907 = vld [vmem:[%s3 + $0x310] sm:$0xff]
      %v1908 = vld [vmem:[%s3 + $0x318] sm:$0xff]
      %v1909 = vld [vmem:[%s3 + $0x320] sm:$0xff]
      %v1910 = vld [vmem:[%s3 + $0x328] sm:$0xff]
      %v1911 = vld [vmem:[%s3 + $0x330] sm:$0xff]
      %v1912 = vld [vmem:[%s3 + $0x338] sm:$0xff]
      %v1913 = vld [vmem:[%s3 + $0x340] sm:$0xff]
      %v1914 = vld [vmem:[%s3 + $0x348] sm:$0xff]
      %v1915 = vld [vmem:[%s3 + $0x350] sm:$0xff]
      %v1916 = vld [vmem:[%s3 + $0x358] sm:$0xff]
      %v1917 = vld [vmem:[%s3 + $0x360] sm:$0xff]
      %v1918 = vld [vmem:[%s3 + $0x368] sm:$0xff]
      %v1919 = vld [vmem:[%s3 + $0x370] sm:$0xff]
      %v1920 = vld [vmem:[%s3 + $0x378] sm:$0xff]
      %v1921 = vpack.c.bf16 %v1699, %v1697
      %v1922 = vpack.c.bf16 %v1700, %v1698
      %v1923 = vpack.c.bf16 %v1703, %v1701
      %v1924 = vpack.c.bf16 %v1704, %v1702
      %v1925 = vpack.c.bf16 %v1707, %v1705
      %v1926 = vpack.c.bf16 %v1708, %v1706
      %v1927 = vpack.c.bf16 %v1711, %v1709
      %v1928 = vpack.c.bf16 %v1712, %v1710
      %v1929 = vpack.c.bf16 %v1715, %v1713
      %v1930 = vpack.c.bf16 %v1716, %v1714
      %v1931 = vpack.c.bf16 %v1719, %v1717
      %v1932 = vpack.c.bf16 %v1720, %v1718
      %v1933 = vpack.c.bf16 %v1723, %v1721
      %v1934 = vpack.c.bf16 %v1724, %v1722
      %v1935 = vpack.c.bf16 %v1727, %v1725
      %v1936 = vpack.c.bf16 %v1728, %v1726
      %v1937 = vpack.c.bf16 %v1731, %v1729
      %v1938 = vpack.c.bf16 %v1732, %v1730
      %v1939 = vpack.c.bf16 %v1735, %v1733
      %v1940 = vpack.c.bf16 %v1736, %v1734
      %v1941 = vpack.c.bf16 %v1739, %v1737
      %v1942 = vpack.c.bf16 %v1740, %v1738
      %v1943 = vpack.c.bf16 %v1743, %v1741
      %v1944 = vpack.c.bf16 %v1744, %v1742
      %v1945 = vpack.c.bf16 %v1747, %v1745
      %v1946 = vpack.c.bf16 %v1748, %v1746
      %v1947 = vpack.c.bf16 %v1751, %v1749
      %v1948 = vpack.c.bf16 %v1752, %v1750
      %v1949 = vpack.c.bf16 %v1755, %v1753
      %v1950 = vpack.c.bf16 %v1756, %v1754
      %v1951 = vpack.c.bf16 %v1759, %v1757
      %v1952 = vpack.c.bf16 %v1760, %v1758
      %v1953 = vpack.c.bf16 %v1763, %v1761
      %v1954 = vpack.c.bf16 %v1764, %v1762
      %v1955 = vpack.c.bf16 %v1767, %v1765
      %v1956 = vpack.c.bf16 %v1768, %v1766
      %v1957 = vpack.c.bf16 %v1771, %v1769
      %v1958 = vpack.c.bf16 %v1772, %v1770
      %v1959 = vpack.c.bf16 %v1775, %v1773
      %v1960 = vpack.c.bf16 %v1776, %v1774
      %v1961 = vpack.c.bf16 %v1779, %v1777
      %v1962 = vpack.c.bf16 %v1780, %v1778
      %v1963 = vpack.c.bf16 %v1783, %v1781
      %v1964 = vpack.c.bf16 %v1784, %v1782
      %v1965 = vpack.c.bf16 %v1787, %v1785
      %v1966 = vpack.c.bf16 %v1788, %v1786
      %v1967 = vpack.c.bf16 %v1791, %v1789
      %v1968 = vpack.c.bf16 %v1792, %v1790
      %v1969 = vpack.c.bf16 %v1795, %v1793
      %v1970 = vpack.c.bf16 %v1796, %v1794
      %v1971 = vpack.c.bf16 %v1799, %v1797
      %v1972 = vpack.c.bf16 %v1800, %v1798
      %v1973 = vpack.c.bf16 %v1803, %v1801
      %v1974 = vpack.c.bf16 %v1804, %v1802
      %v1975 = vpack.c.bf16 %v1807, %v1805
      %v1976 = vpack.c.bf16 %v1808, %v1806
      %v2089 = vunpack.c.l.b16 %v1809
      %v2090 = vunpack.c.h.b16 %v1809
      %v2091 = vunpack.c.l.b16 %v1810
      %v2092 = vunpack.c.h.b16 %v1810
      %v2093 = vunpack.c.l.b16 %v1811
      %v2094 = vunpack.c.h.b16 %v1811
      %v2095 = vunpack.c.l.b16 %v1812
      %v2096 = vunpack.c.h.b16 %v1812
      %v2097 = vunpack.c.l.b16 %v1813
      %v2098 = vunpack.c.h.b16 %v1813
      %v2099 = vunpack.c.l.b16 %v1814
      %v2100 = vunpack.c.h.b16 %v1814
      %v2101 = vunpack.c.l.b16 %v1815
      %v2102 = vunpack.c.h.b16 %v1815
      %v2103 = vunpack.c.l.b16 %v1816
      %v2104 = vunpack.c.h.b16 %v1816
      %v2105 = vunpack.c.l.b16 %v1817
      %v2106 = vunpack.c.h.b16 %v1817
      %v2107 = vunpack.c.l.b16 %v1818
      %v2108 = vunpack.c.h.b16 %v1818
      %v2109 = vunpack.c.l.b16 %v1819
      %v2110 = vunpack.c.h.b16 %v1819
      %v2111 = vunpack.c.l.b16 %v1820
      %v2112 = vunpack.c.h.b16 %v1820
      %v2113 = vunpack.c.l.b16 %v1821
      %v2114 = vunpack.c.h.b16 %v1821
      %v2115 = vunpack.c.l.b16 %v1822
      %v2116 = vunpack.c.h.b16 %v1822
      %v2117 = vunpack.c.l.b16 %v1823
      %v2118 = vunpack.c.h.b16 %v1823
      %v2119 = vunpack.c.l.b16 %v1824
      %v2120 = vunpack.c.h.b16 %v1824
      %v2121 = vunpack.c.l.b16 %v1825
      %v2122 = vunpack.c.h.b16 %v1825
      %v2123 = vunpack.c.l.b16 %v1826
      %v2124 = vunpack.c.h.b16 %v1826
      %v2125 = vunpack.c.l.b16 %v1827
      %v2126 = vunpack.c.h.b16 %v1827
      %v2127 = vunpack.c.l.b16 %v1828
      %v2128 = vunpack.c.h.b16 %v1828
      %v2129 = vunpack.c.l.b16 %v1829
      %v2130 = vunpack.c.h.b16 %v1829
      %v2131 = vunpack.c.l.b16 %v1830
      %v2132 = vunpack.c.h.b16 %v1830
      %v2133 = vunpack.c.l.b16 %v1831
      %v2134 = vunpack.c.h.b16 %v1831
      %v2135 = vunpack.c.l.b16 %v1832
      %v2136 = vunpack.c.h.b16 %v1832
      %v2137 = vunpack.c.l.b16 %v1833
      %v2138 = vunpack.c.h.b16 %v1833
      %v2139 = vunpack.c.l.b16 %v1834
      %v2140 = vunpack.c.h.b16 %v1834
      %v2141 = vunpack.c.l.b16 %v1835
      %v2142 = vunpack.c.h.b16 %v1835
      %v2143 = vunpack.c.l.b16 %v1836
      %v2144 = vunpack.c.h.b16 %v1836
      %v2145 = vunpack.c.l.b16 %v1837
      %v2146 = vunpack.c.h.b16 %v1837
      %v2147 = vunpack.c.l.b16 %v1838
      %v2148 = vunpack.c.h.b16 %v1838
      %v2149 = vunpack.c.l.b16 %v1839
      %v2150 = vunpack.c.h.b16 %v1839
      %v2151 = vunpack.c.l.b16 %v1840
      %v2152 = vunpack.c.h.b16 %v1840
      %v2153 = vunpack.c.l.b16 %v1841
      %v2154 = vunpack.c.h.b16 %v1841
      %v2155 = vunpack.c.l.b16 %v1842
      %v2156 = vunpack.c.h.b16 %v1842
      %v2157 = vunpack.c.l.b16 %v1843
      %v2158 = vunpack.c.h.b16 %v1843
      %v2159 = vunpack.c.l.b16 %v1844
      %v2160 = vunpack.c.h.b16 %v1844
      %v2161 = vunpack.c.l.b16 %v1845
      %v2162 = vunpack.c.h.b16 %v1845
      %v2163 = vunpack.c.l.b16 %v1846
      %v2164 = vunpack.c.h.b16 %v1846
      %v2165 = vunpack.c.l.b16 %v1847
      %v2166 = vunpack.c.h.b16 %v1847
      %v2167 = vunpack.c.l.b16 %v1848
      %v2168 = vunpack.c.h.b16 %v1848
      %v2169 = vunpack.c.l.b16 %v1849
      %v2170 = vunpack.c.h.b16 %v1849
      %v2171 = vunpack.c.l.b16 %v1850
      %v2172 = vunpack.c.h.b16 %v1850
      %v2173 = vunpack.c.l.b16 %v1851
      %v2174 = vunpack.c.h.b16 %v1851
      %v2175 = vunpack.c.l.b16 %v1852
      %v2176 = vunpack.c.h.b16 %v1852
      %v2177 = vunpack.c.l.b16 %v1853
      %v2178 = vunpack.c.h.b16 %v1853
      %v2179 = vunpack.c.l.b16 %v1854
      %v2180 = vunpack.c.h.b16 %v1854
      %v2181 = vunpack.c.l.b16 %v1855
      %v2182 = vunpack.c.h.b16 %v1855
      %v2183 = vunpack.c.l.b16 %v1856
      %v2184 = vunpack.c.h.b16 %v1856
      %v2185 = vunpack.c.l.b16 %v1857
      %v2186 = vunpack.c.h.b16 %v1857
      %v2187 = vunpack.c.l.b16 %v1858
      %v2188 = vunpack.c.h.b16 %v1858
      %v2189 = vunpack.c.l.b16 %v1859
      %v2190 = vunpack.c.h.b16 %v1859
      %v2191 = vunpack.c.l.b16 %v1860
      %v2192 = vunpack.c.h.b16 %v1860
      %v2193 = vunpack.c.l.b16 %v1861
      %v2194 = vunpack.c.h.b16 %v1861
      %v2195 = vunpack.c.l.b16 %v1862
      %v2196 = vunpack.c.h.b16 %v1862
      %v2197 = vunpack.c.l.b16 %v1863
      %v2198 = vunpack.c.h.b16 %v1863
      %v2199 = vunpack.c.l.b16 %v1864
      %v2200 = vunpack.c.h.b16 %v1864
      %v2201 = vunpack.c.l.b16 %v1865
      %v2202 = vunpack.c.h.b16 %v1865
      %v2203 = vunpack.c.l.b16 %v1866
      %v2204 = vunpack.c.h.b16 %v1866
      %v2205 = vunpack.c.l.b16 %v1867
      %v2206 = vunpack.c.h.b16 %v1867
      %v2207 = vunpack.c.l.b16 %v1868
      %v2208 = vunpack.c.h.b16 %v1868
      %v2209 = vunpack.c.l.b16 %v1869
      %v2210 = vunpack.c.h.b16 %v1869
      %v2211 = vunpack.c.l.b16 %v1870
      %v2212 = vunpack.c.h.b16 %v1870
      %v2213 = vunpack.c.l.b16 %v1871
      %v2214 = vunpack.c.h.b16 %v1871
      %v2215 = vunpack.c.l.b16 %v1872
      %v2216 = vunpack.c.h.b16 %v1872
      %v2217 = vunpack.c.l.b16 %v1873
      %v2218 = vunpack.c.h.b16 %v1873
      %v2219 = vunpack.c.l.b16 %v1874
      %v2220 = vunpack.c.h.b16 %v1874
      %v2221 = vunpack.c.l.b16 %v1875
      %v2222 = vunpack.c.h.b16 %v1875
      %v2223 = vunpack.c.l.b16 %v1876
      %v2224 = vunpack.c.h.b16 %v1876
      %v2225 = vunpack.c.l.b16 %v1877
      %v2226 = vunpack.c.h.b16 %v1877
      %v2227 = vunpack.c.l.b16 %v1878
      %v2228 = vunpack.c.h.b16 %v1878
      %v2229 = vunpack.c.l.b16 %v1879
      %v2230 = vunpack.c.h.b16 %v1879
      %v2231 = vunpack.c.l.b16 %v1880
      %v2232 = vunpack.c.h.b16 %v1880
      %v2233 = vunpack.c.l.b16 %v1881
      %v2234 = vunpack.c.h.b16 %v1881
      %v2235 = vunpack.c.l.b16 %v1882
      %v2236 = vunpack.c.h.b16 %v1882
      %v2237 = vunpack.c.l.b16 %v1883
      %v2238 = vunpack.c.h.b16 %v1883
      %v2239 = vunpack.c.l.b16 %v1884
      %v2240 = vunpack.c.h.b16 %v1884
      %v2241 = vunpack.c.l.b16 %v1885
      %v2242 = vunpack.c.h.b16 %v1885
      %v2243 = vunpack.c.l.b16 %v1886
      %v2244 = vunpack.c.h.b16 %v1886
      %v2245 = vunpack.c.l.b16 %v1887
      %v2246 = vunpack.c.h.b16 %v1887
      %v2247 = vunpack.c.l.b16 %v1888
      %v2248 = vunpack.c.h.b16 %v1888
      %v2249 = vunpack.c.l.b16 %v1889
      %v2250 = vunpack.c.h.b16 %v1889
      %v2251 = vunpack.c.l.b16 %v1890
      %v2252 = vunpack.c.h.b16 %v1890
      %v2253 = vunpack.c.l.b16 %v1891
      %v2254 = vunpack.c.h.b16 %v1891
      %v2255 = vunpack.c.l.b16 %v1892
      %v2256 = vunpack.c.h.b16 %v1892
      %v2257 = vunpack.c.l.b16 %v1893
      %v2258 = vunpack.c.h.b16 %v1893
      %v2259 = vunpack.c.l.b16 %v1894
      %v2260 = vunpack.c.h.b16 %v1894
      %v2261 = vunpack.c.l.b16 %v1895
      %v2262 = vunpack.c.h.b16 %v1895
      %v2263 = vunpack.c.l.b16 %v1896
      %v2264 = vunpack.c.h.b16 %v1896
      %v2265 = vunpack.c.l.b16 %v1897
      %v2266 = vunpack.c.h.b16 %v1897
      %v2267 = vunpack.c.l.b16 %v1898
      %v2268 = vunpack.c.h.b16 %v1898
      %v2269 = vunpack.c.l.b16 %v1899
      %v2270 = vunpack.c.h.b16 %v1899
      %v2271 = vunpack.c.l.b16 %v1900
      %v2272 = vunpack.c.h.b16 %v1900
      %v2273 = vunpack.c.l.b16 %v1901
      %v2274 = vunpack.c.h.b16 %v1901
      %v2275 = vunpack.c.l.b16 %v1902
      %v2276 = vunpack.c.h.b16 %v1902
      %v2277 = vunpack.c.l.b16 %v1903
      %v2278 = vunpack.c.h.b16 %v1903
      %v2279 = vunpack.c.l.b16 %v1904
      %v2280 = vunpack.c.h.b16 %v1904
      %v2281 = vunpack.c.l.b16 %v1905
      %v2282 = vunpack.c.h.b16 %v1905
      %v2283 = vunpack.c.l.b16 %v1906
      %v2284 = vunpack.c.h.b16 %v1906
      %v2285 = vunpack.c.l.b16 %v1907
      %v2286 = vunpack.c.h.b16 %v1907
      %v2287 = vunpack.c.l.b16 %v1908
      %v2288 = vunpack.c.h.b16 %v1908
      %v2289 = vunpack.c.l.b16 %v1909
      %v2290 = vunpack.c.h.b16 %v1909
      %v2291 = vunpack.c.l.b16 %v1910
      %v2292 = vunpack.c.h.b16 %v1910
      %v2293 = vunpack.c.l.b16 %v1911
      %v2294 = vunpack.c.h.b16 %v1911
      %v2295 = vunpack.c.l.b16 %v1912
      %v2296 = vunpack.c.h.b16 %v1912
      %v2297 = vunpack.c.l.b16 %v1913
      %v2298 = vunpack.c.h.b16 %v1913
      %v2299 = vunpack.c.l.b16 %v1914
      %v2300 = vunpack.c.h.b16 %v1914
      %v2301 = vunpack.c.l.b16 %v1915
      %v2302 = vunpack.c.h.b16 %v1915
      %v2303 = vunpack.c.l.b16 %v1916
      %v2304 = vunpack.c.h.b16 %v1916
      %v2305 = vunpack.c.l.b16 %v1917
      %v2306 = vunpack.c.h.b16 %v1917
      %v2307 = vunpack.c.l.b16 %v1918
      %v2308 = vunpack.c.h.b16 %v1918
      %v2309 = vunpack.c.l.b16 %v1919
      %v2310 = vunpack.c.h.b16 %v1919
      %v2311 = vunpack.c.l.b16 %v1920
      %v2312 = vunpack.c.h.b16 %v1920
      %v2313 = vpack.c.b16 %v2093, %v2089
      %v2314 = vpack.c.b16 %v2094, %v2090
      %v2315 = vpack.c.b16 %v2095, %v2091
      %v2316 = vpack.c.b16 %v2096, %v2092
      %v2317 = vpack.c.b16 %v2101, %v2097
      %v2318 = vpack.c.b16 %v2102, %v2098
      %v2319 = vpack.c.b16 %v2103, %v2099
      %v2320 = vpack.c.b16 %v2104, %v2100
      %v2321 = vpack.c.b16 %v2109, %v2105
      %v2322 = vpack.c.b16 %v2110, %v2106
      %v2323 = vpack.c.b16 %v2111, %v2107
      %v2324 = vpack.c.b16 %v2112, %v2108
      %v2325 = vpack.c.b16 %v2117, %v2113
      %v2326 = vpack.c.b16 %v2118, %v2114
      %v2327 = vpack.c.b16 %v2119, %v2115
      %v2328 = vpack.c.b16 %v2120, %v2116
      %v2329 = vpack.c.b16 %v2125, %v2121
      %v2330 = vpack.c.b16 %v2126, %v2122
      %v2331 = vpack.c.b16 %v2127, %v2123
      %v2332 = vpack.c.b16 %v2128, %v2124
      %v2333 = vpack.c.b16 %v2133, %v2129
      %v2334 = vpack.c.b16 %v2134, %v2130
      %v2335 = vpack.c.b16 %v2135, %v2131
      %v2336 = vpack.c.b16 %v2136, %v2132
      %v2337 = vpack.c.b16 %v2141, %v2137
      %v2338 = vpack.c.b16 %v2142, %v2138
      %v2339 = vpack.c.b16 %v2143, %v2139
      %v2340 = vpack.c.b16 %v2144, %v2140
      %v2341 = vpack.c.b16 %v2149, %v2145
      %v2342 = vpack.c.b16 %v2150, %v2146
      %v2343 = vpack.c.b16 %v2151, %v2147
      %v2344 = vpack.c.b16 %v2152, %v2148
      %v2345 = vpack.c.b16 %v2157, %v2153
      %v2346 = vpack.c.b16 %v2158, %v2154
      %v2347 = vpack.c.b16 %v2159, %v2155
      %v2348 = vpack.c.b16 %v2160, %v2156
      %v2349 = vpack.c.b16 %v2165, %v2161
      %v2350 = vpack.c.b16 %v2166, %v2162
      %v2351 = vpack.c.b16 %v2167, %v2163
      %v2352 = vpack.c.b16 %v2168, %v2164
      %v2353 = vpack.c.b16 %v2173, %v2169
      %v2354 = vpack.c.b16 %v2174, %v2170
      %v2355 = vpack.c.b16 %v2175, %v2171
      %v2356 = vpack.c.b16 %v2176, %v2172
      %v2357 = vpack.c.b16 %v2181, %v2177
      %v2358 = vpack.c.b16 %v2182, %v2178
      %v2359 = vpack.c.b16 %v2183, %v2179
      %v2360 = vpack.c.b16 %v2184, %v2180
      %v2361 = vpack.c.b16 %v2189, %v2185
      %v2362 = vpack.c.b16 %v2190, %v2186
      %v2363 = vpack.c.b16 %v2191, %v2187
      %v2364 = vpack.c.b16 %v2192, %v2188
      %v2365 = vpack.c.b16 %v2197, %v2193
      %v2366 = vpack.c.b16 %v2198, %v2194
      %v2367 = vpack.c.b16 %v2199, %v2195
      %v2368 = vpack.c.b16 %v2200, %v2196
      %v2369 = vpack.c.b16 %v2205, %v2201
      %v2370 = vpack.c.b16 %v2206, %v2202
      %v2371 = vpack.c.b16 %v2207, %v2203
      %v2372 = vpack.c.b16 %v2208, %v2204
      %v2373 = vpack.c.b16 %v2213, %v2209
      %v2374 = vpack.c.b16 %v2214, %v2210
      %v2375 = vpack.c.b16 %v2215, %v2211
      %v2376 = vpack.c.b16 %v2216, %v2212
      %v2377 = vpack.c.b16 %v2221, %v2217
      %v2378 = vpack.c.b16 %v2222, %v2218
      %v2379 = vpack.c.b16 %v2223, %v2219
      %v2380 = vpack.c.b16 %v2224, %v2220
      %v2381 = vpack.c.b16 %v2229, %v2225
      %v2382 = vpack.c.b16 %v2230, %v2226
      %v2383 = vpack.c.b16 %v2231, %v2227
      %v2384 = vpack.c.b16 %v2232, %v2228
      %v2385 = vpack.c.b16 %v2237, %v2233
      %v2386 = vpack.c.b16 %v2238, %v2234
      %v2387 = vpack.c.b16 %v2239, %v2235
      %v2388 = vpack.c.b16 %v2240, %v2236
      %v2389 = vpack.c.b16 %v2245, %v2241
      %v2390 = vpack.c.b16 %v2246, %v2242
      %v2391 = vpack.c.b16 %v2247, %v2243
      %v2392 = vpack.c.b16 %v2248, %v2244
      %v2393 = vpack.c.b16 %v2253, %v2249
      %v2394 = vpack.c.b16 %v2254, %v2250
      %v2395 = vpack.c.b16 %v2255, %v2251
      %v2396 = vpack.c.b16 %v2256, %v2252
      %v2397 = vpack.c.b16 %v2261, %v2257
      %v2398 = vpack.c.b16 %v2262, %v2258
      %v2399 = vpack.c.b16 %v2263, %v2259
      %v2400 = vpack.c.b16 %v2264, %v2260
      %v2401 = vpack.c.b16 %v2269, %v2265
      %v2402 = vpack.c.b16 %v2270, %v2266
      %v2403 = vpack.c.b16 %v2271, %v2267
      %v2404 = vpack.c.b16 %v2272, %v2268
      %v2405 = vpack.c.b16 %v2277, %v2273
      %v2406 = vpack.c.b16 %v2278, %v2274
      %v2407 = vpack.c.b16 %v2279, %v2275
      %v2408 = vpack.c.b16 %v2280, %v2276
      %v2409 = vpack.c.b16 %v2285, %v2281
      %v2410 = vpack.c.b16 %v2286, %v2282
      %v2411 = vpack.c.b16 %v2287, %v2283
      %v2412 = vpack.c.b16 %v2288, %v2284
      %v2413 = vpack.c.b16 %v2293, %v2289
      %v2414 = vpack.c.b16 %v2294, %v2290
      %v2415 = vpack.c.b16 %v2295, %v2291
      %v2416 = vpack.c.b16 %v2296, %v2292
      %v2417 = vpack.c.b16 %v2301, %v2297
      %v2418 = vpack.c.b16 %v2302, %v2298
      %v2419 = vpack.c.b16 %v2303, %v2299
      %v2420 = vpack.c.b16 %v2304, %v2300
      %v2421 = vpack.c.b16 %v2309, %v2305
      %v2422 = vpack.c.b16 %v2310, %v2306
      %v2423 = vpack.c.b16 %v2311, %v2307
      %v2424 = vpack.c.b16 %v2312, %v2308
      %vm2509 = vcmask 523264
      %v2511 = vsel %vm2509, %v2316, 0
      %v2514 = vsel %vm2509, %v2320, 0
      %v2517 = vsel %vm2509, %v2324, 0
      %v2520 = vsel %vm2509, %v2328, 0
      %v2523 = vsel %vm2509, %v2332, 0
      %v2526 = vsel %vm2509, %v2336, 0
      %v2529 = vsel %vm2509, %v2340, 0
      %v2532 = vsel %vm2509, %v2344, 0
      %v2535 = vsel %vm2509, %v2348, 0
      %v2538 = vsel %vm2509, %v2352, 0
      %v2541 = vsel %vm2509, %v2356, 0
      %v2544 = vsel %vm2509, %v2360, 0
      %v2547 = vsel %vm2509, %v2364, 0
      %v2550 = vsel %vm2509, %v2368, 0
      %v2553 = vsel %vm2509, %v2372, 0
      %v2556 = vsel %vm2509, %v2376, 0
      %v2559 = vsel %vm2509, %v2380, 0
      %v2562 = vsel %vm2509, %v2384, 0
      %v2565 = vsel %vm2509, %v2388, 0
      %v2568 = vsel %vm2509, %v2392, 0
      %v2571 = vsel %vm2509, %v2396, 0
      %v2574 = vsel %vm2509, %v2400, 0
      %v2577 = vsel %vm2509, %v2404, 0
      %v2580 = vsel %vm2509, %v2408, 0
      %v2583 = vsel %vm2509, %v2412, 0
      %v2586 = vsel %vm2509, %v2416, 0
      %v2589 = vsel %vm2509, %v2420, 0
      %v2592 = vsel %vm2509, %v2424, 0
      %2594 = vmatpush.bf16.msra.mxu0 %v1935
      %2595 = vmatpush.bf16.msra.mxu0 %v1933
      %2596 = vmatpush.bf16.msra.mxu0 %v1931
      %2597 = vmatpush.bf16.msra.mxu0 %v1929
      %2598 = vmatpush.bf16.msra.mxu0 %v1927
      %2599 = vmatpush.bf16.msra.mxu0 %v1925
      %2600 = vmatpush.bf16.msra.mxu0 %v1923
      %2601 = vmatpush.bf16.msra.mxu0 %v1921
      %2602 = vmatmul.bf16.gmra.mxu0 %v2313
      %v2603 = vpop.f32.mrf.mxu0
      %v2604 = vadd.f32 0.0, %v2603
      %v2605 = vpop.f32.mrf.mxu0
      %v2606 = vadd.f32 0.0, %v2605
      %2607 = vmatmul.bf16.gmra.mxu0 %v2317
      %v2608 = vpop.f32.mrf.mxu0
      %v2609 = vadd.f32 0.0, %v2608
      %v2610 = vpop.f32.mrf.mxu0
      %v2611 = vadd.f32 0.0, %v2610
      %2612 = vmatmul.bf16.gmra.mxu0 %v2321
      %v2613 = vpop.f32.mrf.mxu0
      %v2614 = vadd.f32 0.0, %v2613
      %v2615 = vpop.f32.mrf.mxu0
      %v2616 = vadd.f32 0.0, %v2615
      %2617 = vmatmul.bf16.gmra.mxu0 %v2325
      %v2618 = vpop.f32.mrf.mxu0
      %v2619 = vadd.f32 0.0, %v2618
      %v2620 = vpop.f32.mrf.mxu0
      %v2621 = vadd.f32 0.0, %v2620
      %2622 = vmatmul.bf16.gmra.mxu0 %v2329
      %v2623 = vpop.f32.mrf.mxu0
      %v2624 = vadd.f32 0.0, %v2623
      %v2625 = vpop.f32.mrf.mxu0
      %v2626 = vadd.f32 0.0, %v2625
      %2627 = vmatmul.bf16.gmra.mxu0 %v2333
      %v2628 = vpop.f32.mrf.mxu0
      %v2629 = vadd.f32 0.0, %v2628
      %v2630 = vpop.f32.mrf.mxu0
      %v2631 = vadd.f32 0.0, %v2630
      %2632 = vmatmul.bf16.gmra.mxu0 %v2337
      %v2633 = vpop.f32.mrf.mxu0
      %v2634 = vadd.f32 0.0, %v2633
      %v2635 = vpop.f32.mrf.mxu0
      %v2636 = vadd.f32 0.0, %v2635
      %2637 = vmatmul.bf16.gmra.mxu0 %v2341
      %v2638 = vpop.f32.mrf.mxu0
      %v2639 = vadd.f32 0.0, %v2638
      %v2640 = vpop.f32.mrf.mxu0
      %v2641 = vadd.f32 0.0, %v2640
      %2642 = vmatmul.bf16.gmra.mxu0 %v2345
      %v2643 = vpop.f32.mrf.mxu0
      %v2644 = vadd.f32 0.0, %v2643
      %v2645 = vpop.f32.mrf.mxu0
      %v2646 = vadd.f32 0.0, %v2645
      %2647 = vmatmul.bf16.gmra.mxu0 %v2349
      %v2648 = vpop.f32.mrf.mxu0
      %v2649 = vadd.f32 0.0, %v2648
      %v2650 = vpop.f32.mrf.mxu0
      %v2651 = vadd.f32 0.0, %v2650
      %2652 = vmatmul.bf16.gmra.mxu0 %v2353
      %v2653 = vpop.f32.mrf.mxu0
      %v2654 = vadd.f32 0.0, %v2653
      %v2655 = vpop.f32.mrf.mxu0
      %v2656 = vadd.f32 0.0, %v2655
      %2657 = vmatmul.bf16.gmra.mxu0 %v2357
      %v2658 = vpop.f32.mrf.mxu0
      %v2659 = vadd.f32 0.0, %v2658
      %v2660 = vpop.f32.mrf.mxu0
      %v2661 = vadd.f32 0.0, %v2660
      %2662 = vmatmul.bf16.gmra.mxu0 %v2361
      %v2663 = vpop.f32.mrf.mxu0
      %v2664 = vadd.f32 0.0, %v2663
      %v2665 = vpop.f32.mrf.mxu0
      %v2666 = vadd.f32 0.0, %v2665
      %2667 = vmatmul.bf16.gmra.mxu0 %v2365
      %v2668 = vpop.f32.mrf.mxu0
      %v2669 = vadd.f32 0.0, %v2668
      %v2670 = vpop.f32.mrf.mxu0
      %v2671 = vadd.f32 0.0, %v2670
      %2672 = vmatmul.bf16.gmra.mxu0 %v2369
      %v2673 = vpop.f32.mrf.mxu0
      %v2674 = vadd.f32 0.0, %v2673
      %v2675 = vpop.f32.mrf.mxu0
      %v2676 = vadd.f32 0.0, %v2675
      %2677 = vmatmul.bf16.gmra.mxu0 %v2373
      %v2678 = vpop.f32.mrf.mxu0
      %v2679 = vadd.f32 0.0, %v2678
      %v2680 = vpop.f32.mrf.mxu0
      %v2681 = vadd.f32 0.0, %v2680
      %2682 = vmatmul.bf16.gmra.mxu0 %v2377
      %v2683 = vpop.f32.mrf.mxu0
      %v2684 = vadd.f32 0.0, %v2683
      %v2685 = vpop.f32.mrf.mxu0
      %v2686 = vadd.f32 0.0, %v2685
      %2687 = vmatmul.bf16.gmra.mxu0 %v2381
      %v2688 = vpop.f32.mrf.mxu0
      %v2689 = vadd.f32 0.0, %v2688
      %v2690 = vpop.f32.mrf.mxu0
      %v2691 = vadd.f32 0.0, %v2690
      %2692 = vmatmul.bf16.gmra.mxu0 %v2385
      %v2693 = vpop.f32.mrf.mxu0
      %v2694 = vadd.f32 0.0, %v2693
      %v2695 = vpop.f32.mrf.mxu0
      %v2696 = vadd.f32 0.0, %v2695
      %2697 = vmatmul.bf16.gmra.mxu0 %v2389
      %v2698 = vpop.f32.mrf.mxu0
      %v2699 = vadd.f32 0.0, %v2698
      %v2700 = vpop.f32.mrf.mxu0
      %v2701 = vadd.f32 0.0, %v2700
      %2702 = vmatmul.bf16.gmra.mxu0 %v2393
      %v2703 = vpop.f32.mrf.mxu0
      %v2704 = vadd.f32 0.0, %v2703
      %v2705 = vpop.f32.mrf.mxu0
      %v2706 = vadd.f32 0.0, %v2705
      %2707 = vmatmul.bf16.gmra.mxu0 %v2397
      %v2708 = vpop.f32.mrf.mxu0
      %v2709 = vadd.f32 0.0, %v2708
      %v2710 = vpop.f32.mrf.mxu0
      %v2711 = vadd.f32 0.0, %v2710
      %2712 = vmatmul.bf16.gmra.mxu0 %v2401
      %v2713 = vpop.f32.mrf.mxu0
      %v2714 = vadd.f32 0.0, %v2713
      %v2715 = vpop.f32.mrf.mxu0
      %v2716 = vadd.f32 0.0, %v2715
      %2717 = vmatmul.bf16.gmra.mxu0 %v2405
      %v2718 = vpop.f32.mrf.mxu0
      %v2719 = vadd.f32 0.0, %v2718
      %v2720 = vpop.f32.mrf.mxu0
      %v2721 = vadd.f32 0.0, %v2720
      %2722 = vmatmul.bf16.gmra.mxu0 %v2409
      %v2723 = vpop.f32.mrf.mxu0
      %v2724 = vadd.f32 0.0, %v2723
      %v2725 = vpop.f32.mrf.mxu0
      %v2726 = vadd.f32 0.0, %v2725
      %2727 = vmatmul.bf16.gmra.mxu0 %v2413
      %v2728 = vpop.f32.mrf.mxu0
      %v2729 = vadd.f32 0.0, %v2728
      %v2730 = vpop.f32.mrf.mxu0
      %v2731 = vadd.f32 0.0, %v2730
      %2732 = vmatmul.bf16.gmra.mxu0 %v2417
      %v2733 = vpop.f32.mrf.mxu0
      %v2734 = vadd.f32 0.0, %v2733
      %v2735 = vpop.f32.mrf.mxu0
      %v2736 = vadd.f32 0.0, %v2735
      %2737 = vmatmul.bf16.gmra.mxu0 %v2421
      %v2738 = vpop.f32.mrf.mxu0
      %v2739 = vadd.f32 0.0, %v2738
      %v2740 = vpop.f32.mrf.mxu0
      %v2741 = vadd.f32 0.0, %v2740
      %2742 = vdwg.mxu0
      %2743 = vmatpush.bf16.msra.mxu0 %v1951
      %2744 = vmatpush.bf16.msra.mxu0 %v1949
      %2745 = vmatpush.bf16.msra.mxu0 %v1947
      %2746 = vmatpush.bf16.msra.mxu0 %v1945
      %2747 = vmatpush.bf16.msra.mxu0 %v1943
      %2748 = vmatpush.bf16.msra.mxu0 %v1941
      %2749 = vmatpush.bf16.msra.mxu0 %v1939
      %2750 = vmatpush.bf16.msra.mxu0 %v1937
      %2751 = vmatmul.bf16.gmra.mxu0 %v2314
      %v2752 = vpop.f32.mrf.mxu0
      %v2753 = vadd.f32 %v2604, %v2752
      %v2754 = vpop.f32.mrf.mxu0
      %v2755 = vadd.f32 %v2606, %v2754
      %2756 = vmatmul.bf16.gmra.mxu0 %v2318
      %v2757 = vpop.f32.mrf.mxu0
      %v2758 = vadd.f32 %v2609, %v2757
      %v2759 = vpop.f32.mrf.mxu0
      %v2760 = vadd.f32 %v2611, %v2759
      %2761 = vmatmul.bf16.gmra.mxu0 %v2322
      %v2762 = vpop.f32.mrf.mxu0
      %v2763 = vadd.f32 %v2614, %v2762
      %v2764 = vpop.f32.mrf.mxu0
      %v2765 = vadd.f32 %v2616, %v2764
      %2766 = vmatmul.bf16.gmra.mxu0 %v2326
      %v2767 = vpop.f32.mrf.mxu0
      %v2768 = vadd.f32 %v2619, %v2767
      %v2769 = vpop.f32.mrf.mxu0
      %v2770 = vadd.f32 %v2621, %v2769
      %2771 = vmatmul.bf16.gmra.mxu0 %v2330
      %v2772 = vpop.f32.mrf.mxu0
      %v2773 = vadd.f32 %v2624, %v2772
      %v2774 = vpop.f32.mrf.mxu0
      %v2775 = vadd.f32 %v2626, %v2774
      %2776 = vmatmul.bf16.gmra.mxu0 %v2334
      %v2777 = vpop.f32.mrf.mxu0
      %v2778 = vadd.f32 %v2629, %v2777
      %v2779 = vpop.f32.mrf.mxu0
      %v2780 = vadd.f32 %v2631, %v2779
      %2781 = vmatmul.bf16.gmra.mxu0 %v2338
      %v2782 = vpop.f32.mrf.mxu0
      %v2783 = vadd.f32 %v2634, %v2782
      %v2784 = vpop.f32.mrf.mxu0
      %v2785 = vadd.f32 %v2636, %v2784
      %2786 = vmatmul.bf16.gmra.mxu0 %v2342
      %v2787 = vpop.f32.mrf.mxu0
      %v2788 = vadd.f32 %v2639, %v2787
      %v2789 = vpop.f32.mrf.mxu0
      %v2790 = vadd.f32 %v2641, %v2789
      %2791 = vmatmul.bf16.gmra.mxu0 %v2346
      %v2792 = vpop.f32.mrf.mxu0
      %v2793 = vadd.f32 %v2644, %v2792
      %v2794 = vpop.f32.mrf.mxu0
      %v2795 = vadd.f32 %v2646, %v2794
      %2796 = vmatmul.bf16.gmra.mxu0 %v2350
      %v2797 = vpop.f32.mrf.mxu0
      %v2798 = vadd.f32 %v2649, %v2797
      %v2799 = vpop.f32.mrf.mxu0
      %v2800 = vadd.f32 %v2651, %v2799
      %2801 = vmatmul.bf16.gmra.mxu0 %v2354
      %v2802 = vpop.f32.mrf.mxu0
      %v2803 = vadd.f32 %v2654, %v2802
      %v2804 = vpop.f32.mrf.mxu0
      %v2805 = vadd.f32 %v2656, %v2804
      %2806 = vmatmul.bf16.gmra.mxu0 %v2358
      %v2807 = vpop.f32.mrf.mxu0
      %v2808 = vadd.f32 %v2659, %v2807
      %v2809 = vpop.f32.mrf.mxu0
      %v2810 = vadd.f32 %v2661, %v2809
      %2811 = vmatmul.bf16.gmra.mxu0 %v2362
      %v2812 = vpop.f32.mrf.mxu0
      %v2813 = vadd.f32 %v2664, %v2812
      %v2814 = vpop.f32.mrf.mxu0
      %v2815 = vadd.f32 %v2666, %v2814
      %2816 = vmatmul.bf16.gmra.mxu0 %v2366
      %v2817 = vpop.f32.mrf.mxu0
      %v2818 = vadd.f32 %v2669, %v2817
      %v2819 = vpop.f32.mrf.mxu0
      %v2820 = vadd.f32 %v2671, %v2819
      %2821 = vmatmul.bf16.gmra.mxu0 %v2370
      %v2822 = vpop.f32.mrf.mxu0
      %v2823 = vadd.f32 %v2674, %v2822
      %v2824 = vpop.f32.mrf.mxu0
      %v2825 = vadd.f32 %v2676, %v2824
      %2826 = vmatmul.bf16.gmra.mxu0 %v2374
      %v2827 = vpop.f32.mrf.mxu0
      %v2828 = vadd.f32 %v2679, %v2827
      %v2829 = vpop.f32.mrf.mxu0
      %v2830 = vadd.f32 %v2681, %v2829
      %2831 = vmatmul.bf16.gmra.mxu0 %v2378
      %v2832 = vpop.f32.mrf.mxu0
      %v2833 = vadd.f32 %v2684, %v2832
      %v2834 = vpop.f32.mrf.mxu0
      %v2835 = vadd.f32 %v2686, %v2834
      %2836 = vmatmul.bf16.gmra.mxu0 %v2382
      %v2837 = vpop.f32.mrf.mxu0
      %v2838 = vadd.f32 %v2689, %v2837
      %v2839 = vpop.f32.mrf.mxu0
      %v2840 = vadd.f32 %v2691, %v2839
      %2841 = vmatmul.bf16.gmra.mxu0 %v2386
      %v2842 = vpop.f32.mrf.mxu0
      %v2843 = vadd.f32 %v2694, %v2842
      %v2844 = vpop.f32.mrf.mxu0
      %v2845 = vadd.f32 %v2696, %v2844
      %2846 = vmatmul.bf16.gmra.mxu0 %v2390
      %v2847 = vpop.f32.mrf.mxu0
      %v2848 = vadd.f32 %v2699, %v2847
      %v2849 = vpop.f32.mrf.mxu0
      %v2850 = vadd.f32 %v2701, %v2849
      %2851 = vmatmul.bf16.gmra.mxu0 %v2394
      %v2852 = vpop.f32.mrf.mxu0
      %v2853 = vadd.f32 %v2704, %v2852
      %v2854 = vpop.f32.mrf.mxu0
      %v2855 = vadd.f32 %v2706, %v2854
      %2856 = vmatmul.bf16.gmra.mxu0 %v2398
      %v2857 = vpop.f32.mrf.mxu0
      %v2858 = vadd.f32 %v2709, %v2857
      %v2859 = vpop.f32.mrf.mxu0
      %v2860 = vadd.f32 %v2711, %v2859
      %2861 = vmatmul.bf16.gmra.mxu0 %v2402
      %v2862 = vpop.f32.mrf.mxu0
      %v2863 = vadd.f32 %v2714, %v2862
      %v2864 = vpop.f32.mrf.mxu0
      %v2865 = vadd.f32 %v2716, %v2864
      %2866 = vmatmul.bf16.gmra.mxu0 %v2406
      %v2867 = vpop.f32.mrf.mxu0
      %v2868 = vadd.f32 %v2719, %v2867
      %v2869 = vpop.f32.mrf.mxu0
      %v2870 = vadd.f32 %v2721, %v2869
      %2871 = vmatmul.bf16.gmra.mxu0 %v2410
      %v2872 = vpop.f32.mrf.mxu0
      %v2873 = vadd.f32 %v2724, %v2872
      %v2874 = vpop.f32.mrf.mxu0
      %v2875 = vadd.f32 %v2726, %v2874
      %2876 = vmatmul.bf16.gmra.mxu0 %v2414
      %v2877 = vpop.f32.mrf.mxu0
      %v2878 = vadd.f32 %v2729, %v2877
      %v2879 = vpop.f32.mrf.mxu0
      %v2880 = vadd.f32 %v2731, %v2879
      %2881 = vmatmul.bf16.gmra.mxu0 %v2418
      %v2882 = vpop.f32.mrf.mxu0
      %v2883 = vadd.f32 %v2734, %v2882
      %v2884 = vpop.f32.mrf.mxu0
      %v2885 = vadd.f32 %v2736, %v2884
      %2886 = vmatmul.bf16.gmra.mxu0 %v2422
      %v2887 = vpop.f32.mrf.mxu0
      %v2888 = vadd.f32 %v2739, %v2887
      %v2889 = vpop.f32.mrf.mxu0
      %v2890 = vadd.f32 %v2741, %v2889
      %2891 = vdwg.mxu0
      %2892 = vmatpush.bf16.msra.mxu0 %v1967
      %2893 = vmatpush.bf16.msra.mxu0 %v1965
      %2894 = vmatpush.bf16.msra.mxu0 %v1963
      %2895 = vmatpush.bf16.msra.mxu0 %v1961
      %2896 = vmatpush.bf16.msra.mxu0 %v1959
      %2897 = vmatpush.bf16.msra.mxu0 %v1957
      %2898 = vmatpush.bf16.msra.mxu0 %v1955
      %2899 = vmatpush.bf16.msra.mxu0 %v1953
      %2900 = vmatmul.bf16.gmra.mxu0 %v2315
      %v2901 = vpop.f32.mrf.mxu0
      %v2902 = vadd.f32 %v2753, %v2901
      %v2903 = vpop.f32.mrf.mxu0
      %v2904 = vadd.f32 %v2755, %v2903
      %2905 = vmatmul.bf16.gmra.mxu0 %v2319
      %v2906 = vpop.f32.mrf.mxu0
      %v2907 = vadd.f32 %v2758, %v2906
      %v2908 = vpop.f32.mrf.mxu0
      %v2909 = vadd.f32 %v2760, %v2908
      %2910 = vmatmul.bf16.gmra.mxu0 %v2323
      %v2911 = vpop.f32.mrf.mxu0
      %v2912 = vadd.f32 %v2763, %v2911
      %v2913 = vpop.f32.mrf.mxu0
      %v2914 = vadd.f32 %v2765, %v2913
      %2915 = vmatmul.bf16.gmra.mxu0 %v2327
      %v2916 = vpop.f32.mrf.mxu0
      %v2917 = vadd.f32 %v2768, %v2916
      %v2918 = vpop.f32.mrf.mxu0
      %v2919 = vadd.f32 %v2770, %v2918
      %2920 = vmatmul.bf16.gmra.mxu0 %v2331
      %v2921 = vpop.f32.mrf.mxu0
      %v2922 = vadd.f32 %v2773, %v2921
      %v2923 = vpop.f32.mrf.mxu0
      %v2924 = vadd.f32 %v2775, %v2923
      %2925 = vmatmul.bf16.gmra.mxu0 %v2335
      %v2926 = vpop.f32.mrf.mxu0
      %v2927 = vadd.f32 %v2778, %v2926
      %v2928 = vpop.f32.mrf.mxu0
      %v2929 = vadd.f32 %v2780, %v2928
      %2930 = vmatmul.bf16.gmra.mxu0 %v2339
      %v2931 = vpop.f32.mrf.mxu0
      %v2932 = vadd.f32 %v2783, %v2931
      %v2933 = vpop.f32.mrf.mxu0
      %v2934 = vadd.f32 %v2785, %v2933
      %2935 = vmatmul.bf16.gmra.mxu0 %v2343
      %v2936 = vpop.f32.mrf.mxu0
      %v2937 = vadd.f32 %v2788, %v2936
      %v2938 = vpop.f32.mrf.mxu0
      %v2939 = vadd.f32 %v2790, %v2938
      %2940 = vmatmul.bf16.gmra.mxu0 %v2347
      %v2941 = vpop.f32.mrf.mxu0
      %v2942 = vadd.f32 %v2793, %v2941
      %v2943 = vpop.f32.mrf.mxu0
      %v2944 = vadd.f32 %v2795, %v2943
      %2945 = vmatmul.bf16.gmra.mxu0 %v2351
      %v2946 = vpop.f32.mrf.mxu0
      %v2947 = vadd.f32 %v2798, %v2946
      %v2948 = vpop.f32.mrf.mxu0
      %v2949 = vadd.f32 %v2800, %v2948
      %2950 = vmatmul.bf16.gmra.mxu0 %v2355
      %v2951 = vpop.f32.mrf.mxu0
      %v2952 = vadd.f32 %v2803, %v2951
      %v2953 = vpop.f32.mrf.mxu0
      %v2954 = vadd.f32 %v2805, %v2953
      %2955 = vmatmul.bf16.gmra.mxu0 %v2359
      %v2956 = vpop.f32.mrf.mxu0
      %v2957 = vadd.f32 %v2808, %v2956
      %v2958 = vpop.f32.mrf.mxu0
      %v2959 = vadd.f32 %v2810, %v2958
      %2960 = vmatmul.bf16.gmra.mxu0 %v2363
      %v2961 = vpop.f32.mrf.mxu0
      %v2962 = vadd.f32 %v2813, %v2961
      %v2963 = vpop.f32.mrf.mxu0
      %v2964 = vadd.f32 %v2815, %v2963
      %2965 = vmatmul.bf16.gmra.mxu0 %v2367
      %v2966 = vpop.f32.mrf.mxu0
      %v2967 = vadd.f32 %v2818, %v2966
      %v2968 = vpop.f32.mrf.mxu0
      %v2969 = vadd.f32 %v2820, %v2968
      %2970 = vmatmul.bf16.gmra.mxu0 %v2371
      %v2971 = vpop.f32.mrf.mxu0
      %v2972 = vadd.f32 %v2823, %v2971
      %v2973 = vpop.f32.mrf.mxu0
      %v2974 = vadd.f32 %v2825, %v2973
      %2975 = vmatmul.bf16.gmra.mxu0 %v2375
      %v2976 = vpop.f32.mrf.mxu0
      %v2977 = vadd.f32 %v2828, %v2976
      %v2978 = vpop.f32.mrf.mxu0
      %v2979 = vadd.f32 %v2830, %v2978
      %2980 = vmatmul.bf16.gmra.mxu0 %v2379
      %v2981 = vpop.f32.mrf.mxu0
      %v2982 = vadd.f32 %v2833, %v2981
      %v2983 = vpop.f32.mrf.mxu0
      %v2984 = vadd.f32 %v2835, %v2983
      %2985 = vmatmul.bf16.gmra.mxu0 %v2383
      %v2986 = vpop.f32.mrf.mxu0
      %v2987 = vadd.f32 %v2838, %v2986
      %v2988 = vpop.f32.mrf.mxu0
      %v2989 = vadd.f32 %v2840, %v2988
      %2990 = vmatmul.bf16.gmra.mxu0 %v2387
      %v2991 = vpop.f32.mrf.mxu0
      %v2992 = vadd.f32 %v2843, %v2991
      %v2993 = vpop.f32.mrf.mxu0
      %v2994 = vadd.f32 %v2845, %v2993
      %2995 = vmatmul.bf16.gmra.mxu0 %v2391
      %v2996 = vpop.f32.mrf.mxu0
      %v2997 = vadd.f32 %v2848, %v2996
      %v2998 = vpop.f32.mrf.mxu0
      %v2999 = vadd.f32 %v2850, %v2998
      %3000 = vmatmul.bf16.gmra.mxu0 %v2395
      %v3001 = vpop.f32.mrf.mxu0
      %v3002 = vadd.f32 %v2853, %v3001
      %v3003 = vpop.f32.mrf.mxu0
      %v3004 = vadd.f32 %v2855, %v3003
      %3005 = vmatmul.bf16.gmra.mxu0 %v2399
      %v3006 = vpop.f32.mrf.mxu0
      %v3007 = vadd.f32 %v2858, %v3006
      %v3008 = vpop.f32.mrf.mxu0
      %v3009 = vadd.f32 %v2860, %v3008
      %3010 = vmatmul.bf16.gmra.mxu0 %v2403
      %v3011 = vpop.f32.mrf.mxu0
      %v3012 = vadd.f32 %v2863, %v3011
      %v3013 = vpop.f32.mrf.mxu0
      %v3014 = vadd.f32 %v2865, %v3013
      %3015 = vmatmul.bf16.gmra.mxu0 %v2407
      %v3016 = vpop.f32.mrf.mxu0
      %v3017 = vadd.f32 %v2868, %v3016
      %v3018 = vpop.f32.mrf.mxu0
      %v3019 = vadd.f32 %v2870, %v3018
      %3020 = vmatmul.bf16.gmra.mxu0 %v2411
      %v3021 = vpop.f32.mrf.mxu0
      %v3022 = vadd.f32 %v2873, %v3021
      %v3023 = vpop.f32.mrf.mxu0
      %v3024 = vadd.f32 %v2875, %v3023
      %3025 = vmatmul.bf16.gmra.mxu0 %v2415
      %v3026 = vpop.f32.mrf.mxu0
      %v3027 = vadd.f32 %v2878, %v3026
      %v3028 = vpop.f32.mrf.mxu0
      %v3029 = vadd.f32 %v2880, %v3028
      %3030 = vmatmul.bf16.gmra.mxu0 %v2419
      %v3031 = vpop.f32.mrf.mxu0
      %v3032 = vadd.f32 %v2883, %v3031
      %v3033 = vpop.f32.mrf.mxu0
      %v3034 = vadd.f32 %v2885, %v3033
      %3035 = vmatmul.bf16.gmra.mxu0 %v2423
      %v3036 = vpop.f32.mrf.mxu0
      %v3037 = vadd.f32 %v2888, %v3036
      %v3038 = vpop.f32.mrf.mxu0
      %v3039 = vadd.f32 %v2890, %v3038
      %3040 = vdwg.mxu0
      %3041 = vmatpush.bf16.msra.mxu0 0
      %3042 = vmatpush.bf16.msra.mxu0 0
      %3043 = vmatpush.bf16.msra.mxu0 0
      %3044 = vmatpush.bf16.msra.mxu0 0
      %3045 = vmatpush.bf16.msra.mxu0 %v1975
      %3046 = vmatpush.bf16.msra.mxu0 %v1973
      %3047 = vmatpush.bf16.msra.mxu0 %v1971
      %3048 = vmatpush.bf16.msra.mxu0 %v1969
      %3049 = vmatmul.bf16.gmra.mxu0 %v2511
      %v3050 = vpop.f32.mrf.mxu0
      %v3051 = vadd.f32 %v2902, %v3050
      %v3052 = vpop.f32.mrf.mxu0
      %v3053 = vadd.f32 %v2904, %v3052
      %3054 = vmatmul.bf16.gmra.mxu0 %v2514
      %v3055 = vpop.f32.mrf.mxu0
      %v3056 = vadd.f32 %v2907, %v3055
      %v3057 = vpop.f32.mrf.mxu0
      %v3058 = vadd.f32 %v2909, %v3057
      %3059 = vmatmul.bf16.gmra.mxu0 %v2517
      %v3060 = vpop.f32.mrf.mxu0
      %v3061 = vadd.f32 %v2912, %v3060
      %v3062 = vpop.f32.mrf.mxu0
      %v3063 = vadd.f32 %v2914, %v3062
      %3064 = vmatmul.bf16.gmra.mxu0 %v2520
      %v3065 = vpop.f32.mrf.mxu0
      %v3066 = vadd.f32 %v2917, %v3065
      %v3067 = vpop.f32.mrf.mxu0
      %v3068 = vadd.f32 %v2919, %v3067
      %3069 = vmatmul.bf16.gmra.mxu0 %v2523
      %v3070 = vpop.f32.mrf.mxu0
      %v3071 = vadd.f32 %v2922, %v3070
      %v3072 = vpop.f32.mrf.mxu0
      %v3073 = vadd.f32 %v2924, %v3072
      %3074 = vmatmul.bf16.gmra.mxu0 %v2526
      %v3075 = vpop.f32.mrf.mxu0
      %v3076 = vadd.f32 %v2927, %v3075
      %v3077 = vpop.f32.mrf.mxu0
      %v3078 = vadd.f32 %v2929, %v3077
      %3079 = vmatmul.bf16.gmra.mxu0 %v2529
      %v3080 = vpop.f32.mrf.mxu0
      %v3081 = vadd.f32 %v2932, %v3080
      %v3082 = vpop.f32.mrf.mxu0
      %v3083 = vadd.f32 %v2934, %v3082
      %3084 = vmatmul.bf16.gmra.mxu0 %v2532
      %v3085 = vpop.f32.mrf.mxu0
      %v3086 = vadd.f32 %v2937, %v3085
      %v3087 = vpop.f32.mrf.mxu0
      %v3088 = vadd.f32 %v2939, %v3087
      %3089 = vmatmul.bf16.gmra.mxu0 %v2535
      %v3090 = vpop.f32.mrf.mxu0
      %v3091 = vadd.f32 %v2942, %v3090
      %v3092 = vpop.f32.mrf.mxu0
      %v3093 = vadd.f32 %v2944, %v3092
      %3094 = vmatmul.bf16.gmra.mxu0 %v2538
      %v3095 = vpop.f32.mrf.mxu0
      %v3096 = vadd.f32 %v2947, %v3095
      %v3097 = vpop.f32.mrf.mxu0
      %v3098 = vadd.f32 %v2949, %v3097
      %3099 = vmatmul.bf16.gmra.mxu0 %v2541
      %v3100 = vpop.f32.mrf.mxu0
      %v3101 = vadd.f32 %v2952, %v3100
      %v3102 = vpop.f32.mrf.mxu0
      %v3103 = vadd.f32 %v2954, %v3102
      %3104 = vmatmul.bf16.gmra.mxu0 %v2544
      %v3105 = vpop.f32.mrf.mxu0
      %v3106 = vadd.f32 %v2957, %v3105
      %v3107 = vpop.f32.mrf.mxu0
      %v3108 = vadd.f32 %v2959, %v3107
      %3109 = vmatmul.bf16.gmra.mxu0 %v2547
      %v3110 = vpop.f32.mrf.mxu0
      %v3111 = vadd.f32 %v2962, %v3110
      %v3112 = vpop.f32.mrf.mxu0
      %v3113 = vadd.f32 %v2964, %v3112
      %3114 = vmatmul.bf16.gmra.mxu0 %v2550
      %v3115 = vpop.f32.mrf.mxu0
      %v3116 = vadd.f32 %v2967, %v3115
      %v3117 = vpop.f32.mrf.mxu0
      %v3118 = vadd.f32 %v2969, %v3117
      %3119 = vmatmul.bf16.gmra.mxu0 %v2553
      %v3120 = vpop.f32.mrf.mxu0
      %v3121 = vadd.f32 %v2972, %v3120
      %v3122 = vpop.f32.mrf.mxu0
      %v3123 = vadd.f32 %v2974, %v3122
      %3124 = vmatmul.bf16.gmra.mxu0 %v2556
      %v3125 = vpop.f32.mrf.mxu0
      %v3126 = vadd.f32 %v2977, %v3125
      %v3127 = vpop.f32.mrf.mxu0
      %v3128 = vadd.f32 %v2979, %v3127
      %3129 = vmatmul.bf16.gmra.mxu0 %v2559
      %v3130 = vpop.f32.mrf.mxu0
      %v3131 = vadd.f32 %v2982, %v3130
      %v3132 = vpop.f32.mrf.mxu0
      %v3133 = vadd.f32 %v2984, %v3132
      %3134 = vmatmul.bf16.gmra.mxu0 %v2562
      %v3135 = vpop.f32.mrf.mxu0
      %v3136 = vadd.f32 %v2987, %v3135
      %v3137 = vpop.f32.mrf.mxu0
      %v3138 = vadd.f32 %v2989, %v3137
      %3139 = vmatmul.bf16.gmra.mxu0 %v2565
      %v3140 = vpop.f32.mrf.mxu0
      %v3141 = vadd.f32 %v2992, %v3140
      %v3142 = vpop.f32.mrf.mxu0
      %v3143 = vadd.f32 %v2994, %v3142
      %3144 = vmatmul.bf16.gmra.mxu0 %v2568
      %v3145 = vpop.f32.mrf.mxu0
      %v3146 = vadd.f32 %v2997, %v3145
      %v3147 = vpop.f32.mrf.mxu0
      %v3148 = vadd.f32 %v2999, %v3147
      %3149 = vmatmul.bf16.gmra.mxu0 %v2571
      %v3150 = vpop.f32.mrf.mxu0
      %v3151 = vadd.f32 %v3002, %v3150
      %v3152 = vpop.f32.mrf.mxu0
      %v3153 = vadd.f32 %v3004, %v3152
      %3154 = vmatmul.bf16.gmra.mxu0 %v2574
      %v3155 = vpop.f32.mrf.mxu0
      %v3156 = vadd.f32 %v3007, %v3155
      %v3157 = vpop.f32.mrf.mxu0
      %v3158 = vadd.f32 %v3009, %v3157
      %3159 = vmatmul.bf16.gmra.mxu0 %v2577
      %v3160 = vpop.f32.mrf.mxu0
      %v3161 = vadd.f32 %v3012, %v3160
      %v3162 = vpop.f32.mrf.mxu0
      %v3163 = vadd.f32 %v3014, %v3162
      %3164 = vmatmul.bf16.gmra.mxu0 %v2580
      %v3165 = vpop.f32.mrf.mxu0
      %v3166 = vadd.f32 %v3017, %v3165
      %v3167 = vpop.f32.mrf.mxu0
      %v3168 = vadd.f32 %v3019, %v3167
      %3169 = vmatmul.bf16.gmra.mxu0 %v2583
      %v3170 = vpop.f32.mrf.mxu0
      %v3171 = vadd.f32 %v3022, %v3170
      %v3172 = vpop.f32.mrf.mxu0
      %v3173 = vadd.f32 %v3024, %v3172
      %3174 = vmatmul.bf16.gmra.mxu0 %v2586
      %v3175 = vpop.f32.mrf.mxu0
      %v3176 = vadd.f32 %v3027, %v3175
      %v3177 = vpop.f32.mrf.mxu0
      %v3178 = vadd.f32 %v3029, %v3177
      %3179 = vmatmul.bf16.gmra.mxu0 %v2589
      %v3180 = vpop.f32.mrf.mxu0
      %v3181 = vadd.f32 %v3032, %v3180
      %v3182 = vpop.f32.mrf.mxu0
      %v3183 = vadd.f32 %v3034, %v3182
      %3184 = vmatmul.bf16.gmra.mxu0 %v2592
      %v3185 = vpop.f32.mrf.mxu0
      %v3186 = vadd.f32 %v3037, %v3185
      %v3187 = vpop.f32.mrf.mxu0
      %v3188 = vadd.f32 %v3039, %v3187
      %3189 = vdwg.mxu0
      %3190 = vmatpush.bf16.msra.mxu0 %v1936
      %3191 = vmatpush.bf16.msra.mxu0 %v1934
      %3192 = vmatpush.bf16.msra.mxu0 %v1932
      %3193 = vmatpush.bf16.msra.mxu0 %v1930
      %3194 = vmatpush.bf16.msra.mxu0 %v1928
      %3195 = vmatpush.bf16.msra.mxu0 %v1926
      %3196 = vmatpush.bf16.msra.mxu0 %v1924
      %3197 = vmatpush.bf16.msra.mxu0 %v1922
      %3198 = vmatmul.bf16.gmra.mxu0 %v2313
      %v3199 = vpop.f32.mrf.mxu0
      %v3200 = vadd.f32 0.0, %v3199
      %v3201 = vpop.f32.mrf.mxu0
      %v3202 = vadd.f32 0.0, %v3201
      %3203 = vmatmul.bf16.gmra.mxu0 %v2317
      %v3204 = vpop.f32.mrf.mxu0
      %v3205 = vadd.f32 0.0, %v3204
      %v3206 = vpop.f32.mrf.mxu0
      %v3207 = vadd.f32 0.0, %v3206
      %3208 = vmatmul.bf16.gmra.mxu0 %v2321
      %v3209 = vpop.f32.mrf.mxu0
      %v3210 = vadd.f32 0.0, %v3209
      %v3211 = vpop.f32.mrf.mxu0
      %v3212 = vadd.f32 0.0, %v3211
      %3213 = vmatmul.bf16.gmra.mxu0 %v2325
      %v3214 = vpop.f32.mrf.mxu0
      %v3215 = vadd.f32 0.0, %v3214
      %v3216 = vpop.f32.mrf.mxu0
      %v3217 = vadd.f32 0.0, %v3216
      %3218 = vmatmul.bf16.gmra.mxu0 %v2329
      %v3219 = vpop.f32.mrf.mxu0
      %v3220 = vadd.f32 0.0, %v3219
      %v3221 = vpop.f32.mrf.mxu0
      %v3222 = vadd.f32 0.0, %v3221
      %3223 = vmatmul.bf16.gmra.mxu0 %v2333
      %v3224 = vpop.f32.mrf.mxu0
      %v3225 = vadd.f32 0.0, %v3224
      %v3226 = vpop.f32.mrf.mxu0
      %v3227 = vadd.f32 0.0, %v3226
      %3228 = vmatmul.bf16.gmra.mxu0 %v2337
      %v3229 = vpop.f32.mrf.mxu0
      %v3230 = vadd.f32 0.0, %v3229
      %v3231 = vpop.f32.mrf.mxu0
      %v3232 = vadd.f32 0.0, %v3231
      %3233 = vmatmul.bf16.gmra.mxu0 %v2341
      %v3234 = vpop.f32.mrf.mxu0
      %v3235 = vadd.f32 0.0, %v3234
      %v3236 = vpop.f32.mrf.mxu0
      %v3237 = vadd.f32 0.0, %v3236
      %3238 = vmatmul.bf16.gmra.mxu0 %v2345
      %v3239 = vpop.f32.mrf.mxu0
      %v3240 = vadd.f32 0.0, %v3239
      %v3241 = vpop.f32.mrf.mxu0
      %v3242 = vadd.f32 0.0, %v3241
      %3243 = vmatmul.bf16.gmra.mxu0 %v2349
      %v3244 = vpop.f32.mrf.mxu0
      %v3245 = vadd.f32 0.0, %v3244
      %v3246 = vpop.f32.mrf.mxu0
      %v3247 = vadd.f32 0.0, %v3246
      %3248 = vmatmul.bf16.gmra.mxu0 %v2353
      %v3249 = vpop.f32.mrf.mxu0
      %v3250 = vadd.f32 0.0, %v3249
      %v3251 = vpop.f32.mrf.mxu0
      %v3252 = vadd.f32 0.0, %v3251
      %3253 = vmatmul.bf16.gmra.mxu0 %v2357
      %v3254 = vpop.f32.mrf.mxu0
      %v3255 = vadd.f32 0.0, %v3254
      %v3256 = vpop.f32.mrf.mxu0
      %v3257 = vadd.f32 0.0, %v3256
      %3258 = vmatmul.bf16.gmra.mxu0 %v2361
      %v3259 = vpop.f32.mrf.mxu0
      %v3260 = vadd.f32 0.0, %v3259
      %v3261 = vpop.f32.mrf.mxu0
      %v3262 = vadd.f32 0.0, %v3261
      %3263 = vmatmul.bf16.gmra.mxu0 %v2365
      %v3264 = vpop.f32.mrf.mxu0
      %v3265 = vadd.f32 0.0, %v3264
      %v3266 = vpop.f32.mrf.mxu0
      %v3267 = vadd.f32 0.0, %v3266
      %3268 = vmatmul.bf16.gmra.mxu0 %v2369
      %v3269 = vpop.f32.mrf.mxu0
      %v3270 = vadd.f32 0.0, %v3269
      %v3271 = vpop.f32.mrf.mxu0
      %v3272 = vadd.f32 0.0, %v3271
      %3273 = vmatmul.bf16.gmra.mxu0 %v2373
      %v3274 = vpop.f32.mrf.mxu0
      %v3275 = vadd.f32 0.0, %v3274
      %v3276 = vpop.f32.mrf.mxu0
      %v3277 = vadd.f32 0.0, %v3276
      %3278 = vmatmul.bf16.gmra.mxu0 %v2377
      %v3279 = vpop.f32.mrf.mxu0
      %v3280 = vadd.f32 0.0, %v3279
      %v3281 = vpop.f32.mrf.mxu0
      %v3282 = vadd.f32 0.0, %v3281
      %3283 = vmatmul.bf16.gmra.mxu0 %v2381
      %v3284 = vpop.f32.mrf.mxu0
      %v3285 = vadd.f32 0.0, %v3284
      %v3286 = vpop.f32.mrf.mxu0
      %v3287 = vadd.f32 0.0, %v3286
      %3288 = vmatmul.bf16.gmra.mxu0 %v2385
      %v3289 = vpop.f32.mrf.mxu0
      %v3290 = vadd.f32 0.0, %v3289
      %v3291 = vpop.f32.mrf.mxu0
      %v3292 = vadd.f32 0.0, %v3291
      %3293 = vmatmul.bf16.gmra.mxu0 %v2389
      %v3294 = vpop.f32.mrf.mxu0
      %v3295 = vadd.f32 0.0, %v3294
      %v3296 = vpop.f32.mrf.mxu0
      %v3297 = vadd.f32 0.0, %v3296
      %3298 = vmatmul.bf16.gmra.mxu0 %v2393
      %v3299 = vpop.f32.mrf.mxu0
      %v3300 = vadd.f32 0.0, %v3299
      %v3301 = vpop.f32.mrf.mxu0
      %v3302 = vadd.f32 0.0, %v3301
      %3303 = vmatmul.bf16.gmra.mxu0 %v2397
      %v3304 = vpop.f32.mrf.mxu0
      %v3305 = vadd.f32 0.0, %v3304
      %v3306 = vpop.f32.mrf.mxu0
      %v3307 = vadd.f32 0.0, %v3306
      %3308 = vmatmul.bf16.gmra.mxu0 %v2401
      %v3309 = vpop.f32.mrf.mxu0
      %v3310 = vadd.f32 0.0, %v3309
      %v3311 = vpop.f32.mrf.mxu0
      %v3312 = vadd.f32 0.0, %v3311
      %3313 = vmatmul.bf16.gmra.mxu0 %v2405
      %v3314 = vpop.f32.mrf.mxu0
      %v3315 = vadd.f32 0.0, %v3314
      %v3316 = vpop.f32.mrf.mxu0
      %v3317 = vadd.f32 0.0, %v3316
      %3318 = vmatmul.bf16.gmra.mxu0 %v2409
      %v3319 = vpop.f32.mrf.mxu0
      %v3320 = vadd.f32 0.0, %v3319
      %v3321 = vpop.f32.mrf.mxu0
      %v3322 = vadd.f32 0.0, %v3321
      %3323 = vmatmul.bf16.gmra.mxu0 %v2413
      %v3324 = vpop.f32.mrf.mxu0
      %v3325 = vadd.f32 0.0, %v3324
      %v3326 = vpop.f32.mrf.mxu0
      %v3327 = vadd.f32 0.0, %v3326
      %3328 = vmatmul.bf16.gmra.mxu0 %v2417
      %v3329 = vpop.f32.mrf.mxu0
      %v3330 = vadd.f32 0.0, %v3329
      %v3331 = vpop.f32.mrf.mxu0
      %v3332 = vadd.f32 0.0, %v3331
      %3333 = vmatmul.bf16.gmra.mxu0 %v2421
      %v3334 = vpop.f32.mrf.mxu0
      %v3335 = vadd.f32 0.0, %v3334
      %v3336 = vpop.f32.mrf.mxu0
      %v3337 = vadd.f32 0.0, %v3336
      %3338 = vdwg.mxu0
      %3339 = vmatpush.bf16.msra.mxu0 %v1952
      %3340 = vmatpush.bf16.msra.mxu0 %v1950
      %3341 = vmatpush.bf16.msra.mxu0 %v1948
      %3342 = vmatpush.bf16.msra.mxu0 %v1946
      %3343 = vmatpush.bf16.msra.mxu0 %v1944
      %3344 = vmatpush.bf16.msra.mxu0 %v1942
      %3345 = vmatpush.bf16.msra.mxu0 %v1940
      %3346 = vmatpush.bf16.msra.mxu0 %v1938
      %3347 = vmatmul.bf16.gmra.mxu0 %v2314
      %v3348 = vpop.f32.mrf.mxu0
      %v3349 = vadd.f32 %v3200, %v3348
      %v3350 = vpop.f32.mrf.mxu0
      %v3351 = vadd.f32 %v3202, %v3350
      %3352 = vmatmul.bf16.gmra.mxu0 %v2318
      %v3353 = vpop.f32.mrf.mxu0
      %v3354 = vadd.f32 %v3205, %v3353
      %v3355 = vpop.f32.mrf.mxu0
      %v3356 = vadd.f32 %v3207, %v3355
      %3357 = vmatmul.bf16.gmra.mxu0 %v2322
      %v3358 = vpop.f32.mrf.mxu0
      %v3359 = vadd.f32 %v3210, %v3358
      %v3360 = vpop.f32.mrf.mxu0
      %v3361 = vadd.f32 %v3212, %v3360
      %3362 = vmatmul.bf16.gmra.mxu0 %v2326
      %v3363 = vpop.f32.mrf.mxu0
      %v3364 = vadd.f32 %v3215, %v3363
      %v3365 = vpop.f32.mrf.mxu0
      %v3366 = vadd.f32 %v3217, %v3365
      %3367 = vmatmul.bf16.gmra.mxu0 %v2330
      %v3368 = vpop.f32.mrf.mxu0
      %v3369 = vadd.f32 %v3220, %v3368
      %v3370 = vpop.f32.mrf.mxu0
      %v3371 = vadd.f32 %v3222, %v3370
      %3372 = vmatmul.bf16.gmra.mxu0 %v2334
      %v3373 = vpop.f32.mrf.mxu0
      %v3374 = vadd.f32 %v3225, %v3373
      %v3375 = vpop.f32.mrf.mxu0
      %v3376 = vadd.f32 %v3227, %v3375
      %3377 = vmatmul.bf16.gmra.mxu0 %v2338
      %v3378 = vpop.f32.mrf.mxu0
      %v3379 = vadd.f32 %v3230, %v3378
      %v3380 = vpop.f32.mrf.mxu0
      %v3381 = vadd.f32 %v3232, %v3380
      %3382 = vmatmul.bf16.gmra.mxu0 %v2342
      %v3383 = vpop.f32.mrf.mxu0
      %v3384 = vadd.f32 %v3235, %v3383
      %v3385 = vpop.f32.mrf.mxu0
      %v3386 = vadd.f32 %v3237, %v3385
      %3387 = vmatmul.bf16.gmra.mxu0 %v2346
      %v3388 = vpop.f32.mrf.mxu0
      %v3389 = vadd.f32 %v3240, %v3388
      %v3390 = vpop.f32.mrf.mxu0
      %v3391 = vadd.f32 %v3242, %v3390
      %3392 = vmatmul.bf16.gmra.mxu0 %v2350
      %v3393 = vpop.f32.mrf.mxu0
      %v3394 = vadd.f32 %v3245, %v3393
      %v3395 = vpop.f32.mrf.mxu0
      %v3396 = vadd.f32 %v3247, %v3395
      %3397 = vmatmul.bf16.gmra.mxu0 %v2354
      %v3398 = vpop.f32.mrf.mxu0
      %v3399 = vadd.f32 %v3250, %v3398
      %v3400 = vpop.f32.mrf.mxu0
      %v3401 = vadd.f32 %v3252, %v3400
      %3402 = vmatmul.bf16.gmra.mxu0 %v2358
      %v3403 = vpop.f32.mrf.mxu0
      %v3404 = vadd.f32 %v3255, %v3403
      %v3405 = vpop.f32.mrf.mxu0
      %v3406 = vadd.f32 %v3257, %v3405
      %3407 = vmatmul.bf16.gmra.mxu0 %v2362
      %v3408 = vpop.f32.mrf.mxu0
      %v3409 = vadd.f32 %v3260, %v3408
      %v3410 = vpop.f32.mrf.mxu0
      %v3411 = vadd.f32 %v3262, %v3410
      %3412 = vmatmul.bf16.gmra.mxu0 %v2366
      %v3413 = vpop.f32.mrf.mxu0
      %v3414 = vadd.f32 %v3265, %v3413
      %v3415 = vpop.f32.mrf.mxu0
      %v3416 = vadd.f32 %v3267, %v3415
      %3417 = vmatmul.bf16.gmra.mxu0 %v2370
      %v3418 = vpop.f32.mrf.mxu0
      %v3419 = vadd.f32 %v3270, %v3418
      %v3420 = vpop.f32.mrf.mxu0
      %v3421 = vadd.f32 %v3272, %v3420
      %3422 = vmatmul.bf16.gmra.mxu0 %v2374
      %v3423 = vpop.f32.mrf.mxu0
      %v3424 = vadd.f32 %v3275, %v3423
      %v3425 = vpop.f32.mrf.mxu0
      %v3426 = vadd.f32 %v3277, %v3425
      %3427 = vmatmul.bf16.gmra.mxu0 %v2378
      %v3428 = vpop.f32.mrf.mxu0
      %v3429 = vadd.f32 %v3280, %v3428
      %v3430 = vpop.f32.mrf.mxu0
      %v3431 = vadd.f32 %v3282, %v3430
      %3432 = vmatmul.bf16.gmra.mxu0 %v2382
      %v3433 = vpop.f32.mrf.mxu0
      %v3434 = vadd.f32 %v3285, %v3433
      %v3435 = vpop.f32.mrf.mxu0
      %v3436 = vadd.f32 %v3287, %v3435
      %3437 = vmatmul.bf16.gmra.mxu0 %v2386
      %v3438 = vpop.f32.mrf.mxu0
      %v3439 = vadd.f32 %v3290, %v3438
      %v3440 = vpop.f32.mrf.mxu0
      %v3441 = vadd.f32 %v3292, %v3440
      %3442 = vmatmul.bf16.gmra.mxu0 %v2390
      %v3443 = vpop.f32.mrf.mxu0
      %v3444 = vadd.f32 %v3295, %v3443
      %v3445 = vpop.f32.mrf.mxu0
      %v3446 = vadd.f32 %v3297, %v3445
      %3447 = vmatmul.bf16.gmra.mxu0 %v2394
      %v3448 = vpop.f32.mrf.mxu0
      %v3449 = vadd.f32 %v3300, %v3448
      %v3450 = vpop.f32.mrf.mxu0
      %v3451 = vadd.f32 %v3302, %v3450
      %3452 = vmatmul.bf16.gmra.mxu0 %v2398
      %v3453 = vpop.f32.mrf.mxu0
      %v3454 = vadd.f32 %v3305, %v3453
      %v3455 = vpop.f32.mrf.mxu0
      %v3456 = vadd.f32 %v3307, %v3455
      %3457 = vmatmul.bf16.gmra.mxu0 %v2402
      %v3458 = vpop.f32.mrf.mxu0
      %v3459 = vadd.f32 %v3310, %v3458
      %v3460 = vpop.f32.mrf.mxu0
      %v3461 = vadd.f32 %v3312, %v3460
      %3462 = vmatmul.bf16.gmra.mxu0 %v2406
      %v3463 = vpop.f32.mrf.mxu0
      %v3464 = vadd.f32 %v3315, %v3463
      %v3465 = vpop.f32.mrf.mxu0
      %v3466 = vadd.f32 %v3317, %v3465
      %3467 = vmatmul.bf16.gmra.mxu0 %v2410
      %v3468 = vpop.f32.mrf.mxu0
      %v3469 = vadd.f32 %v3320, %v3468
      %v3470 = vpop.f32.mrf.mxu0
      %v3471 = vadd.f32 %v3322, %v3470
      %3472 = vmatmul.bf16.gmra.mxu0 %v2414
      %v3473 = vpop.f32.mrf.mxu0
      %v3474 = vadd.f32 %v3325, %v3473
      %v3475 = vpop.f32.mrf.mxu0
      %v3476 = vadd.f32 %v3327, %v3475
      %3477 = vmatmul.bf16.gmra.mxu0 %v2418
      %v3478 = vpop.f32.mrf.mxu0
      %v3479 = vadd.f32 %v3330, %v3478
      %v3480 = vpop.f32.mrf.mxu0
      %v3481 = vadd.f32 %v3332, %v3480
      %3482 = vmatmul.bf16.gmra.mxu0 %v2422
      %v3483 = vpop.f32.mrf.mxu0
      %v3484 = vadd.f32 %v3335, %v3483
      %v3485 = vpop.f32.mrf.mxu0
      %v3486 = vadd.f32 %v3337, %v3485
      %3487 = vdwg.mxu0
      %3488 = vmatpush.bf16.msra.mxu0 %v1968
      %3489 = vmatpush.bf16.msra.mxu0 %v1966
      %3490 = vmatpush.bf16.msra.mxu0 %v1964
      %3491 = vmatpush.bf16.msra.mxu0 %v1962
      %3492 = vmatpush.bf16.msra.mxu0 %v1960
      %3493 = vmatpush.bf16.msra.mxu0 %v1958
      %3494 = vmatpush.bf16.msra.mxu0 %v1956
      %3495 = vmatpush.bf16.msra.mxu0 %v1954
      %3496 = vmatmul.bf16.gmra.mxu0 %v2315
      %v3497 = vpop.f32.mrf.mxu0
      %v3498 = vadd.f32 %v3349, %v3497
      %v3499 = vpop.f32.mrf.mxu0
      %v3500 = vadd.f32 %v3351, %v3499
      %3501 = vmatmul.bf16.gmra.mxu0 %v2319
      %v3502 = vpop.f32.mrf.mxu0
      %v3503 = vadd.f32 %v3354, %v3502
      %v3504 = vpop.f32.mrf.mxu0
      %v3505 = vadd.f32 %v3356, %v3504
      %3506 = vmatmul.bf16.gmra.mxu0 %v2323
      %v3507 = vpop.f32.mrf.mxu0
      %v3508 = vadd.f32 %v3359, %v3507
      %v3509 = vpop.f32.mrf.mxu0
      %v3510 = vadd.f32 %v3361, %v3509
      %3511 = vmatmul.bf16.gmra.mxu0 %v2327
      %v3512 = vpop.f32.mrf.mxu0
      %v3513 = vadd.f32 %v3364, %v3512
      %v3514 = vpop.f32.mrf.mxu0
      %v3515 = vadd.f32 %v3366, %v3514
      %3516 = vmatmul.bf16.gmra.mxu0 %v2331
      %v3517 = vpop.f32.mrf.mxu0
      %v3518 = vadd.f32 %v3369, %v3517
      %v3519 = vpop.f32.mrf.mxu0
      %v3520 = vadd.f32 %v3371, %v3519
      %3521 = vmatmul.bf16.gmra.mxu0 %v2335
      %v3522 = vpop.f32.mrf.mxu0
      %v3523 = vadd.f32 %v3374, %v3522
      %v3524 = vpop.f32.mrf.mxu0
      %v3525 = vadd.f32 %v3376, %v3524
      %3526 = vmatmul.bf16.gmra.mxu0 %v2339
      %v3527 = vpop.f32.mrf.mxu0
      %v3528 = vadd.f32 %v3379, %v3527
      %v3529 = vpop.f32.mrf.mxu0
      %v3530 = vadd.f32 %v3381, %v3529
      %3531 = vmatmul.bf16.gmra.mxu0 %v2343
      %v3532 = vpop.f32.mrf.mxu0
      %v3533 = vadd.f32 %v3384, %v3532
      %v3534 = vpop.f32.mrf.mxu0
      %v3535 = vadd.f32 %v3386, %v3534
      %3536 = vmatmul.bf16.gmra.mxu0 %v2347
      %v3537 = vpop.f32.mrf.mxu0
      %v3538 = vadd.f32 %v3389, %v3537
      %v3539 = vpop.f32.mrf.mxu0
      %v3540 = vadd.f32 %v3391, %v3539
      %3541 = vmatmul.bf16.gmra.mxu0 %v2351
      %v3542 = vpop.f32.mrf.mxu0
      %v3543 = vadd.f32 %v3394, %v3542
      %v3544 = vpop.f32.mrf.mxu0
      %v3545 = vadd.f32 %v3396, %v3544
      %3546 = vmatmul.bf16.gmra.mxu0 %v2355
      %v3547 = vpop.f32.mrf.mxu0
      %v3548 = vadd.f32 %v3399, %v3547
      %v3549 = vpop.f32.mrf.mxu0
      %v3550 = vadd.f32 %v3401, %v3549
      %3551 = vmatmul.bf16.gmra.mxu0 %v2359
      %v3552 = vpop.f32.mrf.mxu0
      %v3553 = vadd.f32 %v3404, %v3552
      %v3554 = vpop.f32.mrf.mxu0
      %v3555 = vadd.f32 %v3406, %v3554
      %3556 = vmatmul.bf16.gmra.mxu0 %v2363
      %v3557 = vpop.f32.mrf.mxu0
      %v3558 = vadd.f32 %v3409, %v3557
      %v3559 = vpop.f32.mrf.mxu0
      %v3560 = vadd.f32 %v3411, %v3559
      %3561 = vmatmul.bf16.gmra.mxu0 %v2367
      %v3562 = vpop.f32.mrf.mxu0
      %v3563 = vadd.f32 %v3414, %v3562
      %v3564 = vpop.f32.mrf.mxu0
      %v3565 = vadd.f32 %v3416, %v3564
      %3566 = vmatmul.bf16.gmra.mxu0 %v2371
      %v3567 = vpop.f32.mrf.mxu0
      %v3568 = vadd.f32 %v3419, %v3567
      %v3569 = vpop.f32.mrf.mxu0
      %v3570 = vadd.f32 %v3421, %v3569
      %3571 = vmatmul.bf16.gmra.mxu0 %v2375
      %v3572 = vpop.f32.mrf.mxu0
      %v3573 = vadd.f32 %v3424, %v3572
      %v3574 = vpop.f32.mrf.mxu0
      %v3575 = vadd.f32 %v3426, %v3574
      %3576 = vmatmul.bf16.gmra.mxu0 %v2379
      %v3577 = vpop.f32.mrf.mxu0
      %v3578 = vadd.f32 %v3429, %v3577
      %v3579 = vpop.f32.mrf.mxu0
      %v3580 = vadd.f32 %v3431, %v3579
      %3581 = vmatmul.bf16.gmra.mxu0 %v2383
      %v3582 = vpop.f32.mrf.mxu0
      %v3583 = vadd.f32 %v3434, %v3582
      %v3584 = vpop.f32.mrf.mxu0
      %v3585 = vadd.f32 %v3436, %v3584
      %3586 = vmatmul.bf16.gmra.mxu0 %v2387
      %v3587 = vpop.f32.mrf.mxu0
      %v3588 = vadd.f32 %v3439, %v3587
      %v3589 = vpop.f32.mrf.mxu0
      %v3590 = vadd.f32 %v3441, %v3589
      %3591 = vmatmul.bf16.gmra.mxu0 %v2391
      %v3592 = vpop.f32.mrf.mxu0
      %v3593 = vadd.f32 %v3444, %v3592
      %v3594 = vpop.f32.mrf.mxu0
      %v3595 = vadd.f32 %v3446, %v3594
      %3596 = vmatmul.bf16.gmra.mxu0 %v2395
      %v3597 = vpop.f32.mrf.mxu0
      %v3598 = vadd.f32 %v3449, %v3597
      %v3599 = vpop.f32.mrf.mxu0
      %v3600 = vadd.f32 %v3451, %v3599
      %3601 = vmatmul.bf16.gmra.mxu0 %v2399
      %v3602 = vpop.f32.mrf.mxu0
      %v3603 = vadd.f32 %v3454, %v3602
      %v3604 = vpop.f32.mrf.mxu0
      %v3605 = vadd.f32 %v3456, %v3604
      %3606 = vmatmul.bf16.gmra.mxu0 %v2403
      %v3607 = vpop.f32.mrf.mxu0
      %v3608 = vadd.f32 %v3459, %v3607
      %v3609 = vpop.f32.mrf.mxu0
      %v3610 = vadd.f32 %v3461, %v3609
      %3611 = vmatmul.bf16.gmra.mxu0 %v2407
      %v3612 = vpop.f32.mrf.mxu0
      %v3613 = vadd.f32 %v3464, %v3612
      %v3614 = vpop.f32.mrf.mxu0
      %v3615 = vadd.f32 %v3466, %v3614
      %3616 = vmatmul.bf16.gmra.mxu0 %v2411
      %v3617 = vpop.f32.mrf.mxu0
      %v3618 = vadd.f32 %v3469, %v3617
      %v3619 = vpop.f32.mrf.mxu0
      %v3620 = vadd.f32 %v3471, %v3619
      %3621 = vmatmul.bf16.gmra.mxu0 %v2415
      %v3622 = vpop.f32.mrf.mxu0
      %v3623 = vadd.f32 %v3474, %v3622
      %v3624 = vpop.f32.mrf.mxu0
      %v3625 = vadd.f32 %v3476, %v3624
      %3626 = vmatmul.bf16.gmra.mxu0 %v2419
      %v3627 = vpop.f32.mrf.mxu0
      %v3628 = vadd.f32 %v3479, %v3627
      %v3629 = vpop.f32.mrf.mxu0
      %v3630 = vadd.f32 %v3481, %v3629
      %3631 = vmatmul.bf16.gmra.mxu0 %v2423
      %v3632 = vpop.f32.mrf.mxu0
      %v3633 = vadd.f32 %v3484, %v3632
      %v3634 = vpop.f32.mrf.mxu0
      %v3635 = vadd.f32 %v3486, %v3634
      %3636 = vdwg.mxu0
      %3637 = vmatpush.bf16.msra.mxu0 0
      %3638 = vmatpush.bf16.msra.mxu0 0
      %3639 = vmatpush.bf16.msra.mxu0 0
      %3640 = vmatpush.bf16.msra.mxu0 0
      %3641 = vmatpush.bf16.msra.mxu0 %v1976
      %3642 = vmatpush.bf16.msra.mxu0 %v1974
      %3643 = vmatpush.bf16.msra.mxu0 %v1972
      %3644 = vmatpush.bf16.msra.mxu0 %v1970
      %3645 = vmatmul.bf16.gmra.mxu0 %v2511
      %v3646 = vpop.f32.mrf.mxu0
      %v3647 = vadd.f32 %v3498, %v3646
      %v3648 = vpop.f32.mrf.mxu0
      %v3649 = vadd.f32 %v3500, %v3648
      %3650 = vmatmul.bf16.gmra.mxu0 %v2514
      %v3651 = vpop.f32.mrf.mxu0
      %v3652 = vadd.f32 %v3503, %v3651
      %v3653 = vpop.f32.mrf.mxu0
      %v3654 = vadd.f32 %v3505, %v3653
      %3655 = vmatmul.bf16.gmra.mxu0 %v2517
      %v3656 = vpop.f32.mrf.mxu0
      %v3657 = vadd.f32 %v3508, %v3656
      %v3658 = vpop.f32.mrf.mxu0
      %v3659 = vadd.f32 %v3510, %v3658
      %3660 = vmatmul.bf16.gmra.mxu0 %v2520
      %v3661 = vpop.f32.mrf.mxu0
      %v3662 = vadd.f32 %v3513, %v3661
      %v3663 = vpop.f32.mrf.mxu0
      %v3664 = vadd.f32 %v3515, %v3663
      %3665 = vmatmul.bf16.gmra.mxu0 %v2523
      %v3666 = vpop.f32.mrf.mxu0
      %v3667 = vadd.f32 %v3518, %v3666
      %v3668 = vpop.f32.mrf.mxu0
      %v3669 = vadd.f32 %v3520, %v3668
      %3670 = vmatmul.bf16.gmra.mxu0 %v2526
      %v3671 = vpop.f32.mrf.mxu0
      %v3672 = vadd.f32 %v3523, %v3671
      %v3673 = vpop.f32.mrf.mxu0
      %v3674 = vadd.f32 %v3525, %v3673
      %3675 = vmatmul.bf16.gmra.mxu0 %v2529
      %v3676 = vpop.f32.mrf.mxu0
      %v3677 = vadd.f32 %v3528, %v3676
      %v3678 = vpop.f32.mrf.mxu0
      %v3679 = vadd.f32 %v3530, %v3678
      %3680 = vmatmul.bf16.gmra.mxu0 %v2532
      %v3681 = vpop.f32.mrf.mxu0
      %v3682 = vadd.f32 %v3533, %v3681
      %v3683 = vpop.f32.mrf.mxu0
      %v3684 = vadd.f32 %v3535, %v3683
      %3685 = vmatmul.bf16.gmra.mxu0 %v2535
      %v3686 = vpop.f32.mrf.mxu0
      %v3687 = vadd.f32 %v3538, %v3686
      %v3688 = vpop.f32.mrf.mxu0
      %v3689 = vadd.f32 %v3540, %v3688
      %3690 = vmatmul.bf16.gmra.mxu0 %v2538
      %v3691 = vpop.f32.mrf.mxu0
      %v3692 = vadd.f32 %v3543, %v3691
      %v3693 = vpop.f32.mrf.mxu0
      %v3694 = vadd.f32 %v3545, %v3693
      %3695 = vmatmul.bf16.gmra.mxu0 %v2541
      %v3696 = vpop.f32.mrf.mxu0
      %v3697 = vadd.f32 %v3548, %v3696
      %v3698 = vpop.f32.mrf.mxu0
      %v3699 = vadd.f32 %v3550, %v3698
      %3700 = vmatmul.bf16.gmra.mxu0 %v2544
      %v3701 = vpop.f32.mrf.mxu0
      %v3702 = vadd.f32 %v3553, %v3701
      %v3703 = vpop.f32.mrf.mxu0
      %v3704 = vadd.f32 %v3555, %v3703
      %3705 = vmatmul.bf16.gmra.mxu0 %v2547
      %v3706 = vpop.f32.mrf.mxu0
      %v3707 = vadd.f32 %v3558, %v3706
      %v3708 = vpop.f32.mrf.mxu0
      %v3709 = vadd.f32 %v3560, %v3708
      %3710 = vmatmul.bf16.gmra.mxu0 %v2550
      %v3711 = vpop.f32.mrf.mxu0
      %v3712 = vadd.f32 %v3563, %v3711
      %v3713 = vpop.f32.mrf.mxu0
      %v3714 = vadd.f32 %v3565, %v3713
      %3715 = vmatmul.bf16.gmra.mxu0 %v2553
      %v3716 = vpop.f32.mrf.mxu0
      %v3717 = vadd.f32 %v3568, %v3716
      %v3718 = vpop.f32.mrf.mxu0
      %v3719 = vadd.f32 %v3570, %v3718
      %3720 = vmatmul.bf16.gmra.mxu0 %v2556
      %v3721 = vpop.f32.mrf.mxu0
      %v3722 = vadd.f32 %v3573, %v3721
      %v3723 = vpop.f32.mrf.mxu0
      %v3724 = vadd.f32 %v3575, %v3723
      %3725 = vmatmul.bf16.gmra.mxu0 %v2559
      %v3726 = vpop.f32.mrf.mxu0
      %v3727 = vadd.f32 %v3578, %v3726
      %v3728 = vpop.f32.mrf.mxu0
      %v3729 = vadd.f32 %v3580, %v3728
      %3730 = vmatmul.bf16.gmra.mxu0 %v2562
      %v3731 = vpop.f32.mrf.mxu0
      %v3732 = vadd.f32 %v3583, %v3731
      %v3733 = vpop.f32.mrf.mxu0
      %v3734 = vadd.f32 %v3585, %v3733
      %3735 = vmatmul.bf16.gmra.mxu0 %v2565
      %v3736 = vpop.f32.mrf.mxu0
      %v3737 = vadd.f32 %v3588, %v3736
      %v3738 = vpop.f32.mrf.mxu0
      %v3739 = vadd.f32 %v3590, %v3738
      %3740 = vmatmul.bf16.gmra.mxu0 %v2568
      %v3741 = vpop.f32.mrf.mxu0
      %v3742 = vadd.f32 %v3593, %v3741
      %v3743 = vpop.f32.mrf.mxu0
      %v3744 = vadd.f32 %v3595, %v3743
      %3745 = vmatmul.bf16.gmra.mxu0 %v2571
      %v3746 = vpop.f32.mrf.mxu0
      %v3747 = vadd.f32 %v3598, %v3746
      %v3748 = vpop.f32.mrf.mxu0
      %v3749 = vadd.f32 %v3600, %v3748
      %3750 = vmatmul.bf16.gmra.mxu0 %v2574
      %v3751 = vpop.f32.mrf.mxu0
      %v3752 = vadd.f32 %v3603, %v3751
      %v3753 = vpop.f32.mrf.mxu0
      %v3754 = vadd.f32 %v3605, %v3753
      %3755 = vmatmul.bf16.gmra.mxu0 %v2577
      %v3756 = vpop.f32.mrf.mxu0
      %v3757 = vadd.f32 %v3608, %v3756
      %v3758 = vpop.f32.mrf.mxu0
      %v3759 = vadd.f32 %v3610, %v3758
      %3760 = vmatmul.bf16.gmra.mxu0 %v2580
      %v3761 = vpop.f32.mrf.mxu0
      %v3762 = vadd.f32 %v3613, %v3761
      %v3763 = vpop.f32.mrf.mxu0
      %v3764 = vadd.f32 %v3615, %v3763
      %3765 = vmatmul.bf16.gmra.mxu0 %v2583
      %v3766 = vpop.f32.mrf.mxu0
      %v3767 = vadd.f32 %v3618, %v3766
      %v3768 = vpop.f32.mrf.mxu0
      %v3769 = vadd.f32 %v3620, %v3768
      %3770 = vmatmul.bf16.gmra.mxu0 %v2586
      %v3771 = vpop.f32.mrf.mxu0
      %v3772 = vadd.f32 %v3623, %v3771
      %v3773 = vpop.f32.mrf.mxu0
      %v3774 = vadd.f32 %v3625, %v3773
      %3775 = vmatmul.bf16.gmra.mxu0 %v2589
      %v3776 = vpop.f32.mrf.mxu0
      %v3777 = vadd.f32 %v3628, %v3776
      %v3778 = vpop.f32.mrf.mxu0
      %v3779 = vadd.f32 %v3630, %v3778
      %3780 = vmatmul.bf16.gmra.mxu0 %v2592
      %v3781 = vpop.f32.mrf.mxu0
      %v3782 = vadd.f32 %v3633, %v3781
      %v3783 = vpop.f32.mrf.mxu0
      %v3784 = vadd.f32 %v3635, %v3783
      %3785 = vdwg.mxu0
      %v3786 = vpack.c.bf16 %v3647, %v3051
      %v3787 = vpack.c.bf16 %v3649, %v3053
      %v3788 = vpack.c.bf16 %v3652, %v3056
      %v3789 = vpack.c.bf16 %v3654, %v3058
      %v3790 = vpack.c.bf16 %v3657, %v3061
      %v3791 = vpack.c.bf16 %v3659, %v3063
      %v3792 = vpack.c.bf16 %v3662, %v3066
      %v3793 = vpack.c.bf16 %v3664, %v3068
      %v3794 = vpack.c.bf16 %v3667, %v3071
      %v3795 = vpack.c.bf16 %v3669, %v3073
      %v3796 = vpack.c.bf16 %v3672, %v3076
      %v3797 = vpack.c.bf16 %v3674, %v3078
      %v3798 = vpack.c.bf16 %v3677, %v3081
      %v3799 = vpack.c.bf16 %v3679, %v3083
      %v3800 = vpack.c.bf16 %v3682, %v3086
      %v3801 = vpack.c.bf16 %v3684, %v3088
      %v3802 = vpack.c.bf16 %v3687, %v3091
      %v3803 = vpack.c.bf16 %v3689, %v3093
      %v3804 = vpack.c.bf16 %v3692, %v3096
      %v3805 = vpack.c.bf16 %v3694, %v3098
      %v3806 = vpack.c.bf16 %v3697, %v3101
      %v3807 = vpack.c.bf16 %v3699, %v3103
      %v3808 = vpack.c.bf16 %v3702, %v3106
      %v3809 = vpack.c.bf16 %v3704, %v3108
      %v3810 = vpack.c.bf16 %v3707, %v3111
      %v3811 = vpack.c.bf16 %v3709, %v3113
      %v3812 = vpack.c.bf16 %v3712, %v3116
      %v3813 = vpack.c.bf16 %v3714, %v3118
      %v3814 = vpack.c.bf16 %v3717, %v3121
      %v3815 = vpack.c.bf16 %v3719, %v3123
      %v3816 = vpack.c.bf16 %v3722, %v3126
      %v3817 = vpack.c.bf16 %v3724, %v3128
      %v3818 = vpack.c.bf16 %v3727, %v3131
      %v3819 = vpack.c.bf16 %v3729, %v3133
      %v3820 = vpack.c.bf16 %v3732, %v3136
      %v3821 = vpack.c.bf16 %v3734, %v3138
      %v3822 = vpack.c.bf16 %v3737, %v3141
      %v3823 = vpack.c.bf16 %v3739, %v3143
      %v3824 = vpack.c.bf16 %v3742, %v3146
      %v3825 = vpack.c.bf16 %v3744, %v3148
      %v3826 = vpack.c.bf16 %v3747, %v3151
      %v3827 = vpack.c.bf16 %v3749, %v3153
      %v3828 = vpack.c.bf16 %v3752, %v3156
      %v3829 = vpack.c.bf16 %v3754, %v3158
      %v3830 = vpack.c.bf16 %v3757, %v3161
      %v3831 = vpack.c.bf16 %v3759, %v3163
      %v3832 = vpack.c.bf16 %v3762, %v3166
      %v3833 = vpack.c.bf16 %v3764, %v3168
      %v3834 = vpack.c.bf16 %v3767, %v3171
      %v3835 = vpack.c.bf16 %v3769, %v3173
      %v3836 = vpack.c.bf16 %v3772, %v3176
      %v3837 = vpack.c.bf16 %v3774, %v3178
      %v3838 = vpack.c.bf16 %v3777, %v3181
      %v3839 = vpack.c.bf16 %v3779, %v3183
      %v3840 = vpack.c.bf16 %v3782, %v3186
      %v3841 = vpack.c.bf16 %v3784, %v3188
      %3842 = vst [vmem:[%s276] sm:$0xff] %v3786
      %3843 = vst [vmem:[%s276 + $0x8] sm:$0xff] %v3787
      %3844 = vst [vmem:[%s276 + $0x10] sm:$0xff] %v3788
      %3845 = vst [vmem:[%s276 + $0x18] sm:$0xff] %v3789
      %3846 = vst [vmem:[%s276 + $0x20] sm:$0xff] %v3790
      %3847 = vst [vmem:[%s276 + $0x28] sm:$0xff] %v3791
      %3848 = vst [vmem:[%s276 + $0x30] sm:$0xff] %v3792
      %3849 = vst [vmem:[%s276 + $0x38] sm:$0xff] %v3793
      %3850 = vst [vmem:[%s276 + $0x40] sm:$0xff] %v3794
      %3851 = vst [vmem:[%s276 + $0x48] sm:$0xff] %v3795
      %3852 = vst [vmem:[%s276 + $0x50] sm:$0xff] %v3796
      %3853 = vst [vmem:[%s276 + $0x58] sm:$0xff] %v3797
      %3854 = vst [vmem:[%s276 + $0x60] sm:$0xff] %v3798
      %3855 = vst [vmem:[%s276 + $0x68] sm:$0xff] %v3799
      %3856 = vst [vmem:[%s276 + $0x70] sm:$0xff] %v3800
      %3857 = vst [vmem:[%s276 + $0x78] sm:$0xff] %v3801
      %3858 = vst [vmem:[%s276 + $0x80] sm:$0xff] %v3802
      %3859 = vst [vmem:[%s276 + $0x88] sm:$0xff] %v3803
      %3860 = vst [vmem:[%s276 + $0x90] sm:$0xff] %v3804
      %3861 = vst [vmem:[%s276 + $0x98] sm:$0xff] %v3805
      %3862 = vst [vmem:[%s276 + $0xa0] sm:$0xff] %v3806
      %3863 = vst [vmem:[%s276 + $0xa8] sm:$0xff] %v3807
      %3864 = vst [vmem:[%s276 + $0xb0] sm:$0xff] %v3808
      %3865 = vst [vmem:[%s276 + $0xb8] sm:$0xff] %v3809
      %3866 = vst [vmem:[%s276 + $0xc0] sm:$0xff] %v3810
      %3867 = vst [vmem:[%s276 + $0xc8] sm:$0xff] %v3811
      %3868 = vst [vmem:[%s276 + $0xd0] sm:$0xff] %v3812
      %3869 = vst [vmem:[%s276 + $0xd8] sm:$0xff] %v3813
      %3870 = vst [vmem:[%s276 + $0xe0] sm:$0xff] %v3814
      %3871 = vst [vmem:[%s276 + $0xe8] sm:$0xff] %v3815
      %3872 = vst [vmem:[%s276 + $0xf0] sm:$0xff] %v3816
      %3873 = vst [vmem:[%s276 + $0xf8] sm:$0xff] %v3817
      %3874 = vst [vmem:[%s276 + $0x100] sm:$0xff] %v3818
      %3875 = vst [vmem:[%s276 + $0x108] sm:$0xff] %v3819
      %3876 = vst [vmem:[%s276 + $0x110] sm:$0xff] %v3820
      %3877 = vst [vmem:[%s276 + $0x118] sm:$0xff] %v3821
      %3878 = vst [vmem:[%s276 + $0x120] sm:$0xff] %v3822
      %3879 = vst [vmem:[%s276 + $0x128] sm:$0xff] %v3823
      %3880 = vst [vmem:[%s276 + $0x130] sm:$0xff] %v3824
      %3881 = vst [vmem:[%s276 + $0x138] sm:$0xff] %v3825
      %3882 = vst [vmem:[%s276 + $0x140] sm:$0xff] %v3826
      %3883 = vst [vmem:[%s276 + $0x148] sm:$0xff] %v3827
      %3884 = vst [vmem:[%s276 + $0x150] sm:$0xff] %v3828
      %3885 = vst [vmem:[%s276 + $0x158] sm:$0xff] %v3829
      %3886 = vst [vmem:[%s276 + $0x160] sm:$0xff] %v3830
      %3887 = vst [vmem:[%s276 + $0x168] sm:$0xff] %v3831
      %3888 = vst [vmem:[%s276 + $0x170] sm:$0xff] %v3832
      %3889 = vst [vmem:[%s276 + $0x178] sm:$0xff] %v3833
      %3890 = vst [vmem:[%s276 + $0x180] sm:$0xff] %v3834
      %3891 = vst [vmem:[%s276 + $0x188] sm:$0xff] %v3835
      %3892 = vst [vmem:[%s276 + $0x190] sm:$0xff] %v3836
      %3893 = vst [vmem:[%s276 + $0x198] sm:$0xff] %v3837
      %3894 = vst [vmem:[%s276 + $0x1a0] sm:$0xff] %v3838
      %3895 = vst [vmem:[%s276 + $0x1a8] sm:$0xff] %v3839
      %3896 = vst [vmem:[%s276 + $0x1b0] sm:$0xff] %v3840
      %3897 = vst [vmem:[%s276 + $0x1b8] sm:$0xff] %v3841
      %v3898 = vadd.f32 %v3051, %v3647
      %3899 = vadd.xlane.f32.xlu0 %v3898
      %v3900 = vpop.xlane.xlu0 %3899
      %v3901 = vadd.f32 %v3053, %v3649
      %3902 = vadd.xlane.f32.xlu0 %v3901
      %v3903 = vpop.xlane.xlu0 %3902
      %v3904 = vadd.f32 %v3056, %v3652
      %3905 = vadd.xlane.f32.xlu0 %v3904
      %v3906 = vpop.xlane.xlu0 %3905
      %v3907 = vadd.f32 %v3058, %v3654
      %3908 = vadd.xlane.f32.xlu0 %v3907
      %v3909 = vpop.xlane.xlu0 %3908
      %v3910 = vadd.f32 %v3061, %v3657
      %3911 = vadd.xlane.f32.xlu0 %v3910
      %v3912 = vpop.xlane.xlu0 %3911
      %v3913 = vadd.f32 %v3063, %v3659
      %3914 = vadd.xlane.f32.xlu0 %v3913
      %v3915 = vpop.xlane.xlu0 %3914
      %v3916 = vadd.f32 %v3066, %v3662
      %3917 = vadd.xlane.f32.xlu0 %v3916
      %v3918 = vpop.xlane.xlu0 %3917
      %v3919 = vadd.f32 %v3068, %v3664
      %3920 = vadd.xlane.f32.xlu0 %v3919
      %v3921 = vpop.xlane.xlu0 %3920
      %v3922 = vadd.f32 %v3071, %v3667
      %3923 = vadd.xlane.f32.xlu0 %v3922
      %v3924 = vpop.xlane.xlu0 %3923
      %v3925 = vadd.f32 %v3073, %v3669
      %3926 = vadd.xlane.f32.xlu0 %v3925
      %v3927 = vpop.xlane.xlu0 %3926
      %v3928 = vadd.f32 %v3076, %v3672
      %3929 = vadd.xlane.f32.xlu0 %v3928
      %v3930 = vpop.xlane.xlu0 %3929
      %v3931 = vadd.f32 %v3078, %v3674
      %3932 = vadd.xlane.f32.xlu0 %v3931
      %v3933 = vpop.xlane.xlu0 %3932
      %v3934 = vadd.f32 %v3081, %v3677
      %3935 = vadd.xlane.f32.xlu0 %v3934
      %v3936 = vpop.xlane.xlu0 %3935
      %v3937 = vadd.f32 %v3083, %v3679
      %3938 = vadd.xlane.f32.xlu0 %v3937
      %v3939 = vpop.xlane.xlu0 %3938
      %v3940 = vadd.f32 %v3086, %v3682
      %3941 = vadd.xlane.f32.xlu0 %v3940
      %v3942 = vpop.xlane.xlu0 %3941
      %v3943 = vadd.f32 %v3088, %v3684
      %3944 = vadd.xlane.f32.xlu0 %v3943
      %v3945 = vpop.xlane.xlu0 %3944
      %v3946 = vadd.f32 %v3091, %v3687
      %3947 = vadd.xlane.f32.xlu0 %v3946
      %v3948 = vpop.xlane.xlu0 %3947
      %v3949 = vadd.f32 %v3093, %v3689
      %3950 = vadd.xlane.f32.xlu0 %v3949
      %v3951 = vpop.xlane.xlu0 %3950
      %v3952 = vadd.f32 %v3096, %v3692
      %3953 = vadd.xlane.f32.xlu0 %v3952
      %v3954 = vpop.xlane.xlu0 %3953
      %v3955 = vadd.f32 %v3098, %v3694
      %3956 = vadd.xlane.f32.xlu0 %v3955
      %v3957 = vpop.xlane.xlu0 %3956
      %v3958 = vadd.f32 %v3101, %v3697
      %3959 = vadd.xlane.f32.xlu0 %v3958
      %v3960 = vpop.xlane.xlu0 %3959
      %v3961 = vadd.f32 %v3103, %v3699
      %3962 = vadd.xlane.f32.xlu0 %v3961
      %v3963 = vpop.xlane.xlu0 %3962
      %v3964 = vadd.f32 %v3106, %v3702
      %3965 = vadd.xlane.f32.xlu0 %v3964
      %v3966 = vpop.xlane.xlu0 %3965
      %v3967 = vadd.f32 %v3108, %v3704
      %3968 = vadd.xlane.f32.xlu0 %v3967
      %v3969 = vpop.xlane.xlu0 %3968
      %v3970 = vadd.f32 %v3111, %v3707
      %3971 = vadd.xlane.f32.xlu0 %v3970
      %v3972 = vpop.xlane.xlu0 %3971
      %v3973 = vadd.f32 %v3113, %v3709
      %3974 = vadd.xlane.f32.xlu0 %v3973
      %v3975 = vpop.xlane.xlu0 %3974
      %v3976 = vadd.f32 %v3116, %v3712
      %3977 = vadd.xlane.f32.xlu0 %v3976
      %v3978 = vpop.xlane.xlu0 %3977
      %v3979 = vadd.f32 %v3118, %v3714
      %3980 = vadd.xlane.f32.xlu0 %v3979
      %v3981 = vpop.xlane.xlu0 %3980
      %v3982 = vadd.f32 %v3121, %v3717
      %3983 = vadd.xlane.f32.xlu0 %v3982
      %v3984 = vpop.xlane.xlu0 %3983
      %v3985 = vadd.f32 %v3123, %v3719
      %3986 = vadd.xlane.f32.xlu0 %v3985
      %v3987 = vpop.xlane.xlu0 %3986
      %v3988 = vadd.f32 %v3126, %v3722
      %3989 = vadd.xlane.f32.xlu0 %v3988
      %v3990 = vpop.xlane.xlu0 %3989
      %v3991 = vadd.f32 %v3128, %v3724
      %3992 = vadd.xlane.f32.xlu0 %v3991
      %v3993 = vpop.xlane.xlu0 %3992
      %v3994 = vadd.f32 %v3131, %v3727
      %3995 = vadd.xlane.f32.xlu0 %v3994
      %v3996 = vpop.xlane.xlu0 %3995
      %v3997 = vadd.f32 %v3133, %v3729
      %3998 = vadd.xlane.f32.xlu0 %v3997
      %v3999 = vpop.xlane.xlu0 %3998
      %v4000 = vadd.f32 %v3136, %v3732
      %4001 = vadd.xlane.f32.xlu0 %v4000
      %v4002 = vpop.xlane.xlu0 %4001
      %v4003 = vadd.f32 %v3138, %v3734
      %4004 = vadd.xlane.f32.xlu0 %v4003
      %v4005 = vpop.xlane.xlu0 %4004
      %v4006 = vadd.f32 %v3141, %v3737
      %4007 = vadd.xlane.f32.xlu0 %v4006
      %v4008 = vpop.xlane.xlu0 %4007
      %v4009 = vadd.f32 %v3143, %v3739
      %4010 = vadd.xlane.f32.xlu0 %v4009
      %v4011 = vpop.xlane.xlu0 %4010
      %v4012 = vadd.f32 %v3146, %v3742
      %4013 = vadd.xlane.f32.xlu0 %v4012
      %v4014 = vpop.xlane.xlu0 %4013
      %v4015 = vadd.f32 %v3148, %v3744
      %4016 = vadd.xlane.f32.xlu0 %v4015
      %v4017 = vpop.xlane.xlu0 %4016
      %v4018 = vadd.f32 %v3151, %v3747
      %4019 = vadd.xlane.f32.xlu0 %v4018
      %v4020 = vpop.xlane.xlu0 %4019
      %v4021 = vadd.f32 %v3153, %v3749
      %4022 = vadd.xlane.f32.xlu0 %v4021
      %v4023 = vpop.xlane.xlu0 %4022
      %v4024 = vadd.f32 %v3156, %v3752
      %4025 = vadd.xlane.f32.xlu0 %v4024
      %v4026 = vpop.xlane.xlu0 %4025
      %v4027 = vadd.f32 %v3158, %v3754
      %4028 = vadd.xlane.f32.xlu0 %v4027
      %v4029 = vpop.xlane.xlu0 %4028
      %v4030 = vadd.f32 %v3161, %v3757
      %4031 = vadd.xlane.f32.xlu0 %v4030
      %v4032 = vpop.xlane.xlu0 %4031
      %v4033 = vadd.f32 %v3163, %v3759
      %4034 = vadd.xlane.f32.xlu0 %v4033
      %v4035 = vpop.xlane.xlu0 %4034
      %v4036 = vadd.f32 %v3166, %v3762
      %4037 = vadd.xlane.f32.xlu0 %v4036
      %v4038 = vpop.xlane.xlu0 %4037
      %v4039 = vadd.f32 %v3168, %v3764
      %4040 = vadd.xlane.f32.xlu0 %v4039
      %v4041 = vpop.xlane.xlu0 %4040
      %v4042 = vadd.f32 %v3171, %v3767
      %4043 = vadd.xlane.f32.xlu0 %v4042
      %v4044 = vpop.xlane.xlu0 %4043
      %v4045 = vadd.f32 %v3173, %v3769
      %4046 = vadd.xlane.f32.xlu0 %v4045
      %v4047 = vpop.xlane.xlu0 %4046
      %v4048 = vadd.f32 %v3176, %v3772
      %4049 = vadd.xlane.f32.xlu0 %v4048
      %v4050 = vpop.xlane.xlu0 %4049
      %v4051 = vadd.f32 %v3178, %v3774
      %4052 = vadd.xlane.f32.xlu0 %v4051
      %v4053 = vpop.xlane.xlu0 %4052
      %v4054 = vadd.f32 %v3181, %v3777
      %4055 = vadd.xlane.f32.xlu0 %v4054
      %v4056 = vpop.xlane.xlu0 %4055
      %v4057 = vadd.f32 %v3183, %v3779
      %4058 = vadd.xlane.f32.xlu0 %v4057
      %v4059 = vpop.xlane.xlu0 %4058
      %v4060 = vadd.f32 %v3186, %v3782
      %4061 = vadd.xlane.f32.xlu0 %v4060
      %v4062 = vpop.xlane.xlu0 %4061
      %v4063 = vadd.f32 %v3188, %v3784
      %4064 = vadd.xlane.f32.xlu0 %v4063
      %v4065 = vpop.xlane.xlu0 %4064
      %v4066 = vmul.f32 %v3051, %v3051
      %v4067 = vmul.f32 %v3647, %v3647
      %v4068 = vmul.f32 %v3053, %v3053
      %v4069 = vmul.f32 %v3649, %v3649
      %v4070 = vmul.f32 %v3056, %v3056
      %v4071 = vmul.f32 %v3652, %v3652
      %v4072 = vmul.f32 %v3058, %v3058
      %v4073 = vmul.f32 %v3654, %v3654
      %v4074 = vmul.f32 %v3061, %v3061
      %v4075 = vmul.f32 %v3657, %v3657
      %v4076 = vmul.f32 %v3063, %v3063
      %v4077 = vmul.f32 %v3659, %v3659
      %v4078 = vmul.f32 %v3066, %v3066
      %v4079 = vmul.f32 %v3662, %v3662
      %v4080 = vmul.f32 %v3068, %v3068
      %v4081 = vmul.f32 %v3664, %v3664
      %v4082 = vmul.f32 %v3071, %v3071
      %v4083 = vmul.f32 %v3667, %v3667
      %v4084 = vmul.f32 %v3073, %v3073
      %v4085 = vmul.f32 %v3669, %v3669
      %v4086 = vmul.f32 %v3076, %v3076
      %v4087 = vmul.f32 %v3672, %v3672
      %v4088 = vmul.f32 %v3078, %v3078
      %v4089 = vmul.f32 %v3674, %v3674
      %v4090 = vmul.f32 %v3081, %v3081
      %v4091 = vmul.f32 %v3677, %v3677
      %v4092 = vmul.f32 %v3083, %v3083
      %v4093 = vmul.f32 %v3679, %v3679
      %v4094 = vmul.f32 %v3086, %v3086
      %v4095 = vmul.f32 %v3682, %v3682
      %v4096 = vmul.f32 %v3088, %v3088
      %v4097 = vmul.f32 %v3684, %v3684
      %v4098 = vmul.f32 %v3091, %v3091
      %v4099 = vmul.f32 %v3687, %v3687
      %v4100 = vmul.f32 %v3093, %v3093
      %v4101 = vmul.f32 %v3689, %v3689
      %v4102 = vmul.f32 %v3096, %v3096
      %v4103 = vmul.f32 %v3692, %v3692
      %v4104 = vmul.f32 %v3098, %v3098
      %v4105 = vmul.f32 %v3694, %v3694
      %v4106 = vmul.f32 %v3101, %v3101
      %v4107 = vmul.f32 %v3697, %v3697
      %v4108 = vmul.f32 %v3103, %v3103
      %v4109 = vmul.f32 %v3699, %v3699
      %v4110 = vmul.f32 %v3106, %v3106
      %v4111 = vmul.f32 %v3702, %v3702
      %v4112 = vmul.f32 %v3108, %v3108
      %v4113 = vmul.f32 %v3704, %v3704
      %v4114 = vmul.f32 %v3111, %v3111
      %v4115 = vmul.f32 %v3707, %v3707
      %v4116 = vmul.f32 %v3113, %v3113
      %v4117 = vmul.f32 %v3709, %v3709
      %v4118 = vmul.f32 %v3116, %v3116
      %v4119 = vmul.f32 %v3712, %v3712
      %v4120 = vmul.f32 %v3118, %v3118
      %v4121 = vmul.f32 %v3714, %v3714
      %v4122 = vmul.f32 %v3121, %v3121
      %v4123 = vmul.f32 %v3717, %v3717
      %v4124 = vmul.f32 %v3123, %v3123
      %v4125 = vmul.f32 %v3719, %v3719
      %v4126 = vmul.f32 %v3126, %v3126
      %v4127 = vmul.f32 %v3722, %v3722
      %v4128 = vmul.f32 %v3128, %v3128
      %v4129 = vmul.f32 %v3724, %v3724
      %v4130 = vmul.f32 %v3131, %v3131
      %v4131 = vmul.f32 %v3727, %v3727
      %v4132 = vmul.f32 %v3133, %v3133
      %v4133 = vmul.f32 %v3729, %v3729
      %v4134 = vmul.f32 %v3136, %v3136
      %v4135 = vmul.f32 %v3732, %v3732
      %v4136 = vmul.f32 %v3138, %v3138
      %v4137 = vmul.f32 %v3734, %v3734
      %v4138 = vmul.f32 %v3141, %v3141
      %v4139 = vmul.f32 %v3737, %v3737
      %v4140 = vmul.f32 %v3143, %v3143
      %v4141 = vmul.f32 %v3739, %v3739
      %v4142 = vmul.f32 %v3146, %v3146
      %v4143 = vmul.f32 %v3742, %v3742
      %v4144 = vmul.f32 %v3148, %v3148
      %v4145 = vmul.f32 %v3744, %v3744
      %v4146 = vmul.f32 %v3151, %v3151
      %v4147 = vmul.f32 %v3747, %v3747
      %v4148 = vmul.f32 %v3153, %v3153
      %v4149 = vmul.f32 %v3749, %v3749
      %v4150 = vmul.f32 %v3156, %v3156
      %v4151 = vmul.f32 %v3752, %v3752
      %v4152 = vmul.f32 %v3158, %v3158
      %v4153 = vmul.f32 %v3754, %v3754
      %v4154 = vmul.f32 %v3161, %v3161
      %v4155 = vmul.f32 %v3757, %v3757
      %v4156 = vmul.f32 %v3163, %v3163
      %v4157 = vmul.f32 %v3759, %v3759
      %v4158 = vmul.f32 %v3166, %v3166
      %v4159 = vmul.f32 %v3762, %v3762
      %v4160 = vmul.f32 %v3168, %v3168
      %v4161 = vmul.f32 %v3764, %v3764
      %v4162 = vmul.f32 %v3171, %v3171
      %v4163 = vmul.f32 %v3767, %v3767
      %v4164 = vmul.f32 %v3173, %v3173
      %v4165 = vmul.f32 %v3769, %v3769
      %v4166 = vmul.f32 %v3176, %v3176
      %v4167 = vmul.f32 %v3772, %v3772
      %v4168 = vmul.f32 %v3178, %v3178
      %v4169 = vmul.f32 %v3774, %v3774
      %v4170 = vmul.f32 %v3181, %v3181
      %v4171 = vmul.f32 %v3777, %v3777
      %v4172 = vmul.f32 %v3183, %v3183
      %v4173 = vmul.f32 %v3779, %v3779
      %v4174 = vmul.f32 %v3186, %v3186
      %v4175 = vmul.f32 %v3782, %v3782
      %v4176 = vmul.f32 %v3188, %v3188
      %v4177 = vmul.f32 %v3784, %v3784
      %v4178 = vadd.f32 %v4066, %v4067
      %4179 = vadd.xlane.f32.xlu0 %v4178
      %v4180 = vpop.xlane.xlu0 %4179
      %v4181 = vadd.f32 %v4068, %v4069
      %4182 = vadd.xlane.f32.xlu0 %v4181
      %v4183 = vpop.xlane.xlu0 %4182
      %v4184 = vadd.f32 %v4070, %v4071
      %4185 = vadd.xlane.f32.xlu0 %v4184
      %v4186 = vpop.xlane.xlu0 %4185
      %v4187 = vadd.f32 %v4072, %v4073
      %4188 = vadd.xlane.f32.xlu0 %v4187
      %v4189 = vpop.xlane.xlu0 %4188
      %v4190 = vadd.f32 %v4074, %v4075
      %4191 = vadd.xlane.f32.xlu0 %v4190
      %v4192 = vpop.xlane.xlu0 %4191
      %v4193 = vadd.f32 %v4076, %v4077
      %4194 = vadd.xlane.f32.xlu0 %v4193
      %v4195 = vpop.xlane.xlu0 %4194
      %v4196 = vadd.f32 %v4078, %v4079
      %4197 = vadd.xlane.f32.xlu0 %v4196
      %v4198 = vpop.xlane.xlu0 %4197
      %v4199 = vadd.f32 %v4080, %v4081
      %4200 = vadd.xlane.f32.xlu0 %v4199
      %v4201 = vpop.xlane.xlu0 %4200
      %v4202 = vadd.f32 %v4082, %v4083
      %4203 = vadd.xlane.f32.xlu0 %v4202
      %v4204 = vpop.xlane.xlu0 %4203
      %v4205 = vadd.f32 %v4084, %v4085
      %4206 = vadd.xlane.f32.xlu0 %v4205
      %v4207 = vpop.xlane.xlu0 %4206
      %v4208 = vadd.f32 %v4086, %v4087
      %4209 = vadd.xlane.f32.xlu0 %v4208
      %v4210 = vpop.xlane.xlu0 %4209
      %v4211 = vadd.f32 %v4088, %v4089
      %4212 = vadd.xlane.f32.xlu0 %v4211
      %v4213 = vpop.xlane.xlu0 %4212
      %v4214 = vadd.f32 %v4090, %v4091
      %4215 = vadd.xlane.f32.xlu0 %v4214
      %v4216 = vpop.xlane.xlu0 %4215
      %v4217 = vadd.f32 %v4092, %v4093
      %4218 = vadd.xlane.f32.xlu0 %v4217
      %v4219 = vpop.xlane.xlu0 %4218
      %v4220 = vadd.f32 %v4094, %v4095
      %4221 = vadd.xlane.f32.xlu0 %v4220
      %v4222 = vpop.xlane.xlu0 %4221
      %v4223 = vadd.f32 %v4096, %v4097
      %4224 = vadd.xlane.f32.xlu0 %v4223
      %v4225 = vpop.xlane.xlu0 %4224
      %v4226 = vadd.f32 %v4098, %v4099
      %4227 = vadd.xlane.f32.xlu0 %v4226
      %v4228 = vpop.xlane.xlu0 %4227
      %v4229 = vadd.f32 %v4100, %v4101
      %4230 = vadd.xlane.f32.xlu0 %v4229
      %v4231 = vpop.xlane.xlu0 %4230
      %v4232 = vadd.f32 %v4102, %v4103
      %4233 = vadd.xlane.f32.xlu0 %v4232
      %v4234 = vpop.xlane.xlu0 %4233
      %v4235 = vadd.f32 %v4104, %v4105
      %4236 = vadd.xlane.f32.xlu0 %v4235
      %v4237 = vpop.xlane.xlu0 %4236
      %v4238 = vadd.f32 %v4106, %v4107
      %4239 = vadd.xlane.f32.xlu0 %v4238
      %v4240 = vpop.xlane.xlu0 %4239
      %v4241 = vadd.f32 %v4108, %v4109
      %4242 = vadd.xlane.f32.xlu0 %v4241
      %v4243 = vpop.xlane.xlu0 %4242
      %v4244 = vadd.f32 %v4110, %v4111
      %4245 = vadd.xlane.f32.xlu0 %v4244
      %v4246 = vpop.xlane.xlu0 %4245
      %v4247 = vadd.f32 %v4112, %v4113
      %4248 = vadd.xlane.f32.xlu0 %v4247
      %v4249 = vpop.xlane.xlu0 %4248
      %v4250 = vadd.f32 %v4114, %v4115
      %4251 = vadd.xlane.f32.xlu0 %v4250
      %v4252 = vpop.xlane.xlu0 %4251
      %v4253 = vadd.f32 %v4116, %v4117
      %4254 = vadd.xlane.f32.xlu0 %v4253
      %v4255 = vpop.xlane.xlu0 %4254
      %v4256 = vadd.f32 %v4118, %v4119
      %4257 = vadd.xlane.f32.xlu0 %v4256
      %v4258 = vpop.xlane.xlu0 %4257
      %v4259 = vadd.f32 %v4120, %v4121
      %4260 = vadd.xlane.f32.xlu0 %v4259
      %v4261 = vpop.xlane.xlu0 %4260
      %v4262 = vadd.f32 %v4122, %v4123
      %4263 = vadd.xlane.f32.xlu0 %v4262
      %v4264 = vpop.xlane.xlu0 %4263
      %v4265 = vadd.f32 %v4124, %v4125
      %4266 = vadd.xlane.f32.xlu0 %v4265
      %v4267 = vpop.xlane.xlu0 %4266
      %v4268 = vadd.f32 %v4126, %v4127
      %4269 = vadd.xlane.f32.xlu0 %v4268
      %v4270 = vpop.xlane.xlu0 %4269
      %v4271 = vadd.f32 %v4128, %v4129
      %4272 = vadd.xlane.f32.xlu0 %v4271
      %v4273 = vpop.xlane.xlu0 %4272
      %v4274 = vadd.f32 %v4130, %v4131
      %4275 = vadd.xlane.f32.xlu0 %v4274
      %v4276 = vpop.xlane.xlu0 %4275
      %v4277 = vadd.f32 %v4132, %v4133
      %4278 = vadd.xlane.f32.xlu0 %v4277
      %v4279 = vpop.xlane.xlu0 %4278
      %v4280 = vadd.f32 %v4134, %v4135
      %4281 = vadd.xlane.f32.xlu0 %v4280
      %v4282 = vpop.xlane.xlu0 %4281
      %v4283 = vadd.f32 %v4136, %v4137
      %4284 = vadd.xlane.f32.xlu0 %v4283
      %v4285 = vpop.xlane.xlu0 %4284
      %v4286 = vadd.f32 %v4138, %v4139
      %4287 = vadd.xlane.f32.xlu0 %v4286
      %v4288 = vpop.xlane.xlu0 %4287
      %v4289 = vadd.f32 %v4140, %v4141
      %4290 = vadd.xlane.f32.xlu0 %v4289
      %v4291 = vpop.xlane.xlu0 %4290
      %v4292 = vadd.f32 %v4142, %v4143
      %4293 = vadd.xlane.f32.xlu0 %v4292
      %v4294 = vpop.xlane.xlu0 %4293
      %v4295 = vadd.f32 %v4144, %v4145
      %4296 = vadd.xlane.f32.xlu0 %v4295
      %v4297 = vpop.xlane.xlu0 %4296
      %v4298 = vadd.f32 %v4146, %v4147
      %4299 = vadd.xlane.f32.xlu0 %v4298
      %v4300 = vpop.xlane.xlu0 %4299
      %v4301 = vadd.f32 %v4148, %v4149
      %4302 = vadd.xlane.f32.xlu0 %v4301
      %v4303 = vpop.xlane.xlu0 %4302
      %v4304 = vadd.f32 %v4150, %v4151
      %4305 = vadd.xlane.f32.xlu0 %v4304
      %v4306 = vpop.xlane.xlu0 %4305
      %v4307 = vadd.f32 %v4152, %v4153
      %4308 = vadd.xlane.f32.xlu0 %v4307
      %v4309 = vpop.xlane.xlu0 %4308
      %v4310 = vadd.f32 %v4154, %v4155
      %4311 = vadd.xlane.f32.xlu0 %v4310
      %v4312 = vpop.xlane.xlu0 %4311
      %v4313 = vadd.f32 %v4156, %v4157
      %4314 = vadd.xlane.f32.xlu0 %v4313
      %v4315 = vpop.xlane.xlu0 %4314
      %v4316 = vadd.f32 %v4158, %v4159
      %4317 = vadd.xlane.f32.xlu0 %v4316
      %v4318 = vpop.xlane.xlu0 %4317
      %v4319 = vadd.f32 %v4160, %v4161
      %4320 = vadd.xlane.f32.xlu0 %v4319
      %v4321 = vpop.xlane.xlu0 %4320
      %v4322 = vadd.f32 %v4162, %v4163
      %4323 = vadd.xlane.f32.xlu0 %v4322
      %v4324 = vpop.xlane.xlu0 %4323
      %v4325 = vadd.f32 %v4164, %v4165
      %4326 = vadd.xlane.f32.xlu0 %v4325
      %v4327 = vpop.xlane.xlu0 %4326
      %v4328 = vadd.f32 %v4166, %v4167
      %4329 = vadd.xlane.f32.xlu0 %v4328
      %v4330 = vpop.xlane.xlu0 %4329
      %v4331 = vadd.f32 %v4168, %v4169
      %4332 = vadd.xlane.f32.xlu0 %v4331
      %v4333 = vpop.xlane.xlu0 %4332
      %v4334 = vadd.f32 %v4170, %v4171
      %4335 = vadd.xlane.f32.xlu0 %v4334
      %v4336 = vpop.xlane.xlu0 %4335
      %v4337 = vadd.f32 %v4172, %v4173
      %4338 = vadd.xlane.f32.xlu0 %v4337
      %v4339 = vpop.xlane.xlu0 %4338
      %v4340 = vadd.f32 %v4174, %v4175
      %4341 = vadd.xlane.f32.xlu0 %v4340
      %v4342 = vpop.xlane.xlu0 %4341
      %v4343 = vadd.f32 %v4176, %v4177
      %4344 = vadd.xlane.f32.xlu0 %v4343
      %v4345 = vpop.xlane.xlu0 %4344
      %vm4346 = vcmask 7168
      %v4347 = vsel %vm4346, %v3900, %v4180
      %v4348 = vsel %vm4346, %v3903, %v4183
      %v4349 = vsel %vm4346, %v3906, %v4186
      %v4350 = vsel %vm4346, %v3909, %v4189
      %v4351 = vsel %vm4346, %v3912, %v4192
      %v4352 = vsel %vm4346, %v3915, %v4195
      %v4353 = vsel %vm4346, %v3918, %v4198
      %v4354 = vsel %vm4346, %v3921, %v4201
      %v4355 = vsel %vm4346, %v3924, %v4204
      %v4356 = vsel %vm4346, %v3927, %v4207
      %v4357 = vsel %vm4346, %v3930, %v4210
      %v4358 = vsel %vm4346, %v3933, %v4213
      %v4359 = vsel %vm4346, %v3936, %v4216
      %v4360 = vsel %vm4346, %v3939, %v4219
      %v4361 = vsel %vm4346, %v3942, %v4222
      %v4362 = vsel %vm4346, %v3945, %v4225
      %v4363 = vsel %vm4346, %v3948, %v4228
      %v4364 = vsel %vm4346, %v3951, %v4231
      %v4365 = vsel %vm4346, %v3954, %v4234
      %v4366 = vsel %vm4346, %v3957, %v4237
      %v4367 = vsel %vm4346, %v3960, %v4240
      %v4368 = vsel %vm4346, %v3963, %v4243
      %v4369 = vsel %vm4346, %v3966, %v4246
      %v4370 = vsel %vm4346, %v3969, %v4249
      %v4371 = vsel %vm4346, %v3972, %v4252
      %v4372 = vsel %vm4346, %v3975, %v4255
      %v4373 = vsel %vm4346, %v3978, %v4258
      %v4374 = vsel %vm4346, %v3981, %v4261
      %v4375 = vsel %vm4346, %v3984, %v4264
      %v4376 = vsel %vm4346, %v3987, %v4267
      %v4377 = vsel %vm4346, %v3990, %v4270
      %v4378 = vsel %vm4346, %v3993, %v4273
      %v4379 = vsel %vm4346, %v3996, %v4276
      %v4380 = vsel %vm4346, %v3999, %v4279
      %v4381 = vsel %vm4346, %v4002, %v4282
      %v4382 = vsel %vm4346, %v4005, %v4285
      %v4383 = vsel %vm4346, %v4008, %v4288
      %v4384 = vsel %vm4346, %v4011, %v4291
      %v4385 = vsel %vm4346, %v4014, %v4294
      %v4386 = vsel %vm4346, %v4017, %v4297
      %v4387 = vsel %vm4346, %v4020, %v4300
      %v4388 = vsel %vm4346, %v4023, %v4303
      %v4389 = vsel %vm4346, %v4026, %v4306
      %v4390 = vsel %vm4346, %v4029, %v4309
      %v4391 = vsel %vm4346, %v4032, %v4312
      %v4392 = vsel %vm4346, %v4035, %v4315
      %v4393 = vsel %vm4346, %v4038, %v4318
      %v4394 = vsel %vm4346, %v4041, %v4321
      %v4395 = vsel %vm4346, %v4044, %v4324
      %v4396 = vsel %vm4346, %v4047, %v4327
      %v4397 = vsel %vm4346, %v4050, %v4330
      %v4398 = vsel %vm4346, %v4053, %v4333
      %v4399 = vsel %vm4346, %v4056, %v4336
      %v4400 = vsel %vm4346, %v4059, %v4339
      %v4401 = vsel %vm4346, %v4062, %v4342
      %v4402 = vsel %vm4346, %v4065, %v4345
      %vm4403 = vcmask 15360
      %4404 = vst.msk [vmem:[%s286] sm:$0xff] %vm4403, %v4347
      %4405 = vst.msk [vmem:[%s286 + $0x8] sm:$0xff] %vm4403, %v4348
      %4406 = vst.msk [vmem:[%s286 + $0x10] sm:$0xff] %vm4403, %v4349
      %4407 = vst.msk [vmem:[%s286 + $0x18] sm:$0xff] %vm4403, %v4350
      %4408 = vst.msk [vmem:[%s286 + $0x20] sm:$0xff] %vm4403, %v4351
      %4409 = vst.msk [vmem:[%s286 + $0x28] sm:$0xff] %vm4403, %v4352
      %4410 = vst.msk [vmem:[%s286 + $0x30] sm:$0xff] %vm4403, %v4353
      %4411 = vst.msk [vmem:[%s286 + $0x38] sm:$0xff] %vm4403, %v4354
      %4412 = vst.msk [vmem:[%s286 + $0x40] sm:$0xff] %vm4403, %v4355
      %4413 = vst.msk [vmem:[%s286 + $0x48] sm:$0xff] %vm4403, %v4356
      %4414 = vst.msk [vmem:[%s286 + $0x50] sm:$0xff] %vm4403, %v4357
      %4415 = vst.msk [vmem:[%s286 + $0x58] sm:$0xff] %vm4403, %v4358
      %4416 = vst.msk [vmem:[%s286 + $0x60] sm:$0xff] %vm4403, %v4359
      %4417 = vst.msk [vmem:[%s286 + $0x68] sm:$0xff] %vm4403, %v4360
      %4418 = vst.msk [vmem:[%s286 + $0x70] sm:$0xff] %vm4403, %v4361
      %4419 = vst.msk [vmem:[%s286 + $0x78] sm:$0xff] %vm4403, %v4362
      %4420 = vst.msk [vmem:[%s286 + $0x80] sm:$0xff] %vm4403, %v4363
      %4421 = vst.msk [vmem:[%s286 + $0x88] sm:$0xff] %vm4403, %v4364
      %4422 = vst.msk [vmem:[%s286 + $0x90] sm:$0xff] %vm4403, %v4365
      %4423 = vst.msk [vmem:[%s286 + $0x98] sm:$0xff] %vm4403, %v4366
      %4424 = vst.msk [vmem:[%s286 + $0xa0] sm:$0xff] %vm4403, %v4367
      %4425 = vst.msk [vmem:[%s286 + $0xa8] sm:$0xff] %vm4403, %v4368
      %4426 = vst.msk [vmem:[%s286 + $0xb0] sm:$0xff] %vm4403, %v4369
      %4427 = vst.msk [vmem:[%s286 + $0xb8] sm:$0xff] %vm4403, %v4370
      %4428 = vst.msk [vmem:[%s286 + $0xc0] sm:$0xff] %vm4403, %v4371
      %4429 = vst.msk [vmem:[%s286 + $0xc8] sm:$0xff] %vm4403, %v4372
      %4430 = vst.msk [vmem:[%s286 + $0xd0] sm:$0xff] %vm4403, %v4373
      %4431 = vst.msk [vmem:[%s286 + $0xd8] sm:$0xff] %vm4403, %v4374
      %4432 = vst.msk [vmem:[%s286 + $0xe0] sm:$0xff] %vm4403, %v4375
      %4433 = vst.msk [vmem:[%s286 + $0xe8] sm:$0xff] %vm4403, %v4376
      %4434 = vst.msk [vmem:[%s286 + $0xf0] sm:$0xff] %vm4403, %v4377
      %4435 = vst.msk [vmem:[%s286 + $0xf8] sm:$0xff] %vm4403, %v4378
      %4436 = vst.msk [vmem:[%s286 + $0x100] sm:$0xff] %vm4403, %v4379
      %4437 = vst.msk [vmem:[%s286 + $0x108] sm:$0xff] %vm4403, %v4380
      %4438 = vst.msk [vmem:[%s286 + $0x110] sm:$0xff] %vm4403, %v4381
      %4439 = vst.msk [vmem:[%s286 + $0x118] sm:$0xff] %vm4403, %v4382
      %4440 = vst.msk [vmem:[%s286 + $0x120] sm:$0xff] %vm4403, %v4383
      %4441 = vst.msk [vmem:[%s286 + $0x128] sm:$0xff] %vm4403, %v4384
      %4442 = vst.msk [vmem:[%s286 + $0x130] sm:$0xff] %vm4403, %v4385
      %4443 = vst.msk [vmem:[%s286 + $0x138] sm:$0xff] %vm4403, %v4386
      %4444 = vst.msk [vmem:[%s286 + $0x140] sm:$0xff] %vm4403, %v4387
      %4445 = vst.msk [vmem:[%s286 + $0x148] sm:$0xff] %vm4403, %v4388
      %4446 = vst.msk [vmem:[%s286 + $0x150] sm:$0xff] %vm4403, %v4389
      %4447 = vst.msk [vmem:[%s286 + $0x158] sm:$0xff] %vm4403, %v4390
      %4448 = vst.msk [vmem:[%s286 + $0x160] sm:$0xff] %vm4403, %v4391
      %4449 = vst.msk [vmem:[%s286 + $0x168] sm:$0xff] %vm4403, %v4392
      %4450 = vst.msk [vmem:[%s286 + $0x170] sm:$0xff] %vm4403, %v4393
      %4451 = vst.msk [vmem:[%s286 + $0x178] sm:$0xff] %vm4403, %v4394
      %4452 = vst.msk [vmem:[%s286 + $0x180] sm:$0xff] %vm4403, %v4395
      %4453 = vst.msk [vmem:[%s286 + $0x188] sm:$0xff] %vm4403, %v4396
      %4454 = vst.msk [vmem:[%s286 + $0x190] sm:$0xff] %vm4403, %v4397
      %4455 = vst.msk [vmem:[%s286 + $0x198] sm:$0xff] %vm4403, %v4398
      %4456 = vst.msk [vmem:[%s286 + $0x1a0] sm:$0xff] %vm4403, %v4399
      %4457 = vst.msk [vmem:[%s286 + $0x1a8] sm:$0xff] %vm4403, %v4400
      %4458 = vst.msk [vmem:[%s286 + $0x1b0] sm:$0xff] %vm4403, %v4401
      %4459 = vst.msk [vmem:[%s286 + $0x1b8] sm:$0xff] %vm4403, %v4402
      %s4460 = smul.u32 2, %s22
      %p4461 = scmp.lt.s32.totalorder %s21, 1
      %s4462 = scalar_select %p4461, %s21, 1
      %p4463 = scmp.lt.s32.totalorder %s4460, 1
      %s4464 = scalar_select %p4463, %s4460, 1
      %s4465 = smul.addr %s4462, 112
      %s4466 = sadd.s32 %s4464, %s4465
      %s4467 = smul.addr %s4466, 4
      %s4468 = scalar_lea.vmem %s4, %s4467
      %p4469 = scmp.lt.s32.totalorder %s21, 1
      %s4470 = scalar_select %p4469, %s21, 1
      %p4471 = scmp.lt.s32.totalorder %s22, 0
      %s4472 = scalar_select %p4471, %s22, 0
      %s4473 = smul.addr %s4472, 56
      %s4474 = smul.addr %s4470, 56
      %s4475 = sadd.s32 %s4473, %s4474
      %s4476 = smul.addr %s4475, 8
      %s4477 = scalar_lea.vmem %s5, %s4476
      // Predicated region
      $region37: #{res_bottleneck_block3.4} parent=35 // pred_check
        %p4478 = pneg %p140
      $region38: #{res_bottleneck_block3.4} parent=35 // pred_check_branch
        %4480 = sbr.rel (%p4478) target = $region40
      $region39: #{res_bottleneck_block3.4} parent=35 // pred_region
        %s4481 = smul.u32 2, %s22
      $region40: #{res_bottleneck_block3.4} parent=35 // pred_fallthru
        _
      // Predicated region
      $region41: #{res_bottleneck_block3.4} parent=35 // pred_check
        %p4482 = pneg %p168
      $region42: #{res_bottleneck_block3.4} parent=35 // pred_check_branch
        %4484 = sbr.rel (%p4482) target = $region44
      $region43: #{res_bottleneck_block3.4} parent=35 // pred_region
        _
      $region44: #{res_bottleneck_block3.4} parent=35 // pred_fallthru
        _
    $region36: #{res_bottleneck_block3.4} parent=5 // pred_fallthru
      _
    %p4485 = scmp.le.s32.totalorder 2, %s12
    // Predicated region
    $region45: #{res_bottleneck_block3.4} parent=5 // pred_check
      %p4486 = pneg %p4485
    $region46: #{res_bottleneck_block3.4} parent=5 // pred_check_branch
      %4488 = sbr.rel (%p4486) target = $region48
    $region47: #{res_bottleneck_block3.4} parent=5 // pred_region
      %s4489 = ssub.s32 %s12, 2
      // Predicated region
      $region49: #{res_bottleneck_block3.4} parent=47 // pred_check
        %p4490 = pneg %p146
      $region50: #{res_bottleneck_block3.4} parent=47 // pred_check_branch
        %4492 = sbr.rel (%p4490) target = $region52
      $region51: #{res_bottleneck_block3.4} parent=47 // pred_region
        %s4493 = smul.u32 2, %s24
        %p4494 = scmp.lt.s32.totalorder %s23, 1
        %s4495 = scalar_select %p4494, %s23, 1
        %p4496 = scmp.lt.s32.totalorder %s4493, 1
        %s4497 = scalar_select %p4496, %s4493, 1
        %s4498 = smul.addr %s4495, 112
        %s4499 = sadd.s32 %s4497, %s4498
        %s4500 = smul.addr %s4499, 4
        %s4501 = scalar_lea.vmem %s4, %s4500
      $region52: #{res_bottleneck_block3.4} parent=47 // pred_fallthru
        _
      // Predicated region
      $region53: #{res_bottleneck_block3.4} parent=47 // pred_check
        %p4502 = pneg %p174
      $region54: #{res_bottleneck_block3.4} parent=47 // pred_check_branch
        %4504 = sbr.rel (%p4502) target = $region56
      $region55: #{res_bottleneck_block3.4} parent=47 // pred_region
        %p4505 = scmp.lt.s32.totalorder %s23, 1
        %s4506 = scalar_select %p4505, %s23, 1
        %p4507 = scmp.lt.s32.totalorder %s24, 0
        %s4508 = scalar_select %p4507, %s24, 0
        %s4509 = smul.addr %s4508, 56
        %s4510 = smul.addr %s4506, 56
        %s4511 = sadd.s32 %s4509, %s4510
        %s4512 = smul.addr %s4511, 8
        %s4513 = scalar_lea.vmem %s5, %s4512
      $region56: #{res_bottleneck_block3.4} parent=47 // pred_fallthru
        _
    $region48: #{res_bottleneck_block3.4} parent=5 // pred_fallthru
      _
  $region6: #{res_bottleneck_block3.4} parent=0 // loop_footer
    %s16 = sadd.s32 1, %s12
  $region7: #{res_bottleneck_block3.4} parent=0 // loop_footer_branch
    %11 = sbr.rel target = $region3
  $region8: #{res_bottleneck_block3.4} parent=0 // loop_exit
    _

</llo_original>
